<compile_context>
chip_gen: v7x
topology: tpu7x:2x2x1
jax: 0.10.0
libtpu: 0.0.40
codegen_flags: <defaults>
</compile_context>

<pallas_src>
import functools

import jax
import jax.numpy as jnp
from jax.experimental import pallas as pl
from jax.experimental.pallas import tpu as pltpu

LN_EPS = 1e-5       # float32 path of the PyTorch LayerNorm (eps=1e-5)
NEG_INF = -1e30     # finite mask value for padded key positions (no NaN in exp)


# --------------------------------------------------------------------------
# generation-aware configuration helpers
# --------------------------------------------------------------------------
def _device_kind():
    try:
        return jax.devices()[0].device_kind.lower()
    except Exception:
        return ""


def _phys_vmem_bytes():
    try:
        return int(pltpu.get_tpu_info().vmem_capacity_bytes)
    except Exception:
        # v7x has 64 MiB per TensorCore, v5e/v6e have 128 MiB
        return (64 if "v7" in _device_kind() else 128) * 1024 * 1024


_IS_V5 = "v5" in _device_kind()
_PHYS_VMEM = _phys_vmem_bytes()
_VMEM_BUDGET = int(0.85 * _PHYS_VMEM)   # leave headroom for compiler scratch


def _vmem_limit(estimate_bytes):
    # 2x headroom over the rough working-set estimate, floored at 32 MiB and
    # capped at ~85% of this generation's physical VMEM.
    return int(min(max(2 * estimate_bytes, 32 * 1024 * 1024), _VMEM_BUDGET))


def _round_up(x, m):
    return (x + m - 1) // m * m


def _pad_len(n):
    # pad the sequence so every tile stays (8,128)-aligned (lane-dense stores)
    return _round_up(n, 8) if n < 128 else _round_up(n, 128)


def _pick_seq_tile(n_pad, candidates, est_fn):
    # largest candidate tile that divides the padded length and fits VMEM
    for t in candidates:
        if n_pad % t == 0 and est_fn(t) <= _VMEM_BUDGET:
            return t
    for t in candidates:
        if n_pad % t == 0:
            return t
    return n_pad      # tiny sequences: a single full-extent tile


# --------------------------------------------------------------------------
# in-kernel helpers
# --------------------------------------------------------------------------
def _layer_norm(x, g):
    # gain-only LayerNorm with biased variance — matches the reference module
    mean = jnp.mean(x, axis=-1, keepdims=True)
    var = jnp.mean(jnp.square(x - mean), axis=-1, keepdims=True)
    return (x - mean) * jax.lax.rsqrt(var + LN_EPS) * g


# --------------------------------------------------------------------------
# 1) fused Q/K/V projection kernel (PreNorm + to_qkv), head-major outputs
# --------------------------------------------------------------------------
def qkv_project_kernel(x_ref, g_in_ref, g_pre_ref, wq_ref, wkt_ref, wv_ref,
                       q_ref, kt_ref, v_ref, *, heads, dim_head, fuse_norm_in):
    H, dh = heads, dim_head
    x = x_ref[0]                                                # (TN, D) f32
    if fuse_norm_in:
        x = _layer_norm(x, g_in_ref[...])                       # module-level norm_in
    xn32 = _layer_norm(x, g_pre_ref[...])                       # PreNorm
    xn = xn32.astype(jnp.bfloat16)                              # (TN, D)
    xnt = jnp.swapaxes(xn32, 0, 1).astype(jnp.bfloat16)         # (D, TN)

    tn = x.shape[0]
    # 1/sqrt(dh) is folded into wq at parameter init -> no per-tile scale mul.
    q = jnp.dot(xn, wq_ref[...], preferred_element_type=jnp.float32)    # (TN, H*dh)
    v = jnp.dot(xn, wv_ref[...], preferred_element_type=jnp.float32)    # (TN, H*dh)
    kt = jnp.dot(wkt_ref[...], xnt, preferred_element_type=jnp.float32)  # (H*dh, TN)

    q_ref[0] = jnp.swapaxes(q.reshape(tn, H, dh), 0, 1).astype(jnp.bfloat16)  # (H,TN,dh)
    v_ref[0] = jnp.swapaxes(v.reshape(tn, H, dh), 0, 1).astype(jnp.bfloat16)  # (H,TN,dh)
    kt_ref[0] = kt.reshape(H, dh, tn).astype(jnp.bfloat16)                    # (H,dh,TN)


def pallas_qkv_project(x, g_in, g_pre, wq, wk_t, wv, *, heads, dim_head,
                       fuse_norm_in):
    B, Np, D = x.shape
    inner = heads * dim_head

    def est(tn):
        e = tn * D * 4 * 2                        # x tile (double-buffered)
        e += 3 * D * inner * 2 * 2                # bf16 weights (double-buffered)
        e += 3 * tn * inner * 4                   # q/v/kt f32 temporaries
        e += 3 * heads * tn * dim_head * 2 * 2    # bf16 outputs (double-buffered)
        return e

    TN = _pick_seq_tile(Np, (512, 256, 128), est)
    kernel = functools.partial(qkv_project_kernel, heads=heads,
                               dim_head=dim_head, fuse_norm_in=fuse_norm_in)
    return pl.pallas_call(
        kernel,
        out_shape=(jax.ShapeDtypeStruct((B, heads, Np, dim_head), jnp.bfloat16),
                   jax.ShapeDtypeStruct((B, heads, dim_head, Np), jnp.bfloat16),
                   jax.ShapeDtypeStruct((B, heads, Np, dim_head), jnp.bfloat16)),
        grid=(B, Np // TN),
        in_specs=[
            pl.BlockSpec((1, TN, D), lambda b, n: (b, n, 0)),     # x tile
            pl.BlockSpec((1, D), lambda b, n: (0, 0)),            # norm_in gain
            pl.BlockSpec((1, D), lambda b, n: (0, 0)),            # prenorm gain
            pl.BlockSpec((D, inner), lambda b, n: (0, 0)),        # wq (scale folded, bf16)
            pl.BlockSpec((inner, D), lambda b, n: (0, 0)),        # wk^T (bf16)
            pl.BlockSpec((D, inner), lambda b, n: (0, 0)),        # wv (bf16)
        ],
        out_specs=(
            pl.BlockSpec((1, heads, TN, dim_head), lambda b, n: (b, 0, n, 0)),  # Q
            pl.BlockSpec((1, heads, dim_head, TN), lambda b, n: (b, 0, 0, n)),  # K^T
            pl.BlockSpec((1, heads, TN, dim_head), lambda b, n: (b, 0, n, 0)),  # V
        ),
        compiler_params=pltpu.CompilerParams(
            dimension_semantics=("parallel", "parallel"),
            vmem_limit_bytes=_vmem_limit(est(TN))),
    )(x, g_in, g_pre, wq, wk_t, wv)


# --------------------------------------------------------------------------
# 2) flash attention kernel:  x <- to_out(softmax(q k^T) v) + x
# --------------------------------------------------------------------------
def attn_block_kernel(x_ref, g_in_ref, q_ref, k_ref, v_ref, wout_ref, g_out_ref,
                      o_ref, m_scr, l_scr, acc_scr,
                      *, tile_k, n_valid, fuse_norm_in):
    ki = pl.program_id(2)

    @pl.when(ki == 0)
    def _():
        m_scr[...] = jnp.full(m_scr.shape, -jnp.inf, jnp.float32)
        l_scr[...] = jnp.zeros(l_scr.shape, jnp.float32)
        acc_scr[...] = jnp.zeros(acc_scr.shape, jnp.float32)

    q = q_ref[0]                                                # (H, TQ, dh) bf16 (pre-scaled)
    k = k_ref[0]                                                # (H, dh, TK) bf16 (lane-dense)
    v = v_ref[0]                                                # (H, TK, dh) bf16

    s = jnp.einsum('hqd,hdk->hqk', q, k,
                   preferred_element_type=jnp.float32)          # (H, TQ, TK) f32
    if n_valid is not None:                                     # mask padded key positions
        kpos = ki * tile_k + jax.lax.broadcasted_iota(jnp.int32, s.shape, 2)
        s = jnp.where(kpos < n_valid, s, NEG_INF)

    m_prev = m_scr[...]
    m_new = jnp.maximum(m_prev, jnp.max(s, axis=-1, keepdims=True))
    alpha = jnp.exp(m_prev - m_new)
    p = jnp.exp(s - m_new)                                      # f32 softmax numerator
    l_scr[...] = alpha * l_scr[...] + jnp.sum(p, axis=-1, keepdims=True)
    acc_scr[...] = alpha * acc_scr[...] + jnp.einsum(
        'hqk,hkd->hqd', p.astype(jnp.bfloat16), v,
        preferred_element_type=jnp.float32)                     # (H, TQ, dh)
    m_scr[...] = m_new

    @pl.when(ki == pl.num_programs(2) - 1)
    def _():
        h, tq, dh = acc_scr.shape
        attn = acc_scr[...] / l_scr[...]                        # exact divide (epilogue only)
        attn = jnp.swapaxes(attn, 0, 1).reshape(tq, h * dh).astype(jnp.bfloat16)
        proj = jnp.dot(attn, wout_ref[...], preferred_element_type=jnp.float32)
        proj = _layer_norm(proj, g_out_ref[...])                # to_out LayerNorm
        x_res = x_ref[0]                                        # residual input (f32)
        if fuse_norm_in:
            x_res = _layer_norm(x_res, g_in_ref[...])           # layer-0 fused norm_in
        o_ref[0] = proj + x_res


def pallas_attn_block(x, g_in, q, k_t, v, wout, g_out, *, heads, dim_head,
                      n_valid, fuse_norm_in):
    B, Np, D = x.shape
    inner = heads * dim_head

    def est(t):
        e = t * D * 4 * 4                          # x residual + output tiles
        e += heads * t * dim_head * 2 * 2          # q tile bf16
        e += 2 * heads * t * dim_head * 2 * 2      # k/v tiles bf16 (double-buffered)
        e += inner * D * 2 * 2                     # wout bf16
        e += heads * t * (dim_head + 2) * 4        # m/l/acc scratch
        e += 3 * heads * t * t * 4                 # s/p f32 temporaries
        return e

    # v5e's MXU is 4x128^2 -> 128-tiles; v6e/v7x prefer 256 where VMEM allows
    cands = (128,) if _IS_V5 else (256, 128)
    TQ = TK = _pick_seq_tile(Np, cands, est)

    kernel = functools.partial(attn_block_kernel, tile_k=TK, n_valid=n_valid,
                               fuse_norm_in=fuse_norm_in)
    return pl.pallas_call(
        kernel,
        out_shape=jax.ShapeDtypeStruct((B, Np, D), jnp.float32),
        grid=(B, Np // TQ, Np // TK),
        in_specs=[
            pl.BlockSpec((1, TQ, D), lambda b, qi, ki: (b, qi, 0)),                   # x residual
            pl.BlockSpec((1, D), lambda b, qi, ki: (0, 0)),                           # norm_in gain
            pl.BlockSpec((1, heads, TQ, dim_head), lambda b, qi, ki: (b, 0, qi, 0)),  # Q
            pl.BlockSpec((1, heads, dim_head, TK), lambda b, qi, ki: (b, 0, 0, ki)),  # K^T
            pl.BlockSpec((1, heads, TK, dim_head), lambda b, qi, ki: (b, 0, ki, 0)),  # V
            pl.BlockSpec((inner, D), lambda b, qi, ki: (0, 0)),                       # wout (bf16)
            pl.BlockSpec((1, D), lambda b, qi, ki: (0, 0)),                           # to_out LN gain
        ],
        out_specs=pl.BlockSpec((1, TQ, D), lambda b, qi, ki: (b, qi, 0)),
        scratch_shapes=[pltpu.VMEM((heads, TQ, 1), jnp.float32),          # m
                        pltpu.VMEM((heads, TQ, 1), jnp.float32),          # l
                        pltpu.VMEM((heads, TQ, dim_head), jnp.float32)],  # acc
        compiler_params=pltpu.CompilerParams(
            dimension_semantics=("parallel", "parallel", "arbitrary"),
            vmem_limit_bytes=_vmem_limit(est(TQ))),
    )(x, g_in, q, k_t, v, wout, g_out)


# --------------------------------------------------------------------------
# 3) feed-forward block kernel:  x <- ff(prenorm(x)) + x   [+ fused norm_out]
# --------------------------------------------------------------------------
def ff_block_kernel(x_ref, g_pre_ref, w1v_ref, w1g_ref, g_mid_ref, w2_ref,
                    g_fin_ref, o_ref, *, fuse_norm_out):
    x = x_ref[0]                                                          # (TN, D) f32
    xn = _layer_norm(x, g_pre_ref[...]).astype(jnp.bfloat16)
    val = jnp.dot(xn, w1v_ref[...], preferred_element_type=jnp.float32)   # (TN, F)
    gate = jnp.dot(xn, w1g_ref[...], preferred_element_type=jnp.float32)  # (TN, F)
    # tanh GELU runs on the EUP (separate VLIW slot) instead of a long VPU poly
    h = val * jax.nn.gelu(gate, approximate=True)
    h = _layer_norm(h, g_mid_ref[...]).astype(jnp.bfloat16)
    out = jnp.dot(h, w2_ref[...], preferred_element_type=jnp.float32)     # (TN, D)
    y = out + x                                                           # residual (f32)
    if fuse_norm_out:
        y = _layer_norm(y, g_fin_ref[...])                                # fused norm_out
    o_ref[0] = y


def pallas_ff_block(x, g_pre, w1v, w1g, g_mid, w2, g_fin, *, fuse_norm_out):
    B, Np, D = x.shape
    F = w1v.shape[1]

    def est(tn):
        e = tn * D * 4 * 4                    # x in + out tiles
        e += (2 * D * F + F * D) * 2 * 2      # bf16 weights (double-buffered)
        e += 4 * tn * F * 4                   # val/gate/h f32 temporaries
        return e

    TN = _pick_seq_tile(Np, (512, 256, 128), est)
    kernel = functools.partial(ff_block_kernel, fuse_norm_out=fuse_norm_out)
    return pl.pallas_call(
        kernel,
        out_shape=jax.ShapeDtypeStruct((B, Np, D), jnp.float32),
        grid=(B, Np // TN),
        in_specs=[
            pl.BlockSpec((1, TN, D), lambda b, n: (b, n, 0)),    # x tile
            pl.BlockSpec((1, D), lambda b, n: (0, 0)),           # prenorm gain
            pl.BlockSpec((D, F), lambda b, n: (0, 0)),           # w1 value half (bf16)
            pl.BlockSpec((D, F), lambda b, n: (0, 0)),           # w1 gate half (bf16)
            pl.BlockSpec((1, F), lambda b, n: (0, 0)),           # mid LN gain
            pl.BlockSpec((F, D), lambda b, n: (0, 0)),           # w2 (bf16)
            pl.BlockSpec((1, D), lambda b, n: (0, 0)),           # norm_out gain
        ],
        out_specs=pl.BlockSpec((1, TN, D), lambda b, n: (b, n, 0)),
        compiler_params=pltpu.CompilerParams(
            dimension_semantics=("parallel", "parallel"),
            vmem_limit_bytes=_vmem_limit(est(TN))),
    )(x, g_pre, w1v, w1g, g_mid, w2, g_fin)


# --------------------------------------------------------------------------
# full Transformer forward
# --------------------------------------------------------------------------
def transformer_forward(x, params, *, heads, dim_head):
    B, N, D = x.shape
    Np = _pad_len(N)
    if Np != N:
        x = jnp.pad(x, ((0, 0), (0, Np - N), (0, 0)))
    n_valid = N if Np != N else None          # static key-mask bound (None = no mask)

    layers = params["layers"]
    depth = len(layers)
    for i, layer in enumerate(layers):
        fuse_in = (i == 0)                    # module norm_in fused into layer 0
        q, k_t, v = pallas_qkv_project(
            x, params["g_in"], layer["attn_g_pre"],
            layer["wq"], layer["wk_t"], layer["wv"],
            heads=heads, dim_head=dim_head, fuse_norm_in=fuse_in)
        x = pallas_attn_block(
            x, params["g_in"], q, k_t, v, layer["wout"], layer["attn_g_out"],
            heads=heads, dim_head=dim_head, n_valid=n_valid,
            fuse_norm_in=fuse_in)
        x = pallas_ff_block(
            x, layer["ff_g_pre"], layer["w1_val"], layer["w1_gate"],
            layer["ff_g_mid"], layer["w2"], params["g_out"],
            fuse_norm_out=(i == depth - 1))   # module norm_out fused into last layer
    if Np != N:
        x = x[:, :N, :]
    return x


def init_params(key, *, dim, depth, heads, dim_head, ff_mult):
    inner = heads * dim_head
    inner_ff = int(dim * ff_mult)
    scale = dim_head ** -0.5
    layers = []
    for _ in range(depth):
        key, k1, k2, k3, k4 = jax.random.split(key, 5)
        wqkv = jax.random.normal(k1, (dim, 3 * inner), jnp.float32) * 0.02
        w1 = jax.random.normal(k3, (dim, 2 * inner_ff), jnp.float32) * 0.02
        layers.append(dict(
            attn_g_pre=jnp.ones((1, dim), jnp.float32),
            # fold 1/sqrt(dh) into wq (constant weight fold, one-time)
            wq=(wqkv[:, :inner] * scale).astype(jnp.bfloat16),
            # store K weight transposed -> kernel writes lane-dense (H, dh, N) K
            wk_t=wqkv[:, inner:2 * inner].T.astype(jnp.bfloat16),
            wv=wqkv[:, 2 * inner:].astype(jnp.bfloat16),
            wout=(jax.random.normal(k2, (inner, dim), jnp.float32) * 0.02
                  ).astype(jnp.bfloat16),
            attn_g_out=jnp.ones((1, dim), jnp.float32),
            ff_g_pre=jnp.ones((1, dim), jnp.float32),
            w1_val=w1[:, :inner_ff].astype(jnp.bfloat16),
            w1_gate=w1[:, inner_ff:].astype(jnp.bfloat16),
            ff_g_mid=jnp.ones((1, inner_ff), jnp.float32),
            w2=(jax.random.normal(k4, (inner_ff, dim), jnp.float32) * 0.02
                ).astype(jnp.bfloat16),
        ))
    return dict(
        g_in=jnp.ones((1, dim), jnp.float32),
        g_out=jnp.ones((1, dim), jnp.float32),
        layers=layers,
    )


if __name__ == "__main__":
    # N=12 exercises the pad-to-multiple-of-8 path + in-kernel key masking.
    B, N, D = 2, 12, 32
    HEADS, DIM_HEAD, DEPTH, FF_MULT = 4, 8, 2, 4

    key = jax.random.PRNGKey(0)
    key, kx, kp = jax.random.split(key, 3)
    x = jax.random.normal(kx, (B, N, D), jnp.float32)
    params = init_params(kp, dim=D, depth=DEPTH, heads=HEADS,
                         dim_head=DIM_HEAD, ff_mult=FF_MULT)

    fwd = jax.jit(functools.partial(transformer_forward,
                                    heads=HEADS, dim_head=DIM_HEAD))
    out = fwd(x, params)
    jax.block_until_ready(out)
    assert out.shape == (B, N, D) and out.dtype == jnp.float32
    assert bool(jnp.all(jnp.isfinite(out)))
    print("KERNEL_OK")
</pallas_src>

<mosaic_0001>
module attributes {stable_mosaic.version = 11 : i64} {
  func.func @attn_block_kernel(%arg0: i32, %arg1: i32, %arg2: i32, %arg3: memref<1x16x32xf32, #tpu.memory_space<vmem>>, %arg4: memref<1x32xf32, #tpu.memory_space<vmem>>, %arg5: memref<1x4x16x8xbf16, #tpu.memory_space<vmem>>, %arg6: memref<1x4x8x16xbf16, #tpu.memory_space<vmem>>, %arg7: memref<1x4x16x8xbf16, #tpu.memory_space<vmem>>, %arg8: memref<32x32xbf16, #tpu.memory_space<vmem>>, %arg9: memref<1x32xf32, #tpu.memory_space<vmem>>, %arg10: memref<1x16x32xf32, #tpu.memory_space<vmem>>, %arg11: memref<4x16x1xf32, #tpu.memory_space<vmem>>, %arg12: memref<4x16x1xf32, #tpu.memory_space<vmem>>, %arg13: memref<4x16x8xf32, #tpu.memory_space<vmem>>) attributes {dimension_semantics = [#tpu.dimension_semantics<parallel>, #tpu.dimension_semantics<parallel>, #tpu.dimension_semantics<arbitrary>], iteration_bounds = array<i64: 2, 1, 1>, scalar_prefetch = 0 : i64, scratch_operands = 3 : i64, tpu.core_type = #tpu.core_type<tc>, window_params = [{transform_indices = @transform_0, window_bounds = array<i64: 1, 16, 32>}, {pipeline_mode = #tpu.pipeline_mode<synchronous>, transform_indices = @transform_1, window_bounds = array<i64: 1, 32>}, {transform_indices = @transform_2, window_bounds = array<i64: 1, 4, 16, 8>}, {transform_indices = @transform_3, window_bounds = array<i64: 1, 4, 8, 16>}, {transform_indices = @transform_4, window_bounds = array<i64: 1, 4, 16, 8>}, {pipeline_mode = #tpu.pipeline_mode<synchronous>, transform_indices = @transform_5, window_bounds = array<i64: 32, 32>}, {pipeline_mode = #tpu.pipeline_mode<synchronous>, transform_indices = @transform_6, window_bounds = array<i64: 1, 32>}, {transform_indices = @transform_7, window_bounds = array<i64: 1, 16, 32>}]} {
    %c0_i32 = arith.constant 0 : i32
    %0 = arith.cmpi eq, %arg2, %c0_i32 : i32
    %1 = arith.extui %0 : i1 to i32
    %c0_i32_0 = arith.constant 0 : i32
    %2 = arith.cmpi ne, %1, %c0_i32_0 : i32
    scf.if %2 {
      %cst_36 = arith.constant 0xFF800000 : f32
      %44 = vector.broadcast %cst_36 : f32 to vector<4x16x1xf32>
      %c0_37 = arith.constant 0 : index
      %c0_38 = arith.constant 0 : index
      %c0_39 = arith.constant 0 : index
      %45 = vector.load %arg11[%c0_37, %c0_38, %c0_39] : memref<4x16x1xf32, #tpu.memory_space<vmem>>, vector<4x16x1xf32>
      tpu.vector_store %arg11[%c0_37, %c0_38, %c0_39], %44 {strides = array<i32>} : memref<4x16x1xf32, #tpu.memory_space<vmem>>, vector<4x16x1xf32>,
      %cst_40 = arith.constant 0.000000e+00 : f32
      %46 = vector.broadcast %cst_40 : f32 to vector<4x16x1xf32>
      %c0_41 = arith.constant 0 : index
      %c0_42 = arith.constant 0 : index
      %c0_43 = arith.constant 0 : index
      %47 = vector.load %arg12[%c0_41, %c0_42, %c0_43] : memref<4x16x1xf32, #tpu.memory_space<vmem>>, vector<4x16x1xf32>
      tpu.vector_store %arg12[%c0_41, %c0_42, %c0_43], %46 {strides = array<i32>} : memref<4x16x1xf32, #tpu.memory_space<vmem>>, vector<4x16x1xf32>,
      %cst_44 = arith.constant 0.000000e+00 : f32
      %48 = vector.broadcast %cst_44 : f32 to vector<4x16x8xf32>
      %c0_45 = arith.constant 0 : index
      %c0_46 = arith.constant 0 : index
      %c0_47 = arith.constant 0 : index
      %49 = vector.load %arg13[%c0_45, %c0_46, %c0_47] : memref<4x16x8xf32, #tpu.memory_space<vmem>>, vector<4x16x8xf32>
      tpu.vector_store %arg13[%c0_45, %c0_46, %c0_47], %48 {strides = array<i32>} : memref<4x16x8xf32, #tpu.memory_space<vmem>>, vector<4x16x8xf32>,
    } else {
    }
    %c0 = arith.constant 0 : index
    %c0_1 = arith.constant 0 : index
    %c0_2 = arith.constant 0 : index
    %c0_3 = arith.constant 0 : index
    %3 = vector.load %arg5[%c0, %c0_1, %c0_2, %c0_3] : memref<1x4x16x8xbf16, #tpu.memory_space<vmem>>, vector<1x4x16x8xbf16>
    %4 = vector.shape_cast %3 : vector<1x4x16x8xbf16> to vector<4x16x8xbf16>
    %c0_4 = arith.constant 0 : index
    %c0_5 = arith.constant 0 : index
    %c0_6 = arith.constant 0 : index
    %c0_7 = arith.constant 0 : index
    %5 = vector.load %arg6[%c0_4, %c0_5, %c0_6, %c0_7] : memref<1x4x8x16xbf16, #tpu.memory_space<vmem>>, vector<1x4x8x16xbf16>
    %6 = vector.shape_cast %5 : vector<1x4x8x16xbf16> to vector<4x8x16xbf16>
    %c0_8 = arith.constant 0 : index
    %c0_9 = arith.constant 0 : index
    %c0_10 = arith.constant 0 : index
    %c0_11 = arith.constant 0 : index
    %7 = vector.load %arg7[%c0_8, %c0_9, %c0_10, %c0_11] : memref<1x4x16x8xbf16, #tpu.memory_space<vmem>>, vector<1x4x16x8xbf16>
    %8 = vector.shape_cast %7 : vector<1x4x16x8xbf16> to vector<4x16x8xbf16>
    "tpu.trace_start"() <{level = 10 : i32, message = "hqd,hdk->hqk"}> : () -> ()
    %cst = arith.constant dense<0.000000e+00> : vector<4x16x16xf32>
    %9 = tpu.matmul %4, %6, %cst {dimension_numbers = #tpu.dot_dimension_numbers<[2], [1], [1], [2], [0, 0, 0, 1, 1, 2], [0], [0]>} : vector<4x16x8xbf16>, vector<4x8x16xbf16>, vector<4x16x16xf32> -> vector<4x16x16xf32>
    "tpu.trace_stop"() : () -> ()
    %c16_i32 = arith.constant 16 : i32
    %10 = arith.muli %arg2, %c16_i32 : i32
    %11 = tpu.iota {dimensions = array<i32: 2>} : vector<4x16x16xi32>
    %12 = vector.broadcast %10 : i32 to vector<4x16x16xi32>
    %13 = arith.addi %12, %11 : vector<4x16x16xi32>
    %c12_i32 = arith.constant 12 : i32
    %14 = vector.broadcast %c12_i32 : i32 to vector<4x16x16xi32>
    %15 = arith.cmpi slt, %13, %14 : vector<4x16x16xi32>
    %cst_12 = arith.constant -1.000000e+30 : f32
    %16 = vector.broadcast %cst_12 : f32 to vector<4x16x16xf32>
    %17 = arith.select %15, %9, %16 : vector<4x16x16xi1>, vector<4x16x16xf32>
    %c0_13 = arith.constant 0 : index
    %c0_14 = arith.constant 0 : index
    %c0_15 = arith.constant 0 : index
    %18 = vector.load %arg11[%c0_13, %c0_14, %c0_15] : memref<4x16x1xf32, #tpu.memory_space<vmem>>, vector<4x16x1xf32>
    %cst_16 = arith.constant dense<0xFF800000> : vector<4x16xf32>
    %19 = vector.multi_reduction <maximumf>, %17, %cst_16 [2] : vector<4x16x16xf32> to vector<4x16xf32>
    %20 = vector.shape_cast %19 : vector<4x16xf32> to vector<4x16x1xf32>
    %21 = arith.maximumf %18, %20 : vector<4x16x1xf32>
    %22 = arith.subf %18, %21 : vector<4x16x1xf32>
    %23 = math.exp %22 : vector<4x16x1xf32>
    %24 = vector.broadcast %21 : vector<4x16x1xf32> to vector<4x16x16xf32>
    %25 = arith.subf %17, %24 : vector<4x16x16xf32>
    %26 = math.exp %25 : vector<4x16x16xf32>
    %c0_17 = arith.constant 0 : index
    %c0_18 = arith.constant 0 : index
    %c0_19 = arith.constant 0 : index
    %27 = vector.load %arg12[%c0_17, %c0_18, %c0_19] : memref<4x16x1xf32, #tpu.memory_space<vmem>>, vector<4x16x1xf32>
    %28 = arith.mulf %23, %27 : vector<4x16x1xf32>
    %cst_20 = arith.constant dense<0.000000e+00> : vector<4x16xf32>
    %29 = vector.multi_reduction <add>, %26, %cst_20 [2] : vector<4x16x16xf32> to vector<4x16xf32>
    %30 = vector.shape_cast %29 : vector<4x16xf32> to vector<4x16x1xf32>
    %31 = arith.addf %28, %30 : vector<4x16x1xf32>
    %c0_21 = arith.constant 0 : index
    %c0_22 = arith.constant 0 : index
    %c0_23 = arith.constant 0 : index
    %32 = vector.load %arg12[%c0_21, %c0_22, %c0_23] : memref<4x16x1xf32, #tpu.memory_space<vmem>>, vector<4x16x1xf32>
    tpu.vector_store %arg12[%c0_21, %c0_22, %c0_23], %31 {strides = array<i32>} : memref<4x16x1xf32, #tpu.memory_space<vmem>>, vector<4x16x1xf32>,
    %c0_24 = arith.constant 0 : index
    %c0_25 = arith.constant 0 : index
    %c0_26 = arith.constant 0 : index
    %33 = vector.load %arg13[%c0_24, %c0_25, %c0_26] : memref<4x16x8xf32, #tpu.memory_space<vmem>>, vector<4x16x8xf32>
    %34 = vector.broadcast %23 : vector<4x16x1xf32> to vector<4x16x8xf32>
    %35 = arith.mulf %34, %33 : vector<4x16x8xf32>
    %36 = arith.truncf %26 : vector<4x16x16xf32> to vector<4x16x16xbf16>
    "tpu.trace_start"() <{level = 10 : i32, message = "hqk,hkd->hqd"}> : () -> ()
    %cst_27 = arith.constant dense<0.000000e+00> : vector<4x16x8xf32>
    %37 = tpu.matmul %36, %8, %cst_27 {dimension_numbers = #tpu.dot_dimension_numbers<[2], [1], [1], [2], [0, 0, 0, 1, 1, 2], [0], [0]>} : vector<4x16x16xbf16>, vector<4x16x8xbf16>, vector<4x16x8xf32> -> vector<4x16x8xf32>
    "tpu.trace_stop"() : () -> ()
    %38 = arith.addf %35, %37 : vector<4x16x8xf32>
    %c0_28 = arith.constant 0 : index
    %c0_29 = arith.constant 0 : index
    %c0_30 = arith.constant 0 : index
    %39 = vector.load %arg13[%c0_28, %c0_29, %c0_30] : memref<4x16x8xf32, #tpu.memory_space<vmem>>, vector<4x16x8xf32>
    tpu.vector_store %arg13[%c0_28, %c0_29, %c0_30], %38 {strides = array<i32>} : memref<4x16x8xf32, #tpu.memory_space<vmem>>, vector<4x16x8xf32>,
    %c0_31 = arith.constant 0 : index
    %c0_32 = arith.constant 0 : index
    %c0_33 = arith.constant 0 : index
    %40 = vector.load %arg11[%c0_31, %c0_32, %c0_33] : memref<4x16x1xf32, #tpu.memory_space<vmem>>, vector<4x16x1xf32>
    tpu.vector_store %arg11[%c0_31, %c0_32, %c0_33], %21 {strides = array<i32>} : memref<4x16x1xf32, #tpu.memory_space<vmem>>, vector<4x16x1xf32>,
    %c0_i32_34 = arith.constant 0 : i32
    %41 = arith.cmpi eq, %arg2, %c0_i32_34 : i32
    %42 = arith.extui %41 : i1 to i32
    %c0_i32_35 = arith.constant 0 : i32
    %43 = arith.cmpi ne, %42, %c0_i32_35 : i32
    scf.if %43 {
      %c0_36 = arith.constant 0 : index
      %c0_37 = arith.constant 0 : index
      %c0_38 = arith.constant 0 : index
      %44 = vector.load %arg13[%c0_36, %c0_37, %c0_38] : memref<4x16x8xf32, #tpu.memory_space<vmem>>, vector<4x16x8xf32>
      %c0_39 = arith.constant 0 : index
      %c0_40 = arith.constant 0 : index
      %c0_41 = arith.constant 0 : index
      %45 = vector.load %arg12[%c0_39, %c0_40, %c0_41] : memref<4x16x1xf32, #tpu.memory_space<vmem>>, vector<4x16x1xf32>
      %46 = vector.broadcast %45 : vector<4x16x1xf32> to vector<4x16x8xf32>
      %47 = arith.divf %44, %46 : vector<4x16x8xf32>
      %48 = tpu.transpose %47, [1, 0, 2] : vector<4x16x8xf32> -> vector<16x4x8xf32>
      %49 = vector.shape_cast %48 : vector<16x4x8xf32> to vector<16x32xf32>
      %50 = arith.truncf %49 : vector<16x32xf32> to vector<16x32xbf16>
      %c0_42 = arith.constant 0 : index
      %c0_43 = arith.constant 0 : index
      %51 = vector.load %arg8[%c0_42, %c0_43] : memref<32x32xbf16, #tpu.memory_space<vmem>>, vector<32x32xbf16>
      %cst_44 = arith.constant dense<0.000000e+00> : vector<16x32xf32>
      %52 = tpu.matmul %50, %51, %cst_44 {dimension_numbers = #tpu.dot_dimension_numbers<[1], [0], [0], [1], [0, 0, 1, 1], [], []>} : vector<16x32xbf16>, vector<32x32xbf16>, vector<16x32xf32> -> vector<16x32xf32>
      %c0_45 = arith.constant 0 : index
      %c0_46 = arith.constant 0 : index
      %53 = vector.load %arg9[%c0_45, %c0_46] : memref<1x32xf32, #tpu.memory_space<vmem>>, vector<1x32xf32>
      %cst_47 = arith.constant dense<0.000000e+00> : vector<16xf32>
      %54 = vector.multi_reduction <add>, %52, %cst_47 [1] : vector<16x32xf32> to vector<16xf32>
      %55 = vector.shape_cast %54 : vector<16xf32> to vector<16x1xf32>
      %cst_48 = arith.constant 3.200000e+01 : f32
      %56 = vector.broadcast %cst_48 : f32 to vector<16x1xf32>
      %57 = arith.divf %55, %56 : vector<16x1xf32>
      %58 = vector.broadcast %57 : vector<16x1xf32> to vector<16x32xf32>
      %59 = arith.subf %52, %58 : vector<16x32xf32>
      %60 = arith.mulf %59, %59 : vector<16x32xf32>
      %cst_49 = arith.constant dense<0.000000e+00> : vector<16xf32>
      %61 = vector.multi_reduction <add>, %60, %cst_49 [1] : vector<16x32xf32> to vector<16xf32>
      %62 = vector.shape_cast %61 : vector<16xf32> to vector<16x1xf32>
      %cst_50 = arith.constant 3.200000e+01 : f32
      %63 = vector.broadcast %cst_50 : f32 to vector<16x1xf32>
      %64 = arith.divf %62, %63 : vector<16x1xf32>
      %65 = vector.broadcast %57 : vector<16x1xf32> to vector<16x32xf32>
      %66 = arith.subf %52, %65 : vector<16x32xf32>
      %cst_51 = arith.constant 9.99999974E-6 : f32
      %67 = vector.broadcast %cst_51 : f32 to vector<16x1xf32>
      %68 = arith.addf %64, %67 : vector<16x1xf32>
      %69 = math.rsqrt %68 : vector<16x1xf32>
      %70 = vector.broadcast %69 : vector<16x1xf32> to vector<16x32xf32>
      %71 = arith.mulf %66, %70 : vector<16x32xf32>
      %72 = vector.broadcast %53 : vector<1x32xf32> to vector<16x32xf32>
      %73 = arith.mulf %71, %72 : vector<16x32xf32>
      %c0_52 = arith.constant 0 : index
      %c0_53 = arith.constant 0 : index
      %c0_54 = arith.constant 0 : index
      %74 = vector.load %arg3[%c0_52, %c0_53, %c0_54] : memref<1x16x32xf32, #tpu.memory_space<vmem>>, vector<1x16x32xf32>
      %75 = vector.shape_cast %74 : vector<1x16x32xf32> to vector<16x32xf32>
      %c0_55 = arith.constant 0 : index
      %c0_56 = arith.constant 0 : index
      %76 = vector.load %arg4[%c0_55, %c0_56] : memref<1x32xf32, #tpu.memory_space<vmem>>, vector<1x32xf32>
      %cst_57 = arith.constant dense<0.000000e+00> : vector<16xf32>
      %77 = vector.multi_reduction <add>, %75, %cst_57 [1] : vector<16x32xf32> to vector<16xf32>
      %78 = vector.shape_cast %77 : vector<16xf32> to vector<16x1xf32>
      %cst_58 = arith.constant 3.200000e+01 : f32
      %79 = vector.broadcast %cst_58 : f32 to vector<16x1xf32>
      %80 = arith.divf %78, %79 : vector<16x1xf32>
      %81 = vector.broadcast %80 : vector<16x1xf32> to vector<16x32xf32>
      %82 = arith.subf %75, %81 : vector<16x32xf32>
      %83 = arith.mulf %82, %82 : vector<16x32xf32>
      %cst_59 = arith.constant dense<0.000000e+00> : vector<16xf32>
      %84 = vector.multi_reduction <add>, %83, %cst_59 [1] : vector<16x32xf32> to vector<16xf32>
      %85 = vector.shape_cast %84 : vector<16xf32> to vector<16x1xf32>
      %cst_60 = arith.constant 3.200000e+01 : f32
      %86 = vector.broadcast %cst_60 : f32 to vector<16x1xf32>
      %87 = arith.divf %85, %86 : vector<16x1xf32>
      %88 = vector.broadcast %80 : vector<16x1xf32> to vector<16x32xf32>
      %89 = arith.subf %75, %88 : vector<16x32xf32>
      %cst_61 = arith.constant 9.99999974E-6 : f32
      %90 = vector.broadcast %cst_61 : f32 to vector<16x1xf32>
      %91 = arith.addf %87, %90 : vector<16x1xf32>
      %92 = math.rsqrt %91 : vector<16x1xf32>
      %93 = vector.broadcast %92 : vector<16x1xf32> to vector<16x32xf32>
      %94 = arith.mulf %89, %93 : vector<16x32xf32>
      %95 = vector.broadcast %76 : vector<1x32xf32> to vector<16x32xf32>
      %96 = arith.mulf %94, %95 : vector<16x32xf32>
      %97 = arith.addf %73, %96 : vector<16x32xf32>
      %c0_62 = arith.constant 0 : index
      %c0_63 = arith.constant 0 : index
      %c0_64 = arith.constant 0 : index
      %98 = vector.load %arg10[%c0_62, %c0_63, %c0_64] : memref<1x16x32xf32, #tpu.memory_space<vmem>>, vector<1x16x32xf32>
      %99 = vector.shape_cast %98 : vector<1x16x32xf32> to vector<16x32xf32>
      %100 = vector.shape_cast %97 : vector<16x32xf32> to vector<1x16x32xf32>
      tpu.vector_store %arg10[%c0_62, %c0_63, %c0_64], %100 {strides = array<i32>} : memref<1x16x32xf32, #tpu.memory_space<vmem>>, vector<1x16x32xf32>,
    } else {
    }
    return
  }
  func.func @transform_0(%arg0: i32, %arg1: i32, %arg2: i32) -> (i32, i32, i32) {
    %c0_i32 = arith.constant 0 : i32
    %c0_i32_0 = arith.constant 0 : i32
    return %arg0, %arg1, %c0_i32 : i32, i32, i32
  }
  func.func @transform_1(%arg0: i32, %arg1: i32, %arg2: i32) -> (i32, i32) {
    %c0_i32 = arith.constant 0 : i32
    %c0_i32_0 = arith.constant 0 : i32
    %c0_i32_1 = arith.constant 0 : i32
    return %c0_i32, %c0_i32_0 : i32, i32
  }
  func.func @transform_2(%arg0: i32, %arg1: i32, %arg2: i32) -> (i32, i32, i32, i32) {
    %c0_i32 = arith.constant 0 : i32
    %c0_i32_0 = arith.constant 0 : i32
    %c0_i32_1 = arith.constant 0 : i32
    return %arg0, %c0_i32, %arg1, %c0_i32_0 : i32, i32, i32, i32
  }
  func.func @transform_3(%arg0: i32, %arg1: i32, %arg2: i32) -> (i32, i32, i32, i32) {
    %c0_i32 = arith.constant 0 : i32
    %c0_i32_0 = arith.constant 0 : i32
    %c0_i32_1 = arith.constant 0 : i32
    return %arg0, %c0_i32, %c0_i32_0, %arg2 : i32, i32, i32, i32
  }
  func.func @transform_4(%arg0: i32, %arg1: i32, %arg2: i32) -> (i32, i32, i32, i32) {
    %c0_i32 = arith.constant 0 : i32
    %c0_i32_0 = arith.constant 0 : i32
    %c0_i32_1 = arith.constant 0 : i32
    return %arg0, %c0_i32, %arg2, %c0_i32_0 : i32, i32, i32, i32
  }
  func.func @transform_5(%arg0: i32, %arg1: i32, %arg2: i32) -> (i32, i32) {
    %c0_i32 = arith.constant 0 : i32
    %c0_i32_0 = arith.constant 0 : i32
    %c0_i32_1 = arith.constant 0 : i32
    return %c0_i32, %c0_i32_0 : i32, i32
  }
  func.func @transform_6(%arg0: i32, %arg1: i32, %arg2: i32) -> (i32, i32) {
    %c0_i32 = arith.constant 0 : i32
    %c0_i32_0 = arith.constant 0 : i32
    %c0_i32_1 = arith.constant 0 : i32
    return %c0_i32, %c0_i32_0 : i32, i32
  }
  func.func @transform_7(%arg0: i32, %arg1: i32, %arg2: i32) -> (i32, i32, i32) {
    %c0_i32 = arith.constant 0 : i32
    %c0_i32_0 = arith.constant 0 : i32
    return %arg0, %arg1, %c0_i32 : i32, i32, i32
  }
}

module attributes {stable_mosaic.version = 11 : i64} {
  func.func @qkv_project_kernel(%arg0: i32, %arg1: i32, %arg2: memref<1x16x32xf32, #tpu.memory_space<vmem>>, %arg3: memref<1x32xf32, #tpu.memory_space<vmem>>, %arg4: memref<1x32xf32, #tpu.memory_space<vmem>>, %arg5: memref<32x32xbf16, #tpu.memory_space<vmem>>, %arg6: memref<32x32xbf16, #tpu.memory_space<vmem>>, %arg7: memref<32x32xbf16, #tpu.memory_space<vmem>>, %arg8: memref<1x4x16x8xbf16, #tpu.memory_space<vmem>>, %arg9: memref<1x4x8x16xbf16, #tpu.memory_space<vmem>>, %arg10: memref<1x4x16x8xbf16, #tpu.memory_space<vmem>>) attributes {dimension_semantics = [#tpu.dimension_semantics<parallel>, #tpu.dimension_semantics<parallel>], iteration_bounds = array<i64: 2, 1>, scalar_prefetch = 0 : i64, scratch_operands = 0 : i64, tpu.core_type = #tpu.core_type<tc>, window_params = [{transform_indices = @transform_0, window_bounds = array<i64: 1, 16, 32>}, {pipeline_mode = #tpu.pipeline_mode<synchronous>, transform_indices = @transform_1, window_bounds = array<i64: 1, 32>}, {pipeline_mode = #tpu.pipeline_mode<synchronous>, transform_indices = @transform_2, window_bounds = array<i64: 1, 32>}, {pipeline_mode = #tpu.pipeline_mode<synchronous>, transform_indices = @transform_3, window_bounds = array<i64: 32, 32>}, {pipeline_mode = #tpu.pipeline_mode<synchronous>, transform_indices = @transform_4, window_bounds = array<i64: 32, 32>}, {pipeline_mode = #tpu.pipeline_mode<synchronous>, transform_indices = @transform_5, window_bounds = array<i64: 32, 32>}, {transform_indices = @transform_6, window_bounds = array<i64: 1, 4, 16, 8>}, {transform_indices = @transform_7, window_bounds = array<i64: 1, 4, 8, 16>}, {transform_indices = @transform_8, window_bounds = array<i64: 1, 4, 16, 8>}]} {
    %c0 = arith.constant 0 : index
    %c0_0 = arith.constant 0 : index
    %c0_1 = arith.constant 0 : index
    %0 = vector.load %arg2[%c0, %c0_0, %c0_1] : memref<1x16x32xf32, #tpu.memory_space<vmem>>, vector<1x16x32xf32>
    %1 = vector.shape_cast %0 : vector<1x16x32xf32> to vector<16x32xf32>
    %c0_2 = arith.constant 0 : index
    %c0_3 = arith.constant 0 : index
    %2 = vector.load %arg3[%c0_2, %c0_3] : memref<1x32xf32, #tpu.memory_space<vmem>>, vector<1x32xf32>
    %cst = arith.constant dense<0.000000e+00> : vector<16xf32>
    %3 = vector.multi_reduction <add>, %1, %cst [1] : vector<16x32xf32> to vector<16xf32>
    %4 = vector.shape_cast %3 : vector<16xf32> to vector<16x1xf32>
    %cst_4 = arith.constant 3.200000e+01 : f32
    %5 = vector.broadcast %cst_4 : f32 to vector<16x1xf32>
    %6 = arith.divf %4, %5 : vector<16x1xf32>
    %7 = vector.broadcast %6 : vector<16x1xf32> to vector<16x32xf32>
    %8 = arith.subf %1, %7 : vector<16x32xf32>
    %9 = arith.mulf %8, %8 : vector<16x32xf32>
    %cst_5 = arith.constant dense<0.000000e+00> : vector<16xf32>
    %10 = vector.multi_reduction <add>, %9, %cst_5 [1] : vector<16x32xf32> to vector<16xf32>
    %11 = vector.shape_cast %10 : vector<16xf32> to vector<16x1xf32>
    %cst_6 = arith.constant 3.200000e+01 : f32
    %12 = vector.broadcast %cst_6 : f32 to vector<16x1xf32>
    %13 = arith.divf %11, %12 : vector<16x1xf32>
    %14 = vector.broadcast %6 : vector<16x1xf32> to vector<16x32xf32>
    %15 = arith.subf %1, %14 : vector<16x32xf32>
    %cst_7 = arith.constant 9.99999974E-6 : f32
    %16 = vector.broadcast %cst_7 : f32 to vector<16x1xf32>
    %17 = arith.addf %13, %16 : vector<16x1xf32>
    %18 = math.rsqrt %17 : vector<16x1xf32>
    %19 = vector.broadcast %18 : vector<16x1xf32> to vector<16x32xf32>
    %20 = arith.mulf %15, %19 : vector<16x32xf32>
    %21 = vector.broadcast %2 : vector<1x32xf32> to vector<16x32xf32>
    %22 = arith.mulf %20, %21 : vector<16x32xf32>
    %c0_8 = arith.constant 0 : index
    %c0_9 = arith.constant 0 : index
    %23 = vector.load %arg4[%c0_8, %c0_9] : memref<1x32xf32, #tpu.memory_space<vmem>>, vector<1x32xf32>
    %cst_10 = arith.constant dense<0.000000e+00> : vector<16xf32>
    %24 = vector.multi_reduction <add>, %22, %cst_10 [1] : vector<16x32xf32> to vector<16xf32>
    %25 = vector.shape_cast %24 : vector<16xf32> to vector<16x1xf32>
    %cst_11 = arith.constant 3.200000e+01 : f32
    %26 = vector.broadcast %cst_11 : f32 to vector<16x1xf32>
    %27 = arith.divf %25, %26 : vector<16x1xf32>
    %28 = vector.broadcast %27 : vector<16x1xf32> to vector<16x32xf32>
    %29 = arith.subf %22, %28 : vector<16x32xf32>
    %30 = arith.mulf %29, %29 : vector<16x32xf32>
    %cst_12 = arith.constant dense<0.000000e+00> : vector<16xf32>
    %31 = vector.multi_reduction <add>, %30, %cst_12 [1] : vector<16x32xf32> to vector<16xf32>
    %32 = vector.shape_cast %31 : vector<16xf32> to vector<16x1xf32>
    %cst_13 = arith.constant 3.200000e+01 : f32
    %33 = vector.broadcast %cst_13 : f32 to vector<16x1xf32>
    %34 = arith.divf %32, %33 : vector<16x1xf32>
    %35 = vector.broadcast %27 : vector<16x1xf32> to vector<16x32xf32>
    %36 = arith.subf %22, %35 : vector<16x32xf32>
    %cst_14 = arith.constant 9.99999974E-6 : f32
    %37 = vector.broadcast %cst_14 : f32 to vector<16x1xf32>
    %38 = arith.addf %34, %37 : vector<16x1xf32>
    %39 = math.rsqrt %38 : vector<16x1xf32>
    %40 = vector.broadcast %39 : vector<16x1xf32> to vector<16x32xf32>
    %41 = arith.mulf %36, %40 : vector<16x32xf32>
    %42 = vector.broadcast %23 : vector<1x32xf32> to vector<16x32xf32>
    %43 = arith.mulf %41, %42 : vector<16x32xf32>
    %44 = arith.truncf %43 : vector<16x32xf32> to vector<16x32xbf16>
    %45 = tpu.transpose %43, [1, 0] : vector<16x32xf32> -> vector<32x16xf32>
    %46 = arith.truncf %45 : vector<32x16xf32> to vector<32x16xbf16>
    %c0_15 = arith.constant 0 : index
    %c0_16 = arith.constant 0 : index
    %47 = vector.load %arg5[%c0_15, %c0_16] : memref<32x32xbf16, #tpu.memory_space<vmem>>, vector<32x32xbf16>
    %cst_17 = arith.constant dense<0.000000e+00> : vector<16x32xf32>
    %48 = tpu.matmul %44, %47, %cst_17 {dimension_numbers = #tpu.dot_dimension_numbers<[1], [0], [0], [1], [0, 0, 1, 1], [], []>} : vector<16x32xbf16>, vector<32x32xbf16>, vector<16x32xf32> -> vector<16x32xf32>
    %c0_18 = arith.constant 0 : index
    %c0_19 = arith.constant 0 : index
    %49 = vector.load %arg7[%c0_18, %c0_19] : memref<32x32xbf16, #tpu.memory_space<vmem>>, vector<32x32xbf16>
    %cst_20 = arith.constant dense<0.000000e+00> : vector<16x32xf32>
    %50 = tpu.matmul %44, %49, %cst_20 {dimension_numbers = #tpu.dot_dimension_numbers<[1], [0], [0], [1], [0, 0, 1, 1], [], []>} : vector<16x32xbf16>, vector<32x32xbf16>, vector<16x32xf32> -> vector<16x32xf32>
    %c0_21 = arith.constant 0 : index
    %c0_22 = arith.constant 0 : index
    %51 = vector.load %arg6[%c0_21, %c0_22] : memref<32x32xbf16, #tpu.memory_space<vmem>>, vector<32x32xbf16>
    %cst_23 = arith.constant dense<0.000000e+00> : vector<32x16xf32>
    %52 = tpu.matmul %51, %46, %cst_23 {dimension_numbers = #tpu.dot_dimension_numbers<[1], [0], [0], [1], [0, 0, 1, 1], [], []>} : vector<32x32xbf16>, vector<32x16xbf16>, vector<32x16xf32> -> vector<32x16xf32>
    %53 = vector.shape_cast %48 : vector<16x32xf32> to vector<16x4x8xf32>
    %54 = tpu.transpose %53, [1, 0, 2] : vector<16x4x8xf32> -> vector<4x16x8xf32>
    %55 = arith.truncf %54 : vector<4x16x8xf32> to vector<4x16x8xbf16>
    %c0_24 = arith.constant 0 : index
    %c0_25 = arith.constant 0 : index
    %c0_26 = arith.constant 0 : index
    %c0_27 = arith.constant 0 : index
    %56 = vector.load %arg8[%c0_24, %c0_25, %c0_26, %c0_27] : memref<1x4x16x8xbf16, #tpu.memory_space<vmem>>, vector<1x4x16x8xbf16>
    %57 = vector.shape_cast %56 : vector<1x4x16x8xbf16> to vector<4x16x8xbf16>
    %58 = vector.shape_cast %55 : vector<4x16x8xbf16> to vector<1x4x16x8xbf16>
    tpu.vector_store %arg8[%c0_24, %c0_25, %c0_26, %c0_27], %58 {strides = array<i32>} : memref<1x4x16x8xbf16, #tpu.memory_space<vmem>>, vector<1x4x16x8xbf16>,
    %59 = vector.shape_cast %50 : vector<16x32xf32> to vector<16x4x8xf32>
    %60 = tpu.transpose %59, [1, 0, 2] : vector<16x4x8xf32> -> vector<4x16x8xf32>
    %61 = arith.truncf %60 : vector<4x16x8xf32> to vector<4x16x8xbf16>
    %c0_28 = arith.constant 0 : index
    %c0_29 = arith.constant 0 : index
    %c0_30 = arith.constant 0 : index
    %c0_31 = arith.constant 0 : index
    %62 = vector.load %arg10[%c0_28, %c0_29, %c0_30, %c0_31] : memref<1x4x16x8xbf16, #tpu.memory_space<vmem>>, vector<1x4x16x8xbf16>
    %63 = vector.shape_cast %62 : vector<1x4x16x8xbf16> to vector<4x16x8xbf16>
    %64 = vector.shape_cast %61 : vector<4x16x8xbf16> to vector<1x4x16x8xbf16>
    tpu.vector_store %arg10[%c0_28, %c0_29, %c0_30, %c0_31], %64 {strides = array<i32>} : memref<1x4x16x8xbf16, #tpu.memory_space<vmem>>, vector<1x4x16x8xbf16>,
    %65 = vector.shape_cast %52 : vector<32x16xf32> to vector<4x8x16xf32>
    %66 = arith.truncf %65 : vector<4x8x16xf32> to vector<4x8x16xbf16>
    %c0_32 = arith.constant 0 : index
    %c0_33 = arith.constant 0 : index
    %c0_34 = arith.constant 0 : index
    %c0_35 = arith.constant 0 : index
    %67 = vector.load %arg9[%c0_32, %c0_33, %c0_34, %c0_35] : memref<1x4x8x16xbf16, #tpu.memory_space<vmem>>, vector<1x4x8x16xbf16>
    %68 = vector.shape_cast %67 : vector<1x4x8x16xbf16> to vector<4x8x16xbf16>
    %69 = vector.shape_cast %66 : vector<4x8x16xbf16> to vector<1x4x8x16xbf16>
    tpu.vector_store %arg9[%c0_32, %c0_33, %c0_34, %c0_35], %69 {strides = array<i32>} : memref<1x4x8x16xbf16, #tpu.memory_space<vmem>>, vector<1x4x8x16xbf16>,
    return
  }
  func.func @transform_0(%arg0: i32, %arg1: i32) -> (i32, i32, i32) {
    %c0_i32 = arith.constant 0 : i32
    %c0_i32_0 = arith.constant 0 : i32
    return %arg0, %arg1, %c0_i32 : i32, i32, i32
  }
  func.func @transform_1(%arg0: i32, %arg1: i32) -> (i32, i32) {
    %c0_i32 = arith.constant 0 : i32
    %c0_i32_0 = arith.constant 0 : i32
    %c0_i32_1 = arith.constant 0 : i32
    return %c0_i32, %c0_i32_0 : i32, i32
  }
  func.func @transform_2(%arg0: i32, %arg1: i32) -> (i32, i32) {
    %c0_i32 = arith.constant 0 : i32
    %c0_i32_0 = arith.constant 0 : i32
    %c0_i32_1 = arith.constant 0 : i32
    return %c0_i32, %c0_i32_0 : i32, i32
  }
  func.func @transform_3(%arg0: i32, %arg1: i32) -> (i32, i32) {
    %c0_i32 = arith.constant 0 : i32
    %c0_i32_0 = arith.constant 0 : i32
    %c0_i32_1 = arith.constant 0 : i32
    return %c0_i32, %c0_i32_0 : i32, i32
  }
  func.func @transform_4(%arg0: i32, %arg1: i32) -> (i32, i32) {
    %c0_i32 = arith.constant 0 : i32
    %c0_i32_0 = arith.constant 0 : i32
    %c0_i32_1 = arith.constant 0 : i32
    return %c0_i32, %c0_i32_0 : i32, i32
  }
  func.func @transform_5(%arg0: i32, %arg1: i32) -> (i32, i32) {
    %c0_i32 = arith.constant 0 : i32
    %c0_i32_0 = arith.constant 0 : i32
    %c0_i32_1 = arith.constant 0 : i32
    return %c0_i32, %c0_i32_0 : i32, i32
  }
  func.func @transform_6(%arg0: i32, %arg1: i32) -> (i32, i32, i32, i32) {
    %c0_i32 = arith.constant 0 : i32
    %c0_i32_0 = arith.constant 0 : i32
    %c0_i32_1 = arith.constant 0 : i32
    return %arg0, %c0_i32, %arg1, %c0_i32_0 : i32, i32, i32, i32
  }
  func.func @transform_7(%arg0: i32, %arg1: i32) -> (i32, i32, i32, i32) {
    %c0_i32 = arith.constant 0 : i32
    %c0_i32_0 = arith.constant 0 : i32
    %c0_i32_1 = arith.constant 0 : i32
    return %arg0, %c0_i32, %c0_i32_0, %arg1 : i32, i32, i32, i32
  }
  func.func @transform_8(%arg0: i32, %arg1: i32) -> (i32, i32, i32, i32) {
    %c0_i32 = arith.constant 0 : i32
    %c0_i32_0 = arith.constant 0 : i32
    %c0_i32_1 = arith.constant 0 : i32
    return %arg0, %c0_i32, %arg1, %c0_i32_0 : i32, i32, i32, i32
  }
}

module attributes {stable_mosaic.version = 11 : i64} {
  func.func @ff_block_kernel(%arg0: i32, %arg1: i32, %arg2: memref<1x16x32xf32, #tpu.memory_space<vmem>>, %arg3: memref<1x32xf32, #tpu.memory_space<vmem>>, %arg4: memref<32x128xbf16, #tpu.memory_space<vmem>>, %arg5: memref<32x128xbf16, #tpu.memory_space<vmem>>, %arg6: memref<1x128xf32, #tpu.memory_space<vmem>>, %arg7: memref<128x32xbf16, #tpu.memory_space<vmem>>, %arg8: memref<1x32xf32, #tpu.memory_space<vmem>>, %arg9: memref<1x16x32xf32, #tpu.memory_space<vmem>>) attributes {dimension_semantics = [#tpu.dimension_semantics<parallel>, #tpu.dimension_semantics<parallel>], iteration_bounds = array<i64: 2, 1>, scalar_prefetch = 0 : i64, scratch_operands = 0 : i64, tpu.core_type = #tpu.core_type<tc>, window_params = [{transform_indices = @transform_0, window_bounds = array<i64: 1, 16, 32>}, {pipeline_mode = #tpu.pipeline_mode<synchronous>, transform_indices = @transform_1, window_bounds = array<i64: 1, 32>}, {pipeline_mode = #tpu.pipeline_mode<synchronous>, transform_indices = @transform_2, window_bounds = array<i64: 32, 128>}, {pipeline_mode = #tpu.pipeline_mode<synchronous>, transform_indices = @transform_3, window_bounds = array<i64: 32, 128>}, {pipeline_mode = #tpu.pipeline_mode<synchronous>, transform_indices = @transform_4, window_bounds = array<i64: 1, 128>}, {pipeline_mode = #tpu.pipeline_mode<synchronous>, transform_indices = @transform_5, window_bounds = array<i64: 128, 32>}, {pipeline_mode = #tpu.pipeline_mode<synchronous>, transform_indices = @transform_6, window_bounds = array<i64: 1, 32>}, {transform_indices = @transform_7, window_bounds = array<i64: 1, 16, 32>}]} {
    %c0 = arith.constant 0 : index
    %c0_0 = arith.constant 0 : index
    %c0_1 = arith.constant 0 : index
    %0 = vector.load %arg2[%c0, %c0_0, %c0_1] : memref<1x16x32xf32, #tpu.memory_space<vmem>>, vector<1x16x32xf32>
    %1 = vector.shape_cast %0 : vector<1x16x32xf32> to vector<16x32xf32>
    %c0_2 = arith.constant 0 : index
    %c0_3 = arith.constant 0 : index
    %2 = vector.load %arg3[%c0_2, %c0_3] : memref<1x32xf32, #tpu.memory_space<vmem>>, vector<1x32xf32>
    %cst = arith.constant dense<0.000000e+00> : vector<16xf32>
    %3 = vector.multi_reduction <add>, %1, %cst [1] : vector<16x32xf32> to vector<16xf32>
    %4 = vector.shape_cast %3 : vector<16xf32> to vector<16x1xf32>
    %cst_4 = arith.constant 3.200000e+01 : f32
    %5 = vector.broadcast %cst_4 : f32 to vector<16x1xf32>
    %6 = arith.divf %4, %5 : vector<16x1xf32>
    %7 = vector.broadcast %6 : vector<16x1xf32> to vector<16x32xf32>
    %8 = arith.subf %1, %7 : vector<16x32xf32>
    %9 = arith.mulf %8, %8 : vector<16x32xf32>
    %cst_5 = arith.constant dense<0.000000e+00> : vector<16xf32>
    %10 = vector.multi_reduction <add>, %9, %cst_5 [1] : vector<16x32xf32> to vector<16xf32>
    %11 = vector.shape_cast %10 : vector<16xf32> to vector<16x1xf32>
    %cst_6 = arith.constant 3.200000e+01 : f32
    %12 = vector.broadcast %cst_6 : f32 to vector<16x1xf32>
    %13 = arith.divf %11, %12 : vector<16x1xf32>
    %14 = vector.broadcast %6 : vector<16x1xf32> to vector<16x32xf32>
    %15 = arith.subf %1, %14 : vector<16x32xf32>
    %cst_7 = arith.constant 9.99999974E-6 : f32
    %16 = vector.broadcast %cst_7 : f32 to vector<16x1xf32>
    %17 = arith.addf %13, %16 : vector<16x1xf32>
    %18 = math.rsqrt %17 : vector<16x1xf32>
    %19 = vector.broadcast %18 : vector<16x1xf32> to vector<16x32xf32>
    %20 = arith.mulf %15, %19 : vector<16x32xf32>
    %21 = vector.broadcast %2 : vector<1x32xf32> to vector<16x32xf32>
    %22 = arith.mulf %20, %21 : vector<16x32xf32>
    %23 = arith.truncf %22 : vector<16x32xf32> to vector<16x32xbf16>
    %c0_8 = arith.constant 0 : index
    %c0_9 = arith.constant 0 : index
    %24 = vector.load %arg4[%c0_8, %c0_9] : memref<32x128xbf16, #tpu.memory_space<vmem>>, vector<32x128xbf16>
    %cst_10 = arith.constant dense<0.000000e+00> : vector<16x128xf32>
    %25 = tpu.matmul %23, %24, %cst_10 {dimension_numbers = #tpu.dot_dimension_numbers<[1], [0], [0], [1], [0, 0, 1, 1], [], []>} : vector<16x32xbf16>, vector<32x128xbf16>, vector<16x128xf32> -> vector<16x128xf32>
    %c0_11 = arith.constant 0 : index
    %c0_12 = arith.constant 0 : index
    %26 = vector.load %arg5[%c0_11, %c0_12] : memref<32x128xbf16, #tpu.memory_space<vmem>>, vector<32x128xbf16>
    %cst_13 = arith.constant dense<0.000000e+00> : vector<16x128xf32>
    %27 = tpu.matmul %23, %26, %cst_13 {dimension_numbers = #tpu.dot_dimension_numbers<[1], [0], [0], [1], [0, 0, 1, 1], [], []>} : vector<16x32xbf16>, vector<32x128xbf16>, vector<16x128xf32> -> vector<16x128xf32>
    %28 = arith.mulf %27, %27 : vector<16x128xf32>
    %29 = arith.mulf %27, %28 : vector<16x128xf32>
    %cst_14 = arith.constant 4.471500e-02 : f32
    %30 = vector.broadcast %cst_14 : f32 to vector<16x128xf32>
    %31 = arith.mulf %30, %29 : vector<16x128xf32>
    %32 = arith.addf %27, %31 : vector<16x128xf32>
    %cst_15 = arith.constant 0.797884583 : f32
    %33 = vector.broadcast %cst_15 : f32 to vector<16x128xf32>
    %34 = arith.mulf %33, %32 : vector<16x128xf32>
    %35 = math.tanh %34 : vector<16x128xf32>
    %cst_16 = arith.constant 1.000000e+00 : f32
    %36 = vector.broadcast %cst_16 : f32 to vector<16x128xf32>
    %37 = arith.addf %36, %35 : vector<16x128xf32>
    %cst_17 = arith.constant 5.000000e-01 : f32
    %38 = vector.broadcast %cst_17 : f32 to vector<16x128xf32>
    %39 = arith.mulf %38, %37 : vector<16x128xf32>
    %40 = arith.mulf %27, %39 : vector<16x128xf32>
    %41 = arith.mulf %25, %40 : vector<16x128xf32>
    %c0_18 = arith.constant 0 : index
    %c0_19 = arith.constant 0 : index
    %42 = vector.load %arg6[%c0_18, %c0_19] : memref<1x128xf32, #tpu.memory_space<vmem>>, vector<1x128xf32>
    %cst_20 = arith.constant dense<0.000000e+00> : vector<16xf32>
    %43 = vector.multi_reduction <add>, %41, %cst_20 [1] : vector<16x128xf32> to vector<16xf32>
    %44 = vector.shape_cast %43 : vector<16xf32> to vector<16x1xf32>
    %cst_21 = arith.constant 1.280000e+02 : f32
    %45 = vector.broadcast %cst_21 : f32 to vector<16x1xf32>
    %46 = arith.divf %44, %45 : vector<16x1xf32>
    %47 = vector.broadcast %46 : vector<16x1xf32> to vector<16x128xf32>
    %48 = arith.subf %41, %47 : vector<16x128xf32>
    %49 = arith.mulf %48, %48 : vector<16x128xf32>
    %cst_22 = arith.constant dense<0.000000e+00> : vector<16xf32>
    %50 = vector.multi_reduction <add>, %49, %cst_22 [1] : vector<16x128xf32> to vector<16xf32>
    %51 = vector.shape_cast %50 : vector<16xf32> to vector<16x1xf32>
    %cst_23 = arith.constant 1.280000e+02 : f32
    %52 = vector.broadcast %cst_23 : f32 to vector<16x1xf32>
    %53 = arith.divf %51, %52 : vector<16x1xf32>
    %54 = vector.broadcast %46 : vector<16x1xf32> to vector<16x128xf32>
    %55 = arith.subf %41, %54 : vector<16x128xf32>
    %cst_24 = arith.constant 9.99999974E-6 : f32
    %56 = vector.broadcast %cst_24 : f32 to vector<16x1xf32>
    %57 = arith.addf %53, %56 : vector<16x1xf32>
    %58 = math.rsqrt %57 : vector<16x1xf32>
    %59 = vector.broadcast %58 : vector<16x1xf32> to vector<16x128xf32>
    %60 = arith.mulf %55, %59 : vector<16x128xf32>
    %61 = vector.broadcast %42 : vector<1x128xf32> to vector<16x128xf32>
    %62 = arith.mulf %60, %61 : vector<16x128xf32>
    %63 = arith.truncf %62 : vector<16x128xf32> to vector<16x128xbf16>
    %c0_25 = arith.constant 0 : index
    %c0_26 = arith.constant 0 : index
    %64 = vector.load %arg7[%c0_25, %c0_26] : memref<128x32xbf16, #tpu.memory_space<vmem>>, vector<128x32xbf16>
    %cst_27 = arith.constant dense<0.000000e+00> : vector<16x32xf32>
    %65 = tpu.matmul %63, %64, %cst_27 {dimension_numbers = #tpu.dot_dimension_numbers<[1], [0], [0], [1], [0, 0, 1, 1], [], []>} : vector<16x128xbf16>, vector<128x32xbf16>, vector<16x32xf32> -> vector<16x32xf32>
    %66 = arith.addf %65, %1 : vector<16x32xf32>
    %c0_28 = arith.constant 0 : index
    %c0_29 = arith.constant 0 : index
    %c0_30 = arith.constant 0 : index
    %67 = vector.load %arg9[%c0_28, %c0_29, %c0_30] : memref<1x16x32xf32, #tpu.memory_space<vmem>>, vector<1x16x32xf32>
    %68 = vector.shape_cast %67 : vector<1x16x32xf32> to vector<16x32xf32>
    %69 = vector.shape_cast %66 : vector<16x32xf32> to vector<1x16x32xf32>
    tpu.vector_store %arg9[%c0_28, %c0_29, %c0_30], %69 {strides = array<i32>} : memref<1x16x32xf32, #tpu.memory_space<vmem>>, vector<1x16x32xf32>,
    return
  }
  func.func @transform_0(%arg0: i32, %arg1: i32) -> (i32, i32, i32) {
    %c0_i32 = arith.constant 0 : i32
    %c0_i32_0 = arith.constant 0 : i32
    return %arg0, %arg1, %c0_i32 : i32, i32, i32
  }
  func.func @transform_1(%arg0: i32, %arg1: i32) -> (i32, i32) {
    %c0_i32 = arith.constant 0 : i32
    %c0_i32_0 = arith.constant 0 : i32
    %c0_i32_1 = arith.constant 0 : i32
    return %c0_i32, %c0_i32_0 : i32, i32
  }
  func.func @transform_2(%arg0: i32, %arg1: i32) -> (i32, i32) {
    %c0_i32 = arith.constant 0 : i32
    %c0_i32_0 = arith.constant 0 : i32
    %c0_i32_1 = arith.constant 0 : i32
    return %c0_i32, %c0_i32_0 : i32, i32
  }
  func.func @transform_3(%arg0: i32, %arg1: i32) -> (i32, i32) {
    %c0_i32 = arith.constant 0 : i32
    %c0_i32_0 = arith.constant 0 : i32
    %c0_i32_1 = arith.constant 0 : i32
    return %c0_i32, %c0_i32_0 : i32, i32
  }
  func.func @transform_4(%arg0: i32, %arg1: i32) -> (i32, i32) {
    %c0_i32 = arith.constant 0 : i32
    %c0_i32_0 = arith.constant 0 : i32
    %c0_i32_1 = arith.constant 0 : i32
    return %c0_i32, %c0_i32_0 : i32, i32
  }
  func.func @transform_5(%arg0: i32, %arg1: i32) -> (i32, i32) {
    %c0_i32 = arith.constant 0 : i32
    %c0_i32_0 = arith.constant 0 : i32
    %c0_i32_1 = arith.constant 0 : i32
    return %c0_i32, %c0_i32_0 : i32, i32
  }
  func.func @transform_6(%arg0: i32, %arg1: i32) -> (i32, i32) {
    %c0_i32 = arith.constant 0 : i32
    %c0_i32_0 = arith.constant 0 : i32
    %c0_i32_1 = arith.constant 0 : i32
    return %c0_i32, %c0_i32_0 : i32, i32
  }
  func.func @transform_7(%arg0: i32, %arg1: i32) -> (i32, i32, i32) {
    %c0_i32 = arith.constant 0 : i32
    %c0_i32_0 = arith.constant 0 : i32
    return %arg0, %arg1, %c0_i32 : i32, i32, i32
  }
}

module attributes {stable_mosaic.version = 11 : i64} {
  func.func @qkv_project_kernel(%arg0: i32, %arg1: i32, %arg2: memref<1x16x32xf32, #tpu.memory_space<vmem>>, %arg3: memref<1x32xf32, #tpu.memory_space<vmem>>, %arg4: memref<1x32xf32, #tpu.memory_space<vmem>>, %arg5: memref<32x32xbf16, #tpu.memory_space<vmem>>, %arg6: memref<32x32xbf16, #tpu.memory_space<vmem>>, %arg7: memref<32x32xbf16, #tpu.memory_space<vmem>>, %arg8: memref<1x4x16x8xbf16, #tpu.memory_space<vmem>>, %arg9: memref<1x4x8x16xbf16, #tpu.memory_space<vmem>>, %arg10: memref<1x4x16x8xbf16, #tpu.memory_space<vmem>>) attributes {dimension_semantics = [#tpu.dimension_semantics<parallel>, #tpu.dimension_semantics<parallel>], iteration_bounds = array<i64: 2, 1>, scalar_prefetch = 0 : i64, scratch_operands = 0 : i64, tpu.core_type = #tpu.core_type<tc>, window_params = [{transform_indices = @transform_0, window_bounds = array<i64: 1, 16, 32>}, {pipeline_mode = #tpu.pipeline_mode<synchronous>, transform_indices = @transform_1, window_bounds = array<i64: 1, 32>}, {pipeline_mode = #tpu.pipeline_mode<synchronous>, transform_indices = @transform_2, window_bounds = array<i64: 1, 32>}, {pipeline_mode = #tpu.pipeline_mode<synchronous>, transform_indices = @transform_3, window_bounds = array<i64: 32, 32>}, {pipeline_mode = #tpu.pipeline_mode<synchronous>, transform_indices = @transform_4, window_bounds = array<i64: 32, 32>}, {pipeline_mode = #tpu.pipeline_mode<synchronous>, transform_indices = @transform_5, window_bounds = array<i64: 32, 32>}, {transform_indices = @transform_6, window_bounds = array<i64: 1, 4, 16, 8>}, {transform_indices = @transform_7, window_bounds = array<i64: 1, 4, 8, 16>}, {transform_indices = @transform_8, window_bounds = array<i64: 1, 4, 16, 8>}]} {
    %c0 = arith.constant 0 : index
    %c0_0 = arith.constant 0 : index
    %c0_1 = arith.constant 0 : index
    %0 = vector.load %arg2[%c0, %c0_0, %c0_1] : memref<1x16x32xf32, #tpu.memory_space<vmem>>, vector<1x16x32xf32>
    %1 = vector.shape_cast %0 : vector<1x16x32xf32> to vector<16x32xf32>
    %c0_2 = arith.constant 0 : index
    %c0_3 = arith.constant 0 : index
    %2 = vector.load %arg4[%c0_2, %c0_3] : memref<1x32xf32, #tpu.memory_space<vmem>>, vector<1x32xf32>
    %cst = arith.constant dense<0.000000e+00> : vector<16xf32>
    %3 = vector.multi_reduction <add>, %1, %cst [1] : vector<16x32xf32> to vector<16xf32>
    %4 = vector.shape_cast %3 : vector<16xf32> to vector<16x1xf32>
    %cst_4 = arith.constant 3.200000e+01 : f32
    %5 = vector.broadcast %cst_4 : f32 to vector<16x1xf32>
    %6 = arith.divf %4, %5 : vector<16x1xf32>
    %7 = vector.broadcast %6 : vector<16x1xf32> to vector<16x32xf32>
    %8 = arith.subf %1, %7 : vector<16x32xf32>
    %9 = arith.mulf %8, %8 : vector<16x32xf32>
    %cst_5 = arith.constant dense<0.000000e+00> : vector<16xf32>
    %10 = vector.multi_reduction <add>, %9, %cst_5 [1] : vector<16x32xf32> to vector<16xf32>
    %11 = vector.shape_cast %10 : vector<16xf32> to vector<16x1xf32>
    %cst_6 = arith.constant 3.200000e+01 : f32
    %12 = vector.broadcast %cst_6 : f32 to vector<16x1xf32>
    %13 = arith.divf %11, %12 : vector<16x1xf32>
    %14 = vector.broadcast %6 : vector<16x1xf32> to vector<16x32xf32>
    %15 = arith.subf %1, %14 : vector<16x32xf32>
    %cst_7 = arith.constant 9.99999974E-6 : f32
    %16 = vector.broadcast %cst_7 : f32 to vector<16x1xf32>
    %17 = arith.addf %13, %16 : vector<16x1xf32>
    %18 = math.rsqrt %17 : vector<16x1xf32>
    %19 = vector.broadcast %18 : vector<16x1xf32> to vector<16x32xf32>
    %20 = arith.mulf %15, %19 : vector<16x32xf32>
    %21 = vector.broadcast %2 : vector<1x32xf32> to vector<16x32xf32>
    %22 = arith.mulf %20, %21 : vector<16x32xf32>
    %23 = arith.truncf %22 : vector<16x32xf32> to vector<16x32xbf16>
    %24 = tpu.transpose %22, [1, 0] : vector<16x32xf32> -> vector<32x16xf32>
    %25 = arith.truncf %24 : vector<32x16xf32> to vector<32x16xbf16>
    %c0_8 = arith.constant 0 : index
    %c0_9 = arith.constant 0 : index
    %26 = vector.load %arg5[%c0_8, %c0_9] : memref<32x32xbf16, #tpu.memory_space<vmem>>, vector<32x32xbf16>
    %cst_10 = arith.constant dense<0.000000e+00> : vector<16x32xf32>
    %27 = tpu.matmul %23, %26, %cst_10 {dimension_numbers = #tpu.dot_dimension_numbers<[1], [0], [0], [1], [0, 0, 1, 1], [], []>} : vector<16x32xbf16>, vector<32x32xbf16>, vector<16x32xf32> -> vector<16x32xf32>
    %c0_11 = arith.constant 0 : index
    %c0_12 = arith.constant 0 : index
    %28 = vector.load %arg7[%c0_11, %c0_12] : memref<32x32xbf16, #tpu.memory_space<vmem>>, vector<32x32xbf16>
    %cst_13 = arith.constant dense<0.000000e+00> : vector<16x32xf32>
    %29 = tpu.matmul %23, %28, %cst_13 {dimension_numbers = #tpu.dot_dimension_numbers<[1], [0], [0], [1], [0, 0, 1, 1], [], []>} : vector<16x32xbf16>, vector<32x32xbf16>, vector<16x32xf32> -> vector<16x32xf32>
    %c0_14 = arith.constant 0 : index
    %c0_15 = arith.constant 0 : index
    %30 = vector.load %arg6[%c0_14, %c0_15] : memref<32x32xbf16, #tpu.memory_space<vmem>>, vector<32x32xbf16>
    %cst_16 = arith.constant dense<0.000000e+00> : vector<32x16xf32>
    %31 = tpu.matmul %30, %25, %cst_16 {dimension_numbers = #tpu.dot_dimension_numbers<[1], [0], [0], [1], [0, 0, 1, 1], [], []>} : vector<32x32xbf16>, vector<32x16xbf16>, vector<32x16xf32> -> vector<32x16xf32>
    %32 = vector.shape_cast %27 : vector<16x32xf32> to vector<16x4x8xf32>
    %33 = tpu.transpose %32, [1, 0, 2] : vector<16x4x8xf32> -> vector<4x16x8xf32>
    %34 = arith.truncf %33 : vector<4x16x8xf32> to vector<4x16x8xbf16>
    %c0_17 = arith.constant 0 : index
    %c0_18 = arith.constant 0 : index
    %c0_19 = arith.constant 0 : index
    %c0_20 = arith.constant 0 : index
    %35 = vector.load %arg8[%c0_17, %c0_18, %c0_19, %c0_20] : memref<1x4x16x8xbf16, #tpu.memory_space<vmem>>, vector<1x4x16x8xbf16>
    %36 = vector.shape_cast %35 : vector<1x4x16x8xbf16> to vector<4x16x8xbf16>
    %37 = vector.shape_cast %34 : vector<4x16x8xbf16> to vector<1x4x16x8xbf16>
    tpu.vector_store %arg8[%c0_17, %c0_18, %c0_19, %c0_20], %37 {strides = array<i32>} : memref<1x4x16x8xbf16, #tpu.memory_space<vmem>>, vector<1x4x16x8xbf16>,
    %38 = vector.shape_cast %29 : vector<16x32xf32> to vector<16x4x8xf32>
    %39 = tpu.transpose %38, [1, 0, 2] : vector<16x4x8xf32> -> vector<4x16x8xf32>
    %40 = arith.truncf %39 : vector<4x16x8xf32> to vector<4x16x8xbf16>
    %c0_21 = arith.constant 0 : index
    %c0_22 = arith.constant 0 : index
    %c0_23 = arith.constant 0 : index
    %c0_24 = arith.constant 0 : index
    %41 = vector.load %arg10[%c0_21, %c0_22, %c0_23, %c0_24] : memref<1x4x16x8xbf16, #tpu.memory_space<vmem>>, vector<1x4x16x8xbf16>
    %42 = vector.shape_cast %41 : vector<1x4x16x8xbf16> to vector<4x16x8xbf16>
    %43 = vector.shape_cast %40 : vector<4x16x8xbf16> to vector<1x4x16x8xbf16>
    tpu.vector_store %arg10[%c0_21, %c0_22, %c0_23, %c0_24], %43 {strides = array<i32>} : memref<1x4x16x8xbf16, #tpu.memory_space<vmem>>, vector<1x4x16x8xbf16>,
    %44 = vector.shape_cast %31 : vector<32x16xf32> to vector<4x8x16xf32>
    %45 = arith.truncf %44 : vector<4x8x16xf32> to vector<4x8x16xbf16>
    %c0_25 = arith.constant 0 : index
    %c0_26 = arith.constant 0 : index
    %c0_27 = arith.constant 0 : index
    %c0_28 = arith.constant 0 : index
    %46 = vector.load %arg9[%c0_25, %c0_26, %c0_27, %c0_28] : memref<1x4x8x16xbf16, #tpu.memory_space<vmem>>, vector<1x4x8x16xbf16>
    %47 = vector.shape_cast %46 : vector<1x4x8x16xbf16> to vector<4x8x16xbf16>
    %48 = vector.shape_cast %45 : vector<4x8x16xbf16> to vector<1x4x8x16xbf16>
    tpu.vector_store %arg9[%c0_25, %c0_26, %c0_27, %c0_28], %48 {strides = array<i32>} : memref<1x4x8x16xbf16, #tpu.memory_space<vmem>>, vector<1x4x8x16xbf16>,
    return
  }
  func.func @transform_0(%arg0: i32, %arg1: i32) -> (i32, i32, i32) {
    %c0_i32 = arith.constant 0 : i32
    %c0_i32_0 = arith.constant 0 : i32
    return %arg0, %arg1, %c0_i32 : i32, i32, i32
  }
  func.func @transform_1(%arg0: i32, %arg1: i32) -> (i32, i32) {
    %c0_i32 = arith.constant 0 : i32
    %c0_i32_0 = arith.constant 0 : i32
    %c0_i32_1 = arith.constant 0 : i32
    return %c0_i32, %c0_i32_0 : i32, i32
  }
  func.func @transform_2(%arg0: i32, %arg1: i32) -> (i32, i32) {
    %c0_i32 = arith.constant 0 : i32
    %c0_i32_0 = arith.constant 0 : i32
    %c0_i32_1 = arith.constant 0 : i32
    return %c0_i32, %c0_i32_0 : i32, i32
  }
  func.func @transform_3(%arg0: i32, %arg1: i32) -> (i32, i32) {
    %c0_i32 = arith.constant 0 : i32
    %c0_i32_0 = arith.constant 0 : i32
    %c0_i32_1 = arith.constant 0 : i32
    return %c0_i32, %c0_i32_0 : i32, i32
  }
  func.func @transform_4(%arg0: i32, %arg1: i32) -> (i32, i32) {
    %c0_i32 = arith.constant 0 : i32
    %c0_i32_0 = arith.constant 0 : i32
    %c0_i32_1 = arith.constant 0 : i32
    return %c0_i32, %c0_i32_0 : i32, i32
  }
  func.func @transform_5(%arg0: i32, %arg1: i32) -> (i32, i32) {
    %c0_i32 = arith.constant 0 : i32
    %c0_i32_0 = arith.constant 0 : i32
    %c0_i32_1 = arith.constant 0 : i32
    return %c0_i32, %c0_i32_0 : i32, i32
  }
  func.func @transform_6(%arg0: i32, %arg1: i32) -> (i32, i32, i32, i32) {
    %c0_i32 = arith.constant 0 : i32
    %c0_i32_0 = arith.constant 0 : i32
    %c0_i32_1 = arith.constant 0 : i32
    return %arg0, %c0_i32, %arg1, %c0_i32_0 : i32, i32, i32, i32
  }
  func.func @transform_7(%arg0: i32, %arg1: i32) -> (i32, i32, i32, i32) {
    %c0_i32 = arith.constant 0 : i32
    %c0_i32_0 = arith.constant 0 : i32
    %c0_i32_1 = arith.constant 0 : i32
    return %arg0, %c0_i32, %c0_i32_0, %arg1 : i32, i32, i32, i32
  }
  func.func @transform_8(%arg0: i32, %arg1: i32) -> (i32, i32, i32, i32) {
    %c0_i32 = arith.constant 0 : i32
    %c0_i32_0 = arith.constant 0 : i32
    %c0_i32_1 = arith.constant 0 : i32
    return %arg0, %c0_i32, %arg1, %c0_i32_0 : i32, i32, i32, i32
  }
}

module attributes {stable_mosaic.version = 11 : i64} {
  func.func @attn_block_kernel(%arg0: i32, %arg1: i32, %arg2: i32, %arg3: memref<1x16x32xf32, #tpu.memory_space<vmem>>, %arg4: memref<1x32xf32, #tpu.memory_space<vmem>>, %arg5: memref<1x4x16x8xbf16, #tpu.memory_space<vmem>>, %arg6: memref<1x4x8x16xbf16, #tpu.memory_space<vmem>>, %arg7: memref<1x4x16x8xbf16, #tpu.memory_space<vmem>>, %arg8: memref<32x32xbf16, #tpu.memory_space<vmem>>, %arg9: memref<1x32xf32, #tpu.memory_space<vmem>>, %arg10: memref<1x16x32xf32, #tpu.memory_space<vmem>>, %arg11: memref<4x16x1xf32, #tpu.memory_space<vmem>>, %arg12: memref<4x16x1xf32, #tpu.memory_space<vmem>>, %arg13: memref<4x16x8xf32, #tpu.memory_space<vmem>>) attributes {dimension_semantics = [#tpu.dimension_semantics<parallel>, #tpu.dimension_semantics<parallel>, #tpu.dimension_semantics<arbitrary>], iteration_bounds = array<i64: 2, 1, 1>, scalar_prefetch = 0 : i64, scratch_operands = 3 : i64, tpu.core_type = #tpu.core_type<tc>, window_params = [{transform_indices = @transform_0, window_bounds = array<i64: 1, 16, 32>}, {pipeline_mode = #tpu.pipeline_mode<synchronous>, transform_indices = @transform_1, window_bounds = array<i64: 1, 32>}, {transform_indices = @transform_2, window_bounds = array<i64: 1, 4, 16, 8>}, {transform_indices = @transform_3, window_bounds = array<i64: 1, 4, 8, 16>}, {transform_indices = @transform_4, window_bounds = array<i64: 1, 4, 16, 8>}, {pipeline_mode = #tpu.pipeline_mode<synchronous>, transform_indices = @transform_5, window_bounds = array<i64: 32, 32>}, {pipeline_mode = #tpu.pipeline_mode<synchronous>, transform_indices = @transform_6, window_bounds = array<i64: 1, 32>}, {transform_indices = @transform_7, window_bounds = array<i64: 1, 16, 32>}]} {
    %c0_i32 = arith.constant 0 : i32
    %0 = arith.cmpi eq, %arg2, %c0_i32 : i32
    %1 = arith.extui %0 : i1 to i32
    %c0_i32_0 = arith.constant 0 : i32
    %2 = arith.cmpi ne, %1, %c0_i32_0 : i32
    scf.if %2 {
      %cst_36 = arith.constant 0xFF800000 : f32
      %44 = vector.broadcast %cst_36 : f32 to vector<4x16x1xf32>
      %c0_37 = arith.constant 0 : index
      %c0_38 = arith.constant 0 : index
      %c0_39 = arith.constant 0 : index
      %45 = vector.load %arg11[%c0_37, %c0_38, %c0_39] : memref<4x16x1xf32, #tpu.memory_space<vmem>>, vector<4x16x1xf32>
      tpu.vector_store %arg11[%c0_37, %c0_38, %c0_39], %44 {strides = array<i32>} : memref<4x16x1xf32, #tpu.memory_space<vmem>>, vector<4x16x1xf32>,
      %cst_40 = arith.constant 0.000000e+00 : f32
      %46 = vector.broadcast %cst_40 : f32 to vector<4x16x1xf32>
      %c0_41 = arith.constant 0 : index
      %c0_42 = arith.constant 0 : index
      %c0_43 = arith.constant 0 : index
      %47 = vector.load %arg12[%c0_41, %c0_42, %c0_43] : memref<4x16x1xf32, #tpu.memory_space<vmem>>, vector<4x16x1xf32>
      tpu.vector_store %arg12[%c0_41, %c0_42, %c0_43], %46 {strides = array<i32>} : memref<4x16x1xf32, #tpu.memory_space<vmem>>, vector<4x16x1xf32>,
      %cst_44 = arith.constant 0.000000e+00 : f32
      %48 = vector.broadcast %cst_44 : f32 to vector<4x16x8xf32>
      %c0_45 = arith.constant 0 : index
      %c0_46 = arith.constant 0 : index
      %c0_47 = arith.constant 0 : index
      %49 = vector.load %arg13[%c0_45, %c0_46, %c0_47] : memref<4x16x8xf32, #tpu.memory_space<vmem>>, vector<4x16x8xf32>
      tpu.vector_store %arg13[%c0_45, %c0_46, %c0_47], %48 {strides = array<i32>} : memref<4x16x8xf32, #tpu.memory_space<vmem>>, vector<4x16x8xf32>,
    } else {
    }
    %c0 = arith.constant 0 : index
    %c0_1 = arith.constant 0 : index
    %c0_2 = arith.constant 0 : index
    %c0_3 = arith.constant 0 : index
    %3 = vector.load %arg5[%c0, %c0_1, %c0_2, %c0_3] : memref<1x4x16x8xbf16, #tpu.memory_space<vmem>>, vector<1x4x16x8xbf16>
    %4 = vector.shape_cast %3 : vector<1x4x16x8xbf16> to vector<4x16x8xbf16>
    %c0_4 = arith.constant 0 : index
    %c0_5 = arith.constant 0 : index
    %c0_6 = arith.constant 0 : index
    %c0_7 = arith.constant 0 : index
    %5 = vector.load %arg6[%c0_4, %c0_5, %c0_6, %c0_7] : memref<1x4x8x16xbf16, #tpu.memory_space<vmem>>, vector<1x4x8x16xbf16>
    %6 = vector.shape_cast %5 : vector<1x4x8x16xbf16> to vector<4x8x16xbf16>
    %c0_8 = arith.constant 0 : index
    %c0_9 = arith.constant 0 : index
    %c0_10 = arith.constant 0 : index
    %c0_11 = arith.constant 0 : index
    %7 = vector.load %arg7[%c0_8, %c0_9, %c0_10, %c0_11] : memref<1x4x16x8xbf16, #tpu.memory_space<vmem>>, vector<1x4x16x8xbf16>
    %8 = vector.shape_cast %7 : vector<1x4x16x8xbf16> to vector<4x16x8xbf16>
    "tpu.trace_start"() <{level = 10 : i32, message = "hqd,hdk->hqk"}> : () -> ()
    %cst = arith.constant dense<0.000000e+00> : vector<4x16x16xf32>
    %9 = tpu.matmul %4, %6, %cst {dimension_numbers = #tpu.dot_dimension_numbers<[2], [1], [1], [2], [0, 0, 0, 1, 1, 2], [0], [0]>} : vector<4x16x8xbf16>, vector<4x8x16xbf16>, vector<4x16x16xf32> -> vector<4x16x16xf32>
    "tpu.trace_stop"() : () -> ()
    %c16_i32 = arith.constant 16 : i32
    %10 = arith.muli %arg2, %c16_i32 : i32
    %11 = tpu.iota {dimensions = array<i32: 2>} : vector<4x16x16xi32>
    %12 = vector.broadcast %10 : i32 to vector<4x16x16xi32>
    %13 = arith.addi %12, %11 : vector<4x16x16xi32>
    %c12_i32 = arith.constant 12 : i32
    %14 = vector.broadcast %c12_i32 : i32 to vector<4x16x16xi32>
    %15 = arith.cmpi slt, %13, %14 : vector<4x16x16xi32>
    %cst_12 = arith.constant -1.000000e+30 : f32
    %16 = vector.broadcast %cst_12 : f32 to vector<4x16x16xf32>
    %17 = arith.select %15, %9, %16 : vector<4x16x16xi1>, vector<4x16x16xf32>
    %c0_13 = arith.constant 0 : index
    %c0_14 = arith.constant 0 : index
    %c0_15 = arith.constant 0 : index
    %18 = vector.load %arg11[%c0_13, %c0_14, %c0_15] : memref<4x16x1xf32, #tpu.memory_space<vmem>>, vector<4x16x1xf32>
    %cst_16 = arith.constant dense<0xFF800000> : vector<4x16xf32>
    %19 = vector.multi_reduction <maximumf>, %17, %cst_16 [2] : vector<4x16x16xf32> to vector<4x16xf32>
    %20 = vector.shape_cast %19 : vector<4x16xf32> to vector<4x16x1xf32>
    %21 = arith.maximumf %18, %20 : vector<4x16x1xf32>
    %22 = arith.subf %18, %21 : vector<4x16x1xf32>
    %23 = math.exp %22 : vector<4x16x1xf32>
    %24 = vector.broadcast %21 : vector<4x16x1xf32> to vector<4x16x16xf32>
    %25 = arith.subf %17, %24 : vector<4x16x16xf32>
    %26 = math.exp %25 : vector<4x16x16xf32>
    %c0_17 = arith.constant 0 : index
    %c0_18 = arith.constant 0 : index
    %c0_19 = arith.constant 0 : index
    %27 = vector.load %arg12[%c0_17, %c0_18, %c0_19] : memref<4x16x1xf32, #tpu.memory_space<vmem>>, vector<4x16x1xf32>
    %28 = arith.mulf %23, %27 : vector<4x16x1xf32>
    %cst_20 = arith.constant dense<0.000000e+00> : vector<4x16xf32>
    %29 = vector.multi_reduction <add>, %26, %cst_20 [2] : vector<4x16x16xf32> to vector<4x16xf32>
    %30 = vector.shape_cast %29 : vector<4x16xf32> to vector<4x16x1xf32>
    %31 = arith.addf %28, %30 : vector<4x16x1xf32>
    %c0_21 = arith.constant 0 : index
    %c0_22 = arith.constant 0 : index
    %c0_23 = arith.constant 0 : index
    %32 = vector.load %arg12[%c0_21, %c0_22, %c0_23] : memref<4x16x1xf32, #tpu.memory_space<vmem>>, vector<4x16x1xf32>
    tpu.vector_store %arg12[%c0_21, %c0_22, %c0_23], %31 {strides = array<i32>} : memref<4x16x1xf32, #tpu.memory_space<vmem>>, vector<4x16x1xf32>,
    %c0_24 = arith.constant 0 : index
    %c0_25 = arith.constant 0 : index
    %c0_26 = arith.constant 0 : index
    %33 = vector.load %arg13[%c0_24, %c0_25, %c0_26] : memref<4x16x8xf32, #tpu.memory_space<vmem>>, vector<4x16x8xf32>
    %34 = vector.broadcast %23 : vector<4x16x1xf32> to vector<4x16x8xf32>
    %35 = arith.mulf %34, %33 : vector<4x16x8xf32>
    %36 = arith.truncf %26 : vector<4x16x16xf32> to vector<4x16x16xbf16>
    "tpu.trace_start"() <{level = 10 : i32, message = "hqk,hkd->hqd"}> : () -> ()
    %cst_27 = arith.constant dense<0.000000e+00> : vector<4x16x8xf32>
    %37 = tpu.matmul %36, %8, %cst_27 {dimension_numbers = #tpu.dot_dimension_numbers<[2], [1], [1], [2], [0, 0, 0, 1, 1, 2], [0], [0]>} : vector<4x16x16xbf16>, vector<4x16x8xbf16>, vector<4x16x8xf32> -> vector<4x16x8xf32>
    "tpu.trace_stop"() : () -> ()
    %38 = arith.addf %35, %37 : vector<4x16x8xf32>
    %c0_28 = arith.constant 0 : index
    %c0_29 = arith.constant 0 : index
    %c0_30 = arith.constant 0 : index
    %39 = vector.load %arg13[%c0_28, %c0_29, %c0_30] : memref<4x16x8xf32, #tpu.memory_space<vmem>>, vector<4x16x8xf32>
    tpu.vector_store %arg13[%c0_28, %c0_29, %c0_30], %38 {strides = array<i32>} : memref<4x16x8xf32, #tpu.memory_space<vmem>>, vector<4x16x8xf32>,
    %c0_31 = arith.constant 0 : index
    %c0_32 = arith.constant 0 : index
    %c0_33 = arith.constant 0 : index
    %40 = vector.load %arg11[%c0_31, %c0_32, %c0_33] : memref<4x16x1xf32, #tpu.memory_space<vmem>>, vector<4x16x1xf32>
    tpu.vector_store %arg11[%c0_31, %c0_32, %c0_33], %21 {strides = array<i32>} : memref<4x16x1xf32, #tpu.memory_space<vmem>>, vector<4x16x1xf32>,
    %c0_i32_34 = arith.constant 0 : i32
    %41 = arith.cmpi eq, %arg2, %c0_i32_34 : i32
    %42 = arith.extui %41 : i1 to i32
    %c0_i32_35 = arith.constant 0 : i32
    %43 = arith.cmpi ne, %42, %c0_i32_35 : i32
    scf.if %43 {
      %c0_36 = arith.constant 0 : index
      %c0_37 = arith.constant 0 : index
      %c0_38 = arith.constant 0 : index
      %44 = vector.load %arg13[%c0_36, %c0_37, %c0_38] : memref<4x16x8xf32, #tpu.memory_space<vmem>>, vector<4x16x8xf32>
      %c0_39 = arith.constant 0 : index
      %c0_40 = arith.constant 0 : index
      %c0_41 = arith.constant 0 : index
      %45 = vector.load %arg12[%c0_39, %c0_40, %c0_41] : memref<4x16x1xf32, #tpu.memory_space<vmem>>, vector<4x16x1xf32>
      %46 = vector.broadcast %45 : vector<4x16x1xf32> to vector<4x16x8xf32>
      %47 = arith.divf %44, %46 : vector<4x16x8xf32>
      %48 = tpu.transpose %47, [1, 0, 2] : vector<4x16x8xf32> -> vector<16x4x8xf32>
      %49 = vector.shape_cast %48 : vector<16x4x8xf32> to vector<16x32xf32>
      %50 = arith.truncf %49 : vector<16x32xf32> to vector<16x32xbf16>
      %c0_42 = arith.constant 0 : index
      %c0_43 = arith.constant 0 : index
      %51 = vector.load %arg8[%c0_42, %c0_43] : memref<32x32xbf16, #tpu.memory_space<vmem>>, vector<32x32xbf16>
      %cst_44 = arith.constant dense<0.000000e+00> : vector<16x32xf32>
      %52 = tpu.matmul %50, %51, %cst_44 {dimension_numbers = #tpu.dot_dimension_numbers<[1], [0], [0], [1], [0, 0, 1, 1], [], []>} : vector<16x32xbf16>, vector<32x32xbf16>, vector<16x32xf32> -> vector<16x32xf32>
      %c0_45 = arith.constant 0 : index
      %c0_46 = arith.constant 0 : index
      %53 = vector.load %arg9[%c0_45, %c0_46] : memref<1x32xf32, #tpu.memory_space<vmem>>, vector<1x32xf32>
      %cst_47 = arith.constant dense<0.000000e+00> : vector<16xf32>
      %54 = vector.multi_reduction <add>, %52, %cst_47 [1] : vector<16x32xf32> to vector<16xf32>
      %55 = vector.shape_cast %54 : vector<16xf32> to vector<16x1xf32>
      %cst_48 = arith.constant 3.200000e+01 : f32
      %56 = vector.broadcast %cst_48 : f32 to vector<16x1xf32>
      %57 = arith.divf %55, %56 : vector<16x1xf32>
      %58 = vector.broadcast %57 : vector<16x1xf32> to vector<16x32xf32>
      %59 = arith.subf %52, %58 : vector<16x32xf32>
      %60 = arith.mulf %59, %59 : vector<16x32xf32>
      %cst_49 = arith.constant dense<0.000000e+00> : vector<16xf32>
      %61 = vector.multi_reduction <add>, %60, %cst_49 [1] : vector<16x32xf32> to vector<16xf32>
      %62 = vector.shape_cast %61 : vector<16xf32> to vector<16x1xf32>
      %cst_50 = arith.constant 3.200000e+01 : f32
      %63 = vector.broadcast %cst_50 : f32 to vector<16x1xf32>
      %64 = arith.divf %62, %63 : vector<16x1xf32>
      %65 = vector.broadcast %57 : vector<16x1xf32> to vector<16x32xf32>
      %66 = arith.subf %52, %65 : vector<16x32xf32>
      %cst_51 = arith.constant 9.99999974E-6 : f32
      %67 = vector.broadcast %cst_51 : f32 to vector<16x1xf32>
      %68 = arith.addf %64, %67 : vector<16x1xf32>
      %69 = math.rsqrt %68 : vector<16x1xf32>
      %70 = vector.broadcast %69 : vector<16x1xf32> to vector<16x32xf32>
      %71 = arith.mulf %66, %70 : vector<16x32xf32>
      %72 = vector.broadcast %53 : vector<1x32xf32> to vector<16x32xf32>
      %73 = arith.mulf %71, %72 : vector<16x32xf32>
      %c0_52 = arith.constant 0 : index
      %c0_53 = arith.constant 0 : index
      %c0_54 = arith.constant 0 : index
      %74 = vector.load %arg3[%c0_52, %c0_53, %c0_54] : memref<1x16x32xf32, #tpu.memory_space<vmem>>, vector<1x16x32xf32>
      %75 = vector.shape_cast %74 : vector<1x16x32xf32> to vector<16x32xf32>
      %76 = arith.addf %73, %75 : vector<16x32xf32>
      %c0_55 = arith.constant 0 : index
      %c0_56 = arith.constant 0 : index
      %c0_57 = arith.constant 0 : index
      %77 = vector.load %arg10[%c0_55, %c0_56, %c0_57] : memref<1x16x32xf32, #tpu.memory_space<vmem>>, vector<1x16x32xf32>
      %78 = vector.shape_cast %77 : vector<1x16x32xf32> to vector<16x32xf32>
      %79 = vector.shape_cast %76 : vector<16x32xf32> to vector<1x16x32xf32>
      tpu.vector_store %arg10[%c0_55, %c0_56, %c0_57], %79 {strides = array<i32>} : memref<1x16x32xf32, #tpu.memory_space<vmem>>, vector<1x16x32xf32>,
    } else {
    }
    return
  }
  func.func @transform_0(%arg0: i32, %arg1: i32, %arg2: i32) -> (i32, i32, i32) {
    %c0_i32 = arith.constant 0 : i32
    %c0_i32_0 = arith.constant 0 : i32
    return %arg0, %arg1, %c0_i32 : i32, i32, i32
  }
  func.func @transform_1(%arg0: i32, %arg1: i32, %arg2: i32) -> (i32, i32) {
    %c0_i32 = arith.constant 0 : i32
    %c0_i32_0 = arith.constant 0 : i32
    %c0_i32_1 = arith.constant 0 : i32
    return %c0_i32, %c0_i32_0 : i32, i32
  }
  func.func @transform_2(%arg0: i32, %arg1: i32, %arg2: i32) -> (i32, i32, i32, i32) {
    %c0_i32 = arith.constant 0 : i32
    %c0_i32_0 = arith.constant 0 : i32
    %c0_i32_1 = arith.constant 0 : i32
    return %arg0, %c0_i32, %arg1, %c0_i32_0 : i32, i32, i32, i32
  }
  func.func @transform_3(%arg0: i32, %arg1: i32, %arg2: i32) -> (i32, i32, i32, i32) {
    %c0_i32 = arith.constant 0 : i32
    %c0_i32_0 = arith.constant 0 : i32
    %c0_i32_1 = arith.constant 0 : i32
    return %arg0, %c0_i32, %c0_i32_0, %arg2 : i32, i32, i32, i32
  }
  func.func @transform_4(%arg0: i32, %arg1: i32, %arg2: i32) -> (i32, i32, i32, i32) {
    %c0_i32 = arith.constant 0 : i32
    %c0_i32_0 = arith.constant 0 : i32
    %c0_i32_1 = arith.constant 0 : i32
    return %arg0, %c0_i32, %arg2, %c0_i32_0 : i32, i32, i32, i32
  }
  func.func @transform_5(%arg0: i32, %arg1: i32, %arg2: i32) -> (i32, i32) {
    %c0_i32 = arith.constant 0 : i32
    %c0_i32_0 = arith.constant 0 : i32
    %c0_i32_1 = arith.constant 0 : i32
    return %c0_i32, %c0_i32_0 : i32, i32
  }
  func.func @transform_6(%arg0: i32, %arg1: i32, %arg2: i32) -> (i32, i32) {
    %c0_i32 = arith.constant 0 : i32
    %c0_i32_0 = arith.constant 0 : i32
    %c0_i32_1 = arith.constant 0 : i32
    return %c0_i32, %c0_i32_0 : i32, i32
  }
  func.func @transform_7(%arg0: i32, %arg1: i32, %arg2: i32) -> (i32, i32, i32) {
    %c0_i32 = arith.constant 0 : i32
    %c0_i32_0 = arith.constant 0 : i32
    return %arg0, %arg1, %c0_i32 : i32, i32, i32
  }
}

module attributes {stable_mosaic.version = 11 : i64} {
  func.func @ff_block_kernel(%arg0: i32, %arg1: i32, %arg2: memref<1x16x32xf32, #tpu.memory_space<vmem>>, %arg3: memref<1x32xf32, #tpu.memory_space<vmem>>, %arg4: memref<32x128xbf16, #tpu.memory_space<vmem>>, %arg5: memref<32x128xbf16, #tpu.memory_space<vmem>>, %arg6: memref<1x128xf32, #tpu.memory_space<vmem>>, %arg7: memref<128x32xbf16, #tpu.memory_space<vmem>>, %arg8: memref<1x32xf32, #tpu.memory_space<vmem>>, %arg9: memref<1x16x32xf32, #tpu.memory_space<vmem>>) attributes {dimension_semantics = [#tpu.dimension_semantics<parallel>, #tpu.dimension_semantics<parallel>], iteration_bounds = array<i64: 2, 1>, scalar_prefetch = 0 : i64, scratch_operands = 0 : i64, tpu.core_type = #tpu.core_type<tc>, window_params = [{transform_indices = @transform_0, window_bounds = array<i64: 1, 16, 32>}, {pipeline_mode = #tpu.pipeline_mode<synchronous>, transform_indices = @transform_1, window_bounds = array<i64: 1, 32>}, {pipeline_mode = #tpu.pipeline_mode<synchronous>, transform_indices = @transform_2, window_bounds = array<i64: 32, 128>}, {pipeline_mode = #tpu.pipeline_mode<synchronous>, transform_indices = @transform_3, window_bounds = array<i64: 32, 128>}, {pipeline_mode = #tpu.pipeline_mode<synchronous>, transform_indices = @transform_4, window_bounds = array<i64: 1, 128>}, {pipeline_mode = #tpu.pipeline_mode<synchronous>, transform_indices = @transform_5, window_bounds = array<i64: 128, 32>}, {pipeline_mode = #tpu.pipeline_mode<synchronous>, transform_indices = @transform_6, window_bounds = array<i64: 1, 32>}, {transform_indices = @transform_7, window_bounds = array<i64: 1, 16, 32>}]} {
    %c0 = arith.constant 0 : index
    %c0_0 = arith.constant 0 : index
    %c0_1 = arith.constant 0 : index
    %0 = vector.load %arg2[%c0, %c0_0, %c0_1] : memref<1x16x32xf32, #tpu.memory_space<vmem>>, vector<1x16x32xf32>
    %1 = vector.shape_cast %0 : vector<1x16x32xf32> to vector<16x32xf32>
    %c0_2 = arith.constant 0 : index
    %c0_3 = arith.constant 0 : index
    %2 = vector.load %arg3[%c0_2, %c0_3] : memref<1x32xf32, #tpu.memory_space<vmem>>, vector<1x32xf32>
    %cst = arith.constant dense<0.000000e+00> : vector<16xf32>
    %3 = vector.multi_reduction <add>, %1, %cst [1] : vector<16x32xf32> to vector<16xf32>
    %4 = vector.shape_cast %3 : vector<16xf32> to vector<16x1xf32>
    %cst_4 = arith.constant 3.200000e+01 : f32
    %5 = vector.broadcast %cst_4 : f32 to vector<16x1xf32>
    %6 = arith.divf %4, %5 : vector<16x1xf32>
    %7 = vector.broadcast %6 : vector<16x1xf32> to vector<16x32xf32>
    %8 = arith.subf %1, %7 : vector<16x32xf32>
    %9 = arith.mulf %8, %8 : vector<16x32xf32>
    %cst_5 = arith.constant dense<0.000000e+00> : vector<16xf32>
    %10 = vector.multi_reduction <add>, %9, %cst_5 [1] : vector<16x32xf32> to vector<16xf32>
    %11 = vector.shape_cast %10 : vector<16xf32> to vector<16x1xf32>
    %cst_6 = arith.constant 3.200000e+01 : f32
    %12 = vector.broadcast %cst_6 : f32 to vector<16x1xf32>
    %13 = arith.divf %11, %12 : vector<16x1xf32>
    %14 = vector.broadcast %6 : vector<16x1xf32> to vector<16x32xf32>
    %15 = arith.subf %1, %14 : vector<16x32xf32>
    %cst_7 = arith.constant 9.99999974E-6 : f32
    %16 = vector.broadcast %cst_7 : f32 to vector<16x1xf32>
    %17 = arith.addf %13, %16 : vector<16x1xf32>
    %18 = math.rsqrt %17 : vector<16x1xf32>
    %19 = vector.broadcast %18 : vector<16x1xf32> to vector<16x32xf32>
    %20 = arith.mulf %15, %19 : vector<16x32xf32>
    %21 = vector.broadcast %2 : vector<1x32xf32> to vector<16x32xf32>
    %22 = arith.mulf %20, %21 : vector<16x32xf32>
    %23 = arith.truncf %22 : vector<16x32xf32> to vector<16x32xbf16>
    %c0_8 = arith.constant 0 : index
    %c0_9 = arith.constant 0 : index
    %24 = vector.load %arg4[%c0_8, %c0_9] : memref<32x128xbf16, #tpu.memory_space<vmem>>, vector<32x128xbf16>
    %cst_10 = arith.constant dense<0.000000e+00> : vector<16x128xf32>
    %25 = tpu.matmul %23, %24, %cst_10 {dimension_numbers = #tpu.dot_dimension_numbers<[1], [0], [0], [1], [0, 0, 1, 1], [], []>} : vector<16x32xbf16>, vector<32x128xbf16>, vector<16x128xf32> -> vector<16x128xf32>
    %c0_11 = arith.constant 0 : index
    %c0_12 = arith.constant 0 : index
    %26 = vector.load %arg5[%c0_11, %c0_12] : memref<32x128xbf16, #tpu.memory_space<vmem>>, vector<32x128xbf16>
    %cst_13 = arith.constant dense<0.000000e+00> : vector<16x128xf32>
    %27 = tpu.matmul %23, %26, %cst_13 {dimension_numbers = #tpu.dot_dimension_numbers<[1], [0], [0], [1], [0, 0, 1, 1], [], []>} : vector<16x32xbf16>, vector<32x128xbf16>, vector<16x128xf32> -> vector<16x128xf32>
    %28 = arith.mulf %27, %27 : vector<16x128xf32>
    %29 = arith.mulf %27, %28 : vector<16x128xf32>
    %cst_14 = arith.constant 4.471500e-02 : f32
    %30 = vector.broadcast %cst_14 : f32 to vector<16x128xf32>
    %31 = arith.mulf %30, %29 : vector<16x128xf32>
    %32 = arith.addf %27, %31 : vector<16x128xf32>
    %cst_15 = arith.constant 0.797884583 : f32
    %33 = vector.broadcast %cst_15 : f32 to vector<16x128xf32>
    %34 = arith.mulf %33, %32 : vector<16x128xf32>
    %35 = math.tanh %34 : vector<16x128xf32>
    %cst_16 = arith.constant 1.000000e+00 : f32
    %36 = vector.broadcast %cst_16 : f32 to vector<16x128xf32>
    %37 = arith.addf %36, %35 : vector<16x128xf32>
    %cst_17 = arith.constant 5.000000e-01 : f32
    %38 = vector.broadcast %cst_17 : f32 to vector<16x128xf32>
    %39 = arith.mulf %38, %37 : vector<16x128xf32>
    %40 = arith.mulf %27, %39 : vector<16x128xf32>
    %41 = arith.mulf %25, %40 : vector<16x128xf32>
    %c0_18 = arith.constant 0 : index
    %c0_19 = arith.constant 0 : index
    %42 = vector.load %arg6[%c0_18, %c0_19] : memref<1x128xf32, #tpu.memory_space<vmem>>, vector<1x128xf32>
    %cst_20 = arith.constant dense<0.000000e+00> : vector<16xf32>
    %43 = vector.multi_reduction <add>, %41, %cst_20 [1] : vector<16x128xf32> to vector<16xf32>
    %44 = vector.shape_cast %43 : vector<16xf32> to vector<16x1xf32>
    %cst_21 = arith.constant 1.280000e+02 : f32
    %45 = vector.broadcast %cst_21 : f32 to vector<16x1xf32>
    %46 = arith.divf %44, %45 : vector<16x1xf32>
    %47 = vector.broadcast %46 : vector<16x1xf32> to vector<16x128xf32>
    %48 = arith.subf %41, %47 : vector<16x128xf32>
    %49 = arith.mulf %48, %48 : vector<16x128xf32>
    %cst_22 = arith.constant dense<0.000000e+00> : vector<16xf32>
    %50 = vector.multi_reduction <add>, %49, %cst_22 [1] : vector<16x128xf32> to vector<16xf32>
    %51 = vector.shape_cast %50 : vector<16xf32> to vector<16x1xf32>
    %cst_23 = arith.constant 1.280000e+02 : f32
    %52 = vector.broadcast %cst_23 : f32 to vector<16x1xf32>
    %53 = arith.divf %51, %52 : vector<16x1xf32>
    %54 = vector.broadcast %46 : vector<16x1xf32> to vector<16x128xf32>
    %55 = arith.subf %41, %54 : vector<16x128xf32>
    %cst_24 = arith.constant 9.99999974E-6 : f32
    %56 = vector.broadcast %cst_24 : f32 to vector<16x1xf32>
    %57 = arith.addf %53, %56 : vector<16x1xf32>
    %58 = math.rsqrt %57 : vector<16x1xf32>
    %59 = vector.broadcast %58 : vector<16x1xf32> to vector<16x128xf32>
    %60 = arith.mulf %55, %59 : vector<16x128xf32>
    %61 = vector.broadcast %42 : vector<1x128xf32> to vector<16x128xf32>
    %62 = arith.mulf %60, %61 : vector<16x128xf32>
    %63 = arith.truncf %62 : vector<16x128xf32> to vector<16x128xbf16>
    %c0_25 = arith.constant 0 : index
    %c0_26 = arith.constant 0 : index
    %64 = vector.load %arg7[%c0_25, %c0_26] : memref<128x32xbf16, #tpu.memory_space<vmem>>, vector<128x32xbf16>
    %cst_27 = arith.constant dense<0.000000e+00> : vector<16x32xf32>
    %65 = tpu.matmul %63, %64, %cst_27 {dimension_numbers = #tpu.dot_dimension_numbers<[1], [0], [0], [1], [0, 0, 1, 1], [], []>} : vector<16x128xbf16>, vector<128x32xbf16>, vector<16x32xf32> -> vector<16x32xf32>
    %66 = arith.addf %65, %1 : vector<16x32xf32>
    %c0_28 = arith.constant 0 : index
    %c0_29 = arith.constant 0 : index
    %67 = vector.load %arg8[%c0_28, %c0_29] : memref<1x32xf32, #tpu.memory_space<vmem>>, vector<1x32xf32>
    %cst_30 = arith.constant dense<0.000000e+00> : vector<16xf32>
    %68 = vector.multi_reduction <add>, %66, %cst_30 [1] : vector<16x32xf32> to vector<16xf32>
    %69 = vector.shape_cast %68 : vector<16xf32> to vector<16x1xf32>
    %cst_31 = arith.constant 3.200000e+01 : f32
    %70 = vector.broadcast %cst_31 : f32 to vector<16x1xf32>
    %71 = arith.divf %69, %70 : vector<16x1xf32>
    %72 = vector.broadcast %71 : vector<16x1xf32> to vector<16x32xf32>
    %73 = arith.subf %66, %72 : vector<16x32xf32>
    %74 = arith.mulf %73, %73 : vector<16x32xf32>
    %cst_32 = arith.constant dense<0.000000e+00> : vector<16xf32>
    %75 = vector.multi_reduction <add>, %74, %cst_32 [1] : vector<16x32xf32> to vector<16xf32>
    %76 = vector.shape_cast %75 : vector<16xf32> to vector<16x1xf32>
    %cst_33 = arith.constant 3.200000e+01 : f32
    %77 = vector.broadcast %cst_33 : f32 to vector<16x1xf32>
    %78 = arith.divf %76, %77 : vector<16x1xf32>
    %79 = vector.broadcast %71 : vector<16x1xf32> to vector<16x32xf32>
    %80 = arith.subf %66, %79 : vector<16x32xf32>
    %cst_34 = arith.constant 9.99999974E-6 : f32
    %81 = vector.broadcast %cst_34 : f32 to vector<16x1xf32>
    %82 = arith.addf %78, %81 : vector<16x1xf32>
    %83 = math.rsqrt %82 : vector<16x1xf32>
    %84 = vector.broadcast %83 : vector<16x1xf32> to vector<16x32xf32>
    %85 = arith.mulf %80, %84 : vector<16x32xf32>
    %86 = vector.broadcast %67 : vector<1x32xf32> to vector<16x32xf32>
    %87 = arith.mulf %85, %86 : vector<16x32xf32>
    %c0_35 = arith.constant 0 : index
    %c0_36 = arith.constant 0 : index
    %c0_37 = arith.constant 0 : index
    %88 = vector.load %arg9[%c0_35, %c0_36, %c0_37] : memref<1x16x32xf32, #tpu.memory_space<vmem>>, vector<1x16x32xf32>
    %89 = vector.shape_cast %88 : vector<1x16x32xf32> to vector<16x32xf32>
    %90 = vector.shape_cast %87 : vector<16x32xf32> to vector<1x16x32xf32>
    tpu.vector_store %arg9[%c0_35, %c0_36, %c0_37], %90 {strides = array<i32>} : memref<1x16x32xf32, #tpu.memory_space<vmem>>, vector<1x16x32xf32>,
    return
  }
  func.func @transform_0(%arg0: i32, %arg1: i32) -> (i32, i32, i32) {
    %c0_i32 = arith.constant 0 : i32
    %c0_i32_0 = arith.constant 0 : i32
    return %arg0, %arg1, %c0_i32 : i32, i32, i32
  }
  func.func @transform_1(%arg0: i32, %arg1: i32) -> (i32, i32) {
    %c0_i32 = arith.constant 0 : i32
    %c0_i32_0 = arith.constant 0 : i32
    %c0_i32_1 = arith.constant 0 : i32
    return %c0_i32, %c0_i32_0 : i32, i32
  }
  func.func @transform_2(%arg0: i32, %arg1: i32) -> (i32, i32) {
    %c0_i32 = arith.constant 0 : i32
    %c0_i32_0 = arith.constant 0 : i32
    %c0_i32_1 = arith.constant 0 : i32
    return %c0_i32, %c0_i32_0 : i32, i32
  }
  func.func @transform_3(%arg0: i32, %arg1: i32) -> (i32, i32) {
    %c0_i32 = arith.constant 0 : i32
    %c0_i32_0 = arith.constant 0 : i32
    %c0_i32_1 = arith.constant 0 : i32
    return %c0_i32, %c0_i32_0 : i32, i32
  }
  func.func @transform_4(%arg0: i32, %arg1: i32) -> (i32, i32) {
    %c0_i32 = arith.constant 0 : i32
    %c0_i32_0 = arith.constant 0 : i32
    %c0_i32_1 = arith.constant 0 : i32
    return %c0_i32, %c0_i32_0 : i32, i32
  }
  func.func @transform_5(%arg0: i32, %arg1: i32) -> (i32, i32) {
    %c0_i32 = arith.constant 0 : i32
    %c0_i32_0 = arith.constant 0 : i32
    %c0_i32_1 = arith.constant 0 : i32
    return %c0_i32, %c0_i32_0 : i32, i32
  }
  func.func @transform_6(%arg0: i32, %arg1: i32) -> (i32, i32) {
    %c0_i32 = arith.constant 0 : i32
    %c0_i32_0 = arith.constant 0 : i32
    %c0_i32_1 = arith.constant 0 : i32
    return %c0_i32, %c0_i32_0 : i32, i32
  }
  func.func @transform_7(%arg0: i32, %arg1: i32) -> (i32, i32, i32) {
    %c0_i32 = arith.constant 0 : i32
    %c0_i32_0 = arith.constant 0 : i32
    return %arg0, %arg1, %c0_i32 : i32, i32, i32
  }
}

</mosaic_0001>

<llo_original>
// kernel: transformer_forward.8
$region0: #{transformer_forward.8}
  #allocation0 [shape = 'u32[]', space=smem, size = 0x4, offset = 0x4, fixed_abs, tag = 'smem constant byte address 0x4 - core index']
  #allocation1 [shape = 'u32[144,128]{1,0:T(1,128)}', space=vmem, size = 0x12000, scoped, tag = 'internal scratch']
  %s0 = inlined_call_operand.vmem [shape: f32[2,16,32], index: 0, kind: input, shape index: {}]
  %s1 = inlined_call_operand.vmem [shape: f32[1,32], index: 1, kind: input, shape index: {}]
  %s2 = inlined_call_operand.vmem [shape: bf16[32,128], index: 2, kind: input, shape index: {}]
  %s3 = inlined_call_operand.vmem [shape: bf16[32,128], index: 3, kind: input, shape index: {}]
  %s4 = inlined_call_operand.vmem [shape: f32[1,128], index: 4, kind: input, shape index: {}]
  %s5 = inlined_call_operand.vmem [shape: bf16[128,32], index: 5, kind: input, shape index: {}]
  %s6 = inlined_call_operand.vmem [shape: f32[1,32], index: 6, kind: input, shape index: {}]
  %s7 = inlined_call_operand.vmem [shape: f32[2,16,32], index: 7, kind: output, shape index: {}]
  %s8 = sld [smem:[#allocation0]]
  $region61: #{transformer_forward.8} parent=0
    _
  %s10 = ssub.s32 1, %s8
  %s11 = scalar_select 0, %s10, %s8
  loop: start=0, step=1, limit=4
  $region2: #{transformer_forward.8} parent=0 // loop_pre_header
    _
  $region3: #{transformer_forward.8} parent=0 // loop_header
    %s13 = sphi 0, %s17
    %p14 = scmp.ge.s32.totalorder %s13, 4
    %s20 = sphi 0, %s32
    %s21 = sphi 0, %s28
    %s22 = sphi 0, %s20
    %s23 = sphi 0, %s21
    %s24 = sphi 0, %s22
    %s25 = sphi 0, %s23
    %s37 = sphi 0, %s39
    %s40 = sphi 0, %s37
    %s41 = sphi 0, %s40
    %s57 = sphi 0, %s41
    %s61 = sphi 0, %s61
    %s63 = sphi 0, %s61
    %s64 = sphi 0, %s63
    %s78 = sphi 0, %s64
    %s82 = sphi 0, %s82
    %s84 = sphi 0, %s82
    %s85 = sphi 0, %s84
    %s99 = sphi 0, %s85
    %s103 = sphi 0, %s103
    %s105 = sphi 0, %s103
    %s106 = sphi 0, %s105
    %s120 = sphi 0, %s106
    %s124 = sphi 0, %s124
    %s126 = sphi 0, %s124
    %s127 = sphi 0, %s126
    %s141 = sphi 0, %s127
    %s145 = sphi 0, %s145
    %s147 = sphi 0, %s145
    %s148 = sphi 0, %s147
    %s162 = sphi 0, %s148
    %s166 = sphi 0, %s166
    %s168 = sphi 0, %s166
    %s169 = sphi 0, %s168
    %s183 = sphi 0, %s169
    %s191 = sphi 0, %s193
    %s194 = sphi 0, %s191
    %s195 = sphi 0, %s194
    %s211 = sphi 0, %s195
  $region4: #{transformer_forward.8} parent=0 // loop_header_branch
    %16 = sbr.rel (%p14) target = $region8
  $region5: #{transformer_forward.8} parent=0 // loop_body
    %s18 = ssub.s32 %s13, 1
    %s19 = ssub.s32 %s13, 2
    %s26 = sadd.s32 1, %s21
    %p27 = scmp.ge.s32.totalorder %s26, 1
    %s28 = scalar_select %p27, 0, %s26
    %s29 = sadd.s32 1, %s20
    %s30 = scalar_select %p27, %s29, %s20
    %p31 = scmp.ge.s32.totalorder %s30, 2
    %s32 = scalar_select %p31, 0, %s30
    %s33 = ssub.s32 %s20, %s32
    %s34 = ssub.s32 %s21, %s28
    %s35 = sor.u32 %s33, %s34
    %p36 = scmp.eq.s32.totalorder %s35, 0
    %s38 = sadd.s32 %s37, 1
    %s39 = scalar_select %p36, %s37, %s38
    %p42 = pneg %p36
    %p43 = scmp.eq.s32.totalorder %s13, 1
    %p44 = por %p42, %p43
    %p45 = scmp.ne.s32.totalorder %s37, %s40
    %p46 = scmp.eq.s32.totalorder %s13, 0
    %p47 = por %p45, %p46
    %p48 = scmp.ne.s32.totalorder %s37, %s40
    %p49 = scmp.eq.s32.totalorder %s18, 1
    %p50 = por %p48, %p49
    %p51 = scmp.ne.s32.totalorder %s40, %s41
    %p52 = scmp.eq.s32.totalorder %s18, 0
    %p53 = por %p51, %p52
    %p54 = scmp.ne.s32.totalorder %s40, %s41
    %p55 = scmp.eq.s32.totalorder %s19, 1
    %p56 = por %p54, %p55
    %p58 = scmp.ne.s32.totalorder %s41, %s57
    %p59 = scmp.eq.s32.totalorder %s19, 0
    %p60 = por %p58, %p59
    %s62 = sadd.s32 %s61, 1
    %p65 = scmp.eq.s32.totalorder %s13, 1
    %p66 = scmp.ne.s32.totalorder %s61, %s63
    %p67 = scmp.eq.s32.totalorder %s13, 0
    %p68 = por %p66, %p67
    %p69 = scmp.ne.s32.totalorder %s61, %s63
    %p70 = scmp.eq.s32.totalorder %s18, 1
    %p71 = por %p69, %p70
    %p72 = scmp.ne.s32.totalorder %s63, %s64
    %p73 = scmp.eq.s32.totalorder %s18, 0
    %p74 = por %p72, %p73
    %p75 = scmp.ne.s32.totalorder %s63, %s64
    %p76 = scmp.eq.s32.totalorder %s19, 1
    %p77 = por %p75, %p76
    %p79 = scmp.ne.s32.totalorder %s64, %s78
    %p80 = scmp.eq.s32.totalorder %s19, 0
    %p81 = por %p79, %p80
    %s83 = sadd.s32 %s82, 1
    %p86 = scmp.eq.s32.totalorder %s13, 1
    %p87 = scmp.ne.s32.totalorder %s82, %s84
    %p88 = scmp.eq.s32.totalorder %s13, 0
    %p89 = por %p87, %p88
    %p90 = scmp.ne.s32.totalorder %s82, %s84
    %p91 = scmp.eq.s32.totalorder %s18, 1
    %p92 = por %p90, %p91
    %p93 = scmp.ne.s32.totalorder %s84, %s85
    %p94 = scmp.eq.s32.totalorder %s18, 0
    %p95 = por %p93, %p94
    %p96 = scmp.ne.s32.totalorder %s84, %s85
    %p97 = scmp.eq.s32.totalorder %s19, 1
    %p98 = por %p96, %p97
    %p100 = scmp.ne.s32.totalorder %s85, %s99
    %p101 = scmp.eq.s32.totalorder %s19, 0
    %p102 = por %p100, %p101
    %s104 = sadd.s32 %s103, 1
    %p107 = scmp.eq.s32.totalorder %s13, 1
    %p108 = scmp.ne.s32.totalorder %s103, %s105
    %p109 = scmp.eq.s32.totalorder %s13, 0
    %p110 = por %p108, %p109
    %p111 = scmp.ne.s32.totalorder %s103, %s105
    %p112 = scmp.eq.s32.totalorder %s18, 1
    %p113 = por %p111, %p112
    %p114 = scmp.ne.s32.totalorder %s105, %s106
    %p115 = scmp.eq.s32.totalorder %s18, 0
    %p116 = por %p114, %p115
    %p117 = scmp.ne.s32.totalorder %s105, %s106
    %p118 = scmp.eq.s32.totalorder %s19, 1
    %p119 = por %p117, %p118
    %p121 = scmp.ne.s32.totalorder %s106, %s120
    %p122 = scmp.eq.s32.totalorder %s19, 0
    %p123 = por %p121, %p122
    %s125 = sadd.s32 %s124, 1
    %p128 = scmp.eq.s32.totalorder %s13, 1
    %p129 = scmp.ne.s32.totalorder %s124, %s126
    %p130 = scmp.eq.s32.totalorder %s13, 0
    %p131 = por %p129, %p130
    %p132 = scmp.ne.s32.totalorder %s124, %s126
    %p133 = scmp.eq.s32.totalorder %s18, 1
    %p134 = por %p132, %p133
    %p135 = scmp.ne.s32.totalorder %s126, %s127
    %p136 = scmp.eq.s32.totalorder %s18, 0
    %p137 = por %p135, %p136
    %p138 = scmp.ne.s32.totalorder %s126, %s127
    %p139 = scmp.eq.s32.totalorder %s19, 1
    %p140 = por %p138, %p139
    %p142 = scmp.ne.s32.totalorder %s127, %s141
    %p143 = scmp.eq.s32.totalorder %s19, 0
    %p144 = por %p142, %p143
    %s146 = sadd.s32 %s145, 1
    %p149 = scmp.eq.s32.totalorder %s13, 1
    %p150 = scmp.ne.s32.totalorder %s145, %s147
    %p151 = scmp.eq.s32.totalorder %s13, 0
    %p152 = por %p150, %p151
    %p153 = scmp.ne.s32.totalorder %s145, %s147
    %p154 = scmp.eq.s32.totalorder %s18, 1
    %p155 = por %p153, %p154
    %p156 = scmp.ne.s32.totalorder %s147, %s148
    %p157 = scmp.eq.s32.totalorder %s18, 0
    %p158 = por %p156, %p157
    %p159 = scmp.ne.s32.totalorder %s147, %s148
    %p160 = scmp.eq.s32.totalorder %s19, 1
    %p161 = por %p159, %p160
    %p163 = scmp.ne.s32.totalorder %s148, %s162
    %p164 = scmp.eq.s32.totalorder %s19, 0
    %p165 = por %p163, %p164
    %s167 = sadd.s32 %s166, 1
    %p170 = scmp.eq.s32.totalorder %s13, 1
    %p171 = scmp.ne.s32.totalorder %s166, %s168
    %p172 = scmp.eq.s32.totalorder %s13, 0
    %p173 = por %p171, %p172
    %p174 = scmp.ne.s32.totalorder %s166, %s168
    %p175 = scmp.eq.s32.totalorder %s18, 1
    %p176 = por %p174, %p175
    %p177 = scmp.ne.s32.totalorder %s168, %s169
    %p178 = scmp.eq.s32.totalorder %s18, 0
    %p179 = por %p177, %p178
    %p180 = scmp.ne.s32.totalorder %s168, %s169
    %p181 = scmp.eq.s32.totalorder %s19, 1
    %p182 = por %p180, %p181
    %p184 = scmp.ne.s32.totalorder %s169, %s183
    %p185 = scmp.eq.s32.totalorder %s19, 0
    %p186 = por %p184, %p185
    %s187 = ssub.s32 %s20, %s32
    %s188 = ssub.s32 %s21, %s28
    %s189 = sor.u32 %s187, %s188
    %p190 = scmp.eq.s32.totalorder %s189, 0
    %s192 = sadd.s32 %s191, 1
    %s193 = scalar_select %p190, %s191, %s192
    %p196 = pneg %p190
    %p197 = scmp.eq.s32.totalorder %s13, 1
    %p198 = por %p196, %p197
    %p199 = scmp.ne.s32.totalorder %s191, %s194
    %p200 = scmp.eq.s32.totalorder %s13, 0
    %p201 = por %p199, %p200
    %p202 = scmp.ne.s32.totalorder %s191, %s194
    %p203 = scmp.eq.s32.totalorder %s18, 1
    %p204 = por %p202, %p203
    %p205 = scmp.ne.s32.totalorder %s194, %s195
    %p206 = scmp.eq.s32.totalorder %s18, 0
    %p207 = por %p205, %p206
    %p208 = scmp.ne.s32.totalorder %s194, %s195
    %p209 = scmp.eq.s32.totalorder %s19, 1
    %p210 = por %p208, %p209
    %p212 = scmp.ne.s32.totalorder %s195, %s211
    %p213 = scmp.eq.s32.totalorder %s19, 0
    %p214 = por %p212, %p213
    %p215 = scmp.le.s32.totalorder 1, %s13
    %p216 = scmp.lt.s32.totalorder %s13, 3
    %p217 = pnand %p215, %p216
    %p218 = pneg %p217
    // Predicated region
    $region9: #{transformer_forward.8} parent=5 // pred_check
      _
    $region10: #{transformer_forward.8} parent=5 // pred_check_branch
      %220 = sbr.rel (%p217) target = $region12
    $region11: #{transformer_forward.8} parent=5 // pred_region
      %s221 = ssub.s32 %s13, 1
      // Predicated region
      $region13: #{transformer_forward.8} parent=11 // pred_check
        %p222 = pneg %p74
      $region14: #{transformer_forward.8} parent=11 // pred_check_branch
        %224 = sbr.rel (%p222) target = $region16
      $region15: #{transformer_forward.8} parent=11 // pred_region
        _
      $region16: #{transformer_forward.8} parent=11 // pred_fallthru
        _
      // Predicated region
      $region17: #{transformer_forward.8} parent=11 // pred_check
        %p225 = pneg %p95
      $region18: #{transformer_forward.8} parent=11 // pred_check_branch
        %227 = sbr.rel (%p225) target = $region20
      $region19: #{transformer_forward.8} parent=11 // pred_region
        _
      $region20: #{transformer_forward.8} parent=11 // pred_fallthru
        _
      // Predicated region
      $region21: #{transformer_forward.8} parent=11 // pred_check
        %p228 = pneg %p116
      $region22: #{transformer_forward.8} parent=11 // pred_check_branch
        %230 = sbr.rel (%p228) target = $region24
      $region23: #{transformer_forward.8} parent=11 // pred_region
        _
      $region24: #{transformer_forward.8} parent=11 // pred_fallthru
        _
      // Predicated region
      $region25: #{transformer_forward.8} parent=11 // pred_check
        %p231 = pneg %p137
      $region26: #{transformer_forward.8} parent=11 // pred_check_branch
        %233 = sbr.rel (%p231) target = $region28
      $region27: #{transformer_forward.8} parent=11 // pred_region
        _
      $region28: #{transformer_forward.8} parent=11 // pred_fallthru
        _
      // Predicated region
      $region29: #{transformer_forward.8} parent=11 // pred_check
        %p234 = pneg %p158
      $region30: #{transformer_forward.8} parent=11 // pred_check_branch
        %236 = sbr.rel (%p234) target = $region32
      $region31: #{transformer_forward.8} parent=11 // pred_region
        _
      $region32: #{transformer_forward.8} parent=11 // pred_fallthru
        _
      // Predicated region
      $region33: #{transformer_forward.8} parent=11 // pred_check
        %p237 = pneg %p179
      $region34: #{transformer_forward.8} parent=11 // pred_check_branch
        %239 = sbr.rel (%p237) target = $region36
      $region35: #{transformer_forward.8} parent=11 // pred_region
        _
      $region36: #{transformer_forward.8} parent=11 // pred_fallthru
        _
    $region12: #{transformer_forward.8} parent=5 // pred_fallthru
      _
    %p240 = scmp.lt.s32.totalorder %s13, 2
    // Predicated region
    $region37: #{transformer_forward.8} parent=5 // pred_check
      %p241 = pneg %p240
    $region38: #{transformer_forward.8} parent=5 // pred_check_branch
      %243 = sbr.rel (%p241) target = $region40
    $region39: #{transformer_forward.8} parent=5 // pred_region
      // Predicated region
      $region41: #{transformer_forward.8} parent=39 // pred_check
        %p244 = pneg %p47
      $region42: #{transformer_forward.8} parent=39 // pred_check_branch
        %246 = sbr.rel (%p244) target = $region44
      $region43: #{transformer_forward.8} parent=39 // pred_region
        %s247 = smul.u32 2, %s21
        %p248 = scmp.lt.s32.totalorder %s20, 1
        %s249 = scalar_select %p248, %s20, 1
        %p250 = scmp.lt.s32.totalorder %s247, 1
        %s251 = scalar_select %p250, %s247, 1
        %s252 = smul.addr %s249, 2
        %s253 = sadd.s32 %s251, %s252
        %s254 = smul.addr %s253, 8
        %s255 = scalar_lea.vmem %s0, %s254
        %s256 = smul.u32 2, %s21
      $region44: #{transformer_forward.8} parent=39 // pred_fallthru
        _
    $region40: #{transformer_forward.8} parent=5 // pred_fallthru
      _
    %p257 = scmp.le.s32.totalorder 1, %s13
    %p258 = scmp.lt.s32.totalorder %s13, 3
    %p259 = pnand %p257, %p258
    %p260 = pneg %p259
    // Predicated region
    $region45: #{transformer_forward.8} parent=5 // pred_check
      _
    $region46: #{transformer_forward.8} parent=5 // pred_check_branch
      %262 = sbr.rel (%p259) target = $region48
    $region47: #{transformer_forward.8} parent=5 // pred_region
      %s263 = ssub.s32 %s13, 1
      %s264 = smul.u32 2, %s23
      %p265 = scmp.lt.s32.totalorder %s22, 1
      %s266 = scalar_select %p265, %s22, 1
      %p267 = scmp.lt.s32.totalorder %s264, 1
      %s268 = scalar_select %p267, %s264, 1
      %s269 = smul.addr %s266, 2
      %s270 = sadd.s32 %s268, %s269
      %s271 = smul.addr %s270, 8
      %s272 = scalar_lea.vmem %s0, %s271
      %p273 = pneg %p53
      %p274 = pneg %p50
      %p275 = pneg %p74
      %p276 = pneg %p71
      %p277 = pneg %p95
      %p278 = pneg %p92
      %p279 = pneg %p116
      %p280 = pneg %p113
      %p281 = pneg %p137
      %p282 = pneg %p134
      %p283 = pneg %p158
      %p284 = pneg %p155
      %p285 = pneg %p179
      %p286 = pneg %p176
      %p287 = pneg %p207
      %p288 = pneg %p204
      %s289 = smul.u32 2, %s23
      %p290 = scmp.lt.s32.totalorder %s22, 1
      %s291 = scalar_select %p290, %s22, 1
      %p292 = scmp.lt.s32.totalorder %s289, 1
      %s293 = scalar_select %p292, %s289, 1
      %s294 = smul.addr %s291, 2
      %s295 = sadd.s32 %s293, %s294
      %s296 = smul.addr %s295, 8
      %s297 = scalar_lea.vmem %s7, %s296
      %s298 = smul.u32 2, %s23
      %p299 = scmp.lt.s32.totalorder %s22, 1
      %s300 = scalar_select %p299, %s22, 1
      %p301 = scmp.lt.s32.totalorder %s298, 1
      %s302 = scalar_select %p301, %s298, 1
      %s303 = smul.addr %s300, 2
      %s304 = sadd.s32 %s302, %s303
      %s305 = smul.addr %s304, 8
      %s306 = scalar_lea.vmem %s0, %s305
      %s307 = smul.u32 2, %s23
      %s308 = smul.u32 2, %s23
      %p309 = scmp.lt.s32.totalorder %s22, 1
      %s310 = scalar_select %p309, %s22, 1
      %p311 = scmp.lt.s32.totalorder %s308, 1
      %s312 = scalar_select %p311, %s308, 1
      %s313 = smul.addr %s310, 2
      %s314 = sadd.s32 %s312, %s313
      %s315 = smul.addr %s314, 8
      %s316 = scalar_lea.vmem %s7, %s315
      %s317 = smul.u32 2, %s23
      %v319 = vld [vmem:[%s306] sm:$0xff]
      %v320 = vld [vmem:[%s306 + $0x8] sm:$0xff]
      %v321 = vld [vmem:[%s1] sm:$0x1]
      %vm322 = vcmask 261120
      %v323 = vsel %vm322, %v319, 0.0
      %324 = vadd.xlane.f32.xlu0 %v323
      %v325 = vpop.xlane.xlu0 %324
      %v326 = vsel %vm322, %v320, 0.0
      %327 = vadd.xlane.f32.xlu0 %v326
      %v328 = vpop.xlane.xlu0 %327
      %v329 = vrcp.pop 32.0
      %v330 = vmul.f32 %v325, %v329
      %v331 = vmul.f32 %v328, %v329
      %v332 = vsub.f32 %v319, %v330
      %v333 = vsub.f32 %v320, %v331
      %v334 = vmul.f32 %v332, %v332
      %v335 = vmul.f32 %v333, %v333
      %v336 = vsel %vm322, %v334, 0.0
      %337 = vadd.xlane.f32.xlu0 %v336
      %v338 = vpop.xlane.xlu0 %337
      %v339 = vsel %vm322, %v335, 0.0
      %340 = vadd.xlane.f32.xlu0 %v339
      %v341 = vpop.xlane.xlu0 %340
      %v342 = vmul.f32 %v338, %v329
      %v343 = vmul.f32 %v341, %v329
      %v344 = vadd.f32 %v342, 1e-05
      %v345 = vadd.f32 %v343, 1e-05
      %v346 = vrsqrt.pop %v344
      %v347 = vrsqrt.pop %v345
      %v348 = vmul.f32 %v332, %v346
      %v349 = vmul.f32 %v333, %v347
      %v351 = vlaneseq
      %v352 = vshrl.u32 %v351, 7
      %v353 = vsub.s32 0, %v352
      %v354 = vrot.slane %v321, %v353
      %v356 = vmul.f32 %v348, %v354
      %v357 = vmul.f32 %v349, %v354
      %v358 = vpack.c.bf16 %v357, %v356
      %v359 = vld [vmem:[%s2] sm:$0xf]
      %v360 = vld [vmem:[%s2 + $0x4] sm:$0xf]
      %v361 = vld [vmem:[%s2 + $0x8] sm:$0xf]
      %v362 = vld [vmem:[%s2 + $0xc] sm:$0xf]
      %v367 = vunpack.c.l.b16 %v359
      %v368 = vunpack.c.l.b16 %v360
      %v369 = vunpack.c.l.b16 %v361
      %v370 = vunpack.c.l.b16 %v362
      %v371 = vpack.c.b16 %v368, %v367
      %v372 = vpack.c.b16 %v370, %v369
      %v376 = vsel %vm322, %v358, 0
      %378 = vmatprep.subr.bf16.mxu0 0
      %379 = vmatpush1.bf16.msra.mxu0 %v371
      %380 = vmatprep.subr.bf16.mxu0 0
      %381 = vmatpush1.bf16.msra.mxu0 %v372
      %382 = vmatprep.subr.bf16.mxu0 0
      %383 = vmatpush1.bf16.msra.mxu0 0
      %384 = vmatprep.subr.bf16.mxu0 0
      %385 = vmatpush1.bf16.msra.mxu0 0
      %386 = vmatprep.subr.bf16.mxu0 0
      %387 = vmatpush1.bf16.msra.mxu0 0
      %388 = vmatprep.subr.bf16.mxu0 0
      %389 = vmatpush1.bf16.msra.mxu0 0
      %390 = vmatprep.subr.bf16.mxu0 0
      %391 = vmatpush1.bf16.msra.mxu0 0
      %392 = vmatprep.subr.bf16.mxu0 0
      %393 = vmatpush1.bf16.msra.mxu0 0
      %394 = vmatprep.subr.bf16.mxu0 0
      %395 = vmatpush1.bf16.msra.mxu0 0
      %396 = vmatprep.subr.bf16.mxu0 0
      %397 = vmatpush1.bf16.msra.mxu0 0
      %398 = vmatprep.subr.bf16.mxu0 0
      %399 = vmatpush1.bf16.msra.mxu0 0
      %400 = vmatprep.subr.bf16.mxu0 0
      %401 = vmatpush1.bf16.msra.mxu0 0
      %402 = vmatprep.subr.bf16.mxu0 0
      %403 = vmatpush1.bf16.msra.mxu0 0
      %404 = vmatprep.subr.bf16.mxu0 0
      %405 = vmatpush1.bf16.msra.mxu0 0
      %406 = vmatprep.subr.bf16.mxu0 0
      %407 = vmatpush1.bf16.msra.mxu0 0
      %408 = vmatprep.subr.bf16.mxu0 0
      %409 = vmatpush1.bf16.msra.mxu0 0
      %410 = vmatprep.mubr.bf16.mxu0 0
      %411 = vmatmul.mubr.bf16.gmra.mrb[0].mxu0 %v376
      %v412 = vpop.f32.mrb[0].mxu0
      %v413 = vadd.f32 0.0, %v412
      %v414 = vpop.f32.mrb[0].mxu0
      %v415 = vpop.f32.mrb[0].mxu0
      %v416 = vadd.f32 0.0, %v415
      %v417 = vpop.f32.mrb[0].mxu0
      %418 = vdwg.mxu0
      %v419 = vld [vmem:[%s3] sm:$0xf]
      %v420 = vld [vmem:[%s3 + $0x4] sm:$0xf]
      %v421 = vld [vmem:[%s3 + $0x8] sm:$0xf]
      %v422 = vld [vmem:[%s3 + $0xc] sm:$0xf]
      %v427 = vunpack.c.l.b16 %v419
      %v428 = vunpack.c.l.b16 %v420
      %v429 = vunpack.c.l.b16 %v421
      %v430 = vunpack.c.l.b16 %v422
      %v431 = vpack.c.b16 %v428, %v427
      %v432 = vpack.c.b16 %v430, %v429
      %435 = vmatprep.subr.bf16.mxu0 0
      %436 = vmatpush1.bf16.msra.mxu0 %v431
      %437 = vmatprep.subr.bf16.mxu0 0
      %438 = vmatpush1.bf16.msra.mxu0 %v432
      %439 = vmatprep.subr.bf16.mxu0 0
      %440 = vmatpush1.bf16.msra.mxu0 0
      %441 = vmatprep.subr.bf16.mxu0 0
      %442 = vmatpush1.bf16.msra.mxu0 0
      %443 = vmatprep.subr.bf16.mxu0 0
      %444 = vmatpush1.bf16.msra.mxu0 0
      %445 = vmatprep.subr.bf16.mxu0 0
      %446 = vmatpush1.bf16.msra.mxu0 0
      %447 = vmatprep.subr.bf16.mxu0 0
      %448 = vmatpush1.bf16.msra.mxu0 0
      %449 = vmatprep.subr.bf16.mxu0 0
      %450 = vmatpush1.bf16.msra.mxu0 0
      %451 = vmatprep.subr.bf16.mxu0 0
      %452 = vmatpush1.bf16.msra.mxu0 0
      %453 = vmatprep.subr.bf16.mxu0 0
      %454 = vmatpush1.bf16.msra.mxu0 0
      %455 = vmatprep.subr.bf16.mxu0 0
      %456 = vmatpush1.bf16.msra.mxu0 0
      %457 = vmatprep.subr.bf16.mxu0 0
      %458 = vmatpush1.bf16.msra.mxu0 0
      %459 = vmatprep.subr.bf16.mxu0 0
      %460 = vmatpush1.bf16.msra.mxu0 0
      %461 = vmatprep.subr.bf16.mxu0 0
      %462 = vmatpush1.bf16.msra.mxu0 0
      %463 = vmatprep.subr.bf16.mxu0 0
      %464 = vmatpush1.bf16.msra.mxu0 0
      %465 = vmatprep.subr.bf16.mxu0 0
      %466 = vmatpush1.bf16.msra.mxu0 0
      %467 = vmatprep.mubr.bf16.mxu0 0
      %468 = vmatmul.mubr.bf16.gmra.mrb[0].mxu0 %v376
      %v469 = vpop.f32.mrb[0].mxu0
      %v470 = vadd.f32 0.0, %v469
      %v471 = vpop.f32.mrb[0].mxu0
      %v472 = vpop.f32.mrb[0].mxu0
      %v473 = vadd.f32 0.0, %v472
      %v474 = vpop.f32.mrb[0].mxu0
      %475 = vdwg.mxu0
      %v476 = vmul.f32 %v470, %v470
      %v477 = vmul.f32 %v473, %v473
      %v478 = vmul.f32 %v470, %v476
      %v479 = vmul.f32 %v473, %v477
      %v480 = vmul.f32 %v478, 0.044715
      %v481 = vmul.f32 %v479, 0.044715
      %v482 = vadd.f32 %v470, %v480
      %v483 = vadd.f32 %v473, %v481
      %v484 = vmul.f32 %v482, 0.7978846
      %v485 = vmul.f32 %v483, 0.7978846
      %v486 = vtanh.pop %v484
      %v487 = vtanh.pop %v485
      %v488 = vadd.f32 %v486, 1.0
      %v489 = vadd.f32 %v487, 1.0
      %v490 = vmul.f32 %v488, 0.5
      %v491 = vmul.f32 %v489, 0.5
      %v492 = vmul.f32 %v470, %v490
      %v493 = vmul.f32 %v473, %v491
      %v494 = vmul.f32 %v413, %v492
      %v495 = vmul.f32 %v416, %v493
      %v496 = vld [vmem:[%s4] sm:$0x1]
      %497 = vadd.xlane.f32.xlu0 %v494
      %v498 = vpop.xlane.xlu0 %497
      %499 = vadd.xlane.f32.xlu0 %v495
      %v500 = vpop.xlane.xlu0 %499
      %v501 = vrcp.pop 128.0
      %v502 = vmul.f32 %v498, %v501
      %v503 = vmul.f32 %v500, %v501
      %v504 = vsub.f32 %v494, %v502
      %v505 = vsub.f32 %v495, %v503
      %v506 = vmul.f32 %v504, %v504
      %v507 = vmul.f32 %v505, %v505
      %508 = vadd.xlane.f32.xlu0 %v506
      %v509 = vpop.xlane.xlu0 %508
      %510 = vadd.xlane.f32.xlu0 %v507
      %v511 = vpop.xlane.xlu0 %510
      %v512 = vmul.f32 %v509, %v501
      %v513 = vmul.f32 %v511, %v501
      %v514 = vadd.f32 %v512, 1e-05
      %v515 = vadd.f32 %v513, 1e-05
      %v516 = vrsqrt.pop %v514
      %v517 = vrsqrt.pop %v515
      %v518 = vmul.f32 %v504, %v516
      %v519 = vmul.f32 %v505, %v517
      %v521 = vlaneseq
      %v522 = vshrl.u32 %v521, 7
      %v523 = vsub.s32 0, %v522
      %v524 = vrot.slane %v496, %v523
      %v526 = vmul.f32 %v518, %v524
      %v527 = vmul.f32 %v519, %v524
      %v528 = vpack.c.bf16 %v527, %v526
      %v529 = vld [vmem:[%s5] sm:$0xf]
      %v530 = vld [vmem:[%s5 + $0x4] sm:$0xf]
      %v531 = vld [vmem:[%s5 + $0x8] sm:$0xf]
      %v532 = vld [vmem:[%s5 + $0xc] sm:$0xf]
      %v533 = vld [vmem:[%s5 + $0x10] sm:$0xf]
      %v534 = vld [vmem:[%s5 + $0x14] sm:$0xf]
      %v535 = vld [vmem:[%s5 + $0x18] sm:$0xf]
      %v536 = vld [vmem:[%s5 + $0x1c] sm:$0xf]
      %v537 = vld [vmem:[%s5 + $0x20] sm:$0xf]
      %v538 = vld [vmem:[%s5 + $0x24] sm:$0xf]
      %v539 = vld [vmem:[%s5 + $0x28] sm:$0xf]
      %v540 = vld [vmem:[%s5 + $0x2c] sm:$0xf]
      %v541 = vld [vmem:[%s5 + $0x30] sm:$0xf]
      %v542 = vld [vmem:[%s5 + $0x34] sm:$0xf]
      %v543 = vld [vmem:[%s5 + $0x38] sm:$0xf]
      %v544 = vld [vmem:[%s5 + $0x3c] sm:$0xf]
      %v561 = vunpack.c.l.b16 %v529
      %v562 = vunpack.c.l.b16 %v530
      %v563 = vunpack.c.l.b16 %v531
      %v564 = vunpack.c.l.b16 %v532
      %v565 = vunpack.c.l.b16 %v533
      %v566 = vunpack.c.l.b16 %v534
      %v567 = vunpack.c.l.b16 %v535
      %v568 = vunpack.c.l.b16 %v536
      %v569 = vunpack.c.l.b16 %v537
      %v570 = vunpack.c.l.b16 %v538
      %v571 = vunpack.c.l.b16 %v539
      %v572 = vunpack.c.l.b16 %v540
      %v573 = vunpack.c.l.b16 %v541
      %v574 = vunpack.c.l.b16 %v542
      %v575 = vunpack.c.l.b16 %v543
      %v576 = vunpack.c.l.b16 %v544
      %v577 = vpack.c.b16 %v562, %v561
      %v578 = vpack.c.b16 %v564, %v563
      %v579 = vpack.c.b16 %v566, %v565
      %v580 = vpack.c.b16 %v568, %v567
      %v581 = vpack.c.b16 %v570, %v569
      %v582 = vpack.c.b16 %v572, %v571
      %v583 = vpack.c.b16 %v574, %v573
      %v584 = vpack.c.b16 %v576, %v575
      %593 = vmatprep.subr.bf16.mxu0 0
      %594 = vmatpush1.bf16.msra.mxu0 %v577
      %595 = vmatprep.subr.bf16.mxu0 0
      %596 = vmatpush1.bf16.msra.mxu0 %v578
      %597 = vmatprep.subr.bf16.mxu0 0
      %598 = vmatpush1.bf16.msra.mxu0 %v579
      %599 = vmatprep.subr.bf16.mxu0 0
      %600 = vmatpush1.bf16.msra.mxu0 %v580
      %601 = vmatprep.subr.bf16.mxu0 0
      %602 = vmatpush1.bf16.msra.mxu0 %v581
      %603 = vmatprep.subr.bf16.mxu0 0
      %604 = vmatpush1.bf16.msra.mxu0 %v582
      %605 = vmatprep.subr.bf16.mxu0 0
      %606 = vmatpush1.bf16.msra.mxu0 %v583
      %607 = vmatprep.subr.bf16.mxu0 0
      %608 = vmatpush1.bf16.msra.mxu0 %v584
      %609 = vmatprep.subr.bf16.mxu0 0
      %610 = vmatpush1.bf16.msra.mxu0 0
      %611 = vmatprep.subr.bf16.mxu0 0
      %612 = vmatpush1.bf16.msra.mxu0 0
      %613 = vmatprep.subr.bf16.mxu0 0
      %614 = vmatpush1.bf16.msra.mxu0 0
      %615 = vmatprep.subr.bf16.mxu0 0
      %616 = vmatpush1.bf16.msra.mxu0 0
      %617 = vmatprep.subr.bf16.mxu0 0
      %618 = vmatpush1.bf16.msra.mxu0 0
      %619 = vmatprep.subr.bf16.mxu0 0
      %620 = vmatpush1.bf16.msra.mxu0 0
      %621 = vmatprep.subr.bf16.mxu0 0
      %622 = vmatpush1.bf16.msra.mxu0 0
      %623 = vmatprep.subr.bf16.mxu0 0
      %624 = vmatpush1.bf16.msra.mxu0 0
      %625 = vmatprep.mubr.bf16.mxu0 0
      %626 = vmatmul.mubr.bf16.gmra.mrb[0].mxu0 %v528
      %v627 = vpop.f32.mrb[0].mxu0
      %v628 = vadd.f32 %v319, %v627
      %v629 = vpop.f32.mrb[0].mxu0
      %v630 = vpop.f32.mrb[0].mxu0
      %v631 = vadd.f32 %v320, %v630
      %v632 = vpop.f32.mrb[0].mxu0
      %633 = vdwg.mxu0
      %634 = vst.msk [vmem:[%s316] sm:$0xff] %vm322, %v628
      %635 = vst.msk [vmem:[%s316 + $0x8] sm:$0xff] %vm322, %v631
      %s636 = smul.u32 2, %s23
      %p637 = scmp.lt.s32.totalorder %s22, 1
      %s638 = scalar_select %p637, %s22, 1
      %p639 = scmp.lt.s32.totalorder %s636, 1
      %s640 = scalar_select %p639, %s636, 1
      %s641 = smul.addr %s638, 2
      %s642 = sadd.s32 %s640, %s641
      %s643 = smul.addr %s642, 8
      %s644 = scalar_lea.vmem %s7, %s643
      // Predicated region
      $region49: #{transformer_forward.8} parent=47 // pred_check
        %p645 = pneg %p204
      $region50: #{transformer_forward.8} parent=47 // pred_check_branch
        %647 = sbr.rel (%p645) target = $region52
      $region51: #{transformer_forward.8} parent=47 // pred_region
        %s648 = smul.u32 2, %s23
      $region52: #{transformer_forward.8} parent=47 // pred_fallthru
        _
    $region48: #{transformer_forward.8} parent=5 // pred_fallthru
      _
    %p649 = scmp.le.s32.totalorder 2, %s13
    // Predicated region
    $region53: #{transformer_forward.8} parent=5 // pred_check
      %p650 = pneg %p649
    $region54: #{transformer_forward.8} parent=5 // pred_check_branch
      %652 = sbr.rel (%p650) target = $region56
    $region55: #{transformer_forward.8} parent=5 // pred_region
      %s653 = ssub.s32 %s13, 2
      // Predicated region
      $region57: #{transformer_forward.8} parent=55 // pred_check
        %p654 = pneg %p210
      $region58: #{transformer_forward.8} parent=55 // pred_check_branch
        %656 = sbr.rel (%p654) target = $region60
      $region59: #{transformer_forward.8} parent=55 // pred_region
        %s657 = smul.u32 2, %s25
        %p658 = scmp.lt.s32.totalorder %s24, 1
        %s659 = scalar_select %p658, %s24, 1
        %p660 = scmp.lt.s32.totalorder %s657, 1
        %s661 = scalar_select %p660, %s657, 1
        %s662 = smul.addr %s659, 2
        %s663 = sadd.s32 %s661, %s662
        %s664 = smul.addr %s663, 8
        %s665 = scalar_lea.vmem %s7, %s664
      $region60: #{transformer_forward.8} parent=55 // pred_fallthru
        _
    $region56: #{transformer_forward.8} parent=5 // pred_fallthru
      _
  $region6: #{transformer_forward.8} parent=0 // loop_footer
    %s17 = sadd.s32 1, %s13
  $region7: #{transformer_forward.8} parent=0 // loop_footer_branch
    %12 = sbr.rel target = $region3
  $region8: #{transformer_forward.8} parent=0 // loop_exit
    _

// kernel: transformer_forward.6
$region0: #{transformer_forward.6}
  #allocation0 [shape = 'u32[]', space=smem, size = 0x4, offset = 0x4, fixed_abs, tag = 'smem constant byte address 0x4 - core index']
  #allocation1 [shape = 'u32[144,128]{1,0:T(1,128)}', space=vmem, size = 0x12000, scoped, tag = 'internal scratch']
  %s0 = inlined_call_operand.vmem [shape: f32[2,16,32], index: 0, kind: input, shape index: {}]
  %s1 = inlined_call_operand.vmem [shape: f32[1,32], index: 1, kind: input, shape index: {}]
  %s2 = inlined_call_operand.vmem [shape: f32[1,32], index: 2, kind: input, shape index: {}]
  %s3 = inlined_call_operand.vmem [shape: bf16[32,32], index: 3, kind: input, shape index: {}]
  %s4 = inlined_call_operand.vmem [shape: bf16[32,32], index: 4, kind: input, shape index: {}]
  %s5 = inlined_call_operand.vmem [shape: bf16[32,32], index: 5, kind: input, shape index: {}]
  %s6 = inlined_call_operand.vmem [shape: bf16[2,4,16,8], index: 6, kind: output, shape index: {0}]
  %s7 = inlined_call_operand.vmem [shape: bf16[2,4,8,16], index: 7, kind: output, shape index: {1}]
  %s8 = inlined_call_operand.vmem [shape: bf16[2,4,16,8], index: 8, kind: output, shape index: {2}]
  %9 = xla_tuple %s6, %s7, %s8
  %s10 = sld [smem:[#allocation0]]
  $region73: #{transformer_forward.6} parent=0
    _
  %s12 = ssub.s32 1, %s10
  %s13 = scalar_select 0, %s12, %s10
  loop: start=0, step=1, limit=4
  $region2: #{transformer_forward.6} parent=0 // loop_pre_header
    _
  $region3: #{transformer_forward.6} parent=0 // loop_header
    %s15 = sphi 0, %s19
    %p16 = scmp.ge.s32.totalorder %s15, 4
    %s22 = sphi 0, %s34
    %s23 = sphi 0, %s30
    %s24 = sphi 0, %s22
    %s25 = sphi 0, %s23
    %s26 = sphi 0, %s24
    %s27 = sphi 0, %s25
    %s39 = sphi 0, %s41
    %s42 = sphi 0, %s39
    %s43 = sphi 0, %s42
    %s59 = sphi 0, %s43
    %s63 = sphi 0, %s63
    %s65 = sphi 0, %s63
    %s66 = sphi 0, %s65
    %s80 = sphi 0, %s66
    %s84 = sphi 0, %s84
    %s86 = sphi 0, %s84
    %s87 = sphi 0, %s86
    %s101 = sphi 0, %s87
    %s105 = sphi 0, %s105
    %s107 = sphi 0, %s105
    %s108 = sphi 0, %s107
    %s122 = sphi 0, %s108
    %s126 = sphi 0, %s126
    %s128 = sphi 0, %s126
    %s129 = sphi 0, %s128
    %s143 = sphi 0, %s129
    %s147 = sphi 0, %s147
    %s149 = sphi 0, %s147
    %s150 = sphi 0, %s149
    %s164 = sphi 0, %s150
    %s172 = sphi 0, %s174
    %s175 = sphi 0, %s172
    %s176 = sphi 0, %s175
    %s192 = sphi 0, %s176
    %s200 = sphi 0, %s202
    %s203 = sphi 0, %s200
    %s204 = sphi 0, %s203
    %s220 = sphi 0, %s204
    %s228 = sphi 0, %s230
    %s231 = sphi 0, %s228
    %s232 = sphi 0, %s231
    %s248 = sphi 0, %s232
  $region4: #{transformer_forward.6} parent=0 // loop_header_branch
    %18 = sbr.rel (%p16) target = $region8
  $region5: #{transformer_forward.6} parent=0 // loop_body
    %s20 = ssub.s32 %s15, 1
    %s21 = ssub.s32 %s15, 2
    %s28 = sadd.s32 1, %s23
    %p29 = scmp.ge.s32.totalorder %s28, 1
    %s30 = scalar_select %p29, 0, %s28
    %s31 = sadd.s32 1, %s22
    %s32 = scalar_select %p29, %s31, %s22
    %p33 = scmp.ge.s32.totalorder %s32, 2
    %s34 = scalar_select %p33, 0, %s32
    %s35 = ssub.s32 %s22, %s34
    %s36 = ssub.s32 %s23, %s30
    %s37 = sor.u32 %s35, %s36
    %p38 = scmp.eq.s32.totalorder %s37, 0
    %s40 = sadd.s32 %s39, 1
    %s41 = scalar_select %p38, %s39, %s40
    %p44 = pneg %p38
    %p45 = scmp.eq.s32.totalorder %s15, 1
    %p46 = por %p44, %p45
    %p47 = scmp.ne.s32.totalorder %s39, %s42
    %p48 = scmp.eq.s32.totalorder %s15, 0
    %p49 = por %p47, %p48
    %p50 = scmp.ne.s32.totalorder %s39, %s42
    %p51 = scmp.eq.s32.totalorder %s20, 1
    %p52 = por %p50, %p51
    %p53 = scmp.ne.s32.totalorder %s42, %s43
    %p54 = scmp.eq.s32.totalorder %s20, 0
    %p55 = por %p53, %p54
    %p56 = scmp.ne.s32.totalorder %s42, %s43
    %p57 = scmp.eq.s32.totalorder %s21, 1
    %p58 = por %p56, %p57
    %p60 = scmp.ne.s32.totalorder %s43, %s59
    %p61 = scmp.eq.s32.totalorder %s21, 0
    %p62 = por %p60, %p61
    %s64 = sadd.s32 %s63, 1
    %p67 = scmp.eq.s32.totalorder %s15, 1
    %p68 = scmp.ne.s32.totalorder %s63, %s65
    %p69 = scmp.eq.s32.totalorder %s15, 0
    %p70 = por %p68, %p69
    %p71 = scmp.ne.s32.totalorder %s63, %s65
    %p72 = scmp.eq.s32.totalorder %s20, 1
    %p73 = por %p71, %p72
    %p74 = scmp.ne.s32.totalorder %s65, %s66
    %p75 = scmp.eq.s32.totalorder %s20, 0
    %p76 = por %p74, %p75
    %p77 = scmp.ne.s32.totalorder %s65, %s66
    %p78 = scmp.eq.s32.totalorder %s21, 1
    %p79 = por %p77, %p78
    %p81 = scmp.ne.s32.totalorder %s66, %s80
    %p82 = scmp.eq.s32.totalorder %s21, 0
    %p83 = por %p81, %p82
    %s85 = sadd.s32 %s84, 1
    %p88 = scmp.eq.s32.totalorder %s15, 1
    %p89 = scmp.ne.s32.totalorder %s84, %s86
    %p90 = scmp.eq.s32.totalorder %s15, 0
    %p91 = por %p89, %p90
    %p92 = scmp.ne.s32.totalorder %s84, %s86
    %p93 = scmp.eq.s32.totalorder %s20, 1
    %p94 = por %p92, %p93
    %p95 = scmp.ne.s32.totalorder %s86, %s87
    %p96 = scmp.eq.s32.totalorder %s20, 0
    %p97 = por %p95, %p96
    %p98 = scmp.ne.s32.totalorder %s86, %s87
    %p99 = scmp.eq.s32.totalorder %s21, 1
    %p100 = por %p98, %p99
    %p102 = scmp.ne.s32.totalorder %s87, %s101
    %p103 = scmp.eq.s32.totalorder %s21, 0
    %p104 = por %p102, %p103
    %s106 = sadd.s32 %s105, 1
    %p109 = scmp.eq.s32.totalorder %s15, 1
    %p110 = scmp.ne.s32.totalorder %s105, %s107
    %p111 = scmp.eq.s32.totalorder %s15, 0
    %p112 = por %p110, %p111
    %p113 = scmp.ne.s32.totalorder %s105, %s107
    %p114 = scmp.eq.s32.totalorder %s20, 1
    %p115 = por %p113, %p114
    %p116 = scmp.ne.s32.totalorder %s107, %s108
    %p117 = scmp.eq.s32.totalorder %s20, 0
    %p118 = por %p116, %p117
    %p119 = scmp.ne.s32.totalorder %s107, %s108
    %p120 = scmp.eq.s32.totalorder %s21, 1
    %p121 = por %p119, %p120
    %p123 = scmp.ne.s32.totalorder %s108, %s122
    %p124 = scmp.eq.s32.totalorder %s21, 0
    %p125 = por %p123, %p124
    %s127 = sadd.s32 %s126, 1
    %p130 = scmp.eq.s32.totalorder %s15, 1
    %p131 = scmp.ne.s32.totalorder %s126, %s128
    %p132 = scmp.eq.s32.totalorder %s15, 0
    %p133 = por %p131, %p132
    %p134 = scmp.ne.s32.totalorder %s126, %s128
    %p135 = scmp.eq.s32.totalorder %s20, 1
    %p136 = por %p134, %p135
    %p137 = scmp.ne.s32.totalorder %s128, %s129
    %p138 = scmp.eq.s32.totalorder %s20, 0
    %p139 = por %p137, %p138
    %p140 = scmp.ne.s32.totalorder %s128, %s129
    %p141 = scmp.eq.s32.totalorder %s21, 1
    %p142 = por %p140, %p141
    %p144 = scmp.ne.s32.totalorder %s129, %s143
    %p145 = scmp.eq.s32.totalorder %s21, 0
    %p146 = por %p144, %p145
    %s148 = sadd.s32 %s147, 1
    %p151 = scmp.eq.s32.totalorder %s15, 1
    %p152 = scmp.ne.s32.totalorder %s147, %s149
    %p153 = scmp.eq.s32.totalorder %s15, 0
    %p154 = por %p152, %p153
    %p155 = scmp.ne.s32.totalorder %s147, %s149
    %p156 = scmp.eq.s32.totalorder %s20, 1
    %p157 = por %p155, %p156
    %p158 = scmp.ne.s32.totalorder %s149, %s150
    %p159 = scmp.eq.s32.totalorder %s20, 0
    %p160 = por %p158, %p159
    %p161 = scmp.ne.s32.totalorder %s149, %s150
    %p162 = scmp.eq.s32.totalorder %s21, 1
    %p163 = por %p161, %p162
    %p165 = scmp.ne.s32.totalorder %s150, %s164
    %p166 = scmp.eq.s32.totalorder %s21, 0
    %p167 = por %p165, %p166
    %s168 = ssub.s32 %s22, %s34
    %s169 = ssub.s32 %s23, %s30
    %s170 = sor.u32 %s168, %s169
    %p171 = scmp.eq.s32.totalorder %s170, 0
    %s173 = sadd.s32 %s172, 1
    %s174 = scalar_select %p171, %s172, %s173
    %p177 = pneg %p171
    %p178 = scmp.eq.s32.totalorder %s15, 1
    %p179 = por %p177, %p178
    %p180 = scmp.ne.s32.totalorder %s172, %s175
    %p181 = scmp.eq.s32.totalorder %s15, 0
    %p182 = por %p180, %p181
    %p183 = scmp.ne.s32.totalorder %s172, %s175
    %p184 = scmp.eq.s32.totalorder %s20, 1
    %p185 = por %p183, %p184
    %p186 = scmp.ne.s32.totalorder %s175, %s176
    %p187 = scmp.eq.s32.totalorder %s20, 0
    %p188 = por %p186, %p187
    %p189 = scmp.ne.s32.totalorder %s175, %s176
    %p190 = scmp.eq.s32.totalorder %s21, 1
    %p191 = por %p189, %p190
    %p193 = scmp.ne.s32.totalorder %s176, %s192
    %p194 = scmp.eq.s32.totalorder %s21, 0
    %p195 = por %p193, %p194
    %s196 = ssub.s32 %s22, %s34
    %s197 = ssub.s32 %s23, %s30
    %s198 = sor.u32 %s196, %s197
    %p199 = scmp.eq.s32.totalorder %s198, 0
    %s201 = sadd.s32 %s200, 1
    %s202 = scalar_select %p199, %s200, %s201
    %p205 = pneg %p199
    %p206 = scmp.eq.s32.totalorder %s15, 1
    %p207 = por %p205, %p206
    %p208 = scmp.ne.s32.totalorder %s200, %s203
    %p209 = scmp.eq.s32.totalorder %s15, 0
    %p210 = por %p208, %p209
    %p211 = scmp.ne.s32.totalorder %s200, %s203
    %p212 = scmp.eq.s32.totalorder %s20, 1
    %p213 = por %p211, %p212
    %p214 = scmp.ne.s32.totalorder %s203, %s204
    %p215 = scmp.eq.s32.totalorder %s20, 0
    %p216 = por %p214, %p215
    %p217 = scmp.ne.s32.totalorder %s203, %s204
    %p218 = scmp.eq.s32.totalorder %s21, 1
    %p219 = por %p217, %p218
    %p221 = scmp.ne.s32.totalorder %s204, %s220
    %p222 = scmp.eq.s32.totalorder %s21, 0
    %p223 = por %p221, %p222
    %s224 = ssub.s32 %s22, %s34
    %s225 = ssub.s32 %s23, %s30
    %s226 = sor.u32 %s224, %s225
    %p227 = scmp.eq.s32.totalorder %s226, 0
    %s229 = sadd.s32 %s228, 1
    %s230 = scalar_select %p227, %s228, %s229
    %p233 = pneg %p227
    %p234 = scmp.eq.s32.totalorder %s15, 1
    %p235 = por %p233, %p234
    %p236 = scmp.ne.s32.totalorder %s228, %s231
    %p237 = scmp.eq.s32.totalorder %s15, 0
    %p238 = por %p236, %p237
    %p239 = scmp.ne.s32.totalorder %s228, %s231
    %p240 = scmp.eq.s32.totalorder %s20, 1
    %p241 = por %p239, %p240
    %p242 = scmp.ne.s32.totalorder %s231, %s232
    %p243 = scmp.eq.s32.totalorder %s20, 0
    %p244 = por %p242, %p243
    %p245 = scmp.ne.s32.totalorder %s231, %s232
    %p246 = scmp.eq.s32.totalorder %s21, 1
    %p247 = por %p245, %p246
    %p249 = scmp.ne.s32.totalorder %s232, %s248
    %p250 = scmp.eq.s32.totalorder %s21, 0
    %p251 = por %p249, %p250
    %p252 = scmp.le.s32.totalorder 1, %s15
    %p253 = scmp.lt.s32.totalorder %s15, 3
    %p254 = pnand %p252, %p253
    %p255 = pneg %p254
    // Predicated region
    $region9: #{transformer_forward.6} parent=5 // pred_check
      _
    $region10: #{transformer_forward.6} parent=5 // pred_check_branch
      %257 = sbr.rel (%p254) target = $region12
    $region11: #{transformer_forward.6} parent=5 // pred_region
      %s258 = ssub.s32 %s15, 1
      // Predicated region
      $region13: #{transformer_forward.6} parent=11 // pred_check
        %p259 = pneg %p76
      $region14: #{transformer_forward.6} parent=11 // pred_check_branch
        %261 = sbr.rel (%p259) target = $region16
      $region15: #{transformer_forward.6} parent=11 // pred_region
        _
      $region16: #{transformer_forward.6} parent=11 // pred_fallthru
        _
      // Predicated region
      $region17: #{transformer_forward.6} parent=11 // pred_check
        %p262 = pneg %p97
      $region18: #{transformer_forward.6} parent=11 // pred_check_branch
        %264 = sbr.rel (%p262) target = $region20
      $region19: #{transformer_forward.6} parent=11 // pred_region
        _
      $region20: #{transformer_forward.6} parent=11 // pred_fallthru
        _
      // Predicated region
      $region21: #{transformer_forward.6} parent=11 // pred_check
        %p265 = pneg %p118
      $region22: #{transformer_forward.6} parent=11 // pred_check_branch
        %267 = sbr.rel (%p265) target = $region24
      $region23: #{transformer_forward.6} parent=11 // pred_region
        _
      $region24: #{transformer_forward.6} parent=11 // pred_fallthru
        _
      // Predicated region
      $region25: #{transformer_forward.6} parent=11 // pred_check
        %p268 = pneg %p139
      $region26: #{transformer_forward.6} parent=11 // pred_check_branch
        %270 = sbr.rel (%p268) target = $region28
      $region27: #{transformer_forward.6} parent=11 // pred_region
        _
      $region28: #{transformer_forward.6} parent=11 // pred_fallthru
        _
      // Predicated region
      $region29: #{transformer_forward.6} parent=11 // pred_check
        %p271 = pneg %p160
      $region30: #{transformer_forward.6} parent=11 // pred_check_branch
        %273 = sbr.rel (%p271) target = $region32
      $region31: #{transformer_forward.6} parent=11 // pred_region
        _
      $region32: #{transformer_forward.6} parent=11 // pred_fallthru
        _
    $region12: #{transformer_forward.6} parent=5 // pred_fallthru
      _
    %p274 = scmp.lt.s32.totalorder %s15, 2
    // Predicated region
    $region33: #{transformer_forward.6} parent=5 // pred_check
      %p275 = pneg %p274
    $region34: #{transformer_forward.6} parent=5 // pred_check_branch
      %277 = sbr.rel (%p275) target = $region36
    $region35: #{transformer_forward.6} parent=5 // pred_region
      // Predicated region
      $region37: #{transformer_forward.6} parent=35 // pred_check
        %p278 = pneg %p49
      $region38: #{transformer_forward.6} parent=35 // pred_check_branch
        %280 = sbr.rel (%p278) target = $region40
      $region39: #{transformer_forward.6} parent=35 // pred_region
        %s281 = smul.u32 2, %s23
        %p282 = scmp.lt.s32.totalorder %s22, 1
        %s283 = scalar_select %p282, %s22, 1
        %p284 = scmp.lt.s32.totalorder %s281, 1
        %s285 = scalar_select %p284, %s281, 1
        %s286 = smul.addr %s283, 2
        %s287 = sadd.s32 %s285, %s286
        %s288 = smul.addr %s287, 8
        %s289 = scalar_lea.vmem %s0, %s288
        %s290 = smul.u32 2, %s23
      $region40: #{transformer_forward.6} parent=35 // pred_fallthru
        _
    $region36: #{transformer_forward.6} parent=5 // pred_fallthru
      _
    %p291 = scmp.le.s32.totalorder 1, %s15
    %p292 = scmp.lt.s32.totalorder %s15, 3
    %p293 = pnand %p291, %p292
    %p294 = pneg %p293
    // Predicated region
    $region41: #{transformer_forward.6} parent=5 // pred_check
      _
    $region42: #{transformer_forward.6} parent=5 // pred_check_branch
      %296 = sbr.rel (%p293) target = $region44
    $region43: #{transformer_forward.6} parent=5 // pred_region
      %s297 = ssub.s32 %s15, 1
      %s298 = smul.u32 2, %s25
      %p299 = scmp.lt.s32.totalorder %s24, 1
      %s300 = scalar_select %p299, %s24, 1
      %p301 = scmp.lt.s32.totalorder %s298, 1
      %s302 = scalar_select %p301, %s298, 1
      %s303 = smul.addr %s300, 2
      %s304 = sadd.s32 %s302, %s303
      %s305 = smul.addr %s304, 8
      %s306 = scalar_lea.vmem %s0, %s305
      %p307 = pneg %p55
      %p308 = pneg %p52
      %p309 = pneg %p76
      %p310 = pneg %p73
      %p311 = pneg %p97
      %p312 = pneg %p94
      %p313 = pneg %p118
      %p314 = pneg %p115
      %p315 = pneg %p139
      %p316 = pneg %p136
      %p317 = pneg %p160
      %p318 = pneg %p157
      %p319 = pneg %p188
      %p320 = pneg %p185
      %s321 = smul.u32 2, %s25
      %p322 = scmp.lt.s32.totalorder %s24, 1
      %s323 = scalar_select %p322, %s24, 1
      %p324 = scmp.lt.s32.totalorder %s321, 1
      %s325 = scalar_select %p324, %s321, 1
      %s326 = smul.addr %s323, 8
      %s327 = sadd.s32 %s325, %s326
      %s328 = smul.addr %s327, 4
      %s329 = scalar_lea.vmem %s6, %s328
      %p330 = pneg %p216
      %p331 = pneg %p213
      %p332 = scmp.lt.s32.totalorder %s24, 1
      %s333 = scalar_select %p332, %s24, 1
      %p334 = scmp.lt.s32.totalorder %s25, 0
      %s335 = scalar_select %p334, %s25, 0
      %s336 = smul.addr %s333, 4
      %s337 = sadd.s32 %s335, %s336
      %s338 = smul.addr %s337, 4
      %s339 = scalar_lea.vmem %s7, %s338
      %p340 = pneg %p244
      %p341 = pneg %p241
      %s342 = smul.u32 2, %s25
      %p343 = scmp.lt.s32.totalorder %s24, 1
      %s344 = scalar_select %p343, %s24, 1
      %p345 = scmp.lt.s32.totalorder %s342, 1
      %s346 = scalar_select %p345, %s342, 1
      %s347 = smul.addr %s344, 8
      %s348 = sadd.s32 %s346, %s347
      %s349 = smul.addr %s348, 4
      %s350 = scalar_lea.vmem %s8, %s349
      %s351 = smul.u32 2, %s25
      %p352 = scmp.lt.s32.totalorder %s24, 1
      %s353 = scalar_select %p352, %s24, 1
      %p354 = scmp.lt.s32.totalorder %s351, 1
      %s355 = scalar_select %p354, %s351, 1
      %s356 = smul.addr %s353, 2
      %s357 = sadd.s32 %s355, %s356
      %s358 = smul.addr %s357, 8
      %s359 = scalar_lea.vmem %s0, %s358
      %s360 = smul.u32 2, %s25
      %s361 = smul.u32 2, %s25
      %p362 = scmp.lt.s32.totalorder %s24, 1
      %s363 = scalar_select %p362, %s24, 1
      %p364 = scmp.lt.s32.totalorder %s361, 1
      %s365 = scalar_select %p364, %s361, 1
      %s366 = smul.addr %s363, 8
      %s367 = sadd.s32 %s365, %s366
      %s368 = smul.addr %s367, 4
      %s369 = scalar_lea.vmem %s6, %s368
      %s370 = smul.u32 2, %s25
      %p371 = scmp.lt.s32.totalorder %s24, 1
      %s372 = scalar_select %p371, %s24, 1
      %p373 = scmp.lt.s32.totalorder %s25, 0
      %s374 = scalar_select %p373, %s25, 0
      %s375 = smul.addr %s372, 4
      %s376 = sadd.s32 %s374, %s375
      %s377 = smul.addr %s376, 4
      %s378 = scalar_lea.vmem %s7, %s377
      %s379 = smul.u32 2, %s25
      %p380 = scmp.lt.s32.totalorder %s24, 1
      %s381 = scalar_select %p380, %s24, 1
      %p382 = scmp.lt.s32.totalorder %s379, 1
      %s383 = scalar_select %p382, %s379, 1
      %s384 = smul.addr %s381, 8
      %s385 = sadd.s32 %s383, %s384
      %s386 = smul.addr %s385, 4
      %s387 = scalar_lea.vmem %s8, %s386
      %s388 = smul.u32 2, %s25
      %v390 = vld [vmem:[%s359] sm:$0xff]
      %v391 = vld [vmem:[%s359 + $0x8] sm:$0xff]
      %v392 = vld [vmem:[%s1] sm:$0x1]
      %vm393 = vcmask 261120
      %v394 = vsel %vm393, %v390, 0.0
      %395 = vadd.xlane.f32.xlu0 %v394
      %v396 = vpop.xlane.xlu0 %395
      %v397 = vsel %vm393, %v391, 0.0
      %398 = vadd.xlane.f32.xlu0 %v397
      %v399 = vpop.xlane.xlu0 %398
      %v400 = vrcp.pop 32.0
      %v401 = vmul.f32 %v396, %v400
      %v402 = vmul.f32 %v399, %v400
      %v403 = vsub.f32 %v390, %v401
      %v404 = vsub.f32 %v391, %v402
      %v405 = vmul.f32 %v403, %v403
      %v406 = vmul.f32 %v404, %v404
      %v407 = vsel %vm393, %v405, 0.0
      %408 = vadd.xlane.f32.xlu0 %v407
      %v409 = vpop.xlane.xlu0 %408
      %v410 = vsel %vm393, %v406, 0.0
      %411 = vadd.xlane.f32.xlu0 %v410
      %v412 = vpop.xlane.xlu0 %411
      %v413 = vmul.f32 %v409, %v400
      %v414 = vmul.f32 %v412, %v400
      %v415 = vadd.f32 %v413, 1e-05
      %v416 = vadd.f32 %v414, 1e-05
      %v417 = vrsqrt.pop %v415
      %v418 = vrsqrt.pop %v416
      %v419 = vmul.f32 %v403, %v417
      %v420 = vmul.f32 %v404, %v418
      %v422 = vlaneseq
      %v423 = vshrl.u32 %v422, 7
      %v424 = vsub.s32 0, %v423
      %v425 = vrot.slane %v392, %v424
      %v427 = vmul.f32 %v419, %v425
      %v428 = vmul.f32 %v420, %v425
      %v429 = vld [vmem:[%s2] sm:$0x1]
      %v430 = vsel %vm393, %v427, 0.0
      %431 = vadd.xlane.f32.xlu0 %v430
      %v432 = vpop.xlane.xlu0 %431
      %v433 = vsel %vm393, %v428, 0.0
      %434 = vadd.xlane.f32.xlu0 %v433
      %v435 = vpop.xlane.xlu0 %434
      %v436 = vmul.f32 %v432, %v400
      %v437 = vmul.f32 %v435, %v400
      %v438 = vsub.f32 %v427, %v436
      %v439 = vsub.f32 %v428, %v437
      %v440 = vmul.f32 %v438, %v438
      %v441 = vmul.f32 %v439, %v439
      %v442 = vsel %vm393, %v440, 0.0
      %443 = vadd.xlane.f32.xlu0 %v442
      %v444 = vpop.xlane.xlu0 %443
      %v445 = vsel %vm393, %v441, 0.0
      %446 = vadd.xlane.f32.xlu0 %v445
      %v447 = vpop.xlane.xlu0 %446
      %v448 = vmul.f32 %v444, %v400
      %v449 = vmul.f32 %v447, %v400
      %v450 = vadd.f32 %v448, 1e-05
      %v451 = vadd.f32 %v449, 1e-05
      %v452 = vrsqrt.pop %v450
      %v453 = vrsqrt.pop %v451
      %v454 = vmul.f32 %v438, %v452
      %v455 = vmul.f32 %v439, %v453
      %v457 = vlaneseq
      %v458 = vshrl.u32 %v457, 7
      %v459 = vsub.s32 0, %v458
      %v460 = vrot.slane %v429, %v459
      %v462 = vmul.f32 %v454, %v460
      %v463 = vmul.f32 %v455, %v460
      %v464 = vpack.c.bf16 %v463, %v462
      %465 = vxpose.xlu0.b32.start [1/16] %v462, 128
      %466 = vxpose.xlu0.b32.cont [2/16] %v463, 128
      %467 = vxpose.xlu0.b32.cont [3/16] 0.0, 128
      %468 = vxpose.xlu0.b32.cont [4/16] 0.0, 128
      %469 = vxpose.xlu0.b32.cont [5/16] 0.0, 128
      %470 = vxpose.xlu0.b32.cont [6/16] 0.0, 128
      %471 = vxpose.xlu0.b32.cont [7/16] 0.0, 128
      %472 = vxpose.xlu0.b32.cont [8/16] 0.0, 128
      %473 = vxpose.xlu0.b32.cont [9/16] 0.0, 128
      %474 = vxpose.xlu0.b32.cont [10/16] 0.0, 128
      %475 = vxpose.xlu0.b32.cont [11/16] 0.0, 128
      %476 = vxpose.xlu0.b32.cont [12/16] 0.0, 128
      %477 = vxpose.xlu0.b32.cont [13/16] 0.0, 128
      %478 = vxpose.xlu0.b32.cont [14/16] 0.0, 128
      %479 = vxpose.xlu0.b32.cont [15/16] 0.0, 128
      %480 = vxpose.xlu0.b32.end [16/16] 0.0, 128
      %v481 = vpop.trf.xlu0
      %v482 = vpop.trf.xlu0
      %v483 = vpop.trf.xlu0
      %v484 = vpop.trf.xlu0
      %v485 = vpop.trf.xlu0
      %v486 = vpop.trf.xlu0
      %v487 = vpop.trf.xlu0
      %v488 = vpop.trf.xlu0
      %v489 = vpop.trf.xlu0
      %v490 = vpop.trf.xlu0
      %v491 = vpop.trf.xlu0
      %v492 = vpop.trf.xlu0
      %v493 = vpop.trf.xlu0
      %v494 = vpop.trf.xlu0
      %v495 = vpop.trf.xlu0
      %v496 = vpop.trf.xlu0
      %v497 = vpack.c.bf16 %v482, %v481
      %v498 = vpack.c.bf16 %v484, %v483
      %v499 = vld [vmem:[%s3] sm:$0xf]
      %v500 = vld [vmem:[%s3 + $0x4] sm:$0xf]
      %v501 = vld [vmem:[%s3 + $0x8] sm:$0xf]
      %v502 = vld [vmem:[%s3 + $0xc] sm:$0xf]
      %v507 = vunpack.c.l.b16 %v499
      %v508 = vunpack.c.l.b16 %v500
      %v509 = vunpack.c.l.b16 %v501
      %v510 = vunpack.c.l.b16 %v502
      %v511 = vpack.c.b16 %v508, %v507
      %v512 = vpack.c.b16 %v510, %v509
      %v516 = vsel %vm393, %v464, 0
      %518 = vmatprep.subr.bf16.mxu0 0
      %519 = vmatpush1.bf16.msra.mxu0 %v511
      %520 = vmatprep.subr.bf16.mxu0 0
      %521 = vmatpush1.bf16.msra.mxu0 %v512
      %522 = vmatprep.subr.bf16.mxu0 0
      %523 = vmatpush1.bf16.msra.mxu0 0
      %524 = vmatprep.subr.bf16.mxu0 0
      %525 = vmatpush1.bf16.msra.mxu0 0
      %526 = vmatprep.subr.bf16.mxu0 0
      %527 = vmatpush1.bf16.msra.mxu0 0
      %528 = vmatprep.subr.bf16.mxu0 0
      %529 = vmatpush1.bf16.msra.mxu0 0
      %530 = vmatprep.subr.bf16.mxu0 0
      %531 = vmatpush1.bf16.msra.mxu0 0
      %532 = vmatprep.subr.bf16.mxu0 0
      %533 = vmatpush1.bf16.msra.mxu0 0
      %534 = vmatprep.subr.bf16.mxu0 0
      %535 = vmatpush1.bf16.msra.mxu0 0
      %536 = vmatprep.subr.bf16.mxu0 0
      %537 = vmatpush1.bf16.msra.mxu0 0
      %538 = vmatprep.subr.bf16.mxu0 0
      %539 = vmatpush1.bf16.msra.mxu0 0
      %540 = vmatprep.subr.bf16.mxu0 0
      %541 = vmatpush1.bf16.msra.mxu0 0
      %542 = vmatprep.subr.bf16.mxu0 0
      %543 = vmatpush1.bf16.msra.mxu0 0
      %544 = vmatprep.subr.bf16.mxu0 0
      %545 = vmatpush1.bf16.msra.mxu0 0
      %546 = vmatprep.subr.bf16.mxu0 0
      %547 = vmatpush1.bf16.msra.mxu0 0
      %548 = vmatprep.subr.bf16.mxu0 0
      %549 = vmatpush1.bf16.msra.mxu0 0
      %550 = vmatprep.mubr.bf16.mxu0 0
      %551 = vmatmul.mubr.bf16.gmra.mrb[0].mxu0 %v516
      %v552 = vpop.f32.mrb[0].mxu0
      %v553 = vadd.f32 0.0, %v552
      %v554 = vpop.f32.mrb[0].mxu0
      %v555 = vpop.f32.mrb[0].mxu0
      %v556 = vadd.f32 0.0, %v555
      %v557 = vpop.f32.mrb[0].mxu0
      %558 = vdwg.mxu0
      %v559 = vld [vmem:[%s5] sm:$0xf]
      %v560 = vld [vmem:[%s5 + $0x4] sm:$0xf]
      %v561 = vld [vmem:[%s5 + $0x8] sm:$0xf]
      %v562 = vld [vmem:[%s5 + $0xc] sm:$0xf]
      %v567 = vunpack.c.l.b16 %v559
      %v568 = vunpack.c.l.b16 %v560
      %v569 = vunpack.c.l.b16 %v561
      %v570 = vunpack.c.l.b16 %v562
      %v571 = vpack.c.b16 %v568, %v567
      %v572 = vpack.c.b16 %v570, %v569
      %575 = vmatprep.subr.bf16.mxu0 0
      %576 = vmatpush1.bf16.msra.mxu0 %v571
      %577 = vmatprep.subr.bf16.mxu0 0
      %578 = vmatpush1.bf16.msra.mxu0 %v572
      %579 = vmatprep.subr.bf16.mxu0 0
      %580 = vmatpush1.bf16.msra.mxu0 0
      %581 = vmatprep.subr.bf16.mxu0 0
      %582 = vmatpush1.bf16.msra.mxu0 0
      %583 = vmatprep.subr.bf16.mxu0 0
      %584 = vmatpush1.bf16.msra.mxu0 0
      %585 = vmatprep.subr.bf16.mxu0 0
      %586 = vmatpush1.bf16.msra.mxu0 0
      %587 = vmatprep.subr.bf16.mxu0 0
      %588 = vmatpush1.bf16.msra.mxu0 0
      %589 = vmatprep.subr.bf16.mxu0 0
      %590 = vmatpush1.bf16.msra.mxu0 0
      %591 = vmatprep.subr.bf16.mxu0 0
      %592 = vmatpush1.bf16.msra.mxu0 0
      %593 = vmatprep.subr.bf16.mxu0 0
      %594 = vmatpush1.bf16.msra.mxu0 0
      %595 = vmatprep.subr.bf16.mxu0 0
      %596 = vmatpush1.bf16.msra.mxu0 0
      %597 = vmatprep.subr.bf16.mxu0 0
      %598 = vmatpush1.bf16.msra.mxu0 0
      %599 = vmatprep.subr.bf16.mxu0 0
      %600 = vmatpush1.bf16.msra.mxu0 0
      %601 = vmatprep.subr.bf16.mxu0 0
      %602 = vmatpush1.bf16.msra.mxu0 0
      %603 = vmatprep.subr.bf16.mxu0 0
      %604 = vmatpush1.bf16.msra.mxu0 0
      %605 = vmatprep.subr.bf16.mxu0 0
      %606 = vmatpush1.bf16.msra.mxu0 0
      %607 = vmatprep.mubr.bf16.mxu0 0
      %608 = vmatmul.mubr.bf16.gmra.mrb[0].mxu0 %v516
      %v609 = vpop.f32.mrb[0].mxu0
      %v610 = vadd.f32 0.0, %v609
      %v611 = vpop.f32.mrb[0].mxu0
      %v612 = vpop.f32.mrb[0].mxu0
      %v613 = vadd.f32 0.0, %v612
      %v614 = vpop.f32.mrb[0].mxu0
      %615 = vdwg.mxu0
      %v616 = vld [vmem:[%s4] sm:$0xf]
      %v617 = vld [vmem:[%s4 + $0x4] sm:$0xf]
      %v618 = vld [vmem:[%s4 + $0x8] sm:$0xf]
      %v619 = vld [vmem:[%s4 + $0xc] sm:$0xf]
      %v624 = vunpack.c.l.b16 %v616
      %v625 = vunpack.c.l.b16 %v617
      %v626 = vunpack.c.l.b16 %v618
      %v627 = vunpack.c.l.b16 %v619
      %v628 = vpack.c.b16 %v625, %v624
      %v629 = vpack.c.b16 %v627, %v626
      %v631 = vsel %vm393, %v628, 0
      %v634 = vsel %vm393, %v629, 0
      %636 = vmatprep.subr.bf16.mxu0 0
      %637 = vmatpush1.bf16.msra.mxu0 %v497
      %638 = vmatprep.subr.bf16.mxu0 0
      %639 = vmatpush1.bf16.msra.mxu0 %v498
      %640 = vmatprep.subr.bf16.mxu0 0
      %641 = vmatpush1.bf16.msra.mxu0 0
      %642 = vmatprep.subr.bf16.mxu0 0
      %643 = vmatpush1.bf16.msra.mxu0 0
      %644 = vmatprep.subr.bf16.mxu0 0
      %645 = vmatpush1.bf16.msra.mxu0 0
      %646 = vmatprep.subr.bf16.mxu0 0
      %647 = vmatpush1.bf16.msra.mxu0 0
      %648 = vmatprep.subr.bf16.mxu0 0
      %649 = vmatpush1.bf16.msra.mxu0 0
      %650 = vmatprep.subr.bf16.mxu0 0
      %651 = vmatpush1.bf16.msra.mxu0 0
      %652 = vmatprep.subr.bf16.mxu0 0
      %653 = vmatpush1.bf16.msra.mxu0 0
      %654 = vmatprep.subr.bf16.mxu0 0
      %655 = vmatpush1.bf16.msra.mxu0 0
      %656 = vmatprep.subr.bf16.mxu0 0
      %657 = vmatpush1.bf16.msra.mxu0 0
      %658 = vmatprep.subr.bf16.mxu0 0
      %659 = vmatpush1.bf16.msra.mxu0 0
      %660 = vmatprep.subr.bf16.mxu0 0
      %661 = vmatpush1.bf16.msra.mxu0 0
      %662 = vmatprep.subr.bf16.mxu0 0
      %663 = vmatpush1.bf16.msra.mxu0 0
      %664 = vmatprep.subr.bf16.mxu0 0
      %665 = vmatpush1.bf16.msra.mxu0 0
      %666 = vmatprep.subr.bf16.mxu0 0
      %667 = vmatpush1.bf16.msra.mxu0 0
      %668 = vmatprep.mubr.bf16.mxu0 0
      %669 = vmatmul.mubr.bf16.gmra.mrb[0].mxu0 %v631
      %v670 = vpop.f32.mrb[0].mxu0
      %v671 = vadd.f32 0.0, %v670
      %v672 = vpop.f32.mrb[0].mxu0
      %v673 = vpop.f32.mrb[0].mxu0
      %v674 = vadd.f32 0.0, %v673
      %v675 = vpop.f32.mrb[0].mxu0
      %676 = vmatprep.mubr.bf16.mxu0 0
      %677 = vmatmul.mubr.bf16.gmra.mrb[0].mxu0 %v634
      %v678 = vpop.f32.mrb[0].mxu0
      %v679 = vadd.f32 0.0, %v678
      %v680 = vpop.f32.mrb[0].mxu0
      %v681 = vpop.f32.mrb[0].mxu0
      %v682 = vadd.f32 0.0, %v681
      %v683 = vpop.f32.mrb[0].mxu0
      %684 = vdwg.mxu0
      %687 = vrot.lane.b32.xlu0 %v553, 120
      %v688 = vpop.permute.xlu0 %687
      %689 = vrot.lane.b32.xlu0 %v556, 120
      %v690 = vpop.permute.xlu0 %689
      %693 = vrot.lane.b32.xlu0 %v553, 112
      %v694 = vpop.permute.xlu0 %693
      %695 = vrot.lane.b32.xlu0 %v556, 112
      %v696 = vpop.permute.xlu0 %695
      %699 = vrot.lane.b32.xlu0 %v553, 104
      %v700 = vpop.permute.xlu0 %699
      %701 = vrot.lane.b32.xlu0 %v556, 104
      %v702 = vpop.permute.xlu0 %701
      %v705 = vcombine.low %v553, %v694
      %v706 = vcombine.high %v553, %v694
      %v708 = vunpack.c.l.s4 1983009808
      %v709 = vunpack.c.0.s8 %v708
      %v710 = vlaneseq
      %v711 = vshrl.u32 %v710, 7
      %v712 = vsub.s32 %v709, %v711
      %v713 = vrot.slane %v705, %v712
      %v715 = vunpack.c.l.s4 1983009808
      %v716 = vunpack.c.0.s8 %v715
      %v717 = vlaneseq
      %v718 = vshrl.u32 %v717, 7
      %v719 = vsub.s32 %v716, %v718
      %v720 = vrot.slane %v706, %v719
      %v721 = vcombine.low %v688, %v700
      %v722 = vcombine.high %v688, %v700
      %v724 = vunpack.c.l.s4 1983009808
      %v725 = vunpack.c.0.s8 %v724
      %v726 = vlaneseq
      %v727 = vshrl.u32 %v726, 7
      %v728 = vsub.s32 %v725, %v727
      %v729 = vrot.slane %v721, %v728
      %v731 = vunpack.c.l.s4 1983009808
      %v732 = vunpack.c.0.s8 %v731
      %v733 = vlaneseq
      %v734 = vshrl.u32 %v733, 7
      %v735 = vsub.s32 %v732, %v734
      %v736 = vrot.slane %v722, %v735
      %v737 = vcombine.low %v713, %v729
      %v738 = vcombine.high %v713, %v729
      %v740 = vunpack.c.l.s4 1934713408
      %v741 = vunpack.c.0.s8 %v740
      %v742 = vlaneseq
      %v743 = vshrl.u32 %v742, 7
      %v744 = vsub.s32 %v741, %v743
      %v745 = vrot.slane %v737, %v744
      %v747 = vunpack.c.l.s4 1934713408
      %v748 = vunpack.c.0.s8 %v747
      %v749 = vlaneseq
      %v750 = vshrl.u32 %v749, 7
      %v751 = vsub.s32 %v748, %v750
      %v752 = vrot.slane %v738, %v751
      %v753 = vcombine.low %v720, %v736
      %v754 = vcombine.high %v720, %v736
      %v756 = vunpack.c.l.s4 1934713408
      %v757 = vunpack.c.0.s8 %v756
      %v758 = vlaneseq
      %v759 = vshrl.u32 %v758, 7
      %v760 = vsub.s32 %v757, %v759
      %v761 = vrot.slane %v753, %v760
      %v763 = vunpack.c.l.s4 1934713408
      %v764 = vunpack.c.0.s8 %v763
      %v765 = vlaneseq
      %v766 = vshrl.u32 %v765, 7
      %v767 = vsub.s32 %v764, %v766
      %v768 = vrot.slane %v754, %v767
      %v769 = vcombine.high %v745, 0.0
      %v770 = vcombine.high %v752, 0.0
      %v771 = vcombine.high %v761, 0.0
      %v772 = vcombine.high %v768, 0.0
      %v773 = vcombine.low %v556, %v696
      %v774 = vcombine.high %v556, %v696
      %v776 = vunpack.c.l.s4 1983009808
      %v777 = vunpack.c.0.s8 %v776
      %v778 = vlaneseq
      %v779 = vshrl.u32 %v778, 7
      %v780 = vsub.s32 %v777, %v779
      %v781 = vrot.slane %v773, %v780
      %v783 = vunpack.c.l.s4 1983009808
      %v784 = vunpack.c.0.s8 %v783
      %v785 = vlaneseq
      %v786 = vshrl.u32 %v785, 7
      %v787 = vsub.s32 %v784, %v786
      %v788 = vrot.slane %v774, %v787
      %v789 = vcombine.low %v690, %v702
      %v790 = vcombine.high %v690, %v702
      %v792 = vunpack.c.l.s4 1983009808
      %v793 = vunpack.c.0.s8 %v792
      %v794 = vlaneseq
      %v795 = vshrl.u32 %v794, 7
      %v796 = vsub.s32 %v793, %v795
      %v797 = vrot.slane %v789, %v796
      %v799 = vunpack.c.l.s4 1983009808
      %v800 = vunpack.c.0.s8 %v799
      %v801 = vlaneseq
      %v802 = vshrl.u32 %v801, 7
      %v803 = vsub.s32 %v800, %v802
      %v804 = vrot.slane %v790, %v803
      %v805 = vcombine.low %v781, %v797
      %v806 = vcombine.high %v781, %v797
      %v808 = vunpack.c.l.s4 1934713408
      %v809 = vunpack.c.0.s8 %v808
      %v810 = vlaneseq
      %v811 = vshrl.u32 %v810, 7
      %v812 = vsub.s32 %v809, %v811
      %v813 = vrot.slane %v805, %v812
      %v815 = vunpack.c.l.s4 1934713408
      %v816 = vunpack.c.0.s8 %v815
      %v817 = vlaneseq
      %v818 = vshrl.u32 %v817, 7
      %v819 = vsub.s32 %v816, %v818
      %v820 = vrot.slane %v806, %v819
      %v821 = vcombine.low %v788, %v804
      %v822 = vcombine.high %v788, %v804
      %v824 = vunpack.c.l.s4 1934713408
      %v825 = vunpack.c.0.s8 %v824
      %v826 = vlaneseq
      %v827 = vshrl.u32 %v826, 7
      %v828 = vsub.s32 %v825, %v827
      %v829 = vrot.slane %v821, %v828
      %v831 = vunpack.c.l.s4 1934713408
      %v832 = vunpack.c.0.s8 %v831
      %v833 = vlaneseq
      %v834 = vshrl.u32 %v833, 7
      %v835 = vsub.s32 %v832, %v834
      %v836 = vrot.slane %v822, %v835
      %v837 = vcombine.high %v813, 0.0
      %v838 = vcombine.high %v820, 0.0
      %v839 = vcombine.high %v829, 0.0
      %v840 = vcombine.high %v836, 0.0
      %v841 = vcombine.low %v745, %v752
      %v843 = vunpack.c.l.s4 1983009808
      %v844 = vunpack.c.0.s8 %v843
      %v845 = vlaneseq
      %v846 = vshrl.u32 %v845, 7
      %v847 = vsub.s32 %v844, %v846
      %v848 = vrot.slane %v841, %v847
      %v849 = vcombine.low %v769, %v770
      %v851 = vunpack.c.l.s4 1983009808
      %v852 = vunpack.c.0.s8 %v851
      %v853 = vlaneseq
      %v854 = vshrl.u32 %v853, 7
      %v855 = vsub.s32 %v852, %v854
      %v856 = vrot.slane %v849, %v855
      %v857 = vcombine.low %v761, %v768
      %v859 = vunpack.c.l.s4 1983009808
      %v860 = vunpack.c.0.s8 %v859
      %v861 = vlaneseq
      %v862 = vshrl.u32 %v861, 7
      %v863 = vsub.s32 %v860, %v862
      %v864 = vrot.slane %v857, %v863
      %v865 = vcombine.low %v771, %v772
      %v867 = vunpack.c.l.s4 1983009808
      %v868 = vunpack.c.0.s8 %v867
      %v869 = vlaneseq
      %v870 = vshrl.u32 %v869, 7
      %v871 = vsub.s32 %v868, %v870
      %v872 = vrot.slane %v865, %v871
      %v873 = vcombine.low %v848, %v856
      %v874 = vcombine.high %v848, %v856
      %v876 = vunpack.c.l.s4 1934713408
      %v877 = vunpack.c.0.s8 %v876
      %v878 = vlaneseq
      %v879 = vshrl.u32 %v878, 7
      %v880 = vsub.s32 %v877, %v879
      %v881 = vrot.slane %v873, %v880
      %v883 = vunpack.c.l.s4 1934713408
      %v884 = vunpack.c.0.s8 %v883
      %v885 = vlaneseq
      %v886 = vshrl.u32 %v885, 7
      %v887 = vsub.s32 %v884, %v886
      %v888 = vrot.slane %v874, %v887
      %v889 = vcombine.low %v864, %v872
      %v890 = vcombine.high %v864, %v872
      %v892 = vunpack.c.l.s4 1934713408
      %v893 = vunpack.c.0.s8 %v892
      %v894 = vlaneseq
      %v895 = vshrl.u32 %v894, 7
      %v896 = vsub.s32 %v893, %v895
      %v897 = vrot.slane %v889, %v896
      %v899 = vunpack.c.l.s4 1934713408
      %v900 = vunpack.c.0.s8 %v899
      %v901 = vlaneseq
      %v902 = vshrl.u32 %v901, 7
      %v903 = vsub.s32 %v900, %v902
      %v904 = vrot.slane %v890, %v903
      %v905 = vcombine.low %v881, %v897
      %v906 = vcombine.high %v881, %v897
      %v907 = vcombine.low %v888, %v904
      %v908 = vcombine.high %v888, %v904
      %v909 = vcombine.low %v813, %v820
      %v911 = vunpack.c.l.s4 1983009808
      %v912 = vunpack.c.0.s8 %v911
      %v913 = vlaneseq
      %v914 = vshrl.u32 %v913, 7
      %v915 = vsub.s32 %v912, %v914
      %v916 = vrot.slane %v909, %v915
      %v917 = vcombine.low %v837, %v838
      %v919 = vunpack.c.l.s4 1983009808
      %v920 = vunpack.c.0.s8 %v919
      %v921 = vlaneseq
      %v922 = vshrl.u32 %v921, 7
      %v923 = vsub.s32 %v920, %v922
      %v924 = vrot.slane %v917, %v923
      %v925 = vcombine.low %v829, %v836
      %v927 = vunpack.c.l.s4 1983009808
      %v928 = vunpack.c.0.s8 %v927
      %v929 = vlaneseq
      %v930 = vshrl.u32 %v929, 7
      %v931 = vsub.s32 %v928, %v930
      %v932 = vrot.slane %v925, %v931
      %v933 = vcombine.low %v839, %v840
      %v935 = vunpack.c.l.s4 1983009808
      %v936 = vunpack.c.0.s8 %v935
      %v937 = vlaneseq
      %v938 = vshrl.u32 %v937, 7
      %v939 = vsub.s32 %v936, %v938
      %v940 = vrot.slane %v933, %v939
      %v941 = vcombine.low %v916, %v924
      %v942 = vcombine.high %v916, %v924
      %v944 = vunpack.c.l.s4 1934713408
      %v945 = vunpack.c.0.s8 %v944
      %v946 = vlaneseq
      %v947 = vshrl.u32 %v946, 7
      %v948 = vsub.s32 %v945, %v947
      %v949 = vrot.slane %v941, %v948
      %v951 = vunpack.c.l.s4 1934713408
      %v952 = vunpack.c.0.s8 %v951
      %v953 = vlaneseq
      %v954 = vshrl.u32 %v953, 7
      %v955 = vsub.s32 %v952, %v954
      %v956 = vrot.slane %v942, %v955
      %v957 = vcombine.low %v932, %v940
      %v958 = vcombine.high %v932, %v940
      %v960 = vunpack.c.l.s4 1934713408
      %v961 = vunpack.c.0.s8 %v960
      %v962 = vlaneseq
      %v963 = vshrl.u32 %v962, 7
      %v964 = vsub.s32 %v961, %v963
      %v965 = vrot.slane %v957, %v964
      %v967 = vunpack.c.l.s4 1934713408
      %v968 = vunpack.c.0.s8 %v967
      %v969 = vlaneseq
      %v970 = vshrl.u32 %v969, 7
      %v971 = vsub.s32 %v968, %v970
      %v972 = vrot.slane %v958, %v971
      %v973 = vcombine.low %v949, %v965
      %v974 = vcombine.high %v949, %v965
      %v975 = vcombine.low %v956, %v972
      %v976 = vcombine.high %v956, %v972
      %v977 = vpack.c.bf16 %v973, %v905
      %v978 = vpack.c.bf16 %v974, %v906
      %v979 = vpack.c.bf16 %v975, %v907
      %v980 = vpack.c.bf16 %v976, %v908
      %v985 = vunpack.c.l.b16 %v977
      %v986 = vunpack.c.h.b16 %v977
      %v987 = vunpack.c.l.b16 %v978
      %v988 = vunpack.c.h.b16 %v978
      %v989 = vunpack.c.l.b16 %v979
      %v990 = vunpack.c.h.b16 %v979
      %v991 = vunpack.c.l.b16 %v980
      %v992 = vunpack.c.h.b16 %v980
      %v993 = vpack.c.b16 %v985, %v985
      %v994 = vpack.c.b16 %v986, %v986
      %v995 = vpack.c.b16 %v987, %v987
      %v996 = vpack.c.b16 %v988, %v988
      %v997 = vpack.c.b16 %v989, %v989
      %v998 = vpack.c.b16 %v990, %v990
      %v999 = vpack.c.b16 %v991, %v991
      %v1000 = vpack.c.b16 %v992, %v992
      %vm1009 = vcmask 60416
      %1010 = vst.msk [vmem:[%s369] sm:$0xf] %vm1009, %v993
      %1011 = vst.msk [vmem:[%s369 + $0x4] sm:$0xf] %vm1009, %v994
      %1012 = vst.msk [vmem:[%s369 + $0x8] sm:$0xf] %vm1009, %v995
      %1013 = vst.msk [vmem:[%s369 + $0xc] sm:$0xf] %vm1009, %v996
      %1014 = vst.msk [vmem:[%s369 + $0x10] sm:$0xf] %vm1009, %v997
      %1015 = vst.msk [vmem:[%s369 + $0x14] sm:$0xf] %vm1009, %v998
      %1016 = vst.msk [vmem:[%s369 + $0x18] sm:$0xf] %vm1009, %v999
      %1017 = vst.msk [vmem:[%s369 + $0x1c] sm:$0xf] %vm1009, %v1000
      %1020 = vrot.lane.b32.xlu0 %v610, 120
      %v1021 = vpop.permute.xlu0 %1020
      %1022 = vrot.lane.b32.xlu0 %v613, 120
      %v1023 = vpop.permute.xlu0 %1022
      %1026 = vrot.lane.b32.xlu0 %v610, 112
      %v1027 = vpop.permute.xlu0 %1026
      %1028 = vrot.lane.b32.xlu0 %v613, 112
      %v1029 = vpop.permute.xlu0 %1028
      %1032 = vrot.lane.b32.xlu0 %v610, 104
      %v1033 = vpop.permute.xlu0 %1032
      %1034 = vrot.lane.b32.xlu0 %v613, 104
      %v1035 = vpop.permute.xlu0 %1034
      %v1038 = vcombine.low %v610, %v1027
      %v1039 = vcombine.high %v610, %v1027
      %v1041 = vunpack.c.l.s4 1983009808
      %v1042 = vunpack.c.0.s8 %v1041
      %v1043 = vlaneseq
      %v1044 = vshrl.u32 %v1043, 7
      %v1045 = vsub.s32 %v1042, %v1044
      %v1046 = vrot.slane %v1038, %v1045
      %v1048 = vunpack.c.l.s4 1983009808
      %v1049 = vunpack.c.0.s8 %v1048
      %v1050 = vlaneseq
      %v1051 = vshrl.u32 %v1050, 7
      %v1052 = vsub.s32 %v1049, %v1051
      %v1053 = vrot.slane %v1039, %v1052
      %v1054 = vcombine.low %v1021, %v1033
      %v1055 = vcombine.high %v1021, %v1033
      %v1057 = vunpack.c.l.s4 1983009808
      %v1058 = vunpack.c.0.s8 %v1057
      %v1059 = vlaneseq
      %v1060 = vshrl.u32 %v1059, 7
      %v1061 = vsub.s32 %v1058, %v1060
      %v1062 = vrot.slane %v1054, %v1061
      %v1064 = vunpack.c.l.s4 1983009808
      %v1065 = vunpack.c.0.s8 %v1064
      %v1066 = vlaneseq
      %v1067 = vshrl.u32 %v1066, 7
      %v1068 = vsub.s32 %v1065, %v1067
      %v1069 = vrot.slane %v1055, %v1068
      %v1070 = vcombine.low %v1046, %v1062
      %v1071 = vcombine.high %v1046, %v1062
      %v1073 = vunpack.c.l.s4 1934713408
      %v1074 = vunpack.c.0.s8 %v1073
      %v1075 = vlaneseq
      %v1076 = vshrl.u32 %v1075, 7
      %v1077 = vsub.s32 %v1074, %v1076
      %v1078 = vrot.slane %v1070, %v1077
      %v1080 = vunpack.c.l.s4 1934713408
      %v1081 = vunpack.c.0.s8 %v1080
      %v1082 = vlaneseq
      %v1083 = vshrl.u32 %v1082, 7
      %v1084 = vsub.s32 %v1081, %v1083
      %v1085 = vrot.slane %v1071, %v1084
      %v1086 = vcombine.low %v1053, %v1069
      %v1087 = vcombine.high %v1053, %v1069
      %v1089 = vunpack.c.l.s4 1934713408
      %v1090 = vunpack.c.0.s8 %v1089
      %v1091 = vlaneseq
      %v1092 = vshrl.u32 %v1091, 7
      %v1093 = vsub.s32 %v1090, %v1092
      %v1094 = vrot.slane %v1086, %v1093
      %v1096 = vunpack.c.l.s4 1934713408
      %v1097 = vunpack.c.0.s8 %v1096
      %v1098 = vlaneseq
      %v1099 = vshrl.u32 %v1098, 7
      %v1100 = vsub.s32 %v1097, %v1099
      %v1101 = vrot.slane %v1087, %v1100
      %v1102 = vcombine.high %v1078, 0.0
      %v1103 = vcombine.high %v1085, 0.0
      %v1104 = vcombine.high %v1094, 0.0
      %v1105 = vcombine.high %v1101, 0.0
      %v1106 = vcombine.low %v613, %v1029
      %v1107 = vcombine.high %v613, %v1029
      %v1109 = vunpack.c.l.s4 1983009808
      %v1110 = vunpack.c.0.s8 %v1109
      %v1111 = vlaneseq
      %v1112 = vshrl.u32 %v1111, 7
      %v1113 = vsub.s32 %v1110, %v1112
      %v1114 = vrot.slane %v1106, %v1113
      %v1116 = vunpack.c.l.s4 1983009808
      %v1117 = vunpack.c.0.s8 %v1116
      %v1118 = vlaneseq
      %v1119 = vshrl.u32 %v1118, 7
      %v1120 = vsub.s32 %v1117, %v1119
      %v1121 = vrot.slane %v1107, %v1120
      %v1122 = vcombine.low %v1023, %v1035
      %v1123 = vcombine.high %v1023, %v1035
      %v1125 = vunpack.c.l.s4 1983009808
      %v1126 = vunpack.c.0.s8 %v1125
      %v1127 = vlaneseq
      %v1128 = vshrl.u32 %v1127, 7
      %v1129 = vsub.s32 %v1126, %v1128
      %v1130 = vrot.slane %v1122, %v1129
      %v1132 = vunpack.c.l.s4 1983009808
      %v1133 = vunpack.c.0.s8 %v1132
      %v1134 = vlaneseq
      %v1135 = vshrl.u32 %v1134, 7
      %v1136 = vsub.s32 %v1133, %v1135
      %v1137 = vrot.slane %v1123, %v1136
      %v1138 = vcombine.low %v1114, %v1130
      %v1139 = vcombine.high %v1114, %v1130
      %v1141 = vunpack.c.l.s4 1934713408
      %v1142 = vunpack.c.0.s8 %v1141
      %v1143 = vlaneseq
      %v1144 = vshrl.u32 %v1143, 7
      %v1145 = vsub.s32 %v1142, %v1144
      %v1146 = vrot.slane %v1138, %v1145
      %v1148 = vunpack.c.l.s4 1934713408
      %v1149 = vunpack.c.0.s8 %v1148
      %v1150 = vlaneseq
      %v1151 = vshrl.u32 %v1150, 7
      %v1152 = vsub.s32 %v1149, %v1151
      %v1153 = vrot.slane %v1139, %v1152
      %v1154 = vcombine.low %v1121, %v1137
      %v1155 = vcombine.high %v1121, %v1137
      %v1157 = vunpack.c.l.s4 1934713408
      %v1158 = vunpack.c.0.s8 %v1157
      %v1159 = vlaneseq
      %v1160 = vshrl.u32 %v1159, 7
      %v1161 = vsub.s32 %v1158, %v1160
      %v1162 = vrot.slane %v1154, %v1161
      %v1164 = vunpack.c.l.s4 1934713408
      %v1165 = vunpack.c.0.s8 %v1164
      %v1166 = vlaneseq
      %v1167 = vshrl.u32 %v1166, 7
      %v1168 = vsub.s32 %v1165, %v1167
      %v1169 = vrot.slane %v1155, %v1168
      %v1170 = vcombine.high %v1146, 0.0
      %v1171 = vcombine.high %v1153, 0.0
      %v1172 = vcombine.high %v1162, 0.0
      %v1173 = vcombine.high %v1169, 0.0
      %v1174 = vcombine.low %v1078, %v1085
      %v1176 = vunpack.c.l.s4 1983009808
      %v1177 = vunpack.c.0.s8 %v1176
      %v1178 = vlaneseq
      %v1179 = vshrl.u32 %v1178, 7
      %v1180 = vsub.s32 %v1177, %v1179
      %v1181 = vrot.slane %v1174, %v1180
      %v1182 = vcombine.low %v1102, %v1103
      %v1184 = vunpack.c.l.s4 1983009808
      %v1185 = vunpack.c.0.s8 %v1184
      %v1186 = vlaneseq
      %v1187 = vshrl.u32 %v1186, 7
      %v1188 = vsub.s32 %v1185, %v1187
      %v1189 = vrot.slane %v1182, %v1188
      %v1190 = vcombine.low %v1094, %v1101
      %v1192 = vunpack.c.l.s4 1983009808
      %v1193 = vunpack.c.0.s8 %v1192
      %v1194 = vlaneseq
      %v1195 = vshrl.u32 %v1194, 7
      %v1196 = vsub.s32 %v1193, %v1195
      %v1197 = vrot.slane %v1190, %v1196
      %v1198 = vcombine.low %v1104, %v1105
      %v1200 = vunpack.c.l.s4 1983009808
      %v1201 = vunpack.c.0.s8 %v1200
      %v1202 = vlaneseq
      %v1203 = vshrl.u32 %v1202, 7
      %v1204 = vsub.s32 %v1201, %v1203
      %v1205 = vrot.slane %v1198, %v1204
      %v1206 = vcombine.low %v1181, %v1189
      %v1207 = vcombine.high %v1181, %v1189
      %v1209 = vunpack.c.l.s4 1934713408
      %v1210 = vunpack.c.0.s8 %v1209
      %v1211 = vlaneseq
      %v1212 = vshrl.u32 %v1211, 7
      %v1213 = vsub.s32 %v1210, %v1212
      %v1214 = vrot.slane %v1206, %v1213
      %v1216 = vunpack.c.l.s4 1934713408
      %v1217 = vunpack.c.0.s8 %v1216
      %v1218 = vlaneseq
      %v1219 = vshrl.u32 %v1218, 7
      %v1220 = vsub.s32 %v1217, %v1219
      %v1221 = vrot.slane %v1207, %v1220
      %v1222 = vcombine.low %v1197, %v1205
      %v1223 = vcombine.high %v1197, %v1205
      %v1225 = vunpack.c.l.s4 1934713408
      %v1226 = vunpack.c.0.s8 %v1225
      %v1227 = vlaneseq
      %v1228 = vshrl.u32 %v1227, 7
      %v1229 = vsub.s32 %v1226, %v1228
      %v1230 = vrot.slane %v1222, %v1229
      %v1232 = vunpack.c.l.s4 1934713408
      %v1233 = vunpack.c.0.s8 %v1232
      %v1234 = vlaneseq
      %v1235 = vshrl.u32 %v1234, 7
      %v1236 = vsub.s32 %v1233, %v1235
      %v1237 = vrot.slane %v1223, %v1236
      %v1238 = vcombine.low %v1214, %v1230
      %v1239 = vcombine.high %v1214, %v1230
      %v1240 = vcombine.low %v1221, %v1237
      %v1241 = vcombine.high %v1221, %v1237
      %v1242 = vcombine.low %v1146, %v1153
      %v1244 = vunpack.c.l.s4 1983009808
      %v1245 = vunpack.c.0.s8 %v1244
      %v1246 = vlaneseq
      %v1247 = vshrl.u32 %v1246, 7
      %v1248 = vsub.s32 %v1245, %v1247
      %v1249 = vrot.slane %v1242, %v1248
      %v1250 = vcombine.low %v1170, %v1171
      %v1252 = vunpack.c.l.s4 1983009808
      %v1253 = vunpack.c.0.s8 %v1252
      %v1254 = vlaneseq
      %v1255 = vshrl.u32 %v1254, 7
      %v1256 = vsub.s32 %v1253, %v1255
      %v1257 = vrot.slane %v1250, %v1256
      %v1258 = vcombine.low %v1162, %v1169
      %v1260 = vunpack.c.l.s4 1983009808
      %v1261 = vunpack.c.0.s8 %v1260
      %v1262 = vlaneseq
      %v1263 = vshrl.u32 %v1262, 7
      %v1264 = vsub.s32 %v1261, %v1263
      %v1265 = vrot.slane %v1258, %v1264
      %v1266 = vcombine.low %v1172, %v1173
      %v1268 = vunpack.c.l.s4 1983009808
      %v1269 = vunpack.c.0.s8 %v1268
      %v1270 = vlaneseq
      %v1271 = vshrl.u32 %v1270, 7
      %v1272 = vsub.s32 %v1269, %v1271
      %v1273 = vrot.slane %v1266, %v1272
      %v1274 = vcombine.low %v1249, %v1257
      %v1275 = vcombine.high %v1249, %v1257
      %v1277 = vunpack.c.l.s4 1934713408
      %v1278 = vunpack.c.0.s8 %v1277
      %v1279 = vlaneseq
      %v1280 = vshrl.u32 %v1279, 7
      %v1281 = vsub.s32 %v1278, %v1280
      %v1282 = vrot.slane %v1274, %v1281
      %v1284 = vunpack.c.l.s4 1934713408
      %v1285 = vunpack.c.0.s8 %v1284
      %v1286 = vlaneseq
      %v1287 = vshrl.u32 %v1286, 7
      %v1288 = vsub.s32 %v1285, %v1287
      %v1289 = vrot.slane %v1275, %v1288
      %v1290 = vcombine.low %v1265, %v1273
      %v1291 = vcombine.high %v1265, %v1273
      %v1293 = vunpack.c.l.s4 1934713408
      %v1294 = vunpack.c.0.s8 %v1293
      %v1295 = vlaneseq
      %v1296 = vshrl.u32 %v1295, 7
      %v1297 = vsub.s32 %v1294, %v1296
      %v1298 = vrot.slane %v1290, %v1297
      %v1300 = vunpack.c.l.s4 1934713408
      %v1301 = vunpack.c.0.s8 %v1300
      %v1302 = vlaneseq
      %v1303 = vshrl.u32 %v1302, 7
      %v1304 = vsub.s32 %v1301, %v1303
      %v1305 = vrot.slane %v1291, %v1304
      %v1306 = vcombine.low %v1282, %v1298
      %v1307 = vcombine.high %v1282, %v1298
      %v1308 = vcombine.low %v1289, %v1305
      %v1309 = vcombine.high %v1289, %v1305
      %v1310 = vpack.c.bf16 %v1306, %v1238
      %v1311 = vpack.c.bf16 %v1307, %v1239
      %v1312 = vpack.c.bf16 %v1308, %v1240
      %v1313 = vpack.c.bf16 %v1309, %v1241
      %v1318 = vunpack.c.l.b16 %v1310
      %v1319 = vunpack.c.h.b16 %v1310
      %v1320 = vunpack.c.l.b16 %v1311
      %v1321 = vunpack.c.h.b16 %v1311
      %v1322 = vunpack.c.l.b16 %v1312
      %v1323 = vunpack.c.h.b16 %v1312
      %v1324 = vunpack.c.l.b16 %v1313
      %v1325 = vunpack.c.h.b16 %v1313
      %v1326 = vpack.c.b16 %v1318, %v1318
      %v1327 = vpack.c.b16 %v1319, %v1319
      %v1328 = vpack.c.b16 %v1320, %v1320
      %v1329 = vpack.c.b16 %v1321, %v1321
      %v1330 = vpack.c.b16 %v1322, %v1322
      %v1331 = vpack.c.b16 %v1323, %v1323
      %v1332 = vpack.c.b16 %v1324, %v1324
      %v1333 = vpack.c.b16 %v1325, %v1325
      %1342 = vst.msk [vmem:[%s387] sm:$0xf] %vm1009, %v1326
      %1343 = vst.msk [vmem:[%s387 + $0x4] sm:$0xf] %vm1009, %v1327
      %1344 = vst.msk [vmem:[%s387 + $0x8] sm:$0xf] %vm1009, %v1328
      %1345 = vst.msk [vmem:[%s387 + $0xc] sm:$0xf] %vm1009, %v1329
      %1346 = vst.msk [vmem:[%s387 + $0x10] sm:$0xf] %vm1009, %v1330
      %1347 = vst.msk [vmem:[%s387 + $0x14] sm:$0xf] %vm1009, %v1331
      %1348 = vst.msk [vmem:[%s387 + $0x18] sm:$0xf] %vm1009, %v1332
      %1349 = vst.msk [vmem:[%s387 + $0x1c] sm:$0xf] %vm1009, %v1333
      %v1350 = vpack.c.bf16 %v671, %v671
      %v1351 = vpack.c.bf16 %v674, %v674
      %v1352 = vpack.c.bf16 %v679, %v679
      %v1353 = vpack.c.bf16 %v682, %v682
      %vm1354 = vcmask 125952
      %1355 = vst.msk [vmem:[%s378] sm:$0xf] %vm1354, %v1350
      %1356 = vst.msk [vmem:[%s378 + $0x4] sm:$0xf] %vm1354, %v1351
      %1357 = vst.msk [vmem:[%s378 + $0x8] sm:$0xf] %vm1354, %v1352
      %1358 = vst.msk [vmem:[%s378 + $0xc] sm:$0xf] %vm1354, %v1353
      %s1359 = smul.u32 2, %s25
      %p1360 = scmp.lt.s32.totalorder %s24, 1
      %s1361 = scalar_select %p1360, %s24, 1
      %p1362 = scmp.lt.s32.totalorder %s1359, 1
      %s1363 = scalar_select %p1362, %s1359, 1
      %s1364 = smul.addr %s1361, 8
      %s1365 = sadd.s32 %s1363, %s1364
      %s1366 = smul.addr %s1365, 4
      %s1367 = scalar_lea.vmem %s6, %s1366
      %p1368 = scmp.lt.s32.totalorder %s24, 1
      %s1369 = scalar_select %p1368, %s24, 1
      %p1370 = scmp.lt.s32.totalorder %s25, 0
      %s1371 = scalar_select %p1370, %s25, 0
      %s1372 = smul.addr %s1369, 4
      %s1373 = sadd.s32 %s1371, %s1372
      %s1374 = smul.addr %s1373, 4
      %s1375 = scalar_lea.vmem %s7, %s1374
      %s1376 = smul.u32 2, %s25
      %p1377 = scmp.lt.s32.totalorder %s24, 1
      %s1378 = scalar_select %p1377, %s24, 1
      %p1379 = scmp.lt.s32.totalorder %s1376, 1
      %s1380 = scalar_select %p1379, %s1376, 1
      %s1381 = smul.addr %s1378, 8
      %s1382 = sadd.s32 %s1380, %s1381
      %s1383 = smul.addr %s1382, 4
      %s1384 = scalar_lea.vmem %s8, %s1383
      // Predicated region
      $region45: #{transformer_forward.6} parent=43 // pred_check
        %p1385 = pneg %p185
      $region46: #{transformer_forward.6} parent=43 // pred_check_branch
        %1387 = sbr.rel (%p1385) target = $region48
      $region47: #{transformer_forward.6} parent=43 // pred_region
        %s1388 = smul.u32 2, %s25
      $region48: #{transformer_forward.6} parent=43 // pred_fallthru
        _
      // Predicated region
      $region49: #{transformer_forward.6} parent=43 // pred_check
        %p1389 = pneg %p213
      $region50: #{transformer_forward.6} parent=43 // pred_check_branch
        %1391 = sbr.rel (%p1389) target = $region52
      $region51: #{transformer_forward.6} parent=43 // pred_region
        _
      $region52: #{transformer_forward.6} parent=43 // pred_fallthru
        _
      // Predicated region
      $region53: #{transformer_forward.6} parent=43 // pred_check
        %p1392 = pneg %p241
      $region54: #{transformer_forward.6} parent=43 // pred_check_branch
        %1394 = sbr.rel (%p1392) target = $region56
      $region55: #{transformer_forward.6} parent=43 // pred_region
        %s1395 = smul.u32 2, %s25
      $region56: #{transformer_forward.6} parent=43 // pred_fallthru
        _
    $region44: #{transformer_forward.6} parent=5 // pred_fallthru
      _
    %p1396 = scmp.le.s32.totalorder 2, %s15
    // Predicated region
    $region57: #{transformer_forward.6} parent=5 // pred_check
      %p1397 = pneg %p1396
    $region58: #{transformer_forward.6} parent=5 // pred_check_branch
      %1399 = sbr.rel (%p1397) target = $region60
    $region59: #{transformer_forward.6} parent=5 // pred_region
      %s1400 = ssub.s32 %s15, 2
      // Predicated region
      $region61: #{transformer_forward.6} parent=59 // pred_check
        %p1401 = pneg %p191
      $region62: #{transformer_forward.6} parent=59 // pred_check_branch
        %1403 = sbr.rel (%p1401) target = $region64
      $region63: #{transformer_forward.6} parent=59 // pred_region
        %s1404 = smul.u32 2, %s27
        %p1405 = scmp.lt.s32.totalorder %s26, 1
        %s1406 = scalar_select %p1405, %s26, 1
        %p1407 = scmp.lt.s32.totalorder %s1404, 1
        %s1408 = scalar_select %p1407, %s1404, 1
        %s1409 = smul.addr %s1406, 8
        %s1410 = sadd.s32 %s1408, %s1409
        %s1411 = smul.addr %s1410, 4
        %s1412 = scalar_lea.vmem %s6, %s1411
      $region64: #{transformer_forward.6} parent=59 // pred_fallthru
        _
      // Predicated region
      $region65: #{transformer_forward.6} parent=59 // pred_check
        %p1413 = pneg %p219
      $region66: #{transformer_forward.6} parent=59 // pred_check_branch
        %1415 = sbr.rel (%p1413) target = $region68
      $region67: #{transformer_forward.6} parent=59 // pred_region
        %p1416 = scmp.lt.s32.totalorder %s26, 1
        %s1417 = scalar_select %p1416, %s26, 1
        %p1418 = scmp.lt.s32.totalorder %s27, 0
        %s1419 = scalar_select %p1418, %s27, 0
        %s1420 = smul.addr %s1417, 4
        %s1421 = sadd.s32 %s1419, %s1420
        %s1422 = smul.addr %s1421, 4
        %s1423 = scalar_lea.vmem %s7, %s1422
      $region68: #{transformer_forward.6} parent=59 // pred_fallthru
        _
      // Predicated region
      $region69: #{transformer_forward.6} parent=59 // pred_check
        %p1424 = pneg %p247
      $region70: #{transformer_forward.6} parent=59 // pred_check_branch
        %1426 = sbr.rel (%p1424) target = $region72
      $region71: #{transformer_forward.6} parent=59 // pred_region
        %s1427 = smul.u32 2, %s27
        %p1428 = scmp.lt.s32.totalorder %s26, 1
        %s1429 = scalar_select %p1428, %s26, 1
        %p1430 = scmp.lt.s32.totalorder %s1427, 1
        %s1431 = scalar_select %p1430, %s1427, 1
        %s1432 = smul.addr %s1429, 8
        %s1433 = sadd.s32 %s1431, %s1432
        %s1434 = smul.addr %s1433, 4
        %s1435 = scalar_lea.vmem %s8, %s1434
      $region72: #{transformer_forward.6} parent=59 // pred_fallthru
        _
    $region60: #{transformer_forward.6} parent=5 // pred_fallthru
      _
  $region6: #{transformer_forward.6} parent=0 // loop_footer
    %s19 = sadd.s32 1, %s15
  $region7: #{transformer_forward.6} parent=0 // loop_footer_branch
    %14 = sbr.rel target = $region3
  $region8: #{transformer_forward.6} parent=0 // loop_exit
    _

// kernel: transformer_forward.9
$region0: #{transformer_forward.9}
  #allocation0 [shape = 'u32[]', space=smem, size = 0x4, offset = 0x4, fixed_abs, tag = 'smem constant byte address 0x4 - core index']
  #allocation1 [shape = 'u32[144,128]{1,0:T(1,128)}', space=vmem, size = 0x12000, scoped, tag = 'internal scratch']
  %s0 = inlined_call_operand.vmem [shape: f32[2,16,32], index: 0, kind: input, shape index: {}]
  %s1 = inlined_call_operand.vmem [shape: f32[1,32], index: 1, kind: input, shape index: {}]
  %s2 = inlined_call_operand.vmem [shape: f32[1,32], index: 2, kind: input, shape index: {}]
  %s3 = inlined_call_operand.vmem [shape: bf16[32,32], index: 3, kind: input, shape index: {}]
  %s4 = inlined_call_operand.vmem [shape: bf16[32,32], index: 4, kind: input, shape index: {}]
  %s5 = inlined_call_operand.vmem [shape: bf16[32,32], index: 5, kind: input, shape index: {}]
  %s6 = inlined_call_operand.vmem [shape: bf16[2,4,16,8], index: 6, kind: output, shape index: {0}]
  %s7 = inlined_call_operand.vmem [shape: bf16[2,4,8,16], index: 7, kind: output, shape index: {1}]
  %s8 = inlined_call_operand.vmem [shape: bf16[2,4,16,8], index: 8, kind: output, shape index: {2}]
  %9 = xla_tuple %s6, %s7, %s8
  %s10 = sld [smem:[#allocation0]]
  $region73: #{transformer_forward.9} parent=0
    _
  %s12 = ssub.s32 1, %s10
  %s13 = scalar_select 0, %s12, %s10
  loop: start=0, step=1, limit=4
  $region2: #{transformer_forward.9} parent=0 // loop_pre_header
    _
  $region3: #{transformer_forward.9} parent=0 // loop_header
    %s15 = sphi 0, %s19
    %p16 = scmp.ge.s32.totalorder %s15, 4
    %s22 = sphi 0, %s34
    %s23 = sphi 0, %s30
    %s24 = sphi 0, %s22
    %s25 = sphi 0, %s23
    %s26 = sphi 0, %s24
    %s27 = sphi 0, %s25
    %s39 = sphi 0, %s41
    %s42 = sphi 0, %s39
    %s43 = sphi 0, %s42
    %s59 = sphi 0, %s43
    %s63 = sphi 0, %s63
    %s65 = sphi 0, %s63
    %s66 = sphi 0, %s65
    %s80 = sphi 0, %s66
    %s84 = sphi 0, %s84
    %s86 = sphi 0, %s84
    %s87 = sphi 0, %s86
    %s101 = sphi 0, %s87
    %s105 = sphi 0, %s105
    %s107 = sphi 0, %s105
    %s108 = sphi 0, %s107
    %s122 = sphi 0, %s108
    %s126 = sphi 0, %s126
    %s128 = sphi 0, %s126
    %s129 = sphi 0, %s128
    %s143 = sphi 0, %s129
    %s147 = sphi 0, %s147
    %s149 = sphi 0, %s147
    %s150 = sphi 0, %s149
    %s164 = sphi 0, %s150
    %s172 = sphi 0, %s174
    %s175 = sphi 0, %s172
    %s176 = sphi 0, %s175
    %s192 = sphi 0, %s176
    %s200 = sphi 0, %s202
    %s203 = sphi 0, %s200
    %s204 = sphi 0, %s203
    %s220 = sphi 0, %s204
    %s228 = sphi 0, %s230
    %s231 = sphi 0, %s228
    %s232 = sphi 0, %s231
    %s248 = sphi 0, %s232
  $region4: #{transformer_forward.9} parent=0 // loop_header_branch
    %18 = sbr.rel (%p16) target = $region8
  $region5: #{transformer_forward.9} parent=0 // loop_body
    %s20 = ssub.s32 %s15, 1
    %s21 = ssub.s32 %s15, 2
    %s28 = sadd.s32 1, %s23
    %p29 = scmp.ge.s32.totalorder %s28, 1
    %s30 = scalar_select %p29, 0, %s28
    %s31 = sadd.s32 1, %s22
    %s32 = scalar_select %p29, %s31, %s22
    %p33 = scmp.ge.s32.totalorder %s32, 2
    %s34 = scalar_select %p33, 0, %s32
    %s35 = ssub.s32 %s22, %s34
    %s36 = ssub.s32 %s23, %s30
    %s37 = sor.u32 %s35, %s36
    %p38 = scmp.eq.s32.totalorder %s37, 0
    %s40 = sadd.s32 %s39, 1
    %s41 = scalar_select %p38, %s39, %s40
    %p44 = pneg %p38
    %p45 = scmp.eq.s32.totalorder %s15, 1
    %p46 = por %p44, %p45
    %p47 = scmp.ne.s32.totalorder %s39, %s42
    %p48 = scmp.eq.s32.totalorder %s15, 0
    %p49 = por %p47, %p48
    %p50 = scmp.ne.s32.totalorder %s39, %s42
    %p51 = scmp.eq.s32.totalorder %s20, 1
    %p52 = por %p50, %p51
    %p53 = scmp.ne.s32.totalorder %s42, %s43
    %p54 = scmp.eq.s32.totalorder %s20, 0
    %p55 = por %p53, %p54
    %p56 = scmp.ne.s32.totalorder %s42, %s43
    %p57 = scmp.eq.s32.totalorder %s21, 1
    %p58 = por %p56, %p57
    %p60 = scmp.ne.s32.totalorder %s43, %s59
    %p61 = scmp.eq.s32.totalorder %s21, 0
    %p62 = por %p60, %p61
    %s64 = sadd.s32 %s63, 1
    %p67 = scmp.eq.s32.totalorder %s15, 1
    %p68 = scmp.ne.s32.totalorder %s63, %s65
    %p69 = scmp.eq.s32.totalorder %s15, 0
    %p70 = por %p68, %p69
    %p71 = scmp.ne.s32.totalorder %s63, %s65
    %p72 = scmp.eq.s32.totalorder %s20, 1
    %p73 = por %p71, %p72
    %p74 = scmp.ne.s32.totalorder %s65, %s66
    %p75 = scmp.eq.s32.totalorder %s20, 0
    %p76 = por %p74, %p75
    %p77 = scmp.ne.s32.totalorder %s65, %s66
    %p78 = scmp.eq.s32.totalorder %s21, 1
    %p79 = por %p77, %p78
    %p81 = scmp.ne.s32.totalorder %s66, %s80
    %p82 = scmp.eq.s32.totalorder %s21, 0
    %p83 = por %p81, %p82
    %s85 = sadd.s32 %s84, 1
    %p88 = scmp.eq.s32.totalorder %s15, 1
    %p89 = scmp.ne.s32.totalorder %s84, %s86
    %p90 = scmp.eq.s32.totalorder %s15, 0
    %p91 = por %p89, %p90
    %p92 = scmp.ne.s32.totalorder %s84, %s86
    %p93 = scmp.eq.s32.totalorder %s20, 1
    %p94 = por %p92, %p93
    %p95 = scmp.ne.s32.totalorder %s86, %s87
    %p96 = scmp.eq.s32.totalorder %s20, 0
    %p97 = por %p95, %p96
    %p98 = scmp.ne.s32.totalorder %s86, %s87
    %p99 = scmp.eq.s32.totalorder %s21, 1
    %p100 = por %p98, %p99
    %p102 = scmp.ne.s32.totalorder %s87, %s101
    %p103 = scmp.eq.s32.totalorder %s21, 0
    %p104 = por %p102, %p103
    %s106 = sadd.s32 %s105, 1
    %p109 = scmp.eq.s32.totalorder %s15, 1
    %p110 = scmp.ne.s32.totalorder %s105, %s107
    %p111 = scmp.eq.s32.totalorder %s15, 0
    %p112 = por %p110, %p111
    %p113 = scmp.ne.s32.totalorder %s105, %s107
    %p114 = scmp.eq.s32.totalorder %s20, 1
    %p115 = por %p113, %p114
    %p116 = scmp.ne.s32.totalorder %s107, %s108
    %p117 = scmp.eq.s32.totalorder %s20, 0
    %p118 = por %p116, %p117
    %p119 = scmp.ne.s32.totalorder %s107, %s108
    %p120 = scmp.eq.s32.totalorder %s21, 1
    %p121 = por %p119, %p120
    %p123 = scmp.ne.s32.totalorder %s108, %s122
    %p124 = scmp.eq.s32.totalorder %s21, 0
    %p125 = por %p123, %p124
    %s127 = sadd.s32 %s126, 1
    %p130 = scmp.eq.s32.totalorder %s15, 1
    %p131 = scmp.ne.s32.totalorder %s126, %s128
    %p132 = scmp.eq.s32.totalorder %s15, 0
    %p133 = por %p131, %p132
    %p134 = scmp.ne.s32.totalorder %s126, %s128
    %p135 = scmp.eq.s32.totalorder %s20, 1
    %p136 = por %p134, %p135
    %p137 = scmp.ne.s32.totalorder %s128, %s129
    %p138 = scmp.eq.s32.totalorder %s20, 0
    %p139 = por %p137, %p138
    %p140 = scmp.ne.s32.totalorder %s128, %s129
    %p141 = scmp.eq.s32.totalorder %s21, 1
    %p142 = por %p140, %p141
    %p144 = scmp.ne.s32.totalorder %s129, %s143
    %p145 = scmp.eq.s32.totalorder %s21, 0
    %p146 = por %p144, %p145
    %s148 = sadd.s32 %s147, 1
    %p151 = scmp.eq.s32.totalorder %s15, 1
    %p152 = scmp.ne.s32.totalorder %s147, %s149
    %p153 = scmp.eq.s32.totalorder %s15, 0
    %p154 = por %p152, %p153
    %p155 = scmp.ne.s32.totalorder %s147, %s149
    %p156 = scmp.eq.s32.totalorder %s20, 1
    %p157 = por %p155, %p156
    %p158 = scmp.ne.s32.totalorder %s149, %s150
    %p159 = scmp.eq.s32.totalorder %s20, 0
    %p160 = por %p158, %p159
    %p161 = scmp.ne.s32.totalorder %s149, %s150
    %p162 = scmp.eq.s32.totalorder %s21, 1
    %p163 = por %p161, %p162
    %p165 = scmp.ne.s32.totalorder %s150, %s164
    %p166 = scmp.eq.s32.totalorder %s21, 0
    %p167 = por %p165, %p166
    %s168 = ssub.s32 %s22, %s34
    %s169 = ssub.s32 %s23, %s30
    %s170 = sor.u32 %s168, %s169
    %p171 = scmp.eq.s32.totalorder %s170, 0
    %s173 = sadd.s32 %s172, 1
    %s174 = scalar_select %p171, %s172, %s173
    %p177 = pneg %p171
    %p178 = scmp.eq.s32.totalorder %s15, 1
    %p179 = por %p177, %p178
    %p180 = scmp.ne.s32.totalorder %s172, %s175
    %p181 = scmp.eq.s32.totalorder %s15, 0
    %p182 = por %p180, %p181
    %p183 = scmp.ne.s32.totalorder %s172, %s175
    %p184 = scmp.eq.s32.totalorder %s20, 1
    %p185 = por %p183, %p184
    %p186 = scmp.ne.s32.totalorder %s175, %s176
    %p187 = scmp.eq.s32.totalorder %s20, 0
    %p188 = por %p186, %p187
    %p189 = scmp.ne.s32.totalorder %s175, %s176
    %p190 = scmp.eq.s32.totalorder %s21, 1
    %p191 = por %p189, %p190
    %p193 = scmp.ne.s32.totalorder %s176, %s192
    %p194 = scmp.eq.s32.totalorder %s21, 0
    %p195 = por %p193, %p194
    %s196 = ssub.s32 %s22, %s34
    %s197 = ssub.s32 %s23, %s30
    %s198 = sor.u32 %s196, %s197
    %p199 = scmp.eq.s32.totalorder %s198, 0
    %s201 = sadd.s32 %s200, 1
    %s202 = scalar_select %p199, %s200, %s201
    %p205 = pneg %p199
    %p206 = scmp.eq.s32.totalorder %s15, 1
    %p207 = por %p205, %p206
    %p208 = scmp.ne.s32.totalorder %s200, %s203
    %p209 = scmp.eq.s32.totalorder %s15, 0
    %p210 = por %p208, %p209
    %p211 = scmp.ne.s32.totalorder %s200, %s203
    %p212 = scmp.eq.s32.totalorder %s20, 1
    %p213 = por %p211, %p212
    %p214 = scmp.ne.s32.totalorder %s203, %s204
    %p215 = scmp.eq.s32.totalorder %s20, 0
    %p216 = por %p214, %p215
    %p217 = scmp.ne.s32.totalorder %s203, %s204
    %p218 = scmp.eq.s32.totalorder %s21, 1
    %p219 = por %p217, %p218
    %p221 = scmp.ne.s32.totalorder %s204, %s220
    %p222 = scmp.eq.s32.totalorder %s21, 0
    %p223 = por %p221, %p222
    %s224 = ssub.s32 %s22, %s34
    %s225 = ssub.s32 %s23, %s30
    %s226 = sor.u32 %s224, %s225
    %p227 = scmp.eq.s32.totalorder %s226, 0
    %s229 = sadd.s32 %s228, 1
    %s230 = scalar_select %p227, %s228, %s229
    %p233 = pneg %p227
    %p234 = scmp.eq.s32.totalorder %s15, 1
    %p235 = por %p233, %p234
    %p236 = scmp.ne.s32.totalorder %s228, %s231
    %p237 = scmp.eq.s32.totalorder %s15, 0
    %p238 = por %p236, %p237
    %p239 = scmp.ne.s32.totalorder %s228, %s231
    %p240 = scmp.eq.s32.totalorder %s20, 1
    %p241 = por %p239, %p240
    %p242 = scmp.ne.s32.totalorder %s231, %s232
    %p243 = scmp.eq.s32.totalorder %s20, 0
    %p244 = por %p242, %p243
    %p245 = scmp.ne.s32.totalorder %s231, %s232
    %p246 = scmp.eq.s32.totalorder %s21, 1
    %p247 = por %p245, %p246
    %p249 = scmp.ne.s32.totalorder %s232, %s248
    %p250 = scmp.eq.s32.totalorder %s21, 0
    %p251 = por %p249, %p250
    %p252 = scmp.le.s32.totalorder 1, %s15
    %p253 = scmp.lt.s32.totalorder %s15, 3
    %p254 = pnand %p252, %p253
    %p255 = pneg %p254
    // Predicated region
    $region9: #{transformer_forward.9} parent=5 // pred_check
      _
    $region10: #{transformer_forward.9} parent=5 // pred_check_branch
      %257 = sbr.rel (%p254) target = $region12
    $region11: #{transformer_forward.9} parent=5 // pred_region
      %s258 = ssub.s32 %s15, 1
      // Predicated region
      $region13: #{transformer_forward.9} parent=11 // pred_check
        %p259 = pneg %p76
      $region14: #{transformer_forward.9} parent=11 // pred_check_branch
        %261 = sbr.rel (%p259) target = $region16
      $region15: #{transformer_forward.9} parent=11 // pred_region
        _
      $region16: #{transformer_forward.9} parent=11 // pred_fallthru
        _
      // Predicated region
      $region17: #{transformer_forward.9} parent=11 // pred_check
        %p262 = pneg %p97
      $region18: #{transformer_forward.9} parent=11 // pred_check_branch
        %264 = sbr.rel (%p262) target = $region20
      $region19: #{transformer_forward.9} parent=11 // pred_region
        _
      $region20: #{transformer_forward.9} parent=11 // pred_fallthru
        _
      // Predicated region
      $region21: #{transformer_forward.9} parent=11 // pred_check
        %p265 = pneg %p118
      $region22: #{transformer_forward.9} parent=11 // pred_check_branch
        %267 = sbr.rel (%p265) target = $region24
      $region23: #{transformer_forward.9} parent=11 // pred_region
        _
      $region24: #{transformer_forward.9} parent=11 // pred_fallthru
        _
      // Predicated region
      $region25: #{transformer_forward.9} parent=11 // pred_check
        %p268 = pneg %p139
      $region26: #{transformer_forward.9} parent=11 // pred_check_branch
        %270 = sbr.rel (%p268) target = $region28
      $region27: #{transformer_forward.9} parent=11 // pred_region
        _
      $region28: #{transformer_forward.9} parent=11 // pred_fallthru
        _
      // Predicated region
      $region29: #{transformer_forward.9} parent=11 // pred_check
        %p271 = pneg %p160
      $region30: #{transformer_forward.9} parent=11 // pred_check_branch
        %273 = sbr.rel (%p271) target = $region32
      $region31: #{transformer_forward.9} parent=11 // pred_region
        _
      $region32: #{transformer_forward.9} parent=11 // pred_fallthru
        _
    $region12: #{transformer_forward.9} parent=5 // pred_fallthru
      _
    %p274 = scmp.lt.s32.totalorder %s15, 2
    // Predicated region
    $region33: #{transformer_forward.9} parent=5 // pred_check
      %p275 = pneg %p274
    $region34: #{transformer_forward.9} parent=5 // pred_check_branch
      %277 = sbr.rel (%p275) target = $region36
    $region35: #{transformer_forward.9} parent=5 // pred_region
      // Predicated region
      $region37: #{transformer_forward.9} parent=35 // pred_check
        %p278 = pneg %p49
      $region38: #{transformer_forward.9} parent=35 // pred_check_branch
        %280 = sbr.rel (%p278) target = $region40
      $region39: #{transformer_forward.9} parent=35 // pred_region
        %s281 = smul.u32 2, %s23
        %p282 = scmp.lt.s32.totalorder %s22, 1
        %s283 = scalar_select %p282, %s22, 1
        %p284 = scmp.lt.s32.totalorder %s281, 1
        %s285 = scalar_select %p284, %s281, 1
        %s286 = smul.addr %s283, 2
        %s287 = sadd.s32 %s285, %s286
        %s288 = smul.addr %s287, 8
        %s289 = scalar_lea.vmem %s0, %s288
        %s290 = smul.u32 2, %s23
      $region40: #{transformer_forward.9} parent=35 // pred_fallthru
        _
    $region36: #{transformer_forward.9} parent=5 // pred_fallthru
      _
    %p291 = scmp.le.s32.totalorder 1, %s15
    %p292 = scmp.lt.s32.totalorder %s15, 3
    %p293 = pnand %p291, %p292
    %p294 = pneg %p293
    // Predicated region
    $region41: #{transformer_forward.9} parent=5 // pred_check
      _
    $region42: #{transformer_forward.9} parent=5 // pred_check_branch
      %296 = sbr.rel (%p293) target = $region44
    $region43: #{transformer_forward.9} parent=5 // pred_region
      %s297 = ssub.s32 %s15, 1
      %s298 = smul.u32 2, %s25
      %p299 = scmp.lt.s32.totalorder %s24, 1
      %s300 = scalar_select %p299, %s24, 1
      %p301 = scmp.lt.s32.totalorder %s298, 1
      %s302 = scalar_select %p301, %s298, 1
      %s303 = smul.addr %s300, 2
      %s304 = sadd.s32 %s302, %s303
      %s305 = smul.addr %s304, 8
      %s306 = scalar_lea.vmem %s0, %s305
      %p307 = pneg %p55
      %p308 = pneg %p52
      %p309 = pneg %p76
      %p310 = pneg %p73
      %p311 = pneg %p97
      %p312 = pneg %p94
      %p313 = pneg %p118
      %p314 = pneg %p115
      %p315 = pneg %p139
      %p316 = pneg %p136
      %p317 = pneg %p160
      %p318 = pneg %p157
      %p319 = pneg %p188
      %p320 = pneg %p185
      %s321 = smul.u32 2, %s25
      %p322 = scmp.lt.s32.totalorder %s24, 1
      %s323 = scalar_select %p322, %s24, 1
      %p324 = scmp.lt.s32.totalorder %s321, 1
      %s325 = scalar_select %p324, %s321, 1
      %s326 = smul.addr %s323, 8
      %s327 = sadd.s32 %s325, %s326
      %s328 = smul.addr %s327, 4
      %s329 = scalar_lea.vmem %s6, %s328
      %p330 = pneg %p216
      %p331 = pneg %p213
      %p332 = scmp.lt.s32.totalorder %s24, 1
      %s333 = scalar_select %p332, %s24, 1
      %p334 = scmp.lt.s32.totalorder %s25, 0
      %s335 = scalar_select %p334, %s25, 0
      %s336 = smul.addr %s333, 4
      %s337 = sadd.s32 %s335, %s336
      %s338 = smul.addr %s337, 4
      %s339 = scalar_lea.vmem %s7, %s338
      %p340 = pneg %p244
      %p341 = pneg %p241
      %s342 = smul.u32 2, %s25
      %p343 = scmp.lt.s32.totalorder %s24, 1
      %s344 = scalar_select %p343, %s24, 1
      %p345 = scmp.lt.s32.totalorder %s342, 1
      %s346 = scalar_select %p345, %s342, 1
      %s347 = smul.addr %s344, 8
      %s348 = sadd.s32 %s346, %s347
      %s349 = smul.addr %s348, 4
      %s350 = scalar_lea.vmem %s8, %s349
      %s351 = smul.u32 2, %s25
      %p352 = scmp.lt.s32.totalorder %s24, 1
      %s353 = scalar_select %p352, %s24, 1
      %p354 = scmp.lt.s32.totalorder %s351, 1
      %s355 = scalar_select %p354, %s351, 1
      %s356 = smul.addr %s353, 2
      %s357 = sadd.s32 %s355, %s356
      %s358 = smul.addr %s357, 8
      %s359 = scalar_lea.vmem %s0, %s358
      %s360 = smul.u32 2, %s25
      %s361 = smul.u32 2, %s25
      %p362 = scmp.lt.s32.totalorder %s24, 1
      %s363 = scalar_select %p362, %s24, 1
      %p364 = scmp.lt.s32.totalorder %s361, 1
      %s365 = scalar_select %p364, %s361, 1
      %s366 = smul.addr %s363, 8
      %s367 = sadd.s32 %s365, %s366
      %s368 = smul.addr %s367, 4
      %s369 = scalar_lea.vmem %s6, %s368
      %s370 = smul.u32 2, %s25
      %p371 = scmp.lt.s32.totalorder %s24, 1
      %s372 = scalar_select %p371, %s24, 1
      %p373 = scmp.lt.s32.totalorder %s25, 0
      %s374 = scalar_select %p373, %s25, 0
      %s375 = smul.addr %s372, 4
      %s376 = sadd.s32 %s374, %s375
      %s377 = smul.addr %s376, 4
      %s378 = scalar_lea.vmem %s7, %s377
      %s379 = smul.u32 2, %s25
      %p380 = scmp.lt.s32.totalorder %s24, 1
      %s381 = scalar_select %p380, %s24, 1
      %p382 = scmp.lt.s32.totalorder %s379, 1
      %s383 = scalar_select %p382, %s379, 1
      %s384 = smul.addr %s381, 8
      %s385 = sadd.s32 %s383, %s384
      %s386 = smul.addr %s385, 4
      %s387 = scalar_lea.vmem %s8, %s386
      %s388 = smul.u32 2, %s25
      %v390 = vld [vmem:[%s359] sm:$0xff]
      %v391 = vld [vmem:[%s359 + $0x8] sm:$0xff]
      %v392 = vld [vmem:[%s2] sm:$0x1]
      %vm393 = vcmask 261120
      %v394 = vsel %vm393, %v390, 0.0
      %395 = vadd.xlane.f32.xlu0 %v394
      %v396 = vpop.xlane.xlu0 %395
      %v397 = vsel %vm393, %v391, 0.0
      %398 = vadd.xlane.f32.xlu0 %v397
      %v399 = vpop.xlane.xlu0 %398
      %v400 = vrcp.pop 32.0
      %v401 = vmul.f32 %v396, %v400
      %v402 = vmul.f32 %v399, %v400
      %v403 = vsub.f32 %v390, %v401
      %v404 = vsub.f32 %v391, %v402
      %v405 = vmul.f32 %v403, %v403
      %v406 = vmul.f32 %v404, %v404
      %v407 = vsel %vm393, %v405, 0.0
      %408 = vadd.xlane.f32.xlu0 %v407
      %v409 = vpop.xlane.xlu0 %408
      %v410 = vsel %vm393, %v406, 0.0
      %411 = vadd.xlane.f32.xlu0 %v410
      %v412 = vpop.xlane.xlu0 %411
      %v413 = vmul.f32 %v409, %v400
      %v414 = vmul.f32 %v412, %v400
      %v415 = vadd.f32 %v413, 1e-05
      %v416 = vadd.f32 %v414, 1e-05
      %v417 = vrsqrt.pop %v415
      %v418 = vrsqrt.pop %v416
      %v419 = vmul.f32 %v403, %v417
      %v420 = vmul.f32 %v404, %v418
      %v422 = vlaneseq
      %v423 = vshrl.u32 %v422, 7
      %v424 = vsub.s32 0, %v423
      %v425 = vrot.slane %v392, %v424
      %v427 = vmul.f32 %v419, %v425
      %v428 = vmul.f32 %v420, %v425
      %v429 = vpack.c.bf16 %v428, %v427
      %430 = vxpose.xlu0.b32.start [1/16] %v427, 128
      %431 = vxpose.xlu0.b32.cont [2/16] %v428, 128
      %432 = vxpose.xlu0.b32.cont [3/16] 0.0, 128
      %433 = vxpose.xlu0.b32.cont [4/16] 0.0, 128
      %434 = vxpose.xlu0.b32.cont [5/16] 0.0, 128
      %435 = vxpose.xlu0.b32.cont [6/16] 0.0, 128
      %436 = vxpose.xlu0.b32.cont [7/16] 0.0, 128
      %437 = vxpose.xlu0.b32.cont [8/16] 0.0, 128
      %438 = vxpose.xlu0.b32.cont [9/16] 0.0, 128
      %439 = vxpose.xlu0.b32.cont [10/16] 0.0, 128
      %440 = vxpose.xlu0.b32.cont [11/16] 0.0, 128
      %441 = vxpose.xlu0.b32.cont [12/16] 0.0, 128
      %442 = vxpose.xlu0.b32.cont [13/16] 0.0, 128
      %443 = vxpose.xlu0.b32.cont [14/16] 0.0, 128
      %444 = vxpose.xlu0.b32.cont [15/16] 0.0, 128
      %445 = vxpose.xlu0.b32.end [16/16] 0.0, 128
      %v446 = vpop.trf.xlu0
      %v447 = vpop.trf.xlu0
      %v448 = vpop.trf.xlu0
      %v449 = vpop.trf.xlu0
      %v450 = vpop.trf.xlu0
      %v451 = vpop.trf.xlu0
      %v452 = vpop.trf.xlu0
      %v453 = vpop.trf.xlu0
      %v454 = vpop.trf.xlu0
      %v455 = vpop.trf.xlu0
      %v456 = vpop.trf.xlu0
      %v457 = vpop.trf.xlu0
      %v458 = vpop.trf.xlu0
      %v459 = vpop.trf.xlu0
      %v460 = vpop.trf.xlu0
      %v461 = vpop.trf.xlu0
      %v462 = vpack.c.bf16 %v447, %v446
      %v463 = vpack.c.bf16 %v449, %v448
      %v464 = vld [vmem:[%s3] sm:$0xf]
      %v465 = vld [vmem:[%s3 + $0x4] sm:$0xf]
      %v466 = vld [vmem:[%s3 + $0x8] sm:$0xf]
      %v467 = vld [vmem:[%s3 + $0xc] sm:$0xf]
      %v472 = vunpack.c.l.b16 %v464
      %v473 = vunpack.c.l.b16 %v465
      %v474 = vunpack.c.l.b16 %v466
      %v475 = vunpack.c.l.b16 %v467
      %v476 = vpack.c.b16 %v473, %v472
      %v477 = vpack.c.b16 %v475, %v474
      %v481 = vsel %vm393, %v429, 0
      %483 = vmatprep.subr.bf16.mxu0 0
      %484 = vmatpush1.bf16.msra.mxu0 %v476
      %485 = vmatprep.subr.bf16.mxu0 0
      %486 = vmatpush1.bf16.msra.mxu0 %v477
      %487 = vmatprep.subr.bf16.mxu0 0
      %488 = vmatpush1.bf16.msra.mxu0 0
      %489 = vmatprep.subr.bf16.mxu0 0
      %490 = vmatpush1.bf16.msra.mxu0 0
      %491 = vmatprep.subr.bf16.mxu0 0
      %492 = vmatpush1.bf16.msra.mxu0 0
      %493 = vmatprep.subr.bf16.mxu0 0
      %494 = vmatpush1.bf16.msra.mxu0 0
      %495 = vmatprep.subr.bf16.mxu0 0
      %496 = vmatpush1.bf16.msra.mxu0 0
      %497 = vmatprep.subr.bf16.mxu0 0
      %498 = vmatpush1.bf16.msra.mxu0 0
      %499 = vmatprep.subr.bf16.mxu0 0
      %500 = vmatpush1.bf16.msra.mxu0 0
      %501 = vmatprep.subr.bf16.mxu0 0
      %502 = vmatpush1.bf16.msra.mxu0 0
      %503 = vmatprep.subr.bf16.mxu0 0
      %504 = vmatpush1.bf16.msra.mxu0 0
      %505 = vmatprep.subr.bf16.mxu0 0
      %506 = vmatpush1.bf16.msra.mxu0 0
      %507 = vmatprep.subr.bf16.mxu0 0
      %508 = vmatpush1.bf16.msra.mxu0 0
      %509 = vmatprep.subr.bf16.mxu0 0
      %510 = vmatpush1.bf16.msra.mxu0 0
      %511 = vmatprep.subr.bf16.mxu0 0
      %512 = vmatpush1.bf16.msra.mxu0 0
      %513 = vmatprep.subr.bf16.mxu0 0
      %514 = vmatpush1.bf16.msra.mxu0 0
      %515 = vmatprep.mubr.bf16.mxu0 0
      %516 = vmatmul.mubr.bf16.gmra.mrb[0].mxu0 %v481
      %v517 = vpop.f32.mrb[0].mxu0
      %v518 = vadd.f32 0.0, %v517
      %v519 = vpop.f32.mrb[0].mxu0
      %v520 = vpop.f32.mrb[0].mxu0
      %v521 = vadd.f32 0.0, %v520
      %v522 = vpop.f32.mrb[0].mxu0
      %523 = vdwg.mxu0
      %v524 = vld [vmem:[%s5] sm:$0xf]
      %v525 = vld [vmem:[%s5 + $0x4] sm:$0xf]
      %v526 = vld [vmem:[%s5 + $0x8] sm:$0xf]
      %v527 = vld [vmem:[%s5 + $0xc] sm:$0xf]
      %v532 = vunpack.c.l.b16 %v524
      %v533 = vunpack.c.l.b16 %v525
      %v534 = vunpack.c.l.b16 %v526
      %v535 = vunpack.c.l.b16 %v527
      %v536 = vpack.c.b16 %v533, %v532
      %v537 = vpack.c.b16 %v535, %v534
      %540 = vmatprep.subr.bf16.mxu0 0
      %541 = vmatpush1.bf16.msra.mxu0 %v536
      %542 = vmatprep.subr.bf16.mxu0 0
      %543 = vmatpush1.bf16.msra.mxu0 %v537
      %544 = vmatprep.subr.bf16.mxu0 0
      %545 = vmatpush1.bf16.msra.mxu0 0
      %546 = vmatprep.subr.bf16.mxu0 0
      %547 = vmatpush1.bf16.msra.mxu0 0
      %548 = vmatprep.subr.bf16.mxu0 0
      %549 = vmatpush1.bf16.msra.mxu0 0
      %550 = vmatprep.subr.bf16.mxu0 0
      %551 = vmatpush1.bf16.msra.mxu0 0
      %552 = vmatprep.subr.bf16.mxu0 0
      %553 = vmatpush1.bf16.msra.mxu0 0
      %554 = vmatprep.subr.bf16.mxu0 0
      %555 = vmatpush1.bf16.msra.mxu0 0
      %556 = vmatprep.subr.bf16.mxu0 0
      %557 = vmatpush1.bf16.msra.mxu0 0
      %558 = vmatprep.subr.bf16.mxu0 0
      %559 = vmatpush1.bf16.msra.mxu0 0
      %560 = vmatprep.subr.bf16.mxu0 0
      %561 = vmatpush1.bf16.msra.mxu0 0
      %562 = vmatprep.subr.bf16.mxu0 0
      %563 = vmatpush1.bf16.msra.mxu0 0
      %564 = vmatprep.subr.bf16.mxu0 0
      %565 = vmatpush1.bf16.msra.mxu0 0
      %566 = vmatprep.subr.bf16.mxu0 0
      %567 = vmatpush1.bf16.msra.mxu0 0
      %568 = vmatprep.subr.bf16.mxu0 0
      %569 = vmatpush1.bf16.msra.mxu0 0
      %570 = vmatprep.subr.bf16.mxu0 0
      %571 = vmatpush1.bf16.msra.mxu0 0
      %572 = vmatprep.mubr.bf16.mxu0 0
      %573 = vmatmul.mubr.bf16.gmra.mrb[0].mxu0 %v481
      %v574 = vpop.f32.mrb[0].mxu0
      %v575 = vadd.f32 0.0, %v574
      %v576 = vpop.f32.mrb[0].mxu0
      %v577 = vpop.f32.mrb[0].mxu0
      %v578 = vadd.f32 0.0, %v577
      %v579 = vpop.f32.mrb[0].mxu0
      %580 = vdwg.mxu0
      %v581 = vld [vmem:[%s4] sm:$0xf]
      %v582 = vld [vmem:[%s4 + $0x4] sm:$0xf]
      %v583 = vld [vmem:[%s4 + $0x8] sm:$0xf]
      %v584 = vld [vmem:[%s4 + $0xc] sm:$0xf]
      %v589 = vunpack.c.l.b16 %v581
      %v590 = vunpack.c.l.b16 %v582
      %v591 = vunpack.c.l.b16 %v583
      %v592 = vunpack.c.l.b16 %v584
      %v593 = vpack.c.b16 %v590, %v589
      %v594 = vpack.c.b16 %v592, %v591
      %v596 = vsel %vm393, %v593, 0
      %v599 = vsel %vm393, %v594, 0
      %601 = vmatprep.subr.bf16.mxu0 0
      %602 = vmatpush1.bf16.msra.mxu0 %v462
      %603 = vmatprep.subr.bf16.mxu0 0
      %604 = vmatpush1.bf16.msra.mxu0 %v463
      %605 = vmatprep.subr.bf16.mxu0 0
      %606 = vmatpush1.bf16.msra.mxu0 0
      %607 = vmatprep.subr.bf16.mxu0 0
      %608 = vmatpush1.bf16.msra.mxu0 0
      %609 = vmatprep.subr.bf16.mxu0 0
      %610 = vmatpush1.bf16.msra.mxu0 0
      %611 = vmatprep.subr.bf16.mxu0 0
      %612 = vmatpush1.bf16.msra.mxu0 0
      %613 = vmatprep.subr.bf16.mxu0 0
      %614 = vmatpush1.bf16.msra.mxu0 0
      %615 = vmatprep.subr.bf16.mxu0 0
      %616 = vmatpush1.bf16.msra.mxu0 0
      %617 = vmatprep.subr.bf16.mxu0 0
      %618 = vmatpush1.bf16.msra.mxu0 0
      %619 = vmatprep.subr.bf16.mxu0 0
      %620 = vmatpush1.bf16.msra.mxu0 0
      %621 = vmatprep.subr.bf16.mxu0 0
      %622 = vmatpush1.bf16.msra.mxu0 0
      %623 = vmatprep.subr.bf16.mxu0 0
      %624 = vmatpush1.bf16.msra.mxu0 0
      %625 = vmatprep.subr.bf16.mxu0 0
      %626 = vmatpush1.bf16.msra.mxu0 0
      %627 = vmatprep.subr.bf16.mxu0 0
      %628 = vmatpush1.bf16.msra.mxu0 0
      %629 = vmatprep.subr.bf16.mxu0 0
      %630 = vmatpush1.bf16.msra.mxu0 0
      %631 = vmatprep.subr.bf16.mxu0 0
      %632 = vmatpush1.bf16.msra.mxu0 0
      %633 = vmatprep.mubr.bf16.mxu0 0
      %634 = vmatmul.mubr.bf16.gmra.mrb[0].mxu0 %v596
      %v635 = vpop.f32.mrb[0].mxu0
      %v636 = vadd.f32 0.0, %v635
      %v637 = vpop.f32.mrb[0].mxu0
      %v638 = vpop.f32.mrb[0].mxu0
      %v639 = vadd.f32 0.0, %v638
      %v640 = vpop.f32.mrb[0].mxu0
      %641 = vmatprep.mubr.bf16.mxu0 0
      %642 = vmatmul.mubr.bf16.gmra.mrb[0].mxu0 %v599
      %v643 = vpop.f32.mrb[0].mxu0
      %v644 = vadd.f32 0.0, %v643
      %v645 = vpop.f32.mrb[0].mxu0
      %v646 = vpop.f32.mrb[0].mxu0
      %v647 = vadd.f32 0.0, %v646
      %v648 = vpop.f32.mrb[0].mxu0
      %649 = vdwg.mxu0
      %652 = vrot.lane.b32.xlu0 %v518, 120
      %v653 = vpop.permute.xlu0 %652
      %654 = vrot.lane.b32.xlu0 %v521, 120
      %v655 = vpop.permute.xlu0 %654
      %658 = vrot.lane.b32.xlu0 %v518, 112
      %v659 = vpop.permute.xlu0 %658
      %660 = vrot.lane.b32.xlu0 %v521, 112
      %v661 = vpop.permute.xlu0 %660
      %664 = vrot.lane.b32.xlu0 %v518, 104
      %v665 = vpop.permute.xlu0 %664
      %666 = vrot.lane.b32.xlu0 %v521, 104
      %v667 = vpop.permute.xlu0 %666
      %v670 = vcombine.low %v518, %v659
      %v671 = vcombine.high %v518, %v659
      %v673 = vunpack.c.l.s4 1983009808
      %v674 = vunpack.c.0.s8 %v673
      %v675 = vlaneseq
      %v676 = vshrl.u32 %v675, 7
      %v677 = vsub.s32 %v674, %v676
      %v678 = vrot.slane %v670, %v677
      %v680 = vunpack.c.l.s4 1983009808
      %v681 = vunpack.c.0.s8 %v680
      %v682 = vlaneseq
      %v683 = vshrl.u32 %v682, 7
      %v684 = vsub.s32 %v681, %v683
      %v685 = vrot.slane %v671, %v684
      %v686 = vcombine.low %v653, %v665
      %v687 = vcombine.high %v653, %v665
      %v689 = vunpack.c.l.s4 1983009808
      %v690 = vunpack.c.0.s8 %v689
      %v691 = vlaneseq
      %v692 = vshrl.u32 %v691, 7
      %v693 = vsub.s32 %v690, %v692
      %v694 = vrot.slane %v686, %v693
      %v696 = vunpack.c.l.s4 1983009808
      %v697 = vunpack.c.0.s8 %v696
      %v698 = vlaneseq
      %v699 = vshrl.u32 %v698, 7
      %v700 = vsub.s32 %v697, %v699
      %v701 = vrot.slane %v687, %v700
      %v702 = vcombine.low %v678, %v694
      %v703 = vcombine.high %v678, %v694
      %v705 = vunpack.c.l.s4 1934713408
      %v706 = vunpack.c.0.s8 %v705
      %v707 = vlaneseq
      %v708 = vshrl.u32 %v707, 7
      %v709 = vsub.s32 %v706, %v708
      %v710 = vrot.slane %v702, %v709
      %v712 = vunpack.c.l.s4 1934713408
      %v713 = vunpack.c.0.s8 %v712
      %v714 = vlaneseq
      %v715 = vshrl.u32 %v714, 7
      %v716 = vsub.s32 %v713, %v715
      %v717 = vrot.slane %v703, %v716
      %v718 = vcombine.low %v685, %v701
      %v719 = vcombine.high %v685, %v701
      %v721 = vunpack.c.l.s4 1934713408
      %v722 = vunpack.c.0.s8 %v721
      %v723 = vlaneseq
      %v724 = vshrl.u32 %v723, 7
      %v725 = vsub.s32 %v722, %v724
      %v726 = vrot.slane %v718, %v725
      %v728 = vunpack.c.l.s4 1934713408
      %v729 = vunpack.c.0.s8 %v728
      %v730 = vlaneseq
      %v731 = vshrl.u32 %v730, 7
      %v732 = vsub.s32 %v729, %v731
      %v733 = vrot.slane %v719, %v732
      %v734 = vcombine.high %v710, 0.0
      %v735 = vcombine.high %v717, 0.0
      %v736 = vcombine.high %v726, 0.0
      %v737 = vcombine.high %v733, 0.0
      %v738 = vcombine.low %v521, %v661
      %v739 = vcombine.high %v521, %v661
      %v741 = vunpack.c.l.s4 1983009808
      %v742 = vunpack.c.0.s8 %v741
      %v743 = vlaneseq
      %v744 = vshrl.u32 %v743, 7
      %v745 = vsub.s32 %v742, %v744
      %v746 = vrot.slane %v738, %v745
      %v748 = vunpack.c.l.s4 1983009808
      %v749 = vunpack.c.0.s8 %v748
      %v750 = vlaneseq
      %v751 = vshrl.u32 %v750, 7
      %v752 = vsub.s32 %v749, %v751
      %v753 = vrot.slane %v739, %v752
      %v754 = vcombine.low %v655, %v667
      %v755 = vcombine.high %v655, %v667
      %v757 = vunpack.c.l.s4 1983009808
      %v758 = vunpack.c.0.s8 %v757
      %v759 = vlaneseq
      %v760 = vshrl.u32 %v759, 7
      %v761 = vsub.s32 %v758, %v760
      %v762 = vrot.slane %v754, %v761
      %v764 = vunpack.c.l.s4 1983009808
      %v765 = vunpack.c.0.s8 %v764
      %v766 = vlaneseq
      %v767 = vshrl.u32 %v766, 7
      %v768 = vsub.s32 %v765, %v767
      %v769 = vrot.slane %v755, %v768
      %v770 = vcombine.low %v746, %v762
      %v771 = vcombine.high %v746, %v762
      %v773 = vunpack.c.l.s4 1934713408
      %v774 = vunpack.c.0.s8 %v773
      %v775 = vlaneseq
      %v776 = vshrl.u32 %v775, 7
      %v777 = vsub.s32 %v774, %v776
      %v778 = vrot.slane %v770, %v777
      %v780 = vunpack.c.l.s4 1934713408
      %v781 = vunpack.c.0.s8 %v780
      %v782 = vlaneseq
      %v783 = vshrl.u32 %v782, 7
      %v784 = vsub.s32 %v781, %v783
      %v785 = vrot.slane %v771, %v784
      %v786 = vcombine.low %v753, %v769
      %v787 = vcombine.high %v753, %v769
      %v789 = vunpack.c.l.s4 1934713408
      %v790 = vunpack.c.0.s8 %v789
      %v791 = vlaneseq
      %v792 = vshrl.u32 %v791, 7
      %v793 = vsub.s32 %v790, %v792
      %v794 = vrot.slane %v786, %v793
      %v796 = vunpack.c.l.s4 1934713408
      %v797 = vunpack.c.0.s8 %v796
      %v798 = vlaneseq
      %v799 = vshrl.u32 %v798, 7
      %v800 = vsub.s32 %v797, %v799
      %v801 = vrot.slane %v787, %v800
      %v802 = vcombine.high %v778, 0.0
      %v803 = vcombine.high %v785, 0.0
      %v804 = vcombine.high %v794, 0.0
      %v805 = vcombine.high %v801, 0.0
      %v806 = vcombine.low %v710, %v717
      %v808 = vunpack.c.l.s4 1983009808
      %v809 = vunpack.c.0.s8 %v808
      %v810 = vlaneseq
      %v811 = vshrl.u32 %v810, 7
      %v812 = vsub.s32 %v809, %v811
      %v813 = vrot.slane %v806, %v812
      %v814 = vcombine.low %v734, %v735
      %v816 = vunpack.c.l.s4 1983009808
      %v817 = vunpack.c.0.s8 %v816
      %v818 = vlaneseq
      %v819 = vshrl.u32 %v818, 7
      %v820 = vsub.s32 %v817, %v819
      %v821 = vrot.slane %v814, %v820
      %v822 = vcombine.low %v726, %v733
      %v824 = vunpack.c.l.s4 1983009808
      %v825 = vunpack.c.0.s8 %v824
      %v826 = vlaneseq
      %v827 = vshrl.u32 %v826, 7
      %v828 = vsub.s32 %v825, %v827
      %v829 = vrot.slane %v822, %v828
      %v830 = vcombine.low %v736, %v737
      %v832 = vunpack.c.l.s4 1983009808
      %v833 = vunpack.c.0.s8 %v832
      %v834 = vlaneseq
      %v835 = vshrl.u32 %v834, 7
      %v836 = vsub.s32 %v833, %v835
      %v837 = vrot.slane %v830, %v836
      %v838 = vcombine.low %v813, %v821
      %v839 = vcombine.high %v813, %v821
      %v841 = vunpack.c.l.s4 1934713408
      %v842 = vunpack.c.0.s8 %v841
      %v843 = vlaneseq
      %v844 = vshrl.u32 %v843, 7
      %v845 = vsub.s32 %v842, %v844
      %v846 = vrot.slane %v838, %v845
      %v848 = vunpack.c.l.s4 1934713408
      %v849 = vunpack.c.0.s8 %v848
      %v850 = vlaneseq
      %v851 = vshrl.u32 %v850, 7
      %v852 = vsub.s32 %v849, %v851
      %v853 = vrot.slane %v839, %v852
      %v854 = vcombine.low %v829, %v837
      %v855 = vcombine.high %v829, %v837
      %v857 = vunpack.c.l.s4 1934713408
      %v858 = vunpack.c.0.s8 %v857
      %v859 = vlaneseq
      %v860 = vshrl.u32 %v859, 7
      %v861 = vsub.s32 %v858, %v860
      %v862 = vrot.slane %v854, %v861
      %v864 = vunpack.c.l.s4 1934713408
      %v865 = vunpack.c.0.s8 %v864
      %v866 = vlaneseq
      %v867 = vshrl.u32 %v866, 7
      %v868 = vsub.s32 %v865, %v867
      %v869 = vrot.slane %v855, %v868
      %v870 = vcombine.low %v846, %v862
      %v871 = vcombine.high %v846, %v862
      %v872 = vcombine.low %v853, %v869
      %v873 = vcombine.high %v853, %v869
      %v874 = vcombine.low %v778, %v785
      %v876 = vunpack.c.l.s4 1983009808
      %v877 = vunpack.c.0.s8 %v876
      %v878 = vlaneseq
      %v879 = vshrl.u32 %v878, 7
      %v880 = vsub.s32 %v877, %v879
      %v881 = vrot.slane %v874, %v880
      %v882 = vcombine.low %v802, %v803
      %v884 = vunpack.c.l.s4 1983009808
      %v885 = vunpack.c.0.s8 %v884
      %v886 = vlaneseq
      %v887 = vshrl.u32 %v886, 7
      %v888 = vsub.s32 %v885, %v887
      %v889 = vrot.slane %v882, %v888
      %v890 = vcombine.low %v794, %v801
      %v892 = vunpack.c.l.s4 1983009808
      %v893 = vunpack.c.0.s8 %v892
      %v894 = vlaneseq
      %v895 = vshrl.u32 %v894, 7
      %v896 = vsub.s32 %v893, %v895
      %v897 = vrot.slane %v890, %v896
      %v898 = vcombine.low %v804, %v805
      %v900 = vunpack.c.l.s4 1983009808
      %v901 = vunpack.c.0.s8 %v900
      %v902 = vlaneseq
      %v903 = vshrl.u32 %v902, 7
      %v904 = vsub.s32 %v901, %v903
      %v905 = vrot.slane %v898, %v904
      %v906 = vcombine.low %v881, %v889
      %v907 = vcombine.high %v881, %v889
      %v909 = vunpack.c.l.s4 1934713408
      %v910 = vunpack.c.0.s8 %v909
      %v911 = vlaneseq
      %v912 = vshrl.u32 %v911, 7
      %v913 = vsub.s32 %v910, %v912
      %v914 = vrot.slane %v906, %v913
      %v916 = vunpack.c.l.s4 1934713408
      %v917 = vunpack.c.0.s8 %v916
      %v918 = vlaneseq
      %v919 = vshrl.u32 %v918, 7
      %v920 = vsub.s32 %v917, %v919
      %v921 = vrot.slane %v907, %v920
      %v922 = vcombine.low %v897, %v905
      %v923 = vcombine.high %v897, %v905
      %v925 = vunpack.c.l.s4 1934713408
      %v926 = vunpack.c.0.s8 %v925
      %v927 = vlaneseq
      %v928 = vshrl.u32 %v927, 7
      %v929 = vsub.s32 %v926, %v928
      %v930 = vrot.slane %v922, %v929
      %v932 = vunpack.c.l.s4 1934713408
      %v933 = vunpack.c.0.s8 %v932
      %v934 = vlaneseq
      %v935 = vshrl.u32 %v934, 7
      %v936 = vsub.s32 %v933, %v935
      %v937 = vrot.slane %v923, %v936
      %v938 = vcombine.low %v914, %v930
      %v939 = vcombine.high %v914, %v930
      %v940 = vcombine.low %v921, %v937
      %v941 = vcombine.high %v921, %v937
      %v942 = vpack.c.bf16 %v938, %v870
      %v943 = vpack.c.bf16 %v939, %v871
      %v944 = vpack.c.bf16 %v940, %v872
      %v945 = vpack.c.bf16 %v941, %v873
      %v950 = vunpack.c.l.b16 %v942
      %v951 = vunpack.c.h.b16 %v942
      %v952 = vunpack.c.l.b16 %v943
      %v953 = vunpack.c.h.b16 %v943
      %v954 = vunpack.c.l.b16 %v944
      %v955 = vunpack.c.h.b16 %v944
      %v956 = vunpack.c.l.b16 %v945
      %v957 = vunpack.c.h.b16 %v945
      %v958 = vpack.c.b16 %v950, %v950
      %v959 = vpack.c.b16 %v951, %v951
      %v960 = vpack.c.b16 %v952, %v952
      %v961 = vpack.c.b16 %v953, %v953
      %v962 = vpack.c.b16 %v954, %v954
      %v963 = vpack.c.b16 %v955, %v955
      %v964 = vpack.c.b16 %v956, %v956
      %v965 = vpack.c.b16 %v957, %v957
      %vm974 = vcmask 60416
      %975 = vst.msk [vmem:[%s369] sm:$0xf] %vm974, %v958
      %976 = vst.msk [vmem:[%s369 + $0x4] sm:$0xf] %vm974, %v959
      %977 = vst.msk [vmem:[%s369 + $0x8] sm:$0xf] %vm974, %v960
      %978 = vst.msk [vmem:[%s369 + $0xc] sm:$0xf] %vm974, %v961
      %979 = vst.msk [vmem:[%s369 + $0x10] sm:$0xf] %vm974, %v962
      %980 = vst.msk [vmem:[%s369 + $0x14] sm:$0xf] %vm974, %v963
      %981 = vst.msk [vmem:[%s369 + $0x18] sm:$0xf] %vm974, %v964
      %982 = vst.msk [vmem:[%s369 + $0x1c] sm:$0xf] %vm974, %v965
      %985 = vrot.lane.b32.xlu0 %v575, 120
      %v986 = vpop.permute.xlu0 %985
      %987 = vrot.lane.b32.xlu0 %v578, 120
      %v988 = vpop.permute.xlu0 %987
      %991 = vrot.lane.b32.xlu0 %v575, 112
      %v992 = vpop.permute.xlu0 %991
      %993 = vrot.lane.b32.xlu0 %v578, 112
      %v994 = vpop.permute.xlu0 %993
      %997 = vrot.lane.b32.xlu0 %v575, 104
      %v998 = vpop.permute.xlu0 %997
      %999 = vrot.lane.b32.xlu0 %v578, 104
      %v1000 = vpop.permute.xlu0 %999
      %v1003 = vcombine.low %v575, %v992
      %v1004 = vcombine.high %v575, %v992
      %v1006 = vunpack.c.l.s4 1983009808
      %v1007 = vunpack.c.0.s8 %v1006
      %v1008 = vlaneseq
      %v1009 = vshrl.u32 %v1008, 7
      %v1010 = vsub.s32 %v1007, %v1009
      %v1011 = vrot.slane %v1003, %v1010
      %v1013 = vunpack.c.l.s4 1983009808
      %v1014 = vunpack.c.0.s8 %v1013
      %v1015 = vlaneseq
      %v1016 = vshrl.u32 %v1015, 7
      %v1017 = vsub.s32 %v1014, %v1016
      %v1018 = vrot.slane %v1004, %v1017
      %v1019 = vcombine.low %v986, %v998
      %v1020 = vcombine.high %v986, %v998
      %v1022 = vunpack.c.l.s4 1983009808
      %v1023 = vunpack.c.0.s8 %v1022
      %v1024 = vlaneseq
      %v1025 = vshrl.u32 %v1024, 7
      %v1026 = vsub.s32 %v1023, %v1025
      %v1027 = vrot.slane %v1019, %v1026
      %v1029 = vunpack.c.l.s4 1983009808
      %v1030 = vunpack.c.0.s8 %v1029
      %v1031 = vlaneseq
      %v1032 = vshrl.u32 %v1031, 7
      %v1033 = vsub.s32 %v1030, %v1032
      %v1034 = vrot.slane %v1020, %v1033
      %v1035 = vcombine.low %v1011, %v1027
      %v1036 = vcombine.high %v1011, %v1027
      %v1038 = vunpack.c.l.s4 1934713408
      %v1039 = vunpack.c.0.s8 %v1038
      %v1040 = vlaneseq
      %v1041 = vshrl.u32 %v1040, 7
      %v1042 = vsub.s32 %v1039, %v1041
      %v1043 = vrot.slane %v1035, %v1042
      %v1045 = vunpack.c.l.s4 1934713408
      %v1046 = vunpack.c.0.s8 %v1045
      %v1047 = vlaneseq
      %v1048 = vshrl.u32 %v1047, 7
      %v1049 = vsub.s32 %v1046, %v1048
      %v1050 = vrot.slane %v1036, %v1049
      %v1051 = vcombine.low %v1018, %v1034
      %v1052 = vcombine.high %v1018, %v1034
      %v1054 = vunpack.c.l.s4 1934713408
      %v1055 = vunpack.c.0.s8 %v1054
      %v1056 = vlaneseq
      %v1057 = vshrl.u32 %v1056, 7
      %v1058 = vsub.s32 %v1055, %v1057
      %v1059 = vrot.slane %v1051, %v1058
      %v1061 = vunpack.c.l.s4 1934713408
      %v1062 = vunpack.c.0.s8 %v1061
      %v1063 = vlaneseq
      %v1064 = vshrl.u32 %v1063, 7
      %v1065 = vsub.s32 %v1062, %v1064
      %v1066 = vrot.slane %v1052, %v1065
      %v1067 = vcombine.high %v1043, 0.0
      %v1068 = vcombine.high %v1050, 0.0
      %v1069 = vcombine.high %v1059, 0.0
      %v1070 = vcombine.high %v1066, 0.0
      %v1071 = vcombine.low %v578, %v994
      %v1072 = vcombine.high %v578, %v994
      %v1074 = vunpack.c.l.s4 1983009808
      %v1075 = vunpack.c.0.s8 %v1074
      %v1076 = vlaneseq
      %v1077 = vshrl.u32 %v1076, 7
      %v1078 = vsub.s32 %v1075, %v1077
      %v1079 = vrot.slane %v1071, %v1078
      %v1081 = vunpack.c.l.s4 1983009808
      %v1082 = vunpack.c.0.s8 %v1081
      %v1083 = vlaneseq
      %v1084 = vshrl.u32 %v1083, 7
      %v1085 = vsub.s32 %v1082, %v1084
      %v1086 = vrot.slane %v1072, %v1085
      %v1087 = vcombine.low %v988, %v1000
      %v1088 = vcombine.high %v988, %v1000
      %v1090 = vunpack.c.l.s4 1983009808
      %v1091 = vunpack.c.0.s8 %v1090
      %v1092 = vlaneseq
      %v1093 = vshrl.u32 %v1092, 7
      %v1094 = vsub.s32 %v1091, %v1093
      %v1095 = vrot.slane %v1087, %v1094
      %v1097 = vunpack.c.l.s4 1983009808
      %v1098 = vunpack.c.0.s8 %v1097
      %v1099 = vlaneseq
      %v1100 = vshrl.u32 %v1099, 7
      %v1101 = vsub.s32 %v1098, %v1100
      %v1102 = vrot.slane %v1088, %v1101
      %v1103 = vcombine.low %v1079, %v1095
      %v1104 = vcombine.high %v1079, %v1095
      %v1106 = vunpack.c.l.s4 1934713408
      %v1107 = vunpack.c.0.s8 %v1106
      %v1108 = vlaneseq
      %v1109 = vshrl.u32 %v1108, 7
      %v1110 = vsub.s32 %v1107, %v1109
      %v1111 = vrot.slane %v1103, %v1110
      %v1113 = vunpack.c.l.s4 1934713408
      %v1114 = vunpack.c.0.s8 %v1113
      %v1115 = vlaneseq
      %v1116 = vshrl.u32 %v1115, 7
      %v1117 = vsub.s32 %v1114, %v1116
      %v1118 = vrot.slane %v1104, %v1117
      %v1119 = vcombine.low %v1086, %v1102
      %v1120 = vcombine.high %v1086, %v1102
      %v1122 = vunpack.c.l.s4 1934713408
      %v1123 = vunpack.c.0.s8 %v1122
      %v1124 = vlaneseq
      %v1125 = vshrl.u32 %v1124, 7
      %v1126 = vsub.s32 %v1123, %v1125
      %v1127 = vrot.slane %v1119, %v1126
      %v1129 = vunpack.c.l.s4 1934713408
      %v1130 = vunpack.c.0.s8 %v1129
      %v1131 = vlaneseq
      %v1132 = vshrl.u32 %v1131, 7
      %v1133 = vsub.s32 %v1130, %v1132
      %v1134 = vrot.slane %v1120, %v1133
      %v1135 = vcombine.high %v1111, 0.0
      %v1136 = vcombine.high %v1118, 0.0
      %v1137 = vcombine.high %v1127, 0.0
      %v1138 = vcombine.high %v1134, 0.0
      %v1139 = vcombine.low %v1043, %v1050
      %v1141 = vunpack.c.l.s4 1983009808
      %v1142 = vunpack.c.0.s8 %v1141
      %v1143 = vlaneseq
      %v1144 = vshrl.u32 %v1143, 7
      %v1145 = vsub.s32 %v1142, %v1144
      %v1146 = vrot.slane %v1139, %v1145
      %v1147 = vcombine.low %v1067, %v1068
      %v1149 = vunpack.c.l.s4 1983009808
      %v1150 = vunpack.c.0.s8 %v1149
      %v1151 = vlaneseq
      %v1152 = vshrl.u32 %v1151, 7
      %v1153 = vsub.s32 %v1150, %v1152
      %v1154 = vrot.slane %v1147, %v1153
      %v1155 = vcombine.low %v1059, %v1066
      %v1157 = vunpack.c.l.s4 1983009808
      %v1158 = vunpack.c.0.s8 %v1157
      %v1159 = vlaneseq
      %v1160 = vshrl.u32 %v1159, 7
      %v1161 = vsub.s32 %v1158, %v1160
      %v1162 = vrot.slane %v1155, %v1161
      %v1163 = vcombine.low %v1069, %v1070
      %v1165 = vunpack.c.l.s4 1983009808
      %v1166 = vunpack.c.0.s8 %v1165
      %v1167 = vlaneseq
      %v1168 = vshrl.u32 %v1167, 7
      %v1169 = vsub.s32 %v1166, %v1168
      %v1170 = vrot.slane %v1163, %v1169
      %v1171 = vcombine.low %v1146, %v1154
      %v1172 = vcombine.high %v1146, %v1154
      %v1174 = vunpack.c.l.s4 1934713408
      %v1175 = vunpack.c.0.s8 %v1174
      %v1176 = vlaneseq
      %v1177 = vshrl.u32 %v1176, 7
      %v1178 = vsub.s32 %v1175, %v1177
      %v1179 = vrot.slane %v1171, %v1178
      %v1181 = vunpack.c.l.s4 1934713408
      %v1182 = vunpack.c.0.s8 %v1181
      %v1183 = vlaneseq
      %v1184 = vshrl.u32 %v1183, 7
      %v1185 = vsub.s32 %v1182, %v1184
      %v1186 = vrot.slane %v1172, %v1185
      %v1187 = vcombine.low %v1162, %v1170
      %v1188 = vcombine.high %v1162, %v1170
      %v1190 = vunpack.c.l.s4 1934713408
      %v1191 = vunpack.c.0.s8 %v1190
      %v1192 = vlaneseq
      %v1193 = vshrl.u32 %v1192, 7
      %v1194 = vsub.s32 %v1191, %v1193
      %v1195 = vrot.slane %v1187, %v1194
      %v1197 = vunpack.c.l.s4 1934713408
      %v1198 = vunpack.c.0.s8 %v1197
      %v1199 = vlaneseq
      %v1200 = vshrl.u32 %v1199, 7
      %v1201 = vsub.s32 %v1198, %v1200
      %v1202 = vrot.slane %v1188, %v1201
      %v1203 = vcombine.low %v1179, %v1195
      %v1204 = vcombine.high %v1179, %v1195
      %v1205 = vcombine.low %v1186, %v1202
      %v1206 = vcombine.high %v1186, %v1202
      %v1207 = vcombine.low %v1111, %v1118
      %v1209 = vunpack.c.l.s4 1983009808
      %v1210 = vunpack.c.0.s8 %v1209
      %v1211 = vlaneseq
      %v1212 = vshrl.u32 %v1211, 7
      %v1213 = vsub.s32 %v1210, %v1212
      %v1214 = vrot.slane %v1207, %v1213
      %v1215 = vcombine.low %v1135, %v1136
      %v1217 = vunpack.c.l.s4 1983009808
      %v1218 = vunpack.c.0.s8 %v1217
      %v1219 = vlaneseq
      %v1220 = vshrl.u32 %v1219, 7
      %v1221 = vsub.s32 %v1218, %v1220
      %v1222 = vrot.slane %v1215, %v1221
      %v1223 = vcombine.low %v1127, %v1134
      %v1225 = vunpack.c.l.s4 1983009808
      %v1226 = vunpack.c.0.s8 %v1225
      %v1227 = vlaneseq
      %v1228 = vshrl.u32 %v1227, 7
      %v1229 = vsub.s32 %v1226, %v1228
      %v1230 = vrot.slane %v1223, %v1229
      %v1231 = vcombine.low %v1137, %v1138
      %v1233 = vunpack.c.l.s4 1983009808
      %v1234 = vunpack.c.0.s8 %v1233
      %v1235 = vlaneseq
      %v1236 = vshrl.u32 %v1235, 7
      %v1237 = vsub.s32 %v1234, %v1236
      %v1238 = vrot.slane %v1231, %v1237
      %v1239 = vcombine.low %v1214, %v1222
      %v1240 = vcombine.high %v1214, %v1222
      %v1242 = vunpack.c.l.s4 1934713408
      %v1243 = vunpack.c.0.s8 %v1242
      %v1244 = vlaneseq
      %v1245 = vshrl.u32 %v1244, 7
      %v1246 = vsub.s32 %v1243, %v1245
      %v1247 = vrot.slane %v1239, %v1246
      %v1249 = vunpack.c.l.s4 1934713408
      %v1250 = vunpack.c.0.s8 %v1249
      %v1251 = vlaneseq
      %v1252 = vshrl.u32 %v1251, 7
      %v1253 = vsub.s32 %v1250, %v1252
      %v1254 = vrot.slane %v1240, %v1253
      %v1255 = vcombine.low %v1230, %v1238
      %v1256 = vcombine.high %v1230, %v1238
      %v1258 = vunpack.c.l.s4 1934713408
      %v1259 = vunpack.c.0.s8 %v1258
      %v1260 = vlaneseq
      %v1261 = vshrl.u32 %v1260, 7
      %v1262 = vsub.s32 %v1259, %v1261
      %v1263 = vrot.slane %v1255, %v1262
      %v1265 = vunpack.c.l.s4 1934713408
      %v1266 = vunpack.c.0.s8 %v1265
      %v1267 = vlaneseq
      %v1268 = vshrl.u32 %v1267, 7
      %v1269 = vsub.s32 %v1266, %v1268
      %v1270 = vrot.slane %v1256, %v1269
      %v1271 = vcombine.low %v1247, %v1263
      %v1272 = vcombine.high %v1247, %v1263
      %v1273 = vcombine.low %v1254, %v1270
      %v1274 = vcombine.high %v1254, %v1270
      %v1275 = vpack.c.bf16 %v1271, %v1203
      %v1276 = vpack.c.bf16 %v1272, %v1204
      %v1277 = vpack.c.bf16 %v1273, %v1205
      %v1278 = vpack.c.bf16 %v1274, %v1206
      %v1283 = vunpack.c.l.b16 %v1275
      %v1284 = vunpack.c.h.b16 %v1275
      %v1285 = vunpack.c.l.b16 %v1276
      %v1286 = vunpack.c.h.b16 %v1276
      %v1287 = vunpack.c.l.b16 %v1277
      %v1288 = vunpack.c.h.b16 %v1277
      %v1289 = vunpack.c.l.b16 %v1278
      %v1290 = vunpack.c.h.b16 %v1278
      %v1291 = vpack.c.b16 %v1283, %v1283
      %v1292 = vpack.c.b16 %v1284, %v1284
      %v1293 = vpack.c.b16 %v1285, %v1285
      %v1294 = vpack.c.b16 %v1286, %v1286
      %v1295 = vpack.c.b16 %v1287, %v1287
      %v1296 = vpack.c.b16 %v1288, %v1288
      %v1297 = vpack.c.b16 %v1289, %v1289
      %v1298 = vpack.c.b16 %v1290, %v1290
      %1307 = vst.msk [vmem:[%s387] sm:$0xf] %vm974, %v1291
      %1308 = vst.msk [vmem:[%s387 + $0x4] sm:$0xf] %vm974, %v1292
      %1309 = vst.msk [vmem:[%s387 + $0x8] sm:$0xf] %vm974, %v1293
      %1310 = vst.msk [vmem:[%s387 + $0xc] sm:$0xf] %vm974, %v1294
      %1311 = vst.msk [vmem:[%s387 + $0x10] sm:$0xf] %vm974, %v1295
      %1312 = vst.msk [vmem:[%s387 + $0x14] sm:$0xf] %vm974, %v1296
      %1313 = vst.msk [vmem:[%s387 + $0x18] sm:$0xf] %vm974, %v1297
      %1314 = vst.msk [vmem:[%s387 + $0x1c] sm:$0xf] %vm974, %v1298
      %v1315 = vpack.c.bf16 %v636, %v636
      %v1316 = vpack.c.bf16 %v639, %v639
      %v1317 = vpack.c.bf16 %v644, %v644
      %v1318 = vpack.c.bf16 %v647, %v647
      %vm1319 = vcmask 125952
      %1320 = vst.msk [vmem:[%s378] sm:$0xf] %vm1319, %v1315
      %1321 = vst.msk [vmem:[%s378 + $0x4] sm:$0xf] %vm1319, %v1316
      %1322 = vst.msk [vmem:[%s378 + $0x8] sm:$0xf] %vm1319, %v1317
      %1323 = vst.msk [vmem:[%s378 + $0xc] sm:$0xf] %vm1319, %v1318
      %s1324 = smul.u32 2, %s25
      %p1325 = scmp.lt.s32.totalorder %s24, 1
      %s1326 = scalar_select %p1325, %s24, 1
      %p1327 = scmp.lt.s32.totalorder %s1324, 1
      %s1328 = scalar_select %p1327, %s1324, 1
      %s1329 = smul.addr %s1326, 8
      %s1330 = sadd.s32 %s1328, %s1329
      %s1331 = smul.addr %s1330, 4
      %s1332 = scalar_lea.vmem %s6, %s1331
      %p1333 = scmp.lt.s32.totalorder %s24, 1
      %s1334 = scalar_select %p1333, %s24, 1
      %p1335 = scmp.lt.s32.totalorder %s25, 0
      %s1336 = scalar_select %p1335, %s25, 0
      %s1337 = smul.addr %s1334, 4
      %s1338 = sadd.s32 %s1336, %s1337
      %s1339 = smul.addr %s1338, 4
      %s1340 = scalar_lea.vmem %s7, %s1339
      %s1341 = smul.u32 2, %s25
      %p1342 = scmp.lt.s32.totalorder %s24, 1
      %s1343 = scalar_select %p1342, %s24, 1
      %p1344 = scmp.lt.s32.totalorder %s1341, 1
      %s1345 = scalar_select %p1344, %s1341, 1
      %s1346 = smul.addr %s1343, 8
      %s1347 = sadd.s32 %s1345, %s1346
      %s1348 = smul.addr %s1347, 4
      %s1349 = scalar_lea.vmem %s8, %s1348
      // Predicated region
      $region45: #{transformer_forward.9} parent=43 // pred_check
        %p1350 = pneg %p185
      $region46: #{transformer_forward.9} parent=43 // pred_check_branch
        %1352 = sbr.rel (%p1350) target = $region48
      $region47: #{transformer_forward.9} parent=43 // pred_region
        %s1353 = smul.u32 2, %s25
      $region48: #{transformer_forward.9} parent=43 // pred_fallthru
        _
      // Predicated region
      $region49: #{transformer_forward.9} parent=43 // pred_check
        %p1354 = pneg %p213
      $region50: #{transformer_forward.9} parent=43 // pred_check_branch
        %1356 = sbr.rel (%p1354) target = $region52
      $region51: #{transformer_forward.9} parent=43 // pred_region
        _
      $region52: #{transformer_forward.9} parent=43 // pred_fallthru
        _
      // Predicated region
      $region53: #{transformer_forward.9} parent=43 // pred_check
        %p1357 = pneg %p241
      $region54: #{transformer_forward.9} parent=43 // pred_check_branch
        %1359 = sbr.rel (%p1357) target = $region56
      $region55: #{transformer_forward.9} parent=43 // pred_region
        %s1360 = smul.u32 2, %s25
      $region56: #{transformer_forward.9} parent=43 // pred_fallthru
        _
    $region44: #{transformer_forward.9} parent=5 // pred_fallthru
      _
    %p1361 = scmp.le.s32.totalorder 2, %s15
    // Predicated region
    $region57: #{transformer_forward.9} parent=5 // pred_check
      %p1362 = pneg %p1361
    $region58: #{transformer_forward.9} parent=5 // pred_check_branch
      %1364 = sbr.rel (%p1362) target = $region60
    $region59: #{transformer_forward.9} parent=5 // pred_region
      %s1365 = ssub.s32 %s15, 2
      // Predicated region
      $region61: #{transformer_forward.9} parent=59 // pred_check
        %p1366 = pneg %p191
      $region62: #{transformer_forward.9} parent=59 // pred_check_branch
        %1368 = sbr.rel (%p1366) target = $region64
      $region63: #{transformer_forward.9} parent=59 // pred_region
        %s1369 = smul.u32 2, %s27
        %p1370 = scmp.lt.s32.totalorder %s26, 1
        %s1371 = scalar_select %p1370, %s26, 1
        %p1372 = scmp.lt.s32.totalorder %s1369, 1
        %s1373 = scalar_select %p1372, %s1369, 1
        %s1374 = smul.addr %s1371, 8
        %s1375 = sadd.s32 %s1373, %s1374
        %s1376 = smul.addr %s1375, 4
        %s1377 = scalar_lea.vmem %s6, %s1376
      $region64: #{transformer_forward.9} parent=59 // pred_fallthru
        _
      // Predicated region
      $region65: #{transformer_forward.9} parent=59 // pred_check
        %p1378 = pneg %p219
      $region66: #{transformer_forward.9} parent=59 // pred_check_branch
        %1380 = sbr.rel (%p1378) target = $region68
      $region67: #{transformer_forward.9} parent=59 // pred_region
        %p1381 = scmp.lt.s32.totalorder %s26, 1
        %s1382 = scalar_select %p1381, %s26, 1
        %p1383 = scmp.lt.s32.totalorder %s27, 0
        %s1384 = scalar_select %p1383, %s27, 0
        %s1385 = smul.addr %s1382, 4
        %s1386 = sadd.s32 %s1384, %s1385
        %s1387 = smul.addr %s1386, 4
        %s1388 = scalar_lea.vmem %s7, %s1387
      $region68: #{transformer_forward.9} parent=59 // pred_fallthru
        _
      // Predicated region
      $region69: #{transformer_forward.9} parent=59 // pred_check
        %p1389 = pneg %p247
      $region70: #{transformer_forward.9} parent=59 // pred_check_branch
        %1391 = sbr.rel (%p1389) target = $region72
      $region71: #{transformer_forward.9} parent=59 // pred_region
        %s1392 = smul.u32 2, %s27
        %p1393 = scmp.lt.s32.totalorder %s26, 1
        %s1394 = scalar_select %p1393, %s26, 1
        %p1395 = scmp.lt.s32.totalorder %s1392, 1
        %s1396 = scalar_select %p1395, %s1392, 1
        %s1397 = smul.addr %s1394, 8
        %s1398 = sadd.s32 %s1396, %s1397
        %s1399 = smul.addr %s1398, 4
        %s1400 = scalar_lea.vmem %s8, %s1399
      $region72: #{transformer_forward.9} parent=59 // pred_fallthru
        _
    $region60: #{transformer_forward.9} parent=5 // pred_fallthru
      _
  $region6: #{transformer_forward.9} parent=0 // loop_footer
    %s19 = sadd.s32 1, %s15
  $region7: #{transformer_forward.9} parent=0 // loop_footer_branch
    %14 = sbr.rel target = $region3
  $region8: #{transformer_forward.9} parent=0 // loop_exit
    _

// kernel: transformer_forward.7
$region0: #{transformer_forward.7}
  #allocation0 [shape = 'u32[]', space=smem, size = 0x4, offset = 0x4, fixed_abs, tag = 'smem constant byte address 0x4 - core index']
  #allocation1 [shape = 'u32[144,128]{1,0:T(1,128)}', space=vmem, size = 0x12000, scoped, tag = 'internal scratch']
  #allocation2 [shape = 'f32[4,16,1]{2,1,0:T(8,128)}', space=vmem, size = 0x8000, scoped, tag = 'scratch operand']
  #allocation3 [shape = 'f32[4,16,1]{2,1,0:T(8,128)}', space=vmem, size = 0x8000, scoped, tag = 'scratch operand']
  #allocation4 [shape = 'f32[4,16,8]{2,1,0:T(8,128)}', space=vmem, size = 0x8000, scoped, tag = 'scratch operand']
  %s0 = inlined_call_operand.vmem [shape: f32[2,16,32], index: 0, kind: input, shape index: {}]
  %s1 = inlined_call_operand.vmem [shape: f32[1,32], index: 1, kind: input, shape index: {}]
  %s2 = inlined_call_operand.vmem [shape: bf16[2,4,16,8], index: 2, kind: input, shape index: {}]
  %s3 = inlined_call_operand.vmem [shape: bf16[2,4,8,16], index: 3, kind: input, shape index: {}]
  %s4 = inlined_call_operand.vmem [shape: bf16[2,4,16,8], index: 4, kind: input, shape index: {}]
  %s5 = inlined_call_operand.vmem [shape: bf16[32,32], index: 5, kind: input, shape index: {}]
  %s6 = inlined_call_operand.vmem [shape: f32[1,32], index: 6, kind: input, shape index: {}]
  %s7 = inlined_call_operand.vmem [shape: f32[2,16,32], index: 7, kind: output, shape index: {}]
  %s8 = sld [smem:[#allocation0]]
  $region69: #{transformer_forward.7} parent=0
    _
  %s10 = ssub.s32 1, %s8
  %s11 = scalar_select 0, %s10, %s8
  loop: start=0, step=1, limit=4
  $region2: #{transformer_forward.7} parent=0 // loop_pre_header
    _
  $region3: #{transformer_forward.7} parent=0 // loop_header
    %s13 = sphi 0, %s17
    %p14 = scmp.ge.s32.totalorder %s13, 4
    %s20 = sphi 0, %s39
    %s21 = sphi 0, %s35
    %s22 = sphi 0, %s31
    %s23 = sphi 0, %s20
    %s24 = sphi 0, %s21
    %s25 = sphi 0, %s22
    %s26 = sphi 0, %s23
    %s27 = sphi 0, %s24
    %s28 = sphi 0, %s25
    %s44 = sphi 0, %s46
    %s47 = sphi 0, %s44
    %s48 = sphi 0, %s47
    %s64 = sphi 0, %s48
    %s68 = sphi 0, %s68
    %s70 = sphi 0, %s68
    %s71 = sphi 0, %s70
    %s85 = sphi 0, %s71
    %s93 = sphi 0, %s95
    %s96 = sphi 0, %s93
    %s97 = sphi 0, %s96
    %s113 = sphi 0, %s97
    %s121 = sphi 0, %s123
    %s124 = sphi 0, %s121
    %s125 = sphi 0, %s124
    %s141 = sphi 0, %s125
    %s149 = sphi 0, %s151
    %s152 = sphi 0, %s149
    %s153 = sphi 0, %s152
    %s169 = sphi 0, %s153
    %s173 = sphi 0, %s173
    %s175 = sphi 0, %s173
    %s176 = sphi 0, %s175
    %s190 = sphi 0, %s176
    %s194 = sphi 0, %s194
    %s196 = sphi 0, %s194
    %s197 = sphi 0, %s196
    %s211 = sphi 0, %s197
    %s219 = sphi 0, %s221
    %s222 = sphi 0, %s219
    %s223 = sphi 0, %s222
    %s239 = sphi 0, %s223
  $region4: #{transformer_forward.7} parent=0 // loop_header_branch
    %16 = sbr.rel (%p14) target = $region8
  $region5: #{transformer_forward.7} parent=0 // loop_body
    %s18 = ssub.s32 %s13, 1
    %s19 = ssub.s32 %s13, 2
    %s29 = sadd.s32 1, %s22
    %p30 = scmp.ge.s32.totalorder %s29, 1
    %s31 = scalar_select %p30, 0, %s29
    %s32 = sadd.s32 1, %s21
    %s33 = scalar_select %p30, %s32, %s21
    %p34 = scmp.ge.s32.totalorder %s33, 1
    %s35 = scalar_select %p34, 0, %s33
    %s36 = sadd.s32 1, %s20
    %s37 = scalar_select %p34, %s36, %s20
    %p38 = scmp.ge.s32.totalorder %s37, 2
    %s39 = scalar_select %p38, 0, %s37
    %s40 = ssub.s32 %s20, %s39
    %s41 = ssub.s32 %s21, %s35
    %s42 = sor.u32 %s40, %s41
    %p43 = scmp.eq.s32.totalorder %s42, 0
    %s45 = sadd.s32 %s44, 1
    %s46 = scalar_select %p43, %s44, %s45
    %p49 = pneg %p43
    %p50 = scmp.eq.s32.totalorder %s13, 1
    %p51 = por %p49, %p50
    %p52 = scmp.ne.s32.totalorder %s44, %s47
    %p53 = scmp.eq.s32.totalorder %s13, 0
    %p54 = por %p52, %p53
    %p55 = scmp.ne.s32.totalorder %s44, %s47
    %p56 = scmp.eq.s32.totalorder %s18, 1
    %p57 = por %p55, %p56
    %p58 = scmp.ne.s32.totalorder %s47, %s48
    %p59 = scmp.eq.s32.totalorder %s18, 0
    %p60 = por %p58, %p59
    %p61 = scmp.ne.s32.totalorder %s47, %s48
    %p62 = scmp.eq.s32.totalorder %s19, 1
    %p63 = por %p61, %p62
    %p65 = scmp.ne.s32.totalorder %s48, %s64
    %p66 = scmp.eq.s32.totalorder %s19, 0
    %p67 = por %p65, %p66
    %s69 = sadd.s32 %s68, 1
    %p72 = scmp.eq.s32.totalorder %s13, 1
    %p73 = scmp.ne.s32.totalorder %s68, %s70
    %p74 = scmp.eq.s32.totalorder %s13, 0
    %p75 = por %p73, %p74
    %p76 = scmp.ne.s32.totalorder %s68, %s70
    %p77 = scmp.eq.s32.totalorder %s18, 1
    %p78 = por %p76, %p77
    %p79 = scmp.ne.s32.totalorder %s70, %s71
    %p80 = scmp.eq.s32.totalorder %s18, 0
    %p81 = por %p79, %p80
    %p82 = scmp.ne.s32.totalorder %s70, %s71
    %p83 = scmp.eq.s32.totalorder %s19, 1
    %p84 = por %p82, %p83
    %p86 = scmp.ne.s32.totalorder %s71, %s85
    %p87 = scmp.eq.s32.totalorder %s19, 0
    %p88 = por %p86, %p87
    %s89 = ssub.s32 %s20, %s39
    %s90 = ssub.s32 %s21, %s35
    %s91 = sor.u32 %s89, %s90
    %p92 = scmp.eq.s32.totalorder %s91, 0
    %s94 = sadd.s32 %s93, 1
    %s95 = scalar_select %p92, %s93, %s94
    %p98 = pneg %p92
    %p99 = scmp.eq.s32.totalorder %s13, 1
    %p100 = por %p98, %p99
    %p101 = scmp.ne.s32.totalorder %s93, %s96
    %p102 = scmp.eq.s32.totalorder %s13, 0
    %p103 = por %p101, %p102
    %p104 = scmp.ne.s32.totalorder %s93, %s96
    %p105 = scmp.eq.s32.totalorder %s18, 1
    %p106 = por %p104, %p105
    %p107 = scmp.ne.s32.totalorder %s96, %s97
    %p108 = scmp.eq.s32.totalorder %s18, 0
    %p109 = por %p107, %p108
    %p110 = scmp.ne.s32.totalorder %s96, %s97
    %p111 = scmp.eq.s32.totalorder %s19, 1
    %p112 = por %p110, %p111
    %p114 = scmp.ne.s32.totalorder %s97, %s113
    %p115 = scmp.eq.s32.totalorder %s19, 0
    %p116 = por %p114, %p115
    %s117 = ssub.s32 %s20, %s39
    %s118 = ssub.s32 %s22, %s31
    %s119 = sor.u32 %s117, %s118
    %p120 = scmp.eq.s32.totalorder %s119, 0
    %s122 = sadd.s32 %s121, 1
    %s123 = scalar_select %p120, %s121, %s122
    %p126 = pneg %p120
    %p127 = scmp.eq.s32.totalorder %s13, 1
    %p128 = por %p126, %p127
    %p129 = scmp.ne.s32.totalorder %s121, %s124
    %p130 = scmp.eq.s32.totalorder %s13, 0
    %p131 = por %p129, %p130
    %p132 = scmp.ne.s32.totalorder %s121, %s124
    %p133 = scmp.eq.s32.totalorder %s18, 1
    %p134 = por %p132, %p133
    %p135 = scmp.ne.s32.totalorder %s124, %s125
    %p136 = scmp.eq.s32.totalorder %s18, 0
    %p137 = por %p135, %p136
    %p138 = scmp.ne.s32.totalorder %s124, %s125
    %p139 = scmp.eq.s32.totalorder %s19, 1
    %p140 = por %p138, %p139
    %p142 = scmp.ne.s32.totalorder %s125, %s141
    %p143 = scmp.eq.s32.totalorder %s19, 0
    %p144 = por %p142, %p143
    %s145 = ssub.s32 %s20, %s39
    %s146 = ssub.s32 %s22, %s31
    %s147 = sor.u32 %s145, %s146
    %p148 = scmp.eq.s32.totalorder %s147, 0
    %s150 = sadd.s32 %s149, 1
    %s151 = scalar_select %p148, %s149, %s150
    %p154 = pneg %p148
    %p155 = scmp.eq.s32.totalorder %s13, 1
    %p156 = por %p154, %p155
    %p157 = scmp.ne.s32.totalorder %s149, %s152
    %p158 = scmp.eq.s32.totalorder %s13, 0
    %p159 = por %p157, %p158
    %p160 = scmp.ne.s32.totalorder %s149, %s152
    %p161 = scmp.eq.s32.totalorder %s18, 1
    %p162 = por %p160, %p161
    %p163 = scmp.ne.s32.totalorder %s152, %s153
    %p164 = scmp.eq.s32.totalorder %s18, 0
    %p165 = por %p163, %p164
    %p166 = scmp.ne.s32.totalorder %s152, %s153
    %p167 = scmp.eq.s32.totalorder %s19, 1
    %p168 = por %p166, %p167
    %p170 = scmp.ne.s32.totalorder %s153, %s169
    %p171 = scmp.eq.s32.totalorder %s19, 0
    %p172 = por %p170, %p171
    %s174 = sadd.s32 %s173, 1
    %p177 = scmp.eq.s32.totalorder %s13, 1
    %p178 = scmp.ne.s32.totalorder %s173, %s175
    %p179 = scmp.eq.s32.totalorder %s13, 0
    %p180 = por %p178, %p179
    %p181 = scmp.ne.s32.totalorder %s173, %s175
    %p182 = scmp.eq.s32.totalorder %s18, 1
    %p183 = por %p181, %p182
    %p184 = scmp.ne.s32.totalorder %s175, %s176
    %p185 = scmp.eq.s32.totalorder %s18, 0
    %p186 = por %p184, %p185
    %p187 = scmp.ne.s32.totalorder %s175, %s176
    %p188 = scmp.eq.s32.totalorder %s19, 1
    %p189 = por %p187, %p188
    %p191 = scmp.ne.s32.totalorder %s176, %s190
    %p192 = scmp.eq.s32.totalorder %s19, 0
    %p193 = por %p191, %p192
    %s195 = sadd.s32 %s194, 1
    %p198 = scmp.eq.s32.totalorder %s13, 1
    %p199 = scmp.ne.s32.totalorder %s194, %s196
    %p200 = scmp.eq.s32.totalorder %s13, 0
    %p201 = por %p199, %p200
    %p202 = scmp.ne.s32.totalorder %s194, %s196
    %p203 = scmp.eq.s32.totalorder %s18, 1
    %p204 = por %p202, %p203
    %p205 = scmp.ne.s32.totalorder %s196, %s197
    %p206 = scmp.eq.s32.totalorder %s18, 0
    %p207 = por %p205, %p206
    %p208 = scmp.ne.s32.totalorder %s196, %s197
    %p209 = scmp.eq.s32.totalorder %s19, 1
    %p210 = por %p208, %p209
    %p212 = scmp.ne.s32.totalorder %s197, %s211
    %p213 = scmp.eq.s32.totalorder %s19, 0
    %p214 = por %p212, %p213
    %s215 = ssub.s32 %s20, %s39
    %s216 = ssub.s32 %s21, %s35
    %s217 = sor.u32 %s215, %s216
    %p218 = scmp.eq.s32.totalorder %s217, 0
    %s220 = sadd.s32 %s219, 1
    %s221 = scalar_select %p218, %s219, %s220
    %p224 = pneg %p218
    %p225 = scmp.eq.s32.totalorder %s13, 1
    %p226 = por %p224, %p225
    %p227 = scmp.ne.s32.totalorder %s219, %s222
    %p228 = scmp.eq.s32.totalorder %s13, 0
    %p229 = por %p227, %p228
    %p230 = scmp.ne.s32.totalorder %s219, %s222
    %p231 = scmp.eq.s32.totalorder %s18, 1
    %p232 = por %p230, %p231
    %p233 = scmp.ne.s32.totalorder %s222, %s223
    %p234 = scmp.eq.s32.totalorder %s18, 0
    %p235 = por %p233, %p234
    %p236 = scmp.ne.s32.totalorder %s222, %s223
    %p237 = scmp.eq.s32.totalorder %s19, 1
    %p238 = por %p236, %p237
    %p240 = scmp.ne.s32.totalorder %s223, %s239
    %p241 = scmp.eq.s32.totalorder %s19, 0
    %p242 = por %p240, %p241
    %p243 = scmp.le.s32.totalorder 1, %s13
    %p244 = scmp.lt.s32.totalorder %s13, 3
    %p245 = pnand %p243, %p244
    %p246 = pneg %p245
    // Predicated region
    $region9: #{transformer_forward.7} parent=5 // pred_check
      _
    $region10: #{transformer_forward.7} parent=5 // pred_check_branch
      %248 = sbr.rel (%p245) target = $region12
    $region11: #{transformer_forward.7} parent=5 // pred_region
      %s249 = ssub.s32 %s13, 1
      // Predicated region
      $region13: #{transformer_forward.7} parent=11 // pred_check
        %p250 = pneg %p81
      $region14: #{transformer_forward.7} parent=11 // pred_check_branch
        %252 = sbr.rel (%p250) target = $region16
      $region15: #{transformer_forward.7} parent=11 // pred_region
        _
      $region16: #{transformer_forward.7} parent=11 // pred_fallthru
        _
      // Predicated region
      $region17: #{transformer_forward.7} parent=11 // pred_check
        %p253 = pneg %p186
      $region18: #{transformer_forward.7} parent=11 // pred_check_branch
        %255 = sbr.rel (%p253) target = $region20
      $region19: #{transformer_forward.7} parent=11 // pred_region
        _
      $region20: #{transformer_forward.7} parent=11 // pred_fallthru
        _
      // Predicated region
      $region21: #{transformer_forward.7} parent=11 // pred_check
        %p256 = pneg %p207
      $region22: #{transformer_forward.7} parent=11 // pred_check_branch
        %258 = sbr.rel (%p256) target = $region24
      $region23: #{transformer_forward.7} parent=11 // pred_region
        _
      $region24: #{transformer_forward.7} parent=11 // pred_fallthru
        _
    $region12: #{transformer_forward.7} parent=5 // pred_fallthru
      _
    %p259 = scmp.lt.s32.totalorder %s13, 2
    // Predicated region
    $region25: #{transformer_forward.7} parent=5 // pred_check
      %p260 = pneg %p259
    $region26: #{transformer_forward.7} parent=5 // pred_check_branch
      %262 = sbr.rel (%p260) target = $region28
    $region27: #{transformer_forward.7} parent=5 // pred_region
      // Predicated region
      $region29: #{transformer_forward.7} parent=27 // pred_check
        %p263 = pneg %p54
      $region30: #{transformer_forward.7} parent=27 // pred_check_branch
        %265 = sbr.rel (%p263) target = $region32
      $region31: #{transformer_forward.7} parent=27 // pred_region
        %s266 = smul.u32 2, %s21
        %p267 = scmp.lt.s32.totalorder %s20, 1
        %s268 = scalar_select %p267, %s20, 1
        %p269 = scmp.lt.s32.totalorder %s266, 1
        %s270 = scalar_select %p269, %s266, 1
        %s271 = smul.addr %s268, 2
        %s272 = sadd.s32 %s270, %s271
        %s273 = smul.addr %s272, 8
        %s274 = scalar_lea.vmem %s0, %s273
        %s275 = smul.u32 2, %s21
      $region32: #{transformer_forward.7} parent=27 // pred_fallthru
        _
      // Predicated region
      $region33: #{transformer_forward.7} parent=27 // pred_check
        %p276 = pneg %p103
      $region34: #{transformer_forward.7} parent=27 // pred_check_branch
        %278 = sbr.rel (%p276) target = $region36
      $region35: #{transformer_forward.7} parent=27 // pred_region
        %s279 = smul.u32 2, %s21
        %p280 = scmp.lt.s32.totalorder %s20, 1
        %s281 = scalar_select %p280, %s20, 1
        %p282 = scmp.lt.s32.totalorder %s279, 1
        %s283 = scalar_select %p282, %s279, 1
        %s284 = smul.addr %s281, 8
        %s285 = sadd.s32 %s283, %s284
        %s286 = smul.addr %s285, 4
        %s287 = scalar_lea.vmem %s2, %s286
        %s288 = smul.u32 2, %s21
      $region36: #{transformer_forward.7} parent=27 // pred_fallthru
        _
      // Predicated region
      $region37: #{transformer_forward.7} parent=27 // pred_check
        %p289 = pneg %p131
      $region38: #{transformer_forward.7} parent=27 // pred_check_branch
        %291 = sbr.rel (%p289) target = $region40
      $region39: #{transformer_forward.7} parent=27 // pred_region
        %p292 = scmp.lt.s32.totalorder %s20, 1
        %s293 = scalar_select %p292, %s20, 1
        %p294 = scmp.lt.s32.totalorder %s22, 0
        %s295 = scalar_select %p294, %s22, 0
        %s296 = smul.addr %s293, 4
        %s297 = sadd.s32 %s295, %s296
        %s298 = smul.addr %s297, 4
        %s299 = scalar_lea.vmem %s3, %s298
      $region40: #{transformer_forward.7} parent=27 // pred_fallthru
        _
      // Predicated region
      $region41: #{transformer_forward.7} parent=27 // pred_check
        %p300 = pneg %p159
      $region42: #{transformer_forward.7} parent=27 // pred_check_branch
        %302 = sbr.rel (%p300) target = $region44
      $region43: #{transformer_forward.7} parent=27 // pred_region
        %s303 = smul.u32 2, %s22
        %p304 = scmp.lt.s32.totalorder %s20, 1
        %s305 = scalar_select %p304, %s20, 1
        %p306 = scmp.lt.s32.totalorder %s303, 1
        %s307 = scalar_select %p306, %s303, 1
        %s308 = smul.addr %s305, 8
        %s309 = sadd.s32 %s307, %s308
        %s310 = smul.addr %s309, 4
        %s311 = scalar_lea.vmem %s4, %s310
        %s312 = smul.u32 2, %s22
      $region44: #{transformer_forward.7} parent=27 // pred_fallthru
        _
    $region28: #{transformer_forward.7} parent=5 // pred_fallthru
      _
    %p313 = scmp.le.s32.totalorder 1, %s13
    %p314 = scmp.lt.s32.totalorder %s13, 3
    %p315 = pnand %p313, %p314
    %p316 = pneg %p315
    // Predicated region
    $region45: #{transformer_forward.7} parent=5 // pred_check
      _
    $region46: #{transformer_forward.7} parent=5 // pred_check_branch
      %318 = sbr.rel (%p315) target = $region48
    $region47: #{transformer_forward.7} parent=5 // pred_region
      %s319 = ssub.s32 %s13, 1
      %s320 = smul.u32 2, %s24
      %p321 = scmp.lt.s32.totalorder %s23, 1
      %s322 = scalar_select %p321, %s23, 1
      %p323 = scmp.lt.s32.totalorder %s320, 1
      %s324 = scalar_select %p323, %s320, 1
      %s325 = smul.addr %s322, 2
      %s326 = sadd.s32 %s324, %s325
      %s327 = smul.addr %s326, 8
      %s328 = scalar_lea.vmem %s0, %s327
      %p329 = pneg %p60
      %p330 = pneg %p57
      %p331 = pneg %p81
      %p332 = pneg %p78
      %s333 = smul.u32 2, %s24
      %p334 = scmp.lt.s32.totalorder %s23, 1
      %s335 = scalar_select %p334, %s23, 1
      %p336 = scmp.lt.s32.totalorder %s333, 1
      %s337 = scalar_select %p336, %s333, 1
      %s338 = smul.addr %s335, 8
      %s339 = sadd.s32 %s337, %s338
      %s340 = smul.addr %s339, 4
      %s341 = scalar_lea.vmem %s2, %s340
      %p342 = pneg %p109
      %p343 = pneg %p106
      %p344 = scmp.lt.s32.totalorder %s23, 1
      %s345 = scalar_select %p344, %s23, 1
      %p346 = scmp.lt.s32.totalorder %s25, 0
      %s347 = scalar_select %p346, %s25, 0
      %s348 = smul.addr %s345, 4
      %s349 = sadd.s32 %s347, %s348
      %s350 = smul.addr %s349, 4
      %s351 = scalar_lea.vmem %s3, %s350
      %p352 = pneg %p137
      %p353 = pneg %p134
      %s354 = smul.u32 2, %s25
      %p355 = scmp.lt.s32.totalorder %s23, 1
      %s356 = scalar_select %p355, %s23, 1
      %p357 = scmp.lt.s32.totalorder %s354, 1
      %s358 = scalar_select %p357, %s354, 1
      %s359 = smul.addr %s356, 8
      %s360 = sadd.s32 %s358, %s359
      %s361 = smul.addr %s360, 4
      %s362 = scalar_lea.vmem %s4, %s361
      %p363 = pneg %p165
      %p364 = pneg %p162
      %p365 = pneg %p186
      %p366 = pneg %p183
      %p367 = pneg %p207
      %p368 = pneg %p204
      %p369 = pneg %p235
      %p370 = pneg %p232
      %s371 = smul.u32 2, %s24
      %p372 = scmp.lt.s32.totalorder %s23, 1
      %s373 = scalar_select %p372, %s23, 1
      %p374 = scmp.lt.s32.totalorder %s371, 1
      %s375 = scalar_select %p374, %s371, 1
      %s376 = smul.addr %s373, 2
      %s377 = sadd.s32 %s375, %s376
      %s378 = smul.addr %s377, 8
      %s379 = scalar_lea.vmem %s7, %s378
      %s380 = smul.u32 2, %s24
      %p381 = scmp.lt.s32.totalorder %s23, 1
      %s382 = scalar_select %p381, %s23, 1
      %p383 = scmp.lt.s32.totalorder %s380, 1
      %s384 = scalar_select %p383, %s380, 1
      %s385 = smul.addr %s382, 2
      %s386 = sadd.s32 %s384, %s385
      %s387 = smul.addr %s386, 8
      %s388 = scalar_lea.vmem %s0, %s387
      %s389 = smul.u32 2, %s24
      %s390 = smul.u32 2, %s24
      %p391 = scmp.lt.s32.totalorder %s23, 1
      %s392 = scalar_select %p391, %s23, 1
      %p393 = scmp.lt.s32.totalorder %s390, 1
      %s394 = scalar_select %p393, %s390, 1
      %s395 = smul.addr %s392, 8
      %s396 = sadd.s32 %s394, %s395
      %s397 = smul.addr %s396, 4
      %s398 = scalar_lea.vmem %s2, %s397
      %s399 = smul.u32 2, %s24
      %p400 = scmp.lt.s32.totalorder %s23, 1
      %s401 = scalar_select %p400, %s23, 1
      %p402 = scmp.lt.s32.totalorder %s25, 0
      %s403 = scalar_select %p402, %s25, 0
      %s404 = smul.addr %s401, 4
      %s405 = sadd.s32 %s403, %s404
      %s406 = smul.addr %s405, 4
      %s407 = scalar_lea.vmem %s3, %s406
      %s408 = smul.u32 2, %s25
      %p409 = scmp.lt.s32.totalorder %s23, 1
      %s410 = scalar_select %p409, %s23, 1
      %p411 = scmp.lt.s32.totalorder %s408, 1
      %s412 = scalar_select %p411, %s408, 1
      %s413 = smul.addr %s410, 8
      %s414 = sadd.s32 %s412, %s413
      %s415 = smul.addr %s414, 4
      %s416 = scalar_lea.vmem %s4, %s415
      %s417 = smul.u32 2, %s25
      %s418 = smul.u32 2, %s24
      %p419 = scmp.lt.s32.totalorder %s23, 1
      %s420 = scalar_select %p419, %s23, 1
      %p421 = scmp.lt.s32.totalorder %s418, 1
      %s422 = scalar_select %p421, %s418, 1
      %s423 = smul.addr %s420, 2
      %s424 = sadd.s32 %s422, %s423
      %s425 = smul.addr %s424, 8
      %s426 = scalar_lea.vmem %s7, %s425
      %s427 = smul.u32 2, %s24
      %p429 = scmp.eq.s32.totalorder %s25, 0
      // Predicated region
      $region49: #{transformer_forward.7} parent=47 // pred_check
        %p430 = pneg %p429
      $region50: #{transformer_forward.7} parent=47 // pred_check_branch
        %432 = sbr.rel (%p430) target = $region52
      $region51: #{transformer_forward.7} parent=47 // pred_region
        %vm433 = vcmask 7168
        %434 = vst.msk [vmem:[#allocation2] sm:$0xff] %vm433, -inf
        %435 = vst.msk [vmem:[#allocation2 + $0x8] sm:$0xff] %vm433, -inf
        %436 = vst.msk [vmem:[#allocation2 + $0x10] sm:$0xff] %vm433, -inf
        %437 = vst.msk [vmem:[#allocation2 + $0x18] sm:$0xff] %vm433, -inf
        %438 = vst.msk [vmem:[#allocation2 + $0x20] sm:$0xff] %vm433, -inf
        %439 = vst.msk [vmem:[#allocation2 + $0x28] sm:$0xff] %vm433, -inf
        %440 = vst.msk [vmem:[#allocation2 + $0x30] sm:$0xff] %vm433, -inf
        %441 = vst.msk [vmem:[#allocation2 + $0x38] sm:$0xff] %vm433, -inf
        %442 = vst.msk [vmem:[#allocation3] sm:$0xff] %vm433, 0.0
        %443 = vst.msk [vmem:[#allocation3 + $0x8] sm:$0xff] %vm433, 0.0
        %444 = vst.msk [vmem:[#allocation3 + $0x10] sm:$0xff] %vm433, 0.0
        %445 = vst.msk [vmem:[#allocation3 + $0x18] sm:$0xff] %vm433, 0.0
        %446 = vst.msk [vmem:[#allocation3 + $0x20] sm:$0xff] %vm433, 0.0
        %447 = vst.msk [vmem:[#allocation3 + $0x28] sm:$0xff] %vm433, 0.0
        %448 = vst.msk [vmem:[#allocation3 + $0x30] sm:$0xff] %vm433, 0.0
        %449 = vst.msk [vmem:[#allocation3 + $0x38] sm:$0xff] %vm433, 0.0
        %vm450 = vcmask 64512
        %451 = vst.msk [vmem:[#allocation4] sm:$0xff] %vm450, 0.0
        %452 = vst.msk [vmem:[#allocation4 + $0x8] sm:$0xff] %vm450, 0.0
        %453 = vst.msk [vmem:[#allocation4 + $0x10] sm:$0xff] %vm450, 0.0
        %454 = vst.msk [vmem:[#allocation4 + $0x18] sm:$0xff] %vm450, 0.0
        %455 = vst.msk [vmem:[#allocation4 + $0x20] sm:$0xff] %vm450, 0.0
        %456 = vst.msk [vmem:[#allocation4 + $0x28] sm:$0xff] %vm450, 0.0
        %457 = vst.msk [vmem:[#allocation4 + $0x30] sm:$0xff] %vm450, 0.0
        %458 = vst.msk [vmem:[#allocation4 + $0x38] sm:$0xff] %vm450, 0.0
      $region52: #{transformer_forward.7} parent=47 // pred_fallthru
        _
      %v459 = vld [vmem:[%s398] sm:$0xf]
      %v460 = vld [vmem:[%s398 + $0x4] sm:$0xf]
      %v461 = vld [vmem:[%s398 + $0x8] sm:$0xf]
      %v462 = vld [vmem:[%s398 + $0xc] sm:$0xf]
      %v463 = vld [vmem:[%s398 + $0x10] sm:$0xf]
      %v464 = vld [vmem:[%s398 + $0x14] sm:$0xf]
      %v465 = vld [vmem:[%s398 + $0x18] sm:$0xf]
      %v466 = vld [vmem:[%s398 + $0x1c] sm:$0xf]
      %v467 = vld [vmem:[%s407] sm:$0xf]
      %v468 = vld [vmem:[%s407 + $0x4] sm:$0xf]
      %v469 = vld [vmem:[%s407 + $0x8] sm:$0xf]
      %v470 = vld [vmem:[%s407 + $0xc] sm:$0xf]
      %v471 = vld [vmem:[%s416] sm:$0xf]
      %v472 = vld [vmem:[%s416 + $0x4] sm:$0xf]
      %v473 = vld [vmem:[%s416 + $0x8] sm:$0xf]
      %v474 = vld [vmem:[%s416 + $0xc] sm:$0xf]
      %v475 = vld [vmem:[%s416 + $0x10] sm:$0xf]
      %v476 = vld [vmem:[%s416 + $0x14] sm:$0xf]
      %v477 = vld [vmem:[%s416 + $0x18] sm:$0xf]
      %v478 = vld [vmem:[%s416 + $0x1c] sm:$0xf]
      %v481 = vunpack.c.l.b16 %v459
      %v482 = vunpack.c.l.b16 %v460
      %v483 = vpack.c.b16 %v482, %v481
      %vm484 = vcmask 64512
      %v486 = vsel %vm484, %v483, 0
      %vm488 = vcmask 1043456
      %v490 = vsel %vm488, %v467, 0
      %492 = vmatprep.subr.bf16.mxu0 0
      %493 = vmatpush1.bf16.msra.mxu0 %v490
      %494 = vmatprep.subr.bf16.mxu0 0
      %495 = vmatpush1.bf16.msra.mxu0 0
      %496 = vmatprep.subr.bf16.mxu0 0
      %497 = vmatpush1.bf16.msra.mxu0 0
      %498 = vmatprep.subr.bf16.mxu0 0
      %499 = vmatpush1.bf16.msra.mxu0 0
      %500 = vmatprep.subr.bf16.mxu0 0
      %501 = vmatpush1.bf16.msra.mxu0 0
      %502 = vmatprep.subr.bf16.mxu0 0
      %503 = vmatpush1.bf16.msra.mxu0 0
      %504 = vmatprep.subr.bf16.mxu0 0
      %505 = vmatpush1.bf16.msra.mxu0 0
      %506 = vmatprep.subr.bf16.mxu0 0
      %507 = vmatpush1.bf16.msra.mxu0 0
      %508 = vmatprep.subr.bf16.mxu0 0
      %509 = vmatpush1.bf16.msra.mxu0 0
      %510 = vmatprep.subr.bf16.mxu0 0
      %511 = vmatpush1.bf16.msra.mxu0 0
      %512 = vmatprep.subr.bf16.mxu0 0
      %513 = vmatpush1.bf16.msra.mxu0 0
      %514 = vmatprep.subr.bf16.mxu0 0
      %515 = vmatpush1.bf16.msra.mxu0 0
      %516 = vmatprep.subr.bf16.mxu0 0
      %517 = vmatpush1.bf16.msra.mxu0 0
      %518 = vmatprep.subr.bf16.mxu0 0
      %519 = vmatpush1.bf16.msra.mxu0 0
      %520 = vmatprep.subr.bf16.mxu0 0
      %521 = vmatpush1.bf16.msra.mxu0 0
      %522 = vmatprep.subr.bf16.mxu0 0
      %523 = vmatpush1.bf16.msra.mxu0 0
      %524 = vmatprep.mubr.bf16.mxu0 0
      %525 = vmatmul.mubr.bf16.gmra.mrb[0].mxu0 %v486
      %v526 = vpop.f32.mrb[0].mxu0
      %v527 = vadd.f32 0.0, %v526
      %v528 = vpop.f32.mrb[0].mxu0
      %v529 = vpop.f32.mrb[0].mxu0
      %v530 = vadd.f32 0.0, %v529
      %v531 = vpop.f32.mrb[0].mxu0
      %532 = vdwg.mxu0
      %v535 = vunpack.c.l.b16 %v461
      %v536 = vunpack.c.l.b16 %v462
      %v537 = vpack.c.b16 %v536, %v535
      %v539 = vsel %vm484, %v537, 0
      %v542 = vsel %vm488, %v468, 0
      %544 = vmatprep.subr.bf16.mxu0 0
      %545 = vmatpush1.bf16.msra.mxu0 %v542
      %546 = vmatprep.subr.bf16.mxu0 0
      %547 = vmatpush1.bf16.msra.mxu0 0
      %548 = vmatprep.subr.bf16.mxu0 0
      %549 = vmatpush1.bf16.msra.mxu0 0
      %550 = vmatprep.subr.bf16.mxu0 0
      %551 = vmatpush1.bf16.msra.mxu0 0
      %552 = vmatprep.subr.bf16.mxu0 0
      %553 = vmatpush1.bf16.msra.mxu0 0
      %554 = vmatprep.subr.bf16.mxu0 0
      %555 = vmatpush1.bf16.msra.mxu0 0
      %556 = vmatprep.subr.bf16.mxu0 0
      %557 = vmatpush1.bf16.msra.mxu0 0
      %558 = vmatprep.subr.bf16.mxu0 0
      %559 = vmatpush1.bf16.msra.mxu0 0
      %560 = vmatprep.subr.bf16.mxu0 0
      %561 = vmatpush1.bf16.msra.mxu0 0
      %562 = vmatprep.subr.bf16.mxu0 0
      %563 = vmatpush1.bf16.msra.mxu0 0
      %564 = vmatprep.subr.bf16.mxu0 0
      %565 = vmatpush1.bf16.msra.mxu0 0
      %566 = vmatprep.subr.bf16.mxu0 0
      %567 = vmatpush1.bf16.msra.mxu0 0
      %568 = vmatprep.subr.bf16.mxu0 0
      %569 = vmatpush1.bf16.msra.mxu0 0
      %570 = vmatprep.subr.bf16.mxu0 0
      %571 = vmatpush1.bf16.msra.mxu0 0
      %572 = vmatprep.subr.bf16.mxu0 0
      %573 = vmatpush1.bf16.msra.mxu0 0
      %574 = vmatprep.subr.bf16.mxu0 0
      %575 = vmatpush1.bf16.msra.mxu0 0
      %576 = vmatprep.mubr.bf16.mxu0 0
      %577 = vmatmul.mubr.bf16.gmra.mrb[0].mxu0 %v539
      %v578 = vpop.f32.mrb[0].mxu0
      %v579 = vadd.f32 0.0, %v578
      %v580 = vpop.f32.mrb[0].mxu0
      %v581 = vpop.f32.mrb[0].mxu0
      %v582 = vadd.f32 0.0, %v581
      %v583 = vpop.f32.mrb[0].mxu0
      %584 = vdwg.mxu0
      %v587 = vunpack.c.l.b16 %v463
      %v588 = vunpack.c.l.b16 %v464
      %v589 = vpack.c.b16 %v588, %v587
      %v591 = vsel %vm484, %v589, 0
      %v594 = vsel %vm488, %v469, 0
      %596 = vmatprep.subr.bf16.mxu0 0
      %597 = vmatpush1.bf16.msra.mxu0 %v594
      %598 = vmatprep.subr.bf16.mxu0 0
      %599 = vmatpush1.bf16.msra.mxu0 0
      %600 = vmatprep.subr.bf16.mxu0 0
      %601 = vmatpush1.bf16.msra.mxu0 0
      %602 = vmatprep.subr.bf16.mxu0 0
      %603 = vmatpush1.bf16.msra.mxu0 0
      %604 = vmatprep.subr.bf16.mxu0 0
      %605 = vmatpush1.bf16.msra.mxu0 0
      %606 = vmatprep.subr.bf16.mxu0 0
      %607 = vmatpush1.bf16.msra.mxu0 0
      %608 = vmatprep.subr.bf16.mxu0 0
      %609 = vmatpush1.bf16.msra.mxu0 0
      %610 = vmatprep.subr.bf16.mxu0 0
      %611 = vmatpush1.bf16.msra.mxu0 0
      %612 = vmatprep.subr.bf16.mxu0 0
      %613 = vmatpush1.bf16.msra.mxu0 0
      %614 = vmatprep.subr.bf16.mxu0 0
      %615 = vmatpush1.bf16.msra.mxu0 0
      %616 = vmatprep.subr.bf16.mxu0 0
      %617 = vmatpush1.bf16.msra.mxu0 0
      %618 = vmatprep.subr.bf16.mxu0 0
      %619 = vmatpush1.bf16.msra.mxu0 0
      %620 = vmatprep.subr.bf16.mxu0 0
      %621 = vmatpush1.bf16.msra.mxu0 0
      %622 = vmatprep.subr.bf16.mxu0 0
      %623 = vmatpush1.bf16.msra.mxu0 0
      %624 = vmatprep.subr.bf16.mxu0 0
      %625 = vmatpush1.bf16.msra.mxu0 0
      %626 = vmatprep.subr.bf16.mxu0 0
      %627 = vmatpush1.bf16.msra.mxu0 0
      %628 = vmatprep.mubr.bf16.mxu0 0
      %629 = vmatmul.mubr.bf16.gmra.mrb[0].mxu0 %v591
      %v630 = vpop.f32.mrb[0].mxu0
      %v631 = vadd.f32 0.0, %v630
      %v632 = vpop.f32.mrb[0].mxu0
      %v633 = vpop.f32.mrb[0].mxu0
      %v634 = vadd.f32 0.0, %v633
      %v635 = vpop.f32.mrb[0].mxu0
      %636 = vdwg.mxu0
      %v639 = vunpack.c.l.b16 %v465
      %v640 = vunpack.c.l.b16 %v466
      %v641 = vpack.c.b16 %v640, %v639
      %v643 = vsel %vm484, %v641, 0
      %v646 = vsel %vm488, %v470, 0
      %648 = vmatprep.subr.bf16.mxu0 0
      %649 = vmatpush1.bf16.msra.mxu0 %v646
      %650 = vmatprep.subr.bf16.mxu0 0
      %651 = vmatpush1.bf16.msra.mxu0 0
      %652 = vmatprep.subr.bf16.mxu0 0
      %653 = vmatpush1.bf16.msra.mxu0 0
      %654 = vmatprep.subr.bf16.mxu0 0
      %655 = vmatpush1.bf16.msra.mxu0 0
      %656 = vmatprep.subr.bf16.mxu0 0
      %657 = vmatpush1.bf16.msra.mxu0 0
      %658 = vmatprep.subr.bf16.mxu0 0
      %659 = vmatpush1.bf16.msra.mxu0 0
      %660 = vmatprep.subr.bf16.mxu0 0
      %661 = vmatpush1.bf16.msra.mxu0 0
      %662 = vmatprep.subr.bf16.mxu0 0
      %663 = vmatpush1.bf16.msra.mxu0 0
      %664 = vmatprep.subr.bf16.mxu0 0
      %665 = vmatpush1.bf16.msra.mxu0 0
      %666 = vmatprep.subr.bf16.mxu0 0
      %667 = vmatpush1.bf16.msra.mxu0 0
      %668 = vmatprep.subr.bf16.mxu0 0
      %669 = vmatpush1.bf16.msra.mxu0 0
      %670 = vmatprep.subr.bf16.mxu0 0
      %671 = vmatpush1.bf16.msra.mxu0 0
      %672 = vmatprep.subr.bf16.mxu0 0
      %673 = vmatpush1.bf16.msra.mxu0 0
      %674 = vmatprep.subr.bf16.mxu0 0
      %675 = vmatpush1.bf16.msra.mxu0 0
      %676 = vmatprep.subr.bf16.mxu0 0
      %677 = vmatpush1.bf16.msra.mxu0 0
      %678 = vmatprep.subr.bf16.mxu0 0
      %679 = vmatpush1.bf16.msra.mxu0 0
      %680 = vmatprep.mubr.bf16.mxu0 0
      %681 = vmatmul.mubr.bf16.gmra.mrb[0].mxu0 %v643
      %v682 = vpop.f32.mrb[0].mxu0
      %v683 = vadd.f32 0.0, %v682
      %v684 = vpop.f32.mrb[0].mxu0
      %v685 = vpop.f32.mrb[0].mxu0
      %v686 = vadd.f32 0.0, %v685
      %v687 = vpop.f32.mrb[0].mxu0
      %688 = vdwg.mxu0
      %s689 = smul.u32 %s25, 16
      %v690 = vlaneseq
      %v691 = vand.u32 %v690, 127
      %v692 = vstv %s689
      %v693 = vadd.s32 %v692, %v691
      %vm694 = vcmp.lt.s32.totalorder %v693, 12
      %v695 = vsel %vm694, %v527, -1e+30
      %v696 = vsel %vm694, %v530, -1e+30
      %v697 = vsel %vm694, %v579, -1e+30
      %v698 = vsel %vm694, %v582, -1e+30
      %v699 = vsel %vm694, %v631, -1e+30
      %v700 = vsel %vm694, %v634, -1e+30
      %v701 = vsel %vm694, %v683, -1e+30
      %v702 = vsel %vm694, %v686, -1e+30
      %v703 = vld [vmem:[#allocation2] sm:$0xff]
      %v704 = vld [vmem:[#allocation2 + $0x8] sm:$0xff]
      %v705 = vld [vmem:[#allocation2 + $0x10] sm:$0xff]
      %v706 = vld [vmem:[#allocation2 + $0x18] sm:$0xff]
      %v707 = vld [vmem:[#allocation2 + $0x20] sm:$0xff]
      %v708 = vld [vmem:[#allocation2 + $0x28] sm:$0xff]
      %v709 = vld [vmem:[#allocation2 + $0x30] sm:$0xff]
      %v710 = vld [vmem:[#allocation2 + $0x38] sm:$0xff]
      %vm711 = vcmask 130048
      %v712 = vsel %vm711, %v695, -inf
      %713 = vmax.xlane.f32.xlu0 %v712
      %v714 = vpop.xlane.xlu0 %713
      %v715 = vsel %vm711, %v696, -inf
      %716 = vmax.xlane.f32.xlu0 %v715
      %v717 = vpop.xlane.xlu0 %716
      %v718 = vsel %vm711, %v697, -inf
      %719 = vmax.xlane.f32.xlu0 %v718
      %v720 = vpop.xlane.xlu0 %719
      %v721 = vsel %vm711, %v698, -inf
      %722 = vmax.xlane.f32.xlu0 %v721
      %v723 = vpop.xlane.xlu0 %722
      %v724 = vsel %vm711, %v699, -inf
      %725 = vmax.xlane.f32.xlu0 %v724
      %v726 = vpop.xlane.xlu0 %725
      %v727 = vsel %vm711, %v700, -inf
      %728 = vmax.xlane.f32.xlu0 %v727
      %v729 = vpop.xlane.xlu0 %728
      %v730 = vsel %vm711, %v701, -inf
      %731 = vmax.xlane.f32.xlu0 %v730
      %v732 = vpop.xlane.xlu0 %731
      %v733 = vsel %vm711, %v702, -inf
      %734 = vmax.xlane.f32.xlu0 %v733
      %v735 = vpop.xlane.xlu0 %734
      %v736 = vmax.f32 %v703, %v714
      %v737 = vmax.f32 %v704, %v717
      %v738 = vmax.f32 %v705, %v720
      %v739 = vmax.f32 %v706, %v723
      %v740 = vmax.f32 %v707, %v726
      %v741 = vmax.f32 %v708, %v729
      %v742 = vmax.f32 %v709, %v732
      %v743 = vmax.f32 %v710, %v735
      %v744 = vsub.f32 %v703, %v736
      %v745 = vsub.f32 %v704, %v737
      %v746 = vsub.f32 %v705, %v738
      %v747 = vsub.f32 %v706, %v739
      %v748 = vsub.f32 %v707, %v740
      %v749 = vsub.f32 %v708, %v741
      %v750 = vsub.f32 %v709, %v742
      %v751 = vsub.f32 %v710, %v743
      %v752 = vmul.f32 %v744, 1.442695
      %v753 = vpow.pop %v752
      %v754 = vmul.f32 %v745, 1.442695
      %v755 = vpow.pop %v754
      %v756 = vmul.f32 %v746, 1.442695
      %v757 = vpow.pop %v756
      %v758 = vmul.f32 %v747, 1.442695
      %v759 = vpow.pop %v758
      %v760 = vmul.f32 %v748, 1.442695
      %v761 = vpow.pop %v760
      %v762 = vmul.f32 %v749, 1.442695
      %v763 = vpow.pop %v762
      %v764 = vmul.f32 %v750, 1.442695
      %v765 = vpow.pop %v764
      %v766 = vmul.f32 %v751, 1.442695
      %v767 = vpow.pop %v766
      %769 = vset.pattern.permute.xlu0 0
      %770 = vperm.xlu0 %769, %v736
      %v771 = vpop.permute.xlu0 %770
      %774 = vset.pattern.permute.xlu0 0
      %775 = vperm.xlu0 %774, %v737
      %v776 = vpop.permute.xlu0 %775
      %779 = vset.pattern.permute.xlu0 0
      %780 = vperm.xlu0 %779, %v738
      %v781 = vpop.permute.xlu0 %780
      %784 = vset.pattern.permute.xlu0 0
      %785 = vperm.xlu0 %784, %v739
      %v786 = vpop.permute.xlu0 %785
      %789 = vset.pattern.permute.xlu0 0
      %790 = vperm.xlu0 %789, %v740
      %v791 = vpop.permute.xlu0 %790
      %794 = vset.pattern.permute.xlu0 0
      %795 = vperm.xlu0 %794, %v741
      %v796 = vpop.permute.xlu0 %795
      %799 = vset.pattern.permute.xlu0 0
      %800 = vperm.xlu0 %799, %v742
      %v801 = vpop.permute.xlu0 %800
      %804 = vset.pattern.permute.xlu0 0
      %805 = vperm.xlu0 %804, %v743
      %v806 = vpop.permute.xlu0 %805
      %v808 = vsub.f32 %v695, %v771
      %v809 = vsub.f32 %v696, %v776
      %v810 = vsub.f32 %v697, %v781
      %v811 = vsub.f32 %v698, %v786
      %v812 = vsub.f32 %v699, %v791
      %v813 = vsub.f32 %v700, %v796
      %v814 = vsub.f32 %v701, %v801
      %v815 = vsub.f32 %v702, %v806
      %v816 = vmul.f32 %v808, 1.442695
      %v817 = vpow.pop %v816
      %v818 = vmul.f32 %v809, 1.442695
      %v819 = vpow.pop %v818
      %v820 = vmul.f32 %v810, 1.442695
      %v821 = vpow.pop %v820
      %v822 = vmul.f32 %v811, 1.442695
      %v823 = vpow.pop %v822
      %v824 = vmul.f32 %v812, 1.442695
      %v825 = vpow.pop %v824
      %v826 = vmul.f32 %v813, 1.442695
      %v827 = vpow.pop %v826
      %v828 = vmul.f32 %v814, 1.442695
      %v829 = vpow.pop %v828
      %v830 = vmul.f32 %v815, 1.442695
      %v831 = vpow.pop %v830
      %v832 = vld [vmem:[#allocation3] sm:$0xff]
      %v833 = vld [vmem:[#allocation3 + $0x8] sm:$0xff]
      %v834 = vld [vmem:[#allocation3 + $0x10] sm:$0xff]
      %v835 = vld [vmem:[#allocation3 + $0x18] sm:$0xff]
      %v836 = vld [vmem:[#allocation3 + $0x20] sm:$0xff]
      %v837 = vld [vmem:[#allocation3 + $0x28] sm:$0xff]
      %v838 = vld [vmem:[#allocation3 + $0x30] sm:$0xff]
      %v839 = vld [vmem:[#allocation3 + $0x38] sm:$0xff]
      %v840 = vmul.f32 %v753, %v832
      %v841 = vmul.f32 %v755, %v833
      %v842 = vmul.f32 %v757, %v834
      %v843 = vmul.f32 %v759, %v835
      %v844 = vmul.f32 %v761, %v836
      %v845 = vmul.f32 %v763, %v837
      %v846 = vmul.f32 %v765, %v838
      %v847 = vmul.f32 %v767, %v839
      %v848 = vsel %vm711, %v817, 0.0
      %849 = vadd.xlane.f32.xlu0 %v848
      %v850 = vpop.xlane.xlu0 %849
      %v851 = vsel %vm711, %v819, 0.0
      %852 = vadd.xlane.f32.xlu0 %v851
      %v853 = vpop.xlane.xlu0 %852
      %v854 = vsel %vm711, %v821, 0.0
      %855 = vadd.xlane.f32.xlu0 %v854
      %v856 = vpop.xlane.xlu0 %855
      %v857 = vsel %vm711, %v823, 0.0
      %858 = vadd.xlane.f32.xlu0 %v857
      %v859 = vpop.xlane.xlu0 %858
      %v860 = vsel %vm711, %v825, 0.0
      %861 = vadd.xlane.f32.xlu0 %v860
      %v862 = vpop.xlane.xlu0 %861
      %v863 = vsel %vm711, %v827, 0.0
      %864 = vadd.xlane.f32.xlu0 %v863
      %v865 = vpop.xlane.xlu0 %864
      %v866 = vsel %vm711, %v829, 0.0
      %867 = vadd.xlane.f32.xlu0 %v866
      %v868 = vpop.xlane.xlu0 %867
      %v869 = vsel %vm711, %v831, 0.0
      %870 = vadd.xlane.f32.xlu0 %v869
      %v871 = vpop.xlane.xlu0 %870
      %v872 = vadd.f32 %v840, %v850
      %v873 = vadd.f32 %v841, %v853
      %v874 = vadd.f32 %v842, %v856
      %v875 = vadd.f32 %v843, %v859
      %v876 = vadd.f32 %v844, %v862
      %v877 = vadd.f32 %v845, %v865
      %v878 = vadd.f32 %v846, %v868
      %v879 = vadd.f32 %v847, %v871
      %vm880 = vcmask 7168
      %881 = vst.msk [vmem:[#allocation3] sm:$0xff] %vm880, %v872
      %882 = vst.msk [vmem:[#allocation3 + $0x8] sm:$0xff] %vm880, %v873
      %883 = vst.msk [vmem:[#allocation3 + $0x10] sm:$0xff] %vm880, %v874
      %884 = vst.msk [vmem:[#allocation3 + $0x18] sm:$0xff] %vm880, %v875
      %885 = vst.msk [vmem:[#allocation3 + $0x20] sm:$0xff] %vm880, %v876
      %886 = vst.msk [vmem:[#allocation3 + $0x28] sm:$0xff] %vm880, %v877
      %887 = vst.msk [vmem:[#allocation3 + $0x30] sm:$0xff] %vm880, %v878
      %888 = vst.msk [vmem:[#allocation3 + $0x38] sm:$0xff] %vm880, %v879
      %v889 = vld [vmem:[#allocation4] sm:$0xff]
      %v890 = vld [vmem:[#allocation4 + $0x8] sm:$0xff]
      %v891 = vld [vmem:[#allocation4 + $0x10] sm:$0xff]
      %v892 = vld [vmem:[#allocation4 + $0x18] sm:$0xff]
      %v893 = vld [vmem:[#allocation4 + $0x20] sm:$0xff]
      %v894 = vld [vmem:[#allocation4 + $0x28] sm:$0xff]
      %v895 = vld [vmem:[#allocation4 + $0x30] sm:$0xff]
      %v896 = vld [vmem:[#allocation4 + $0x38] sm:$0xff]
      %898 = vset.pattern.permute.xlu0 0
      %899 = vperm.xlu0 %898, %v753
      %v900 = vpop.permute.xlu0 %899
      %903 = vset.pattern.permute.xlu0 0
      %904 = vperm.xlu0 %903, %v755
      %v905 = vpop.permute.xlu0 %904
      %908 = vset.pattern.permute.xlu0 0
      %909 = vperm.xlu0 %908, %v757
      %v910 = vpop.permute.xlu0 %909
      %913 = vset.pattern.permute.xlu0 0
      %914 = vperm.xlu0 %913, %v759
      %v915 = vpop.permute.xlu0 %914
      %918 = vset.pattern.permute.xlu0 0
      %919 = vperm.xlu0 %918, %v761
      %v920 = vpop.permute.xlu0 %919
      %923 = vset.pattern.permute.xlu0 0
      %924 = vperm.xlu0 %923, %v763
      %v925 = vpop.permute.xlu0 %924
      %928 = vset.pattern.permute.xlu0 0
      %929 = vperm.xlu0 %928, %v765
      %v930 = vpop.permute.xlu0 %929
      %933 = vset.pattern.permute.xlu0 0
      %934 = vperm.xlu0 %933, %v767
      %v935 = vpop.permute.xlu0 %934
      %v937 = vmul.f32 %v900, %v889
      %v938 = vmul.f32 %v905, %v890
      %v939 = vmul.f32 %v910, %v891
      %v940 = vmul.f32 %v915, %v892
      %v941 = vmul.f32 %v920, %v893
      %v942 = vmul.f32 %v925, %v894
      %v943 = vmul.f32 %v930, %v895
      %v944 = vmul.f32 %v935, %v896
      %v945 = vpack.c.bf16 %v819, %v817
      %v946 = vpack.c.bf16 %v823, %v821
      %v947 = vpack.c.bf16 %v827, %v825
      %v948 = vpack.c.bf16 %v831, %v829
      %v951 = vunpack.c.l.b16 %v471
      %v952 = vunpack.c.l.b16 %v472
      %v953 = vpack.c.b16 %v952, %v951
      %v956 = vsel %vm711, %v945, 0
      %958 = vmatprep.subr.bf16.mxu0 0
      %959 = vmatpush1.bf16.msra.mxu0 %v953
      %960 = vmatprep.subr.bf16.mxu0 0
      %961 = vmatpush1.bf16.msra.mxu0 0
      %962 = vmatprep.subr.bf16.mxu0 0
      %963 = vmatpush1.bf16.msra.mxu0 0
      %964 = vmatprep.subr.bf16.mxu0 0
      %965 = vmatpush1.bf16.msra.mxu0 0
      %966 = vmatprep.subr.bf16.mxu0 0
      %967 = vmatpush1.bf16.msra.mxu0 0
      %968 = vmatprep.subr.bf16.mxu0 0
      %969 = vmatpush1.bf16.msra.mxu0 0
      %970 = vmatprep.subr.bf16.mxu0 0
      %971 = vmatpush1.bf16.msra.mxu0 0
      %972 = vmatprep.subr.bf16.mxu0 0
      %973 = vmatpush1.bf16.msra.mxu0 0
      %974 = vmatprep.subr.bf16.mxu0 0
      %975 = vmatpush1.bf16.msra.mxu0 0
      %976 = vmatprep.subr.bf16.mxu0 0
      %977 = vmatpush1.bf16.msra.mxu0 0
      %978 = vmatprep.subr.bf16.mxu0 0
      %979 = vmatpush1.bf16.msra.mxu0 0
      %980 = vmatprep.subr.bf16.mxu0 0
      %981 = vmatpush1.bf16.msra.mxu0 0
      %982 = vmatprep.subr.bf16.mxu0 0
      %983 = vmatpush1.bf16.msra.mxu0 0
      %984 = vmatprep.subr.bf16.mxu0 0
      %985 = vmatpush1.bf16.msra.mxu0 0
      %986 = vmatprep.subr.bf16.mxu0 0
      %987 = vmatpush1.bf16.msra.mxu0 0
      %988 = vmatprep.subr.bf16.mxu0 0
      %989 = vmatpush1.bf16.msra.mxu0 0
      %990 = vmatprep.mubr.bf16.mxu0 0
      %991 = vmatmul.mubr.bf16.gmra.mrb[0].mxu0 %v956
      %v992 = vpop.f32.mrb[0].mxu0
      %v993 = vadd.f32 0.0, %v992
      %v994 = vpop.f32.mrb[0].mxu0
      %v995 = vpop.f32.mrb[0].mxu0
      %v996 = vadd.f32 0.0, %v995
      %v997 = vpop.f32.mrb[0].mxu0
      %998 = vdwg.mxu0
      %v1001 = vunpack.c.l.b16 %v473
      %v1002 = vunpack.c.l.b16 %v474
      %v1003 = vpack.c.b16 %v1002, %v1001
      %v1006 = vsel %vm711, %v946, 0
      %1008 = vmatprep.subr.bf16.mxu0 0
      %1009 = vmatpush1.bf16.msra.mxu0 %v1003
      %1010 = vmatprep.subr.bf16.mxu0 0
      %1011 = vmatpush1.bf16.msra.mxu0 0
      %1012 = vmatprep.subr.bf16.mxu0 0
      %1013 = vmatpush1.bf16.msra.mxu0 0
      %1014 = vmatprep.subr.bf16.mxu0 0
      %1015 = vmatpush1.bf16.msra.mxu0 0
      %1016 = vmatprep.subr.bf16.mxu0 0
      %1017 = vmatpush1.bf16.msra.mxu0 0
      %1018 = vmatprep.subr.bf16.mxu0 0
      %1019 = vmatpush1.bf16.msra.mxu0 0
      %1020 = vmatprep.subr.bf16.mxu0 0
      %1021 = vmatpush1.bf16.msra.mxu0 0
      %1022 = vmatprep.subr.bf16.mxu0 0
      %1023 = vmatpush1.bf16.msra.mxu0 0
      %1024 = vmatprep.subr.bf16.mxu0 0
      %1025 = vmatpush1.bf16.msra.mxu0 0
      %1026 = vmatprep.subr.bf16.mxu0 0
      %1027 = vmatpush1.bf16.msra.mxu0 0
      %1028 = vmatprep.subr.bf16.mxu0 0
      %1029 = vmatpush1.bf16.msra.mxu0 0
      %1030 = vmatprep.subr.bf16.mxu0 0
      %1031 = vmatpush1.bf16.msra.mxu0 0
      %1032 = vmatprep.subr.bf16.mxu0 0
      %1033 = vmatpush1.bf16.msra.mxu0 0
      %1034 = vmatprep.subr.bf16.mxu0 0
      %1035 = vmatpush1.bf16.msra.mxu0 0
      %1036 = vmatprep.subr.bf16.mxu0 0
      %1037 = vmatpush1.bf16.msra.mxu0 0
      %1038 = vmatprep.subr.bf16.mxu0 0
      %1039 = vmatpush1.bf16.msra.mxu0 0
      %1040 = vmatprep.mubr.bf16.mxu0 0
      %1041 = vmatmul.mubr.bf16.gmra.mrb[0].mxu0 %v1006
      %v1042 = vpop.f32.mrb[0].mxu0
      %v1043 = vadd.f32 0.0, %v1042
      %v1044 = vpop.f32.mrb[0].mxu0
      %v1045 = vpop.f32.mrb[0].mxu0
      %v1046 = vadd.f32 0.0, %v1045
      %v1047 = vpop.f32.mrb[0].mxu0
      %1048 = vdwg.mxu0
      %v1051 = vunpack.c.l.b16 %v475
      %v1052 = vunpack.c.l.b16 %v476
      %v1053 = vpack.c.b16 %v1052, %v1051
      %v1056 = vsel %vm711, %v947, 0
      %1058 = vmatprep.subr.bf16.mxu0 0
      %1059 = vmatpush1.bf16.msra.mxu0 %v1053
      %1060 = vmatprep.subr.bf16.mxu0 0
      %1061 = vmatpush1.bf16.msra.mxu0 0
      %1062 = vmatprep.subr.bf16.mxu0 0
      %1063 = vmatpush1.bf16.msra.mxu0 0
      %1064 = vmatprep.subr.bf16.mxu0 0
      %1065 = vmatpush1.bf16.msra.mxu0 0
      %1066 = vmatprep.subr.bf16.mxu0 0
      %1067 = vmatpush1.bf16.msra.mxu0 0
      %1068 = vmatprep.subr.bf16.mxu0 0
      %1069 = vmatpush1.bf16.msra.mxu0 0
      %1070 = vmatprep.subr.bf16.mxu0 0
      %1071 = vmatpush1.bf16.msra.mxu0 0
      %1072 = vmatprep.subr.bf16.mxu0 0
      %1073 = vmatpush1.bf16.msra.mxu0 0
      %1074 = vmatprep.subr.bf16.mxu0 0
      %1075 = vmatpush1.bf16.msra.mxu0 0
      %1076 = vmatprep.subr.bf16.mxu0 0
      %1077 = vmatpush1.bf16.msra.mxu0 0
      %1078 = vmatprep.subr.bf16.mxu0 0
      %1079 = vmatpush1.bf16.msra.mxu0 0
      %1080 = vmatprep.subr.bf16.mxu0 0
      %1081 = vmatpush1.bf16.msra.mxu0 0
      %1082 = vmatprep.subr.bf16.mxu0 0
      %1083 = vmatpush1.bf16.msra.mxu0 0
      %1084 = vmatprep.subr.bf16.mxu0 0
      %1085 = vmatpush1.bf16.msra.mxu0 0
      %1086 = vmatprep.subr.bf16.mxu0 0
      %1087 = vmatpush1.bf16.msra.mxu0 0
      %1088 = vmatprep.subr.bf16.mxu0 0
      %1089 = vmatpush1.bf16.msra.mxu0 0
      %1090 = vmatprep.mubr.bf16.mxu0 0
      %1091 = vmatmul.mubr.bf16.gmra.mrb[0].mxu0 %v1056
      %v1092 = vpop.f32.mrb[0].mxu0
      %v1093 = vadd.f32 0.0, %v1092
      %v1094 = vpop.f32.mrb[0].mxu0
      %v1095 = vpop.f32.mrb[0].mxu0
      %v1096 = vadd.f32 0.0, %v1095
      %v1097 = vpop.f32.mrb[0].mxu0
      %1098 = vdwg.mxu0
      %v1101 = vunpack.c.l.b16 %v477
      %v1102 = vunpack.c.l.b16 %v478
      %v1103 = vpack.c.b16 %v1102, %v1101
      %v1106 = vsel %vm711, %v948, 0
      %1108 = vmatprep.subr.bf16.mxu0 0
      %1109 = vmatpush1.bf16.msra.mxu0 %v1103
      %1110 = vmatprep.subr.bf16.mxu0 0
      %1111 = vmatpush1.bf16.msra.mxu0 0
      %1112 = vmatprep.subr.bf16.mxu0 0
      %1113 = vmatpush1.bf16.msra.mxu0 0
      %1114 = vmatprep.subr.bf16.mxu0 0
      %1115 = vmatpush1.bf16.msra.mxu0 0
      %1116 = vmatprep.subr.bf16.mxu0 0
      %1117 = vmatpush1.bf16.msra.mxu0 0
      %1118 = vmatprep.subr.bf16.mxu0 0
      %1119 = vmatpush1.bf16.msra.mxu0 0
      %1120 = vmatprep.subr.bf16.mxu0 0
      %1121 = vmatpush1.bf16.msra.mxu0 0
      %1122 = vmatprep.subr.bf16.mxu0 0
      %1123 = vmatpush1.bf16.msra.mxu0 0
      %1124 = vmatprep.subr.bf16.mxu0 0
      %1125 = vmatpush1.bf16.msra.mxu0 0
      %1126 = vmatprep.subr.bf16.mxu0 0
      %1127 = vmatpush1.bf16.msra.mxu0 0
      %1128 = vmatprep.subr.bf16.mxu0 0
      %1129 = vmatpush1.bf16.msra.mxu0 0
      %1130 = vmatprep.subr.bf16.mxu0 0
      %1131 = vmatpush1.bf16.msra.mxu0 0
      %1132 = vmatprep.subr.bf16.mxu0 0
      %1133 = vmatpush1.bf16.msra.mxu0 0
      %1134 = vmatprep.subr.bf16.mxu0 0
      %1135 = vmatpush1.bf16.msra.mxu0 0
      %1136 = vmatprep.subr.bf16.mxu0 0
      %1137 = vmatpush1.bf16.msra.mxu0 0
      %1138 = vmatprep.subr.bf16.mxu0 0
      %1139 = vmatpush1.bf16.msra.mxu0 0
      %1140 = vmatprep.mubr.bf16.mxu0 0
      %1141 = vmatmul.mubr.bf16.gmra.mrb[0].mxu0 %v1106
      %v1142 = vpop.f32.mrb[0].mxu0
      %v1143 = vadd.f32 0.0, %v1142
      %v1144 = vpop.f32.mrb[0].mxu0
      %v1145 = vpop.f32.mrb[0].mxu0
      %v1146 = vadd.f32 0.0, %v1145
      %v1147 = vpop.f32.mrb[0].mxu0
      %1148 = vdwg.mxu0
      %v1149 = vadd.f32 %v937, %v993
      %v1150 = vadd.f32 %v938, %v996
      %v1151 = vadd.f32 %v939, %v1043
      %v1152 = vadd.f32 %v940, %v1046
      %v1153 = vadd.f32 %v941, %v1093
      %v1154 = vadd.f32 %v942, %v1096
      %v1155 = vadd.f32 %v943, %v1143
      %v1156 = vadd.f32 %v944, %v1146
      %1157 = vst.msk [vmem:[#allocation4] sm:$0xff] %vm484, %v1149
      %1158 = vst.msk [vmem:[#allocation4 + $0x8] sm:$0xff] %vm484, %v1150
      %1159 = vst.msk [vmem:[#allocation4 + $0x10] sm:$0xff] %vm484, %v1151
      %1160 = vst.msk [vmem:[#allocation4 + $0x18] sm:$0xff] %vm484, %v1152
      %1161 = vst.msk [vmem:[#allocation4 + $0x20] sm:$0xff] %vm484, %v1153
      %1162 = vst.msk [vmem:[#allocation4 + $0x28] sm:$0xff] %vm484, %v1154
      %1163 = vst.msk [vmem:[#allocation4 + $0x30] sm:$0xff] %vm484, %v1155
      %1164 = vst.msk [vmem:[#allocation4 + $0x38] sm:$0xff] %vm484, %v1156
      %1165 = vst.msk [vmem:[#allocation2] sm:$0xff] %vm880, %v736
      %1166 = vst.msk [vmem:[#allocation2 + $0x8] sm:$0xff] %vm880, %v737
      %1167 = vst.msk [vmem:[#allocation2 + $0x10] sm:$0xff] %vm880, %v738
      %1168 = vst.msk [vmem:[#allocation2 + $0x18] sm:$0xff] %vm880, %v739
      %1169 = vst.msk [vmem:[#allocation2 + $0x20] sm:$0xff] %vm880, %v740
      %1170 = vst.msk [vmem:[#allocation2 + $0x28] sm:$0xff] %vm880, %v741
      %1171 = vst.msk [vmem:[#allocation2 + $0x30] sm:$0xff] %vm880, %v742
      %1172 = vst.msk [vmem:[#allocation2 + $0x38] sm:$0xff] %vm880, %v743
      // Predicated region
      $region53: #{transformer_forward.7} parent=47 // pred_check
        %p1173 = pneg %p429
      $region54: #{transformer_forward.7} parent=47 // pred_check_branch
        %1175 = sbr.rel (%p1173) target = $region56
      $region55: #{transformer_forward.7} parent=47 // pred_region
        %v1176 = vld [vmem:[#allocation4] sm:$0xff]
        %v1177 = vld [vmem:[#allocation4 + $0x8] sm:$0xff]
        %v1178 = vld [vmem:[#allocation4 + $0x10] sm:$0xff]
        %v1179 = vld [vmem:[#allocation4 + $0x18] sm:$0xff]
        %v1180 = vld [vmem:[#allocation4 + $0x20] sm:$0xff]
        %v1181 = vld [vmem:[#allocation4 + $0x28] sm:$0xff]
        %v1182 = vld [vmem:[#allocation4 + $0x30] sm:$0xff]
        %v1183 = vld [vmem:[#allocation4 + $0x38] sm:$0xff]
        %v1184 = vld [vmem:[#allocation3] sm:$0xff]
        %v1185 = vld [vmem:[#allocation3 + $0x8] sm:$0xff]
        %v1186 = vld [vmem:[#allocation3 + $0x10] sm:$0xff]
        %v1187 = vld [vmem:[#allocation3 + $0x18] sm:$0xff]
        %v1188 = vld [vmem:[#allocation3 + $0x20] sm:$0xff]
        %v1189 = vld [vmem:[#allocation3 + $0x28] sm:$0xff]
        %v1190 = vld [vmem:[#allocation3 + $0x30] sm:$0xff]
        %v1191 = vld [vmem:[#allocation3 + $0x38] sm:$0xff]
        %1193 = vset.pattern.permute.xlu0 0
        %1194 = vperm.xlu0 %1193, %v1184
        %v1195 = vpop.permute.xlu0 %1194
        %1198 = vset.pattern.permute.xlu0 0
        %1199 = vperm.xlu0 %1198, %v1185
        %v1200 = vpop.permute.xlu0 %1199
        %1203 = vset.pattern.permute.xlu0 0
        %1204 = vperm.xlu0 %1203, %v1186
        %v1205 = vpop.permute.xlu0 %1204
        %1208 = vset.pattern.permute.xlu0 0
        %1209 = vperm.xlu0 %1208, %v1187
        %v1210 = vpop.permute.xlu0 %1209
        %1213 = vset.pattern.permute.xlu0 0
        %1214 = vperm.xlu0 %1213, %v1188
        %v1215 = vpop.permute.xlu0 %1214
        %1218 = vset.pattern.permute.xlu0 0
        %1219 = vperm.xlu0 %1218, %v1189
        %v1220 = vpop.permute.xlu0 %1219
        %1223 = vset.pattern.permute.xlu0 0
        %1224 = vperm.xlu0 %1223, %v1190
        %v1225 = vpop.permute.xlu0 %1224
        %1228 = vset.pattern.permute.xlu0 0
        %1229 = vperm.xlu0 %1228, %v1191
        %v1230 = vpop.permute.xlu0 %1229
        %v1232 = vrcp.pop %v1195
        %v1233 = vmul.f32 %v1176, %v1232
        %v1234 = vrcp.pop %v1200
        %v1235 = vmul.f32 %v1177, %v1234
        %v1236 = vrcp.pop %v1205
        %v1237 = vmul.f32 %v1178, %v1236
        %v1238 = vrcp.pop %v1210
        %v1239 = vmul.f32 %v1179, %v1238
        %v1240 = vrcp.pop %v1215
        %v1241 = vmul.f32 %v1180, %v1240
        %v1242 = vrcp.pop %v1220
        %v1243 = vmul.f32 %v1181, %v1242
        %v1244 = vrcp.pop %v1225
        %v1245 = vmul.f32 %v1182, %v1244
        %v1246 = vrcp.pop %v1230
        %v1247 = vmul.f32 %v1183, %v1246
        %v1248 = vcombine.low %v1233, %v1241
        %v1249 = vcombine.high %v1233, %v1241
        %v1251 = vunpack.c.l.s4 1983009808
        %v1252 = vunpack.c.0.s8 %v1251
        %v1253 = vlaneseq
        %v1254 = vshrl.u32 %v1253, 7
        %v1255 = vsub.s32 %v1252, %v1254
        %v1256 = vrot.slane %v1248, %v1255
        %v1258 = vunpack.c.l.s4 1983009808
        %v1259 = vunpack.c.0.s8 %v1258
        %v1260 = vlaneseq
        %v1261 = vshrl.u32 %v1260, 7
        %v1262 = vsub.s32 %v1259, %v1261
        %v1263 = vrot.slane %v1249, %v1262
        %v1264 = vcombine.low %v1237, %v1245
        %v1265 = vcombine.high %v1237, %v1245
        %v1267 = vunpack.c.l.s4 1983009808
        %v1268 = vunpack.c.0.s8 %v1267
        %v1269 = vlaneseq
        %v1270 = vshrl.u32 %v1269, 7
        %v1271 = vsub.s32 %v1268, %v1270
        %v1272 = vrot.slane %v1264, %v1271
        %v1274 = vunpack.c.l.s4 1983009808
        %v1275 = vunpack.c.0.s8 %v1274
        %v1276 = vlaneseq
        %v1277 = vshrl.u32 %v1276, 7
        %v1278 = vsub.s32 %v1275, %v1277
        %v1279 = vrot.slane %v1265, %v1278
        %v1280 = vcombine.low %v1256, %v1272
        %v1281 = vcombine.high %v1256, %v1272
        %v1283 = vunpack.c.l.s4 1934713408
        %v1284 = vunpack.c.0.s8 %v1283
        %v1285 = vlaneseq
        %v1286 = vshrl.u32 %v1285, 7
        %v1287 = vsub.s32 %v1284, %v1286
        %v1288 = vrot.slane %v1280, %v1287
        %v1290 = vunpack.c.l.s4 1934713408
        %v1291 = vunpack.c.0.s8 %v1290
        %v1292 = vlaneseq
        %v1293 = vshrl.u32 %v1292, 7
        %v1294 = vsub.s32 %v1291, %v1293
        %v1295 = vrot.slane %v1281, %v1294
        %v1296 = vcombine.low %v1263, %v1279
        %v1297 = vcombine.high %v1263, %v1279
        %v1299 = vunpack.c.l.s4 1934713408
        %v1300 = vunpack.c.0.s8 %v1299
        %v1301 = vlaneseq
        %v1302 = vshrl.u32 %v1301, 7
        %v1303 = vsub.s32 %v1300, %v1302
        %v1304 = vrot.slane %v1296, %v1303
        %v1306 = vunpack.c.l.s4 1934713408
        %v1307 = vunpack.c.0.s8 %v1306
        %v1308 = vlaneseq
        %v1309 = vshrl.u32 %v1308, 7
        %v1310 = vsub.s32 %v1307, %v1309
        %v1311 = vrot.slane %v1297, %v1310
        %v1312 = vcombine.high %v1288, 0.0
        %v1313 = vcombine.high %v1295, 0.0
        %v1314 = vcombine.high %v1304, 0.0
        %v1315 = vcombine.high %v1311, 0.0
        %v1316 = vcombine.low %v1235, %v1243
        %v1317 = vcombine.high %v1235, %v1243
        %v1319 = vunpack.c.l.s4 1983009808
        %v1320 = vunpack.c.0.s8 %v1319
        %v1321 = vlaneseq
        %v1322 = vshrl.u32 %v1321, 7
        %v1323 = vsub.s32 %v1320, %v1322
        %v1324 = vrot.slane %v1316, %v1323
        %v1326 = vunpack.c.l.s4 1983009808
        %v1327 = vunpack.c.0.s8 %v1326
        %v1328 = vlaneseq
        %v1329 = vshrl.u32 %v1328, 7
        %v1330 = vsub.s32 %v1327, %v1329
        %v1331 = vrot.slane %v1317, %v1330
        %v1332 = vcombine.low %v1239, %v1247
        %v1333 = vcombine.high %v1239, %v1247
        %v1335 = vunpack.c.l.s4 1983009808
        %v1336 = vunpack.c.0.s8 %v1335
        %v1337 = vlaneseq
        %v1338 = vshrl.u32 %v1337, 7
        %v1339 = vsub.s32 %v1336, %v1338
        %v1340 = vrot.slane %v1332, %v1339
        %v1342 = vunpack.c.l.s4 1983009808
        %v1343 = vunpack.c.0.s8 %v1342
        %v1344 = vlaneseq
        %v1345 = vshrl.u32 %v1344, 7
        %v1346 = vsub.s32 %v1343, %v1345
        %v1347 = vrot.slane %v1333, %v1346
        %v1348 = vcombine.low %v1324, %v1340
        %v1349 = vcombine.high %v1324, %v1340
        %v1351 = vunpack.c.l.s4 1934713408
        %v1352 = vunpack.c.0.s8 %v1351
        %v1353 = vlaneseq
        %v1354 = vshrl.u32 %v1353, 7
        %v1355 = vsub.s32 %v1352, %v1354
        %v1356 = vrot.slane %v1348, %v1355
        %v1358 = vunpack.c.l.s4 1934713408
        %v1359 = vunpack.c.0.s8 %v1358
        %v1360 = vlaneseq
        %v1361 = vshrl.u32 %v1360, 7
        %v1362 = vsub.s32 %v1359, %v1361
        %v1363 = vrot.slane %v1349, %v1362
        %v1364 = vcombine.low %v1331, %v1347
        %v1365 = vcombine.high %v1331, %v1347
        %v1367 = vunpack.c.l.s4 1934713408
        %v1368 = vunpack.c.0.s8 %v1367
        %v1369 = vlaneseq
        %v1370 = vshrl.u32 %v1369, 7
        %v1371 = vsub.s32 %v1368, %v1370
        %v1372 = vrot.slane %v1364, %v1371
        %v1374 = vunpack.c.l.s4 1934713408
        %v1375 = vunpack.c.0.s8 %v1374
        %v1376 = vlaneseq
        %v1377 = vshrl.u32 %v1376, 7
        %v1378 = vsub.s32 %v1375, %v1377
        %v1379 = vrot.slane %v1365, %v1378
        %v1380 = vcombine.high %v1356, 0.0
        %v1381 = vcombine.high %v1363, 0.0
        %v1382 = vcombine.high %v1372, 0.0
        %v1383 = vcombine.high %v1379, 0.0
        %v1384 = vcombine.low %v1288, %v1295
        %v1386 = vunpack.c.l.s4 1983009808
        %v1387 = vunpack.c.0.s8 %v1386
        %v1388 = vlaneseq
        %v1389 = vshrl.u32 %v1388, 7
        %v1390 = vsub.s32 %v1387, %v1389
        %v1391 = vrot.slane %v1384, %v1390
        %v1392 = vcombine.low %v1312, %v1313
        %v1394 = vunpack.c.l.s4 1983009808
        %v1395 = vunpack.c.0.s8 %v1394
        %v1396 = vlaneseq
        %v1397 = vshrl.u32 %v1396, 7
        %v1398 = vsub.s32 %v1395, %v1397
        %v1399 = vrot.slane %v1392, %v1398
        %v1400 = vcombine.low %v1304, %v1311
        %v1402 = vunpack.c.l.s4 1983009808
        %v1403 = vunpack.c.0.s8 %v1402
        %v1404 = vlaneseq
        %v1405 = vshrl.u32 %v1404, 7
        %v1406 = vsub.s32 %v1403, %v1405
        %v1407 = vrot.slane %v1400, %v1406
        %v1408 = vcombine.low %v1314, %v1315
        %v1410 = vunpack.c.l.s4 1983009808
        %v1411 = vunpack.c.0.s8 %v1410
        %v1412 = vlaneseq
        %v1413 = vshrl.u32 %v1412, 7
        %v1414 = vsub.s32 %v1411, %v1413
        %v1415 = vrot.slane %v1408, %v1414
        %v1416 = vcombine.low %v1391, %v1399
        %v1417 = vcombine.high %v1391, %v1399
        %v1419 = vunpack.c.l.s4 1934713408
        %v1420 = vunpack.c.0.s8 %v1419
        %v1421 = vlaneseq
        %v1422 = vshrl.u32 %v1421, 7
        %v1423 = vsub.s32 %v1420, %v1422
        %v1424 = vrot.slane %v1416, %v1423
        %v1426 = vunpack.c.l.s4 1934713408
        %v1427 = vunpack.c.0.s8 %v1426
        %v1428 = vlaneseq
        %v1429 = vshrl.u32 %v1428, 7
        %v1430 = vsub.s32 %v1427, %v1429
        %v1431 = vrot.slane %v1417, %v1430
        %v1432 = vcombine.low %v1407, %v1415
        %v1433 = vcombine.high %v1407, %v1415
        %v1435 = vunpack.c.l.s4 1934713408
        %v1436 = vunpack.c.0.s8 %v1435
        %v1437 = vlaneseq
        %v1438 = vshrl.u32 %v1437, 7
        %v1439 = vsub.s32 %v1436, %v1438
        %v1440 = vrot.slane %v1432, %v1439
        %v1442 = vunpack.c.l.s4 1934713408
        %v1443 = vunpack.c.0.s8 %v1442
        %v1444 = vlaneseq
        %v1445 = vshrl.u32 %v1444, 7
        %v1446 = vsub.s32 %v1443, %v1445
        %v1447 = vrot.slane %v1433, %v1446
        %v1448 = vcombine.low %v1424, %v1440
        %v1449 = vcombine.high %v1424, %v1440
        %v1450 = vcombine.low %v1431, %v1447
        %v1451 = vcombine.high %v1431, %v1447
        %v1452 = vcombine.low %v1356, %v1363
        %v1454 = vunpack.c.l.s4 1983009808
        %v1455 = vunpack.c.0.s8 %v1454
        %v1456 = vlaneseq
        %v1457 = vshrl.u32 %v1456, 7
        %v1458 = vsub.s32 %v1455, %v1457
        %v1459 = vrot.slane %v1452, %v1458
        %v1460 = vcombine.low %v1380, %v1381
        %v1462 = vunpack.c.l.s4 1983009808
        %v1463 = vunpack.c.0.s8 %v1462
        %v1464 = vlaneseq
        %v1465 = vshrl.u32 %v1464, 7
        %v1466 = vsub.s32 %v1463, %v1465
        %v1467 = vrot.slane %v1460, %v1466
        %v1468 = vcombine.low %v1372, %v1379
        %v1470 = vunpack.c.l.s4 1983009808
        %v1471 = vunpack.c.0.s8 %v1470
        %v1472 = vlaneseq
        %v1473 = vshrl.u32 %v1472, 7
        %v1474 = vsub.s32 %v1471, %v1473
        %v1475 = vrot.slane %v1468, %v1474
        %v1476 = vcombine.low %v1382, %v1383
        %v1478 = vunpack.c.l.s4 1983009808
        %v1479 = vunpack.c.0.s8 %v1478
        %v1480 = vlaneseq
        %v1481 = vshrl.u32 %v1480, 7
        %v1482 = vsub.s32 %v1479, %v1481
        %v1483 = vrot.slane %v1476, %v1482
        %v1484 = vcombine.low %v1459, %v1467
        %v1485 = vcombine.high %v1459, %v1467
        %v1487 = vunpack.c.l.s4 1934713408
        %v1488 = vunpack.c.0.s8 %v1487
        %v1489 = vlaneseq
        %v1490 = vshrl.u32 %v1489, 7
        %v1491 = vsub.s32 %v1488, %v1490
        %v1492 = vrot.slane %v1484, %v1491
        %v1494 = vunpack.c.l.s4 1934713408
        %v1495 = vunpack.c.0.s8 %v1494
        %v1496 = vlaneseq
        %v1497 = vshrl.u32 %v1496, 7
        %v1498 = vsub.s32 %v1495, %v1497
        %v1499 = vrot.slane %v1485, %v1498
        %v1500 = vcombine.low %v1475, %v1483
        %v1501 = vcombine.high %v1475, %v1483
        %v1503 = vunpack.c.l.s4 1934713408
        %v1504 = vunpack.c.0.s8 %v1503
        %v1505 = vlaneseq
        %v1506 = vshrl.u32 %v1505, 7
        %v1507 = vsub.s32 %v1504, %v1506
        %v1508 = vrot.slane %v1500, %v1507
        %v1510 = vunpack.c.l.s4 1934713408
        %v1511 = vunpack.c.0.s8 %v1510
        %v1512 = vlaneseq
        %v1513 = vshrl.u32 %v1512, 7
        %v1514 = vsub.s32 %v1511, %v1513
        %v1515 = vrot.slane %v1501, %v1514
        %v1516 = vcombine.low %v1492, %v1508
        %v1517 = vcombine.high %v1492, %v1508
        %v1518 = vcombine.low %v1499, %v1515
        %v1519 = vcombine.high %v1499, %v1515
        %1522 = vrot.lane.b32.xlu0 %v1449, 8
        %v1523 = vpop.permute.xlu0 %1522
        %1524 = vrot.lane.b32.xlu0 %v1517, 8
        %v1525 = vpop.permute.xlu0 %1524
        %1530 = vrot.lane.b32.xlu0 %v1450, 16
        %v1531 = vpop.permute.xlu0 %1530
        %1532 = vrot.lane.b32.xlu0 %v1518, 16
        %v1533 = vpop.permute.xlu0 %1532
        %1538 = vrot.lane.b32.xlu0 %v1451, 24
        %v1539 = vpop.permute.xlu0 %1538
        %1540 = vrot.lane.b32.xlu0 %v1519, 24
        %v1541 = vpop.permute.xlu0 %1540
        %v1544 = vsel %vm484, %v1448, %v1523
        %v1545 = vsel %vm484, %v1516, %v1525
        %v1546 = vsel %vm711, %v1544, %v1531
        %v1547 = vsel %vm711, %v1545, %v1533
        %vm1548 = vcmask 195584
        %v1549 = vsel %vm1548, %v1546, %v1539
        %v1550 = vsel %vm1548, %v1547, %v1541
        %v1551 = vpack.c.bf16 %v1550, %v1549
        %v1552 = vld [vmem:[%s5] sm:$0xf]
        %v1553 = vld [vmem:[%s5 + $0x4] sm:$0xf]
        %v1554 = vld [vmem:[%s5 + $0x8] sm:$0xf]
        %v1555 = vld [vmem:[%s5 + $0xc] sm:$0xf]
        %v1560 = vunpack.c.l.b16 %v1552
        %v1561 = vunpack.c.l.b16 %v1553
        %v1562 = vunpack.c.l.b16 %v1554
        %v1563 = vunpack.c.l.b16 %v1555
        %v1564 = vpack.c.b16 %v1561, %v1560
        %v1565 = vpack.c.b16 %v1563, %v1562
        %vm1568 = vcmask 261120
        %v1570 = vsel %vm1568, %v1551, 0
        %1572 = vmatprep.subr.bf16.mxu0 0
        %1573 = vmatpush1.bf16.msra.mxu0 %v1564
        %1574 = vmatprep.subr.bf16.mxu0 0
        %1575 = vmatpush1.bf16.msra.mxu0 %v1565
        %1576 = vmatprep.subr.bf16.mxu0 0
        %1577 = vmatpush1.bf16.msra.mxu0 0
        %1578 = vmatprep.subr.bf16.mxu0 0
        %1579 = vmatpush1.bf16.msra.mxu0 0
        %1580 = vmatprep.subr.bf16.mxu0 0
        %1581 = vmatpush1.bf16.msra.mxu0 0
        %1582 = vmatprep.subr.bf16.mxu0 0
        %1583 = vmatpush1.bf16.msra.mxu0 0
        %1584 = vmatprep.subr.bf16.mxu0 0
        %1585 = vmatpush1.bf16.msra.mxu0 0
        %1586 = vmatprep.subr.bf16.mxu0 0
        %1587 = vmatpush1.bf16.msra.mxu0 0
        %1588 = vmatprep.subr.bf16.mxu0 0
        %1589 = vmatpush1.bf16.msra.mxu0 0
        %1590 = vmatprep.subr.bf16.mxu0 0
        %1591 = vmatpush1.bf16.msra.mxu0 0
        %1592 = vmatprep.subr.bf16.mxu0 0
        %1593 = vmatpush1.bf16.msra.mxu0 0
        %1594 = vmatprep.subr.bf16.mxu0 0
        %1595 = vmatpush1.bf16.msra.mxu0 0
        %1596 = vmatprep.subr.bf16.mxu0 0
        %1597 = vmatpush1.bf16.msra.mxu0 0
        %1598 = vmatprep.subr.bf16.mxu0 0
        %1599 = vmatpush1.bf16.msra.mxu0 0
        %1600 = vmatprep.subr.bf16.mxu0 0
        %1601 = vmatpush1.bf16.msra.mxu0 0
        %1602 = vmatprep.subr.bf16.mxu0 0
        %1603 = vmatpush1.bf16.msra.mxu0 0
        %1604 = vmatprep.mubr.bf16.mxu0 0
        %1605 = vmatmul.mubr.bf16.gmra.mrb[0].mxu0 %v1570
        %v1606 = vpop.f32.mrb[0].mxu0
        %v1607 = vadd.f32 0.0, %v1606
        %v1608 = vpop.f32.mrb[0].mxu0
        %v1609 = vpop.f32.mrb[0].mxu0
        %v1610 = vadd.f32 0.0, %v1609
        %v1611 = vpop.f32.mrb[0].mxu0
        %1612 = vdwg.mxu0
        %v1613 = vld [vmem:[%s6] sm:$0x1]
        %v1614 = vsel %vm1568, %v1607, 0.0
        %1615 = vadd.xlane.f32.xlu0 %v1614
        %v1616 = vpop.xlane.xlu0 %1615
        %v1617 = vsel %vm1568, %v1610, 0.0
        %1618 = vadd.xlane.f32.xlu0 %v1617
        %v1619 = vpop.xlane.xlu0 %1618
        %v1620 = vrcp.pop 32.0
        %v1621 = vmul.f32 %v1616, %v1620
        %v1622 = vmul.f32 %v1619, %v1620
        %v1623 = vsub.f32 %v1607, %v1621
        %v1624 = vsub.f32 %v1610, %v1622
        %v1625 = vmul.f32 %v1623, %v1623
        %v1626 = vmul.f32 %v1624, %v1624
        %v1627 = vsel %vm1568, %v1625, 0.0
        %1628 = vadd.xlane.f32.xlu0 %v1627
        %v1629 = vpop.xlane.xlu0 %1628
        %v1630 = vsel %vm1568, %v1626, 0.0
        %1631 = vadd.xlane.f32.xlu0 %v1630
        %v1632 = vpop.xlane.xlu0 %1631
        %v1633 = vmul.f32 %v1629, %v1620
        %v1634 = vmul.f32 %v1632, %v1620
        %v1635 = vadd.f32 %v1633, 1e-05
        %v1636 = vadd.f32 %v1634, 1e-05
        %v1637 = vrsqrt.pop %v1635
        %v1638 = vrsqrt.pop %v1636
        %v1639 = vmul.f32 %v1623, %v1637
        %v1640 = vmul.f32 %v1624, %v1638
        %v1642 = vlaneseq
        %v1643 = vshrl.u32 %v1642, 7
        %v1644 = vsub.s32 0, %v1643
        %v1645 = vrot.slane %v1613, %v1644
        %v1647 = vmul.f32 %v1639, %v1645
        %v1648 = vmul.f32 %v1640, %v1645
        %v1649 = vld [vmem:[%s388] sm:$0xff]
        %v1650 = vld [vmem:[%s388 + $0x8] sm:$0xff]
        %v1651 = vld [vmem:[%s1] sm:$0x1]
        %v1652 = vsel %vm1568, %v1649, 0.0
        %1653 = vadd.xlane.f32.xlu0 %v1652
        %v1654 = vpop.xlane.xlu0 %1653
        %v1655 = vsel %vm1568, %v1650, 0.0
        %1656 = vadd.xlane.f32.xlu0 %v1655
        %v1657 = vpop.xlane.xlu0 %1656
        %v1658 = vmul.f32 %v1654, %v1620
        %v1659 = vmul.f32 %v1657, %v1620
        %v1660 = vsub.f32 %v1649, %v1658
        %v1661 = vsub.f32 %v1650, %v1659
        %v1662 = vmul.f32 %v1660, %v1660
        %v1663 = vmul.f32 %v1661, %v1661
        %v1664 = vsel %vm1568, %v1662, 0.0
        %1665 = vadd.xlane.f32.xlu0 %v1664
        %v1666 = vpop.xlane.xlu0 %1665
        %v1667 = vsel %vm1568, %v1663, 0.0
        %1668 = vadd.xlane.f32.xlu0 %v1667
        %v1669 = vpop.xlane.xlu0 %1668
        %v1670 = vmul.f32 %v1666, %v1620
        %v1671 = vmul.f32 %v1669, %v1620
        %v1672 = vadd.f32 %v1670, 1e-05
        %v1673 = vadd.f32 %v1671, 1e-05
        %v1674 = vrsqrt.pop %v1672
        %v1675 = vrsqrt.pop %v1673
        %v1676 = vmul.f32 %v1660, %v1674
        %v1677 = vmul.f32 %v1661, %v1675
        %v1679 = vlaneseq
        %v1680 = vshrl.u32 %v1679, 7
        %v1681 = vsub.s32 0, %v1680
        %v1682 = vrot.slane %v1651, %v1681
        %v1684 = vmul.f32 %v1676, %v1682
        %v1685 = vmul.f32 %v1677, %v1682
        %v1686 = vadd.f32 %v1647, %v1684
        %v1687 = vadd.f32 %v1648, %v1685
        %1688 = vst.msk [vmem:[%s426] sm:$0xff] %vm1568, %v1686
        %1689 = vst.msk [vmem:[%s426 + $0x8] sm:$0xff] %vm1568, %v1687
      $region56: #{transformer_forward.7} parent=47 // pred_fallthru
        _
      %s1690 = smul.u32 2, %s24
      %p1691 = scmp.lt.s32.totalorder %s23, 1
      %s1692 = scalar_select %p1691, %s23, 1
      %p1693 = scmp.lt.s32.totalorder %s1690, 1
      %s1694 = scalar_select %p1693, %s1690, 1
      %s1695 = smul.addr %s1692, 2
      %s1696 = sadd.s32 %s1694, %s1695
      %s1697 = smul.addr %s1696, 8
      %s1698 = scalar_lea.vmem %s7, %s1697
      // Predicated region
      $region57: #{transformer_forward.7} parent=47 // pred_check
        %p1699 = pneg %p232
      $region58: #{transformer_forward.7} parent=47 // pred_check_branch
        %1701 = sbr.rel (%p1699) target = $region60
      $region59: #{transformer_forward.7} parent=47 // pred_region
        %s1702 = smul.u32 2, %s24
      $region60: #{transformer_forward.7} parent=47 // pred_fallthru
        _
    $region48: #{transformer_forward.7} parent=5 // pred_fallthru
      _
    %p1703 = scmp.le.s32.totalorder 2, %s13
    // Predicated region
    $region61: #{transformer_forward.7} parent=5 // pred_check
      %p1704 = pneg %p1703
    $region62: #{transformer_forward.7} parent=5 // pred_check_branch
      %1706 = sbr.rel (%p1704) target = $region64
    $region63: #{transformer_forward.7} parent=5 // pred_region
      %s1707 = ssub.s32 %s13, 2
      // Predicated region
      $region65: #{transformer_forward.7} parent=63 // pred_check
        %p1708 = pneg %p238
      $region66: #{transformer_forward.7} parent=63 // pred_check_branch
        %1710 = sbr.rel (%p1708) target = $region68
      $region67: #{transformer_forward.7} parent=63 // pred_region
        %s1711 = smul.u32 2, %s27
        %p1712 = scmp.lt.s32.totalorder %s26, 1
        %s1713 = scalar_select %p1712, %s26, 1
        %p1714 = scmp.lt.s32.totalorder %s1711, 1
        %s1715 = scalar_select %p1714, %s1711, 1
        %s1716 = smul.addr %s1713, 2
        %s1717 = sadd.s32 %s1715, %s1716
        %s1718 = smul.addr %s1717, 8
        %s1719 = scalar_lea.vmem %s7, %s1718
      $region68: #{transformer_forward.7} parent=63 // pred_fallthru
        _
    $region64: #{transformer_forward.7} parent=5 // pred_fallthru
      _
  $region6: #{transformer_forward.7} parent=0 // loop_footer
    %s17 = sadd.s32 1, %s13
  $region7: #{transformer_forward.7} parent=0 // loop_footer_branch
    %12 = sbr.rel target = $region3
  $region8: #{transformer_forward.7} parent=0 // loop_exit
    _

// kernel: transformer_forward.11
$region0: #{transformer_forward.11}
  #allocation0 [shape = 'u32[]', space=smem, size = 0x4, offset = 0x4, fixed_abs, tag = 'smem constant byte address 0x4 - core index']
  #allocation1 [shape = 'u32[144,128]{1,0:T(1,128)}', space=vmem, size = 0x12000, scoped, tag = 'internal scratch']
  %s0 = inlined_call_operand.vmem [shape: f32[2,16,32], index: 0, kind: input, shape index: {}]
  %s1 = inlined_call_operand.vmem [shape: f32[1,32], index: 1, kind: input, shape index: {}]
  %s2 = inlined_call_operand.vmem [shape: bf16[32,128], index: 2, kind: input, shape index: {}]
  %s3 = inlined_call_operand.vmem [shape: bf16[32,128], index: 3, kind: input, shape index: {}]
  %s4 = inlined_call_operand.vmem [shape: f32[1,128], index: 4, kind: input, shape index: {}]
  %s5 = inlined_call_operand.vmem [shape: bf16[128,32], index: 5, kind: input, shape index: {}]
  %s6 = inlined_call_operand.vmem [shape: f32[1,32], index: 6, kind: input, shape index: {}]
  %s7 = inlined_call_operand.vmem [shape: f32[2,16,32], index: 7, kind: output, shape index: {}]
  %s8 = sld [smem:[#allocation0]]
  $region61: #{transformer_forward.11} parent=0
    _
  %s10 = ssub.s32 1, %s8
  %s11 = scalar_select 0, %s10, %s8
  loop: start=0, step=1, limit=4
  $region2: #{transformer_forward.11} parent=0 // loop_pre_header
    _
  $region3: #{transformer_forward.11} parent=0 // loop_header
    %s13 = sphi 0, %s17
    %p14 = scmp.ge.s32.totalorder %s13, 4
    %s20 = sphi 0, %s32
    %s21 = sphi 0, %s28
    %s22 = sphi 0, %s20
    %s23 = sphi 0, %s21
    %s24 = sphi 0, %s22
    %s25 = sphi 0, %s23
    %s37 = sphi 0, %s39
    %s40 = sphi 0, %s37
    %s41 = sphi 0, %s40
    %s57 = sphi 0, %s41
    %s61 = sphi 0, %s61
    %s63 = sphi 0, %s61
    %s64 = sphi 0, %s63
    %s78 = sphi 0, %s64
    %s82 = sphi 0, %s82
    %s84 = sphi 0, %s82
    %s85 = sphi 0, %s84
    %s99 = sphi 0, %s85
    %s103 = sphi 0, %s103
    %s105 = sphi 0, %s103
    %s106 = sphi 0, %s105
    %s120 = sphi 0, %s106
    %s124 = sphi 0, %s124
    %s126 = sphi 0, %s124
    %s127 = sphi 0, %s126
    %s141 = sphi 0, %s127
    %s145 = sphi 0, %s145
    %s147 = sphi 0, %s145
    %s148 = sphi 0, %s147
    %s162 = sphi 0, %s148
    %s166 = sphi 0, %s166
    %s168 = sphi 0, %s166
    %s169 = sphi 0, %s168
    %s183 = sphi 0, %s169
    %s191 = sphi 0, %s193
    %s194 = sphi 0, %s191
    %s195 = sphi 0, %s194
    %s211 = sphi 0, %s195
  $region4: #{transformer_forward.11} parent=0 // loop_header_branch
    %16 = sbr.rel (%p14) target = $region8
  $region5: #{transformer_forward.11} parent=0 // loop_body
    %s18 = ssub.s32 %s13, 1
    %s19 = ssub.s32 %s13, 2
    %s26 = sadd.s32 1, %s21
    %p27 = scmp.ge.s32.totalorder %s26, 1
    %s28 = scalar_select %p27, 0, %s26
    %s29 = sadd.s32 1, %s20
    %s30 = scalar_select %p27, %s29, %s20
    %p31 = scmp.ge.s32.totalorder %s30, 2
    %s32 = scalar_select %p31, 0, %s30
    %s33 = ssub.s32 %s20, %s32
    %s34 = ssub.s32 %s21, %s28
    %s35 = sor.u32 %s33, %s34
    %p36 = scmp.eq.s32.totalorder %s35, 0
    %s38 = sadd.s32 %s37, 1
    %s39 = scalar_select %p36, %s37, %s38
    %p42 = pneg %p36
    %p43 = scmp.eq.s32.totalorder %s13, 1
    %p44 = por %p42, %p43
    %p45 = scmp.ne.s32.totalorder %s37, %s40
    %p46 = scmp.eq.s32.totalorder %s13, 0
    %p47 = por %p45, %p46
    %p48 = scmp.ne.s32.totalorder %s37, %s40
    %p49 = scmp.eq.s32.totalorder %s18, 1
    %p50 = por %p48, %p49
    %p51 = scmp.ne.s32.totalorder %s40, %s41
    %p52 = scmp.eq.s32.totalorder %s18, 0
    %p53 = por %p51, %p52
    %p54 = scmp.ne.s32.totalorder %s40, %s41
    %p55 = scmp.eq.s32.totalorder %s19, 1
    %p56 = por %p54, %p55
    %p58 = scmp.ne.s32.totalorder %s41, %s57
    %p59 = scmp.eq.s32.totalorder %s19, 0
    %p60 = por %p58, %p59
    %s62 = sadd.s32 %s61, 1
    %p65 = scmp.eq.s32.totalorder %s13, 1
    %p66 = scmp.ne.s32.totalorder %s61, %s63
    %p67 = scmp.eq.s32.totalorder %s13, 0
    %p68 = por %p66, %p67
    %p69 = scmp.ne.s32.totalorder %s61, %s63
    %p70 = scmp.eq.s32.totalorder %s18, 1
    %p71 = por %p69, %p70
    %p72 = scmp.ne.s32.totalorder %s63, %s64
    %p73 = scmp.eq.s32.totalorder %s18, 0
    %p74 = por %p72, %p73
    %p75 = scmp.ne.s32.totalorder %s63, %s64
    %p76 = scmp.eq.s32.totalorder %s19, 1
    %p77 = por %p75, %p76
    %p79 = scmp.ne.s32.totalorder %s64, %s78
    %p80 = scmp.eq.s32.totalorder %s19, 0
    %p81 = por %p79, %p80
    %s83 = sadd.s32 %s82, 1
    %p86 = scmp.eq.s32.totalorder %s13, 1
    %p87 = scmp.ne.s32.totalorder %s82, %s84
    %p88 = scmp.eq.s32.totalorder %s13, 0
    %p89 = por %p87, %p88
    %p90 = scmp.ne.s32.totalorder %s82, %s84
    %p91 = scmp.eq.s32.totalorder %s18, 1
    %p92 = por %p90, %p91
    %p93 = scmp.ne.s32.totalorder %s84, %s85
    %p94 = scmp.eq.s32.totalorder %s18, 0
    %p95 = por %p93, %p94
    %p96 = scmp.ne.s32.totalorder %s84, %s85
    %p97 = scmp.eq.s32.totalorder %s19, 1
    %p98 = por %p96, %p97
    %p100 = scmp.ne.s32.totalorder %s85, %s99
    %p101 = scmp.eq.s32.totalorder %s19, 0
    %p102 = por %p100, %p101
    %s104 = sadd.s32 %s103, 1
    %p107 = scmp.eq.s32.totalorder %s13, 1
    %p108 = scmp.ne.s32.totalorder %s103, %s105
    %p109 = scmp.eq.s32.totalorder %s13, 0
    %p110 = por %p108, %p109
    %p111 = scmp.ne.s32.totalorder %s103, %s105
    %p112 = scmp.eq.s32.totalorder %s18, 1
    %p113 = por %p111, %p112
    %p114 = scmp.ne.s32.totalorder %s105, %s106
    %p115 = scmp.eq.s32.totalorder %s18, 0
    %p116 = por %p114, %p115
    %p117 = scmp.ne.s32.totalorder %s105, %s106
    %p118 = scmp.eq.s32.totalorder %s19, 1
    %p119 = por %p117, %p118
    %p121 = scmp.ne.s32.totalorder %s106, %s120
    %p122 = scmp.eq.s32.totalorder %s19, 0
    %p123 = por %p121, %p122
    %s125 = sadd.s32 %s124, 1
    %p128 = scmp.eq.s32.totalorder %s13, 1
    %p129 = scmp.ne.s32.totalorder %s124, %s126
    %p130 = scmp.eq.s32.totalorder %s13, 0
    %p131 = por %p129, %p130
    %p132 = scmp.ne.s32.totalorder %s124, %s126
    %p133 = scmp.eq.s32.totalorder %s18, 1
    %p134 = por %p132, %p133
    %p135 = scmp.ne.s32.totalorder %s126, %s127
    %p136 = scmp.eq.s32.totalorder %s18, 0
    %p137 = por %p135, %p136
    %p138 = scmp.ne.s32.totalorder %s126, %s127
    %p139 = scmp.eq.s32.totalorder %s19, 1
    %p140 = por %p138, %p139
    %p142 = scmp.ne.s32.totalorder %s127, %s141
    %p143 = scmp.eq.s32.totalorder %s19, 0
    %p144 = por %p142, %p143
    %s146 = sadd.s32 %s145, 1
    %p149 = scmp.eq.s32.totalorder %s13, 1
    %p150 = scmp.ne.s32.totalorder %s145, %s147
    %p151 = scmp.eq.s32.totalorder %s13, 0
    %p152 = por %p150, %p151
    %p153 = scmp.ne.s32.totalorder %s145, %s147
    %p154 = scmp.eq.s32.totalorder %s18, 1
    %p155 = por %p153, %p154
    %p156 = scmp.ne.s32.totalorder %s147, %s148
    %p157 = scmp.eq.s32.totalorder %s18, 0
    %p158 = por %p156, %p157
    %p159 = scmp.ne.s32.totalorder %s147, %s148
    %p160 = scmp.eq.s32.totalorder %s19, 1
    %p161 = por %p159, %p160
    %p163 = scmp.ne.s32.totalorder %s148, %s162
    %p164 = scmp.eq.s32.totalorder %s19, 0
    %p165 = por %p163, %p164
    %s167 = sadd.s32 %s166, 1
    %p170 = scmp.eq.s32.totalorder %s13, 1
    %p171 = scmp.ne.s32.totalorder %s166, %s168
    %p172 = scmp.eq.s32.totalorder %s13, 0
    %p173 = por %p171, %p172
    %p174 = scmp.ne.s32.totalorder %s166, %s168
    %p175 = scmp.eq.s32.totalorder %s18, 1
    %p176 = por %p174, %p175
    %p177 = scmp.ne.s32.totalorder %s168, %s169
    %p178 = scmp.eq.s32.totalorder %s18, 0
    %p179 = por %p177, %p178
    %p180 = scmp.ne.s32.totalorder %s168, %s169
    %p181 = scmp.eq.s32.totalorder %s19, 1
    %p182 = por %p180, %p181
    %p184 = scmp.ne.s32.totalorder %s169, %s183
    %p185 = scmp.eq.s32.totalorder %s19, 0
    %p186 = por %p184, %p185
    %s187 = ssub.s32 %s20, %s32
    %s188 = ssub.s32 %s21, %s28
    %s189 = sor.u32 %s187, %s188
    %p190 = scmp.eq.s32.totalorder %s189, 0
    %s192 = sadd.s32 %s191, 1
    %s193 = scalar_select %p190, %s191, %s192
    %p196 = pneg %p190
    %p197 = scmp.eq.s32.totalorder %s13, 1
    %p198 = por %p196, %p197
    %p199 = scmp.ne.s32.totalorder %s191, %s194
    %p200 = scmp.eq.s32.totalorder %s13, 0
    %p201 = por %p199, %p200
    %p202 = scmp.ne.s32.totalorder %s191, %s194
    %p203 = scmp.eq.s32.totalorder %s18, 1
    %p204 = por %p202, %p203
    %p205 = scmp.ne.s32.totalorder %s194, %s195
    %p206 = scmp.eq.s32.totalorder %s18, 0
    %p207 = por %p205, %p206
    %p208 = scmp.ne.s32.totalorder %s194, %s195
    %p209 = scmp.eq.s32.totalorder %s19, 1
    %p210 = por %p208, %p209
    %p212 = scmp.ne.s32.totalorder %s195, %s211
    %p213 = scmp.eq.s32.totalorder %s19, 0
    %p214 = por %p212, %p213
    %p215 = scmp.le.s32.totalorder 1, %s13
    %p216 = scmp.lt.s32.totalorder %s13, 3
    %p217 = pnand %p215, %p216
    %p218 = pneg %p217
    // Predicated region
    $region9: #{transformer_forward.11} parent=5 // pred_check
      _
    $region10: #{transformer_forward.11} parent=5 // pred_check_branch
      %220 = sbr.rel (%p217) target = $region12
    $region11: #{transformer_forward.11} parent=5 // pred_region
      %s221 = ssub.s32 %s13, 1
      // Predicated region
      $region13: #{transformer_forward.11} parent=11 // pred_check
        %p222 = pneg %p74
      $region14: #{transformer_forward.11} parent=11 // pred_check_branch
        %224 = sbr.rel (%p222) target = $region16
      $region15: #{transformer_forward.11} parent=11 // pred_region
        _
      $region16: #{transformer_forward.11} parent=11 // pred_fallthru
        _
      // Predicated region
      $region17: #{transformer_forward.11} parent=11 // pred_check
        %p225 = pneg %p95
      $region18: #{transformer_forward.11} parent=11 // pred_check_branch
        %227 = sbr.rel (%p225) target = $region20
      $region19: #{transformer_forward.11} parent=11 // pred_region
        _
      $region20: #{transformer_forward.11} parent=11 // pred_fallthru
        _
      // Predicated region
      $region21: #{transformer_forward.11} parent=11 // pred_check
        %p228 = pneg %p116
      $region22: #{transformer_forward.11} parent=11 // pred_check_branch
        %230 = sbr.rel (%p228) target = $region24
      $region23: #{transformer_forward.11} parent=11 // pred_region
        _
      $region24: #{transformer_forward.11} parent=11 // pred_fallthru
        _
      // Predicated region
      $region25: #{transformer_forward.11} parent=11 // pred_check
        %p231 = pneg %p137
      $region26: #{transformer_forward.11} parent=11 // pred_check_branch
        %233 = sbr.rel (%p231) target = $region28
      $region27: #{transformer_forward.11} parent=11 // pred_region
        _
      $region28: #{transformer_forward.11} parent=11 // pred_fallthru
        _
      // Predicated region
      $region29: #{transformer_forward.11} parent=11 // pred_check
        %p234 = pneg %p158
      $region30: #{transformer_forward.11} parent=11 // pred_check_branch
        %236 = sbr.rel (%p234) target = $region32
      $region31: #{transformer_forward.11} parent=11 // pred_region
        _
      $region32: #{transformer_forward.11} parent=11 // pred_fallthru
        _
      // Predicated region
      $region33: #{transformer_forward.11} parent=11 // pred_check
        %p237 = pneg %p179
      $region34: #{transformer_forward.11} parent=11 // pred_check_branch
        %239 = sbr.rel (%p237) target = $region36
      $region35: #{transformer_forward.11} parent=11 // pred_region
        _
      $region36: #{transformer_forward.11} parent=11 // pred_fallthru
        _
    $region12: #{transformer_forward.11} parent=5 // pred_fallthru
      _
    %p240 = scmp.lt.s32.totalorder %s13, 2
    // Predicated region
    $region37: #{transformer_forward.11} parent=5 // pred_check
      %p241 = pneg %p240
    $region38: #{transformer_forward.11} parent=5 // pred_check_branch
      %243 = sbr.rel (%p241) target = $region40
    $region39: #{transformer_forward.11} parent=5 // pred_region
      // Predicated region
      $region41: #{transformer_forward.11} parent=39 // pred_check
        %p244 = pneg %p47
      $region42: #{transformer_forward.11} parent=39 // pred_check_branch
        %246 = sbr.rel (%p244) target = $region44
      $region43: #{transformer_forward.11} parent=39 // pred_region
        %s247 = smul.u32 2, %s21
        %p248 = scmp.lt.s32.totalorder %s20, 1
        %s249 = scalar_select %p248, %s20, 1
        %p250 = scmp.lt.s32.totalorder %s247, 1
        %s251 = scalar_select %p250, %s247, 1
        %s252 = smul.addr %s249, 2
        %s253 = sadd.s32 %s251, %s252
        %s254 = smul.addr %s253, 8
        %s255 = scalar_lea.vmem %s0, %s254
        %s256 = smul.u32 2, %s21
      $region44: #{transformer_forward.11} parent=39 // pred_fallthru
        _
    $region40: #{transformer_forward.11} parent=5 // pred_fallthru
      _
    %p257 = scmp.le.s32.totalorder 1, %s13
    %p258 = scmp.lt.s32.totalorder %s13, 3
    %p259 = pnand %p257, %p258
    %p260 = pneg %p259
    // Predicated region
    $region45: #{transformer_forward.11} parent=5 // pred_check
      _
    $region46: #{transformer_forward.11} parent=5 // pred_check_branch
      %262 = sbr.rel (%p259) target = $region48
    $region47: #{transformer_forward.11} parent=5 // pred_region
      %s263 = ssub.s32 %s13, 1
      %s264 = smul.u32 2, %s23
      %p265 = scmp.lt.s32.totalorder %s22, 1
      %s266 = scalar_select %p265, %s22, 1
      %p267 = scmp.lt.s32.totalorder %s264, 1
      %s268 = scalar_select %p267, %s264, 1
      %s269 = smul.addr %s266, 2
      %s270 = sadd.s32 %s268, %s269
      %s271 = smul.addr %s270, 8
      %s272 = scalar_lea.vmem %s0, %s271
      %p273 = pneg %p53
      %p274 = pneg %p50
      %p275 = pneg %p74
      %p276 = pneg %p71
      %p277 = pneg %p95
      %p278 = pneg %p92
      %p279 = pneg %p116
      %p280 = pneg %p113
      %p281 = pneg %p137
      %p282 = pneg %p134
      %p283 = pneg %p158
      %p284 = pneg %p155
      %p285 = pneg %p179
      %p286 = pneg %p176
      %p287 = pneg %p207
      %p288 = pneg %p204
      %s289 = smul.u32 2, %s23
      %p290 = scmp.lt.s32.totalorder %s22, 1
      %s291 = scalar_select %p290, %s22, 1
      %p292 = scmp.lt.s32.totalorder %s289, 1
      %s293 = scalar_select %p292, %s289, 1
      %s294 = smul.addr %s291, 2
      %s295 = sadd.s32 %s293, %s294
      %s296 = smul.addr %s295, 8
      %s297 = scalar_lea.vmem %s7, %s296
      %s298 = smul.u32 2, %s23
      %p299 = scmp.lt.s32.totalorder %s22, 1
      %s300 = scalar_select %p299, %s22, 1
      %p301 = scmp.lt.s32.totalorder %s298, 1
      %s302 = scalar_select %p301, %s298, 1
      %s303 = smul.addr %s300, 2
      %s304 = sadd.s32 %s302, %s303
      %s305 = smul.addr %s304, 8
      %s306 = scalar_lea.vmem %s0, %s305
      %s307 = smul.u32 2, %s23
      %s308 = smul.u32 2, %s23
      %p309 = scmp.lt.s32.totalorder %s22, 1
      %s310 = scalar_select %p309, %s22, 1
      %p311 = scmp.lt.s32.totalorder %s308, 1
      %s312 = scalar_select %p311, %s308, 1
      %s313 = smul.addr %s310, 2
      %s314 = sadd.s32 %s312, %s313
      %s315 = smul.addr %s314, 8
      %s316 = scalar_lea.vmem %s7, %s315
      %s317 = smul.u32 2, %s23
      %v319 = vld [vmem:[%s306] sm:$0xff]
      %v320 = vld [vmem:[%s306 + $0x8] sm:$0xff]
      %v321 = vld [vmem:[%s1] sm:$0x1]
      %vm322 = vcmask 261120
      %v323 = vsel %vm322, %v319, 0.0
      %324 = vadd.xlane.f32.xlu0 %v323
      %v325 = vpop.xlane.xlu0 %324
      %v326 = vsel %vm322, %v320, 0.0
      %327 = vadd.xlane.f32.xlu0 %v326
      %v328 = vpop.xlane.xlu0 %327
      %v329 = vrcp.pop 32.0
      %v330 = vmul.f32 %v325, %v329
      %v331 = vmul.f32 %v328, %v329
      %v332 = vsub.f32 %v319, %v330
      %v333 = vsub.f32 %v320, %v331
      %v334 = vmul.f32 %v332, %v332
      %v335 = vmul.f32 %v333, %v333
      %v336 = vsel %vm322, %v334, 0.0
      %337 = vadd.xlane.f32.xlu0 %v336
      %v338 = vpop.xlane.xlu0 %337
      %v339 = vsel %vm322, %v335, 0.0
      %340 = vadd.xlane.f32.xlu0 %v339
      %v341 = vpop.xlane.xlu0 %340
      %v342 = vmul.f32 %v338, %v329
      %v343 = vmul.f32 %v341, %v329
      %v344 = vadd.f32 %v342, 1e-05
      %v345 = vadd.f32 %v343, 1e-05
      %v346 = vrsqrt.pop %v344
      %v347 = vrsqrt.pop %v345
      %v348 = vmul.f32 %v332, %v346
      %v349 = vmul.f32 %v333, %v347
      %v351 = vlaneseq
      %v352 = vshrl.u32 %v351, 7
      %v353 = vsub.s32 0, %v352
      %v354 = vrot.slane %v321, %v353
      %v356 = vmul.f32 %v348, %v354
      %v357 = vmul.f32 %v349, %v354
      %v358 = vpack.c.bf16 %v357, %v356
      %v359 = vld [vmem:[%s2] sm:$0xf]
      %v360 = vld [vmem:[%s2 + $0x4] sm:$0xf]
      %v361 = vld [vmem:[%s2 + $0x8] sm:$0xf]
      %v362 = vld [vmem:[%s2 + $0xc] sm:$0xf]
      %v367 = vunpack.c.l.b16 %v359
      %v368 = vunpack.c.l.b16 %v360
      %v369 = vunpack.c.l.b16 %v361
      %v370 = vunpack.c.l.b16 %v362
      %v371 = vpack.c.b16 %v368, %v367
      %v372 = vpack.c.b16 %v370, %v369
      %v376 = vsel %vm322, %v358, 0
      %378 = vmatprep.subr.bf16.mxu0 0
      %379 = vmatpush1.bf16.msra.mxu0 %v371
      %380 = vmatprep.subr.bf16.mxu0 0
      %381 = vmatpush1.bf16.msra.mxu0 %v372
      %382 = vmatprep.subr.bf16.mxu0 0
      %383 = vmatpush1.bf16.msra.mxu0 0
      %384 = vmatprep.subr.bf16.mxu0 0
      %385 = vmatpush1.bf16.msra.mxu0 0
      %386 = vmatprep.subr.bf16.mxu0 0
      %387 = vmatpush1.bf16.msra.mxu0 0
      %388 = vmatprep.subr.bf16.mxu0 0
      %389 = vmatpush1.bf16.msra.mxu0 0
      %390 = vmatprep.subr.bf16.mxu0 0
      %391 = vmatpush1.bf16.msra.mxu0 0
      %392 = vmatprep.subr.bf16.mxu0 0
      %393 = vmatpush1.bf16.msra.mxu0 0
      %394 = vmatprep.subr.bf16.mxu0 0
      %395 = vmatpush1.bf16.msra.mxu0 0
      %396 = vmatprep.subr.bf16.mxu0 0
      %397 = vmatpush1.bf16.msra.mxu0 0
      %398 = vmatprep.subr.bf16.mxu0 0
      %399 = vmatpush1.bf16.msra.mxu0 0
      %400 = vmatprep.subr.bf16.mxu0 0
      %401 = vmatpush1.bf16.msra.mxu0 0
      %402 = vmatprep.subr.bf16.mxu0 0
      %403 = vmatpush1.bf16.msra.mxu0 0
      %404 = vmatprep.subr.bf16.mxu0 0
      %405 = vmatpush1.bf16.msra.mxu0 0
      %406 = vmatprep.subr.bf16.mxu0 0
      %407 = vmatpush1.bf16.msra.mxu0 0
      %408 = vmatprep.subr.bf16.mxu0 0
      %409 = vmatpush1.bf16.msra.mxu0 0
      %410 = vmatprep.mubr.bf16.mxu0 0
      %411 = vmatmul.mubr.bf16.gmra.mrb[0].mxu0 %v376
      %v412 = vpop.f32.mrb[0].mxu0
      %v413 = vadd.f32 0.0, %v412
      %v414 = vpop.f32.mrb[0].mxu0
      %v415 = vpop.f32.mrb[0].mxu0
      %v416 = vadd.f32 0.0, %v415
      %v417 = vpop.f32.mrb[0].mxu0
      %418 = vdwg.mxu0
      %v419 = vld [vmem:[%s3] sm:$0xf]
      %v420 = vld [vmem:[%s3 + $0x4] sm:$0xf]
      %v421 = vld [vmem:[%s3 + $0x8] sm:$0xf]
      %v422 = vld [vmem:[%s3 + $0xc] sm:$0xf]
      %v427 = vunpack.c.l.b16 %v419
      %v428 = vunpack.c.l.b16 %v420
      %v429 = vunpack.c.l.b16 %v421
      %v430 = vunpack.c.l.b16 %v422
      %v431 = vpack.c.b16 %v428, %v427
      %v432 = vpack.c.b16 %v430, %v429
      %435 = vmatprep.subr.bf16.mxu0 0
      %436 = vmatpush1.bf16.msra.mxu0 %v431
      %437 = vmatprep.subr.bf16.mxu0 0
      %438 = vmatpush1.bf16.msra.mxu0 %v432
      %439 = vmatprep.subr.bf16.mxu0 0
      %440 = vmatpush1.bf16.msra.mxu0 0
      %441 = vmatprep.subr.bf16.mxu0 0
      %442 = vmatpush1.bf16.msra.mxu0 0
      %443 = vmatprep.subr.bf16.mxu0 0
      %444 = vmatpush1.bf16.msra.mxu0 0
      %445 = vmatprep.subr.bf16.mxu0 0
      %446 = vmatpush1.bf16.msra.mxu0 0
      %447 = vmatprep.subr.bf16.mxu0 0
      %448 = vmatpush1.bf16.msra.mxu0 0
      %449 = vmatprep.subr.bf16.mxu0 0
      %450 = vmatpush1.bf16.msra.mxu0 0
      %451 = vmatprep.subr.bf16.mxu0 0
      %452 = vmatpush1.bf16.msra.mxu0 0
      %453 = vmatprep.subr.bf16.mxu0 0
      %454 = vmatpush1.bf16.msra.mxu0 0
      %455 = vmatprep.subr.bf16.mxu0 0
      %456 = vmatpush1.bf16.msra.mxu0 0
      %457 = vmatprep.subr.bf16.mxu0 0
      %458 = vmatpush1.bf16.msra.mxu0 0
      %459 = vmatprep.subr.bf16.mxu0 0
      %460 = vmatpush1.bf16.msra.mxu0 0
      %461 = vmatprep.subr.bf16.mxu0 0
      %462 = vmatpush1.bf16.msra.mxu0 0
      %463 = vmatprep.subr.bf16.mxu0 0
      %464 = vmatpush1.bf16.msra.mxu0 0
      %465 = vmatprep.subr.bf16.mxu0 0
      %466 = vmatpush1.bf16.msra.mxu0 0
      %467 = vmatprep.mubr.bf16.mxu0 0
      %468 = vmatmul.mubr.bf16.gmra.mrb[0].mxu0 %v376
      %v469 = vpop.f32.mrb[0].mxu0
      %v470 = vadd.f32 0.0, %v469
      %v471 = vpop.f32.mrb[0].mxu0
      %v472 = vpop.f32.mrb[0].mxu0
      %v473 = vadd.f32 0.0, %v472
      %v474 = vpop.f32.mrb[0].mxu0
      %475 = vdwg.mxu0
      %v476 = vmul.f32 %v470, %v470
      %v477 = vmul.f32 %v473, %v473
      %v478 = vmul.f32 %v470, %v476
      %v479 = vmul.f32 %v473, %v477
      %v480 = vmul.f32 %v478, 0.044715
      %v481 = vmul.f32 %v479, 0.044715
      %v482 = vadd.f32 %v470, %v480
      %v483 = vadd.f32 %v473, %v481
      %v484 = vmul.f32 %v482, 0.7978846
      %v485 = vmul.f32 %v483, 0.7978846
      %v486 = vtanh.pop %v484
      %v487 = vtanh.pop %v485
      %v488 = vadd.f32 %v486, 1.0
      %v489 = vadd.f32 %v487, 1.0
      %v490 = vmul.f32 %v488, 0.5
      %v491 = vmul.f32 %v489, 0.5
      %v492 = vmul.f32 %v470, %v490
      %v493 = vmul.f32 %v473, %v491
      %v494 = vmul.f32 %v413, %v492
      %v495 = vmul.f32 %v416, %v493
      %v496 = vld [vmem:[%s4] sm:$0x1]
      %497 = vadd.xlane.f32.xlu0 %v494
      %v498 = vpop.xlane.xlu0 %497
      %499 = vadd.xlane.f32.xlu0 %v495
      %v500 = vpop.xlane.xlu0 %499
      %v501 = vrcp.pop 128.0
      %v502 = vmul.f32 %v498, %v501
      %v503 = vmul.f32 %v500, %v501
      %v504 = vsub.f32 %v494, %v502
      %v505 = vsub.f32 %v495, %v503
      %v506 = vmul.f32 %v504, %v504
      %v507 = vmul.f32 %v505, %v505
      %508 = vadd.xlane.f32.xlu0 %v506
      %v509 = vpop.xlane.xlu0 %508
      %510 = vadd.xlane.f32.xlu0 %v507
      %v511 = vpop.xlane.xlu0 %510
      %v512 = vmul.f32 %v509, %v501
      %v513 = vmul.f32 %v511, %v501
      %v514 = vadd.f32 %v512, 1e-05
      %v515 = vadd.f32 %v513, 1e-05
      %v516 = vrsqrt.pop %v514
      %v517 = vrsqrt.pop %v515
      %v518 = vmul.f32 %v504, %v516
      %v519 = vmul.f32 %v505, %v517
      %v521 = vlaneseq
      %v522 = vshrl.u32 %v521, 7
      %v523 = vsub.s32 0, %v522
      %v524 = vrot.slane %v496, %v523
      %v526 = vmul.f32 %v518, %v524
      %v527 = vmul.f32 %v519, %v524
      %v528 = vpack.c.bf16 %v527, %v526
      %v529 = vld [vmem:[%s5] sm:$0xf]
      %v530 = vld [vmem:[%s5 + $0x4] sm:$0xf]
      %v531 = vld [vmem:[%s5 + $0x8] sm:$0xf]
      %v532 = vld [vmem:[%s5 + $0xc] sm:$0xf]
      %v533 = vld [vmem:[%s5 + $0x10] sm:$0xf]
      %v534 = vld [vmem:[%s5 + $0x14] sm:$0xf]
      %v535 = vld [vmem:[%s5 + $0x18] sm:$0xf]
      %v536 = vld [vmem:[%s5 + $0x1c] sm:$0xf]
      %v537 = vld [vmem:[%s5 + $0x20] sm:$0xf]
      %v538 = vld [vmem:[%s5 + $0x24] sm:$0xf]
      %v539 = vld [vmem:[%s5 + $0x28] sm:$0xf]
      %v540 = vld [vmem:[%s5 + $0x2c] sm:$0xf]
      %v541 = vld [vmem:[%s5 + $0x30] sm:$0xf]
      %v542 = vld [vmem:[%s5 + $0x34] sm:$0xf]
      %v543 = vld [vmem:[%s5 + $0x38] sm:$0xf]
      %v544 = vld [vmem:[%s5 + $0x3c] sm:$0xf]
      %v561 = vunpack.c.l.b16 %v529
      %v562 = vunpack.c.l.b16 %v530
      %v563 = vunpack.c.l.b16 %v531
      %v564 = vunpack.c.l.b16 %v532
      %v565 = vunpack.c.l.b16 %v533
      %v566 = vunpack.c.l.b16 %v534
      %v567 = vunpack.c.l.b16 %v535
      %v568 = vunpack.c.l.b16 %v536
      %v569 = vunpack.c.l.b16 %v537
      %v570 = vunpack.c.l.b16 %v538
      %v571 = vunpack.c.l.b16 %v539
      %v572 = vunpack.c.l.b16 %v540
      %v573 = vunpack.c.l.b16 %v541
      %v574 = vunpack.c.l.b16 %v542
      %v575 = vunpack.c.l.b16 %v543
      %v576 = vunpack.c.l.b16 %v544
      %v577 = vpack.c.b16 %v562, %v561
      %v578 = vpack.c.b16 %v564, %v563
      %v579 = vpack.c.b16 %v566, %v565
      %v580 = vpack.c.b16 %v568, %v567
      %v581 = vpack.c.b16 %v570, %v569
      %v582 = vpack.c.b16 %v572, %v571
      %v583 = vpack.c.b16 %v574, %v573
      %v584 = vpack.c.b16 %v576, %v575
      %593 = vmatprep.subr.bf16.mxu0 0
      %594 = vmatpush1.bf16.msra.mxu0 %v577
      %595 = vmatprep.subr.bf16.mxu0 0
      %596 = vmatpush1.bf16.msra.mxu0 %v578
      %597 = vmatprep.subr.bf16.mxu0 0
      %598 = vmatpush1.bf16.msra.mxu0 %v579
      %599 = vmatprep.subr.bf16.mxu0 0
      %600 = vmatpush1.bf16.msra.mxu0 %v580
      %601 = vmatprep.subr.bf16.mxu0 0
      %602 = vmatpush1.bf16.msra.mxu0 %v581
      %603 = vmatprep.subr.bf16.mxu0 0
      %604 = vmatpush1.bf16.msra.mxu0 %v582
      %605 = vmatprep.subr.bf16.mxu0 0
      %606 = vmatpush1.bf16.msra.mxu0 %v583
      %607 = vmatprep.subr.bf16.mxu0 0
      %608 = vmatpush1.bf16.msra.mxu0 %v584
      %609 = vmatprep.subr.bf16.mxu0 0
      %610 = vmatpush1.bf16.msra.mxu0 0
      %611 = vmatprep.subr.bf16.mxu0 0
      %612 = vmatpush1.bf16.msra.mxu0 0
      %613 = vmatprep.subr.bf16.mxu0 0
      %614 = vmatpush1.bf16.msra.mxu0 0
      %615 = vmatprep.subr.bf16.mxu0 0
      %616 = vmatpush1.bf16.msra.mxu0 0
      %617 = vmatprep.subr.bf16.mxu0 0
      %618 = vmatpush1.bf16.msra.mxu0 0
      %619 = vmatprep.subr.bf16.mxu0 0
      %620 = vmatpush1.bf16.msra.mxu0 0
      %621 = vmatprep.subr.bf16.mxu0 0
      %622 = vmatpush1.bf16.msra.mxu0 0
      %623 = vmatprep.subr.bf16.mxu0 0
      %624 = vmatpush1.bf16.msra.mxu0 0
      %625 = vmatprep.mubr.bf16.mxu0 0
      %626 = vmatmul.mubr.bf16.gmra.mrb[0].mxu0 %v528
      %v627 = vpop.f32.mrb[0].mxu0
      %v628 = vadd.f32 %v319, %v627
      %v629 = vpop.f32.mrb[0].mxu0
      %v630 = vpop.f32.mrb[0].mxu0
      %v631 = vadd.f32 %v320, %v630
      %v632 = vpop.f32.mrb[0].mxu0
      %633 = vdwg.mxu0
      %v634 = vld [vmem:[%s6] sm:$0x1]
      %v635 = vsel %vm322, %v628, 0.0
      %636 = vadd.xlane.f32.xlu0 %v635
      %v637 = vpop.xlane.xlu0 %636
      %v638 = vsel %vm322, %v631, 0.0
      %639 = vadd.xlane.f32.xlu0 %v638
      %v640 = vpop.xlane.xlu0 %639
      %v641 = vmul.f32 %v637, %v329
      %v642 = vmul.f32 %v640, %v329
      %v643 = vsub.f32 %v628, %v641
      %v644 = vsub.f32 %v631, %v642
      %v645 = vmul.f32 %v643, %v643
      %v646 = vmul.f32 %v644, %v644
      %v647 = vsel %vm322, %v645, 0.0
      %648 = vadd.xlane.f32.xlu0 %v647
      %v649 = vpop.xlane.xlu0 %648
      %v650 = vsel %vm322, %v646, 0.0
      %651 = vadd.xlane.f32.xlu0 %v650
      %v652 = vpop.xlane.xlu0 %651
      %v653 = vmul.f32 %v649, %v329
      %v654 = vmul.f32 %v652, %v329
      %v655 = vadd.f32 %v653, 1e-05
      %v656 = vadd.f32 %v654, 1e-05
      %v657 = vrsqrt.pop %v655
      %v658 = vrsqrt.pop %v656
      %v659 = vmul.f32 %v643, %v657
      %v660 = vmul.f32 %v644, %v658
      %v662 = vlaneseq
      %v663 = vshrl.u32 %v662, 7
      %v664 = vsub.s32 0, %v663
      %v665 = vrot.slane %v634, %v664
      %v667 = vmul.f32 %v659, %v665
      %v668 = vmul.f32 %v660, %v665
      %669 = vst.msk [vmem:[%s316] sm:$0xff] %vm322, %v667
      %670 = vst.msk [vmem:[%s316 + $0x8] sm:$0xff] %vm322, %v668
      %s671 = smul.u32 2, %s23
      %p672 = scmp.lt.s32.totalorder %s22, 1
      %s673 = scalar_select %p672, %s22, 1
      %p674 = scmp.lt.s32.totalorder %s671, 1
      %s675 = scalar_select %p674, %s671, 1
      %s676 = smul.addr %s673, 2
      %s677 = sadd.s32 %s675, %s676
      %s678 = smul.addr %s677, 8
      %s679 = scalar_lea.vmem %s7, %s678
      // Predicated region
      $region49: #{transformer_forward.11} parent=47 // pred_check
        %p680 = pneg %p204
      $region50: #{transformer_forward.11} parent=47 // pred_check_branch
        %682 = sbr.rel (%p680) target = $region52
      $region51: #{transformer_forward.11} parent=47 // pred_region
        %s683 = smul.u32 2, %s23
      $region52: #{transformer_forward.11} parent=47 // pred_fallthru
        _
    $region48: #{transformer_forward.11} parent=5 // pred_fallthru
      _
    %p684 = scmp.le.s32.totalorder 2, %s13
    // Predicated region
    $region53: #{transformer_forward.11} parent=5 // pred_check
      %p685 = pneg %p684
    $region54: #{transformer_forward.11} parent=5 // pred_check_branch
      %687 = sbr.rel (%p685) target = $region56
    $region55: #{transformer_forward.11} parent=5 // pred_region
      %s688 = ssub.s32 %s13, 2
      // Predicated region
      $region57: #{transformer_forward.11} parent=55 // pred_check
        %p689 = pneg %p210
      $region58: #{transformer_forward.11} parent=55 // pred_check_branch
        %691 = sbr.rel (%p689) target = $region60
      $region59: #{transformer_forward.11} parent=55 // pred_region
        %s692 = smul.u32 2, %s25
        %p693 = scmp.lt.s32.totalorder %s24, 1
        %s694 = scalar_select %p693, %s24, 1
        %p695 = scmp.lt.s32.totalorder %s692, 1
        %s696 = scalar_select %p695, %s692, 1
        %s697 = smul.addr %s694, 2
        %s698 = sadd.s32 %s696, %s697
        %s699 = smul.addr %s698, 8
        %s700 = scalar_lea.vmem %s7, %s699
      $region60: #{transformer_forward.11} parent=55 // pred_fallthru
        _
    $region56: #{transformer_forward.11} parent=5 // pred_fallthru
      _
  $region6: #{transformer_forward.11} parent=0 // loop_footer
    %s17 = sadd.s32 1, %s13
  $region7: #{transformer_forward.11} parent=0 // loop_footer_branch
    %12 = sbr.rel target = $region3
  $region8: #{transformer_forward.11} parent=0 // loop_exit
    _

// kernel: transformer_forward.10
$region0: #{transformer_forward.10}
  #allocation0 [shape = 'u32[]', space=smem, size = 0x4, offset = 0x4, fixed_abs, tag = 'smem constant byte address 0x4 - core index']
  #allocation1 [shape = 'u32[144,128]{1,0:T(1,128)}', space=vmem, size = 0x12000, scoped, tag = 'internal scratch']
  #allocation2 [shape = 'f32[4,16,1]{2,1,0:T(8,128)}', space=vmem, size = 0x8000, scoped, tag = 'scratch operand']
  #allocation3 [shape = 'f32[4,16,1]{2,1,0:T(8,128)}', space=vmem, size = 0x8000, scoped, tag = 'scratch operand']
  #allocation4 [shape = 'f32[4,16,8]{2,1,0:T(8,128)}', space=vmem, size = 0x8000, scoped, tag = 'scratch operand']
  %s0 = inlined_call_operand.vmem [shape: f32[2,16,32], index: 0, kind: input, shape index: {}]
  %s1 = inlined_call_operand.vmem [shape: f32[1,32], index: 1, kind: input, shape index: {}]
  %s2 = inlined_call_operand.vmem [shape: bf16[2,4,16,8], index: 2, kind: input, shape index: {}]
  %s3 = inlined_call_operand.vmem [shape: bf16[2,4,8,16], index: 3, kind: input, shape index: {}]
  %s4 = inlined_call_operand.vmem [shape: bf16[2,4,16,8], index: 4, kind: input, shape index: {}]
  %s5 = inlined_call_operand.vmem [shape: bf16[32,32], index: 5, kind: input, shape index: {}]
  %s6 = inlined_call_operand.vmem [shape: f32[1,32], index: 6, kind: input, shape index: {}]
  %s7 = inlined_call_operand.vmem [shape: f32[2,16,32], index: 7, kind: output, shape index: {}]
  %s8 = sld [smem:[#allocation0]]
  $region69: #{transformer_forward.10} parent=0
    _
  %s10 = ssub.s32 1, %s8
  %s11 = scalar_select 0, %s10, %s8
  loop: start=0, step=1, limit=4
  $region2: #{transformer_forward.10} parent=0 // loop_pre_header
    _
  $region3: #{transformer_forward.10} parent=0 // loop_header
    %s13 = sphi 0, %s17
    %p14 = scmp.ge.s32.totalorder %s13, 4
    %s20 = sphi 0, %s39
    %s21 = sphi 0, %s35
    %s22 = sphi 0, %s31
    %s23 = sphi 0, %s20
    %s24 = sphi 0, %s21
    %s25 = sphi 0, %s22
    %s26 = sphi 0, %s23
    %s27 = sphi 0, %s24
    %s28 = sphi 0, %s25
    %s44 = sphi 0, %s46
    %s47 = sphi 0, %s44
    %s48 = sphi 0, %s47
    %s64 = sphi 0, %s48
    %s68 = sphi 0, %s68
    %s70 = sphi 0, %s68
    %s71 = sphi 0, %s70
    %s85 = sphi 0, %s71
    %s93 = sphi 0, %s95
    %s96 = sphi 0, %s93
    %s97 = sphi 0, %s96
    %s113 = sphi 0, %s97
    %s121 = sphi 0, %s123
    %s124 = sphi 0, %s121
    %s125 = sphi 0, %s124
    %s141 = sphi 0, %s125
    %s149 = sphi 0, %s151
    %s152 = sphi 0, %s149
    %s153 = sphi 0, %s152
    %s169 = sphi 0, %s153
    %s173 = sphi 0, %s173
    %s175 = sphi 0, %s173
    %s176 = sphi 0, %s175
    %s190 = sphi 0, %s176
    %s194 = sphi 0, %s194
    %s196 = sphi 0, %s194
    %s197 = sphi 0, %s196
    %s211 = sphi 0, %s197
    %s219 = sphi 0, %s221
    %s222 = sphi 0, %s219
    %s223 = sphi 0, %s222
    %s239 = sphi 0, %s223
  $region4: #{transformer_forward.10} parent=0 // loop_header_branch
    %16 = sbr.rel (%p14) target = $region8
  $region5: #{transformer_forward.10} parent=0 // loop_body
    %s18 = ssub.s32 %s13, 1
    %s19 = ssub.s32 %s13, 2
    %s29 = sadd.s32 1, %s22
    %p30 = scmp.ge.s32.totalorder %s29, 1
    %s31 = scalar_select %p30, 0, %s29
    %s32 = sadd.s32 1, %s21
    %s33 = scalar_select %p30, %s32, %s21
    %p34 = scmp.ge.s32.totalorder %s33, 1
    %s35 = scalar_select %p34, 0, %s33
    %s36 = sadd.s32 1, %s20
    %s37 = scalar_select %p34, %s36, %s20
    %p38 = scmp.ge.s32.totalorder %s37, 2
    %s39 = scalar_select %p38, 0, %s37
    %s40 = ssub.s32 %s20, %s39
    %s41 = ssub.s32 %s21, %s35
    %s42 = sor.u32 %s40, %s41
    %p43 = scmp.eq.s32.totalorder %s42, 0
    %s45 = sadd.s32 %s44, 1
    %s46 = scalar_select %p43, %s44, %s45
    %p49 = pneg %p43
    %p50 = scmp.eq.s32.totalorder %s13, 1
    %p51 = por %p49, %p50
    %p52 = scmp.ne.s32.totalorder %s44, %s47
    %p53 = scmp.eq.s32.totalorder %s13, 0
    %p54 = por %p52, %p53
    %p55 = scmp.ne.s32.totalorder %s44, %s47
    %p56 = scmp.eq.s32.totalorder %s18, 1
    %p57 = por %p55, %p56
    %p58 = scmp.ne.s32.totalorder %s47, %s48
    %p59 = scmp.eq.s32.totalorder %s18, 0
    %p60 = por %p58, %p59
    %p61 = scmp.ne.s32.totalorder %s47, %s48
    %p62 = scmp.eq.s32.totalorder %s19, 1
    %p63 = por %p61, %p62
    %p65 = scmp.ne.s32.totalorder %s48, %s64
    %p66 = scmp.eq.s32.totalorder %s19, 0
    %p67 = por %p65, %p66
    %s69 = sadd.s32 %s68, 1
    %p72 = scmp.eq.s32.totalorder %s13, 1
    %p73 = scmp.ne.s32.totalorder %s68, %s70
    %p74 = scmp.eq.s32.totalorder %s13, 0
    %p75 = por %p73, %p74
    %p76 = scmp.ne.s32.totalorder %s68, %s70
    %p77 = scmp.eq.s32.totalorder %s18, 1
    %p78 = por %p76, %p77
    %p79 = scmp.ne.s32.totalorder %s70, %s71
    %p80 = scmp.eq.s32.totalorder %s18, 0
    %p81 = por %p79, %p80
    %p82 = scmp.ne.s32.totalorder %s70, %s71
    %p83 = scmp.eq.s32.totalorder %s19, 1
    %p84 = por %p82, %p83
    %p86 = scmp.ne.s32.totalorder %s71, %s85
    %p87 = scmp.eq.s32.totalorder %s19, 0
    %p88 = por %p86, %p87
    %s89 = ssub.s32 %s20, %s39
    %s90 = ssub.s32 %s21, %s35
    %s91 = sor.u32 %s89, %s90
    %p92 = scmp.eq.s32.totalorder %s91, 0
    %s94 = sadd.s32 %s93, 1
    %s95 = scalar_select %p92, %s93, %s94
    %p98 = pneg %p92
    %p99 = scmp.eq.s32.totalorder %s13, 1
    %p100 = por %p98, %p99
    %p101 = scmp.ne.s32.totalorder %s93, %s96
    %p102 = scmp.eq.s32.totalorder %s13, 0
    %p103 = por %p101, %p102
    %p104 = scmp.ne.s32.totalorder %s93, %s96
    %p105 = scmp.eq.s32.totalorder %s18, 1
    %p106 = por %p104, %p105
    %p107 = scmp.ne.s32.totalorder %s96, %s97
    %p108 = scmp.eq.s32.totalorder %s18, 0
    %p109 = por %p107, %p108
    %p110 = scmp.ne.s32.totalorder %s96, %s97
    %p111 = scmp.eq.s32.totalorder %s19, 1
    %p112 = por %p110, %p111
    %p114 = scmp.ne.s32.totalorder %s97, %s113
    %p115 = scmp.eq.s32.totalorder %s19, 0
    %p116 = por %p114, %p115
    %s117 = ssub.s32 %s20, %s39
    %s118 = ssub.s32 %s22, %s31
    %s119 = sor.u32 %s117, %s118
    %p120 = scmp.eq.s32.totalorder %s119, 0
    %s122 = sadd.s32 %s121, 1
    %s123 = scalar_select %p120, %s121, %s122
    %p126 = pneg %p120
    %p127 = scmp.eq.s32.totalorder %s13, 1
    %p128 = por %p126, %p127
    %p129 = scmp.ne.s32.totalorder %s121, %s124
    %p130 = scmp.eq.s32.totalorder %s13, 0
    %p131 = por %p129, %p130
    %p132 = scmp.ne.s32.totalorder %s121, %s124
    %p133 = scmp.eq.s32.totalorder %s18, 1
    %p134 = por %p132, %p133
    %p135 = scmp.ne.s32.totalorder %s124, %s125
    %p136 = scmp.eq.s32.totalorder %s18, 0
    %p137 = por %p135, %p136
    %p138 = scmp.ne.s32.totalorder %s124, %s125
    %p139 = scmp.eq.s32.totalorder %s19, 1
    %p140 = por %p138, %p139
    %p142 = scmp.ne.s32.totalorder %s125, %s141
    %p143 = scmp.eq.s32.totalorder %s19, 0
    %p144 = por %p142, %p143
    %s145 = ssub.s32 %s20, %s39
    %s146 = ssub.s32 %s22, %s31
    %s147 = sor.u32 %s145, %s146
    %p148 = scmp.eq.s32.totalorder %s147, 0
    %s150 = sadd.s32 %s149, 1
    %s151 = scalar_select %p148, %s149, %s150
    %p154 = pneg %p148
    %p155 = scmp.eq.s32.totalorder %s13, 1
    %p156 = por %p154, %p155
    %p157 = scmp.ne.s32.totalorder %s149, %s152
    %p158 = scmp.eq.s32.totalorder %s13, 0
    %p159 = por %p157, %p158
    %p160 = scmp.ne.s32.totalorder %s149, %s152
    %p161 = scmp.eq.s32.totalorder %s18, 1
    %p162 = por %p160, %p161
    %p163 = scmp.ne.s32.totalorder %s152, %s153
    %p164 = scmp.eq.s32.totalorder %s18, 0
    %p165 = por %p163, %p164
    %p166 = scmp.ne.s32.totalorder %s152, %s153
    %p167 = scmp.eq.s32.totalorder %s19, 1
    %p168 = por %p166, %p167
    %p170 = scmp.ne.s32.totalorder %s153, %s169
    %p171 = scmp.eq.s32.totalorder %s19, 0
    %p172 = por %p170, %p171
    %s174 = sadd.s32 %s173, 1
    %p177 = scmp.eq.s32.totalorder %s13, 1
    %p178 = scmp.ne.s32.totalorder %s173, %s175
    %p179 = scmp.eq.s32.totalorder %s13, 0
    %p180 = por %p178, %p179
    %p181 = scmp.ne.s32.totalorder %s173, %s175
    %p182 = scmp.eq.s32.totalorder %s18, 1
    %p183 = por %p181, %p182
    %p184 = scmp.ne.s32.totalorder %s175, %s176
    %p185 = scmp.eq.s32.totalorder %s18, 0
    %p186 = por %p184, %p185
    %p187 = scmp.ne.s32.totalorder %s175, %s176
    %p188 = scmp.eq.s32.totalorder %s19, 1
    %p189 = por %p187, %p188
    %p191 = scmp.ne.s32.totalorder %s176, %s190
    %p192 = scmp.eq.s32.totalorder %s19, 0
    %p193 = por %p191, %p192
    %s195 = sadd.s32 %s194, 1
    %p198 = scmp.eq.s32.totalorder %s13, 1
    %p199 = scmp.ne.s32.totalorder %s194, %s196
    %p200 = scmp.eq.s32.totalorder %s13, 0
    %p201 = por %p199, %p200
    %p202 = scmp.ne.s32.totalorder %s194, %s196
    %p203 = scmp.eq.s32.totalorder %s18, 1
    %p204 = por %p202, %p203
    %p205 = scmp.ne.s32.totalorder %s196, %s197
    %p206 = scmp.eq.s32.totalorder %s18, 0
    %p207 = por %p205, %p206
    %p208 = scmp.ne.s32.totalorder %s196, %s197
    %p209 = scmp.eq.s32.totalorder %s19, 1
    %p210 = por %p208, %p209
    %p212 = scmp.ne.s32.totalorder %s197, %s211
    %p213 = scmp.eq.s32.totalorder %s19, 0
    %p214 = por %p212, %p213
    %s215 = ssub.s32 %s20, %s39
    %s216 = ssub.s32 %s21, %s35
    %s217 = sor.u32 %s215, %s216
    %p218 = scmp.eq.s32.totalorder %s217, 0
    %s220 = sadd.s32 %s219, 1
    %s221 = scalar_select %p218, %s219, %s220
    %p224 = pneg %p218
    %p225 = scmp.eq.s32.totalorder %s13, 1
    %p226 = por %p224, %p225
    %p227 = scmp.ne.s32.totalorder %s219, %s222
    %p228 = scmp.eq.s32.totalorder %s13, 0
    %p229 = por %p227, %p228
    %p230 = scmp.ne.s32.totalorder %s219, %s222
    %p231 = scmp.eq.s32.totalorder %s18, 1
    %p232 = por %p230, %p231
    %p233 = scmp.ne.s32.totalorder %s222, %s223
    %p234 = scmp.eq.s32.totalorder %s18, 0
    %p235 = por %p233, %p234
    %p236 = scmp.ne.s32.totalorder %s222, %s223
    %p237 = scmp.eq.s32.totalorder %s19, 1
    %p238 = por %p236, %p237
    %p240 = scmp.ne.s32.totalorder %s223, %s239
    %p241 = scmp.eq.s32.totalorder %s19, 0
    %p242 = por %p240, %p241
    %p243 = scmp.le.s32.totalorder 1, %s13
    %p244 = scmp.lt.s32.totalorder %s13, 3
    %p245 = pnand %p243, %p244
    %p246 = pneg %p245
    // Predicated region
    $region9: #{transformer_forward.10} parent=5 // pred_check
      _
    $region10: #{transformer_forward.10} parent=5 // pred_check_branch
      %248 = sbr.rel (%p245) target = $region12
    $region11: #{transformer_forward.10} parent=5 // pred_region
      %s249 = ssub.s32 %s13, 1
      // Predicated region
      $region13: #{transformer_forward.10} parent=11 // pred_check
        %p250 = pneg %p81
      $region14: #{transformer_forward.10} parent=11 // pred_check_branch
        %252 = sbr.rel (%p250) target = $region16
      $region15: #{transformer_forward.10} parent=11 // pred_region
        _
      $region16: #{transformer_forward.10} parent=11 // pred_fallthru
        _
      // Predicated region
      $region17: #{transformer_forward.10} parent=11 // pred_check
        %p253 = pneg %p186
      $region18: #{transformer_forward.10} parent=11 // pred_check_branch
        %255 = sbr.rel (%p253) target = $region20
      $region19: #{transformer_forward.10} parent=11 // pred_region
        _
      $region20: #{transformer_forward.10} parent=11 // pred_fallthru
        _
      // Predicated region
      $region21: #{transformer_forward.10} parent=11 // pred_check
        %p256 = pneg %p207
      $region22: #{transformer_forward.10} parent=11 // pred_check_branch
        %258 = sbr.rel (%p256) target = $region24
      $region23: #{transformer_forward.10} parent=11 // pred_region
        _
      $region24: #{transformer_forward.10} parent=11 // pred_fallthru
        _
    $region12: #{transformer_forward.10} parent=5 // pred_fallthru
      _
    %p259 = scmp.lt.s32.totalorder %s13, 2
    // Predicated region
    $region25: #{transformer_forward.10} parent=5 // pred_check
      %p260 = pneg %p259
    $region26: #{transformer_forward.10} parent=5 // pred_check_branch
      %262 = sbr.rel (%p260) target = $region28
    $region27: #{transformer_forward.10} parent=5 // pred_region
      // Predicated region
      $region29: #{transformer_forward.10} parent=27 // pred_check
        %p263 = pneg %p54
      $region30: #{transformer_forward.10} parent=27 // pred_check_branch
        %265 = sbr.rel (%p263) target = $region32
      $region31: #{transformer_forward.10} parent=27 // pred_region
        %s266 = smul.u32 2, %s21
        %p267 = scmp.lt.s32.totalorder %s20, 1
        %s268 = scalar_select %p267, %s20, 1
        %p269 = scmp.lt.s32.totalorder %s266, 1
        %s270 = scalar_select %p269, %s266, 1
        %s271 = smul.addr %s268, 2
        %s272 = sadd.s32 %s270, %s271
        %s273 = smul.addr %s272, 8
        %s274 = scalar_lea.vmem %s0, %s273
        %s275 = smul.u32 2, %s21
      $region32: #{transformer_forward.10} parent=27 // pred_fallthru
        _
      // Predicated region
      $region33: #{transformer_forward.10} parent=27 // pred_check
        %p276 = pneg %p103
      $region34: #{transformer_forward.10} parent=27 // pred_check_branch
        %278 = sbr.rel (%p276) target = $region36
      $region35: #{transformer_forward.10} parent=27 // pred_region
        %s279 = smul.u32 2, %s21
        %p280 = scmp.lt.s32.totalorder %s20, 1
        %s281 = scalar_select %p280, %s20, 1
        %p282 = scmp.lt.s32.totalorder %s279, 1
        %s283 = scalar_select %p282, %s279, 1
        %s284 = smul.addr %s281, 8
        %s285 = sadd.s32 %s283, %s284
        %s286 = smul.addr %s285, 4
        %s287 = scalar_lea.vmem %s2, %s286
        %s288 = smul.u32 2, %s21
      $region36: #{transformer_forward.10} parent=27 // pred_fallthru
        _
      // Predicated region
      $region37: #{transformer_forward.10} parent=27 // pred_check
        %p289 = pneg %p131
      $region38: #{transformer_forward.10} parent=27 // pred_check_branch
        %291 = sbr.rel (%p289) target = $region40
      $region39: #{transformer_forward.10} parent=27 // pred_region
        %p292 = scmp.lt.s32.totalorder %s20, 1
        %s293 = scalar_select %p292, %s20, 1
        %p294 = scmp.lt.s32.totalorder %s22, 0
        %s295 = scalar_select %p294, %s22, 0
        %s296 = smul.addr %s293, 4
        %s297 = sadd.s32 %s295, %s296
        %s298 = smul.addr %s297, 4
        %s299 = scalar_lea.vmem %s3, %s298
      $region40: #{transformer_forward.10} parent=27 // pred_fallthru
        _
      // Predicated region
      $region41: #{transformer_forward.10} parent=27 // pred_check
        %p300 = pneg %p159
      $region42: #{transformer_forward.10} parent=27 // pred_check_branch
        %302 = sbr.rel (%p300) target = $region44
      $region43: #{transformer_forward.10} parent=27 // pred_region
        %s303 = smul.u32 2, %s22
        %p304 = scmp.lt.s32.totalorder %s20, 1
        %s305 = scalar_select %p304, %s20, 1
        %p306 = scmp.lt.s32.totalorder %s303, 1
        %s307 = scalar_select %p306, %s303, 1
        %s308 = smul.addr %s305, 8
        %s309 = sadd.s32 %s307, %s308
        %s310 = smul.addr %s309, 4
        %s311 = scalar_lea.vmem %s4, %s310
        %s312 = smul.u32 2, %s22
      $region44: #{transformer_forward.10} parent=27 // pred_fallthru
        _
    $region28: #{transformer_forward.10} parent=5 // pred_fallthru
      _
    %p313 = scmp.le.s32.totalorder 1, %s13
    %p314 = scmp.lt.s32.totalorder %s13, 3
    %p315 = pnand %p313, %p314
    %p316 = pneg %p315
    // Predicated region
    $region45: #{transformer_forward.10} parent=5 // pred_check
      _
    $region46: #{transformer_forward.10} parent=5 // pred_check_branch
      %318 = sbr.rel (%p315) target = $region48
    $region47: #{transformer_forward.10} parent=5 // pred_region
      %s319 = ssub.s32 %s13, 1
      %s320 = smul.u32 2, %s24
      %p321 = scmp.lt.s32.totalorder %s23, 1
      %s322 = scalar_select %p321, %s23, 1
      %p323 = scmp.lt.s32.totalorder %s320, 1
      %s324 = scalar_select %p323, %s320, 1
      %s325 = smul.addr %s322, 2
      %s326 = sadd.s32 %s324, %s325
      %s327 = smul.addr %s326, 8
      %s328 = scalar_lea.vmem %s0, %s327
      %p329 = pneg %p60
      %p330 = pneg %p57
      %p331 = pneg %p81
      %p332 = pneg %p78
      %s333 = smul.u32 2, %s24
      %p334 = scmp.lt.s32.totalorder %s23, 1
      %s335 = scalar_select %p334, %s23, 1
      %p336 = scmp.lt.s32.totalorder %s333, 1
      %s337 = scalar_select %p336, %s333, 1
      %s338 = smul.addr %s335, 8
      %s339 = sadd.s32 %s337, %s338
      %s340 = smul.addr %s339, 4
      %s341 = scalar_lea.vmem %s2, %s340
      %p342 = pneg %p109
      %p343 = pneg %p106
      %p344 = scmp.lt.s32.totalorder %s23, 1
      %s345 = scalar_select %p344, %s23, 1
      %p346 = scmp.lt.s32.totalorder %s25, 0
      %s347 = scalar_select %p346, %s25, 0
      %s348 = smul.addr %s345, 4
      %s349 = sadd.s32 %s347, %s348
      %s350 = smul.addr %s349, 4
      %s351 = scalar_lea.vmem %s3, %s350
      %p352 = pneg %p137
      %p353 = pneg %p134
      %s354 = smul.u32 2, %s25
      %p355 = scmp.lt.s32.totalorder %s23, 1
      %s356 = scalar_select %p355, %s23, 1
      %p357 = scmp.lt.s32.totalorder %s354, 1
      %s358 = scalar_select %p357, %s354, 1
      %s359 = smul.addr %s356, 8
      %s360 = sadd.s32 %s358, %s359
      %s361 = smul.addr %s360, 4
      %s362 = scalar_lea.vmem %s4, %s361
      %p363 = pneg %p165
      %p364 = pneg %p162
      %p365 = pneg %p186
      %p366 = pneg %p183
      %p367 = pneg %p207
      %p368 = pneg %p204
      %p369 = pneg %p235
      %p370 = pneg %p232
      %s371 = smul.u32 2, %s24
      %p372 = scmp.lt.s32.totalorder %s23, 1
      %s373 = scalar_select %p372, %s23, 1
      %p374 = scmp.lt.s32.totalorder %s371, 1
      %s375 = scalar_select %p374, %s371, 1
      %s376 = smul.addr %s373, 2
      %s377 = sadd.s32 %s375, %s376
      %s378 = smul.addr %s377, 8
      %s379 = scalar_lea.vmem %s7, %s378
      %s380 = smul.u32 2, %s24
      %p381 = scmp.lt.s32.totalorder %s23, 1
      %s382 = scalar_select %p381, %s23, 1
      %p383 = scmp.lt.s32.totalorder %s380, 1
      %s384 = scalar_select %p383, %s380, 1
      %s385 = smul.addr %s382, 2
      %s386 = sadd.s32 %s384, %s385
      %s387 = smul.addr %s386, 8
      %s388 = scalar_lea.vmem %s0, %s387
      %s389 = smul.u32 2, %s24
      %s390 = smul.u32 2, %s24
      %p391 = scmp.lt.s32.totalorder %s23, 1
      %s392 = scalar_select %p391, %s23, 1
      %p393 = scmp.lt.s32.totalorder %s390, 1
      %s394 = scalar_select %p393, %s390, 1
      %s395 = smul.addr %s392, 8
      %s396 = sadd.s32 %s394, %s395
      %s397 = smul.addr %s396, 4
      %s398 = scalar_lea.vmem %s2, %s397
      %s399 = smul.u32 2, %s24
      %p400 = scmp.lt.s32.totalorder %s23, 1
      %s401 = scalar_select %p400, %s23, 1
      %p402 = scmp.lt.s32.totalorder %s25, 0
      %s403 = scalar_select %p402, %s25, 0
      %s404 = smul.addr %s401, 4
      %s405 = sadd.s32 %s403, %s404
      %s406 = smul.addr %s405, 4
      %s407 = scalar_lea.vmem %s3, %s406
      %s408 = smul.u32 2, %s25
      %p409 = scmp.lt.s32.totalorder %s23, 1
      %s410 = scalar_select %p409, %s23, 1
      %p411 = scmp.lt.s32.totalorder %s408, 1
      %s412 = scalar_select %p411, %s408, 1
      %s413 = smul.addr %s410, 8
      %s414 = sadd.s32 %s412, %s413
      %s415 = smul.addr %s414, 4
      %s416 = scalar_lea.vmem %s4, %s415
      %s417 = smul.u32 2, %s25
      %s418 = smul.u32 2, %s24
      %p419 = scmp.lt.s32.totalorder %s23, 1
      %s420 = scalar_select %p419, %s23, 1
      %p421 = scmp.lt.s32.totalorder %s418, 1
      %s422 = scalar_select %p421, %s418, 1
      %s423 = smul.addr %s420, 2
      %s424 = sadd.s32 %s422, %s423
      %s425 = smul.addr %s424, 8
      %s426 = scalar_lea.vmem %s7, %s425
      %s427 = smul.u32 2, %s24
      %p429 = scmp.eq.s32.totalorder %s25, 0
      // Predicated region
      $region49: #{transformer_forward.10} parent=47 // pred_check
        %p430 = pneg %p429
      $region50: #{transformer_forward.10} parent=47 // pred_check_branch
        %432 = sbr.rel (%p430) target = $region52
      $region51: #{transformer_forward.10} parent=47 // pred_region
        %vm433 = vcmask 7168
        %434 = vst.msk [vmem:[#allocation2] sm:$0xff] %vm433, -inf
        %435 = vst.msk [vmem:[#allocation2 + $0x8] sm:$0xff] %vm433, -inf
        %436 = vst.msk [vmem:[#allocation2 + $0x10] sm:$0xff] %vm433, -inf
        %437 = vst.msk [vmem:[#allocation2 + $0x18] sm:$0xff] %vm433, -inf
        %438 = vst.msk [vmem:[#allocation2 + $0x20] sm:$0xff] %vm433, -inf
        %439 = vst.msk [vmem:[#allocation2 + $0x28] sm:$0xff] %vm433, -inf
        %440 = vst.msk [vmem:[#allocation2 + $0x30] sm:$0xff] %vm433, -inf
        %441 = vst.msk [vmem:[#allocation2 + $0x38] sm:$0xff] %vm433, -inf
        %442 = vst.msk [vmem:[#allocation3] sm:$0xff] %vm433, 0.0
        %443 = vst.msk [vmem:[#allocation3 + $0x8] sm:$0xff] %vm433, 0.0
        %444 = vst.msk [vmem:[#allocation3 + $0x10] sm:$0xff] %vm433, 0.0
        %445 = vst.msk [vmem:[#allocation3 + $0x18] sm:$0xff] %vm433, 0.0
        %446 = vst.msk [vmem:[#allocation3 + $0x20] sm:$0xff] %vm433, 0.0
        %447 = vst.msk [vmem:[#allocation3 + $0x28] sm:$0xff] %vm433, 0.0
        %448 = vst.msk [vmem:[#allocation3 + $0x30] sm:$0xff] %vm433, 0.0
        %449 = vst.msk [vmem:[#allocation3 + $0x38] sm:$0xff] %vm433, 0.0
        %vm450 = vcmask 64512
        %451 = vst.msk [vmem:[#allocation4] sm:$0xff] %vm450, 0.0
        %452 = vst.msk [vmem:[#allocation4 + $0x8] sm:$0xff] %vm450, 0.0
        %453 = vst.msk [vmem:[#allocation4 + $0x10] sm:$0xff] %vm450, 0.0
        %454 = vst.msk [vmem:[#allocation4 + $0x18] sm:$0xff] %vm450, 0.0
        %455 = vst.msk [vmem:[#allocation4 + $0x20] sm:$0xff] %vm450, 0.0
        %456 = vst.msk [vmem:[#allocation4 + $0x28] sm:$0xff] %vm450, 0.0
        %457 = vst.msk [vmem:[#allocation4 + $0x30] sm:$0xff] %vm450, 0.0
        %458 = vst.msk [vmem:[#allocation4 + $0x38] sm:$0xff] %vm450, 0.0
      $region52: #{transformer_forward.10} parent=47 // pred_fallthru
        _
      %v459 = vld [vmem:[%s398] sm:$0xf]
      %v460 = vld [vmem:[%s398 + $0x4] sm:$0xf]
      %v461 = vld [vmem:[%s398 + $0x8] sm:$0xf]
      %v462 = vld [vmem:[%s398 + $0xc] sm:$0xf]
      %v463 = vld [vmem:[%s398 + $0x10] sm:$0xf]
      %v464 = vld [vmem:[%s398 + $0x14] sm:$0xf]
      %v465 = vld [vmem:[%s398 + $0x18] sm:$0xf]
      %v466 = vld [vmem:[%s398 + $0x1c] sm:$0xf]
      %v467 = vld [vmem:[%s407] sm:$0xf]
      %v468 = vld [vmem:[%s407 + $0x4] sm:$0xf]
      %v469 = vld [vmem:[%s407 + $0x8] sm:$0xf]
      %v470 = vld [vmem:[%s407 + $0xc] sm:$0xf]
      %v471 = vld [vmem:[%s416] sm:$0xf]
      %v472 = vld [vmem:[%s416 + $0x4] sm:$0xf]
      %v473 = vld [vmem:[%s416 + $0x8] sm:$0xf]
      %v474 = vld [vmem:[%s416 + $0xc] sm:$0xf]
      %v475 = vld [vmem:[%s416 + $0x10] sm:$0xf]
      %v476 = vld [vmem:[%s416 + $0x14] sm:$0xf]
      %v477 = vld [vmem:[%s416 + $0x18] sm:$0xf]
      %v478 = vld [vmem:[%s416 + $0x1c] sm:$0xf]
      %v481 = vunpack.c.l.b16 %v459
      %v482 = vunpack.c.l.b16 %v460
      %v483 = vpack.c.b16 %v482, %v481
      %vm484 = vcmask 64512
      %v486 = vsel %vm484, %v483, 0
      %vm488 = vcmask 1043456
      %v490 = vsel %vm488, %v467, 0
      %492 = vmatprep.subr.bf16.mxu0 0
      %493 = vmatpush1.bf16.msra.mxu0 %v490
      %494 = vmatprep.subr.bf16.mxu0 0
      %495 = vmatpush1.bf16.msra.mxu0 0
      %496 = vmatprep.subr.bf16.mxu0 0
      %497 = vmatpush1.bf16.msra.mxu0 0
      %498 = vmatprep.subr.bf16.mxu0 0
      %499 = vmatpush1.bf16.msra.mxu0 0
      %500 = vmatprep.subr.bf16.mxu0 0
      %501 = vmatpush1.bf16.msra.mxu0 0
      %502 = vmatprep.subr.bf16.mxu0 0
      %503 = vmatpush1.bf16.msra.mxu0 0
      %504 = vmatprep.subr.bf16.mxu0 0
      %505 = vmatpush1.bf16.msra.mxu0 0
      %506 = vmatprep.subr.bf16.mxu0 0
      %507 = vmatpush1.bf16.msra.mxu0 0
      %508 = vmatprep.subr.bf16.mxu0 0
      %509 = vmatpush1.bf16.msra.mxu0 0
      %510 = vmatprep.subr.bf16.mxu0 0
      %511 = vmatpush1.bf16.msra.mxu0 0
      %512 = vmatprep.subr.bf16.mxu0 0
      %513 = vmatpush1.bf16.msra.mxu0 0
      %514 = vmatprep.subr.bf16.mxu0 0
      %515 = vmatpush1.bf16.msra.mxu0 0
      %516 = vmatprep.subr.bf16.mxu0 0
      %517 = vmatpush1.bf16.msra.mxu0 0
      %518 = vmatprep.subr.bf16.mxu0 0
      %519 = vmatpush1.bf16.msra.mxu0 0
      %520 = vmatprep.subr.bf16.mxu0 0
      %521 = vmatpush1.bf16.msra.mxu0 0
      %522 = vmatprep.subr.bf16.mxu0 0
      %523 = vmatpush1.bf16.msra.mxu0 0
      %524 = vmatprep.mubr.bf16.mxu0 0
      %525 = vmatmul.mubr.bf16.gmra.mrb[0].mxu0 %v486
      %v526 = vpop.f32.mrb[0].mxu0
      %v527 = vadd.f32 0.0, %v526
      %v528 = vpop.f32.mrb[0].mxu0
      %v529 = vpop.f32.mrb[0].mxu0
      %v530 = vadd.f32 0.0, %v529
      %v531 = vpop.f32.mrb[0].mxu0
      %532 = vdwg.mxu0
      %v535 = vunpack.c.l.b16 %v461
      %v536 = vunpack.c.l.b16 %v462
      %v537 = vpack.c.b16 %v536, %v535
      %v539 = vsel %vm484, %v537, 0
      %v542 = vsel %vm488, %v468, 0
      %544 = vmatprep.subr.bf16.mxu0 0
      %545 = vmatpush1.bf16.msra.mxu0 %v542
      %546 = vmatprep.subr.bf16.mxu0 0
      %547 = vmatpush1.bf16.msra.mxu0 0
      %548 = vmatprep.subr.bf16.mxu0 0
      %549 = vmatpush1.bf16.msra.mxu0 0
      %550 = vmatprep.subr.bf16.mxu0 0
      %551 = vmatpush1.bf16.msra.mxu0 0
      %552 = vmatprep.subr.bf16.mxu0 0
      %553 = vmatpush1.bf16.msra.mxu0 0
      %554 = vmatprep.subr.bf16.mxu0 0
      %555 = vmatpush1.bf16.msra.mxu0 0
      %556 = vmatprep.subr.bf16.mxu0 0
      %557 = vmatpush1.bf16.msra.mxu0 0
      %558 = vmatprep.subr.bf16.mxu0 0
      %559 = vmatpush1.bf16.msra.mxu0 0
      %560 = vmatprep.subr.bf16.mxu0 0
      %561 = vmatpush1.bf16.msra.mxu0 0
      %562 = vmatprep.subr.bf16.mxu0 0
      %563 = vmatpush1.bf16.msra.mxu0 0
      %564 = vmatprep.subr.bf16.mxu0 0
      %565 = vmatpush1.bf16.msra.mxu0 0
      %566 = vmatprep.subr.bf16.mxu0 0
      %567 = vmatpush1.bf16.msra.mxu0 0
      %568 = vmatprep.subr.bf16.mxu0 0
      %569 = vmatpush1.bf16.msra.mxu0 0
      %570 = vmatprep.subr.bf16.mxu0 0
      %571 = vmatpush1.bf16.msra.mxu0 0
      %572 = vmatprep.subr.bf16.mxu0 0
      %573 = vmatpush1.bf16.msra.mxu0 0
      %574 = vmatprep.subr.bf16.mxu0 0
      %575 = vmatpush1.bf16.msra.mxu0 0
      %576 = vmatprep.mubr.bf16.mxu0 0
      %577 = vmatmul.mubr.bf16.gmra.mrb[0].mxu0 %v539
      %v578 = vpop.f32.mrb[0].mxu0
      %v579 = vadd.f32 0.0, %v578
      %v580 = vpop.f32.mrb[0].mxu0
      %v581 = vpop.f32.mrb[0].mxu0
      %v582 = vadd.f32 0.0, %v581
      %v583 = vpop.f32.mrb[0].mxu0
      %584 = vdwg.mxu0
      %v587 = vunpack.c.l.b16 %v463
      %v588 = vunpack.c.l.b16 %v464
      %v589 = vpack.c.b16 %v588, %v587
      %v591 = vsel %vm484, %v589, 0
      %v594 = vsel %vm488, %v469, 0
      %596 = vmatprep.subr.bf16.mxu0 0
      %597 = vmatpush1.bf16.msra.mxu0 %v594
      %598 = vmatprep.subr.bf16.mxu0 0
      %599 = vmatpush1.bf16.msra.mxu0 0
      %600 = vmatprep.subr.bf16.mxu0 0
      %601 = vmatpush1.bf16.msra.mxu0 0
      %602 = vmatprep.subr.bf16.mxu0 0
      %603 = vmatpush1.bf16.msra.mxu0 0
      %604 = vmatprep.subr.bf16.mxu0 0
      %605 = vmatpush1.bf16.msra.mxu0 0
      %606 = vmatprep.subr.bf16.mxu0 0
      %607 = vmatpush1.bf16.msra.mxu0 0
      %608 = vmatprep.subr.bf16.mxu0 0
      %609 = vmatpush1.bf16.msra.mxu0 0
      %610 = vmatprep.subr.bf16.mxu0 0
      %611 = vmatpush1.bf16.msra.mxu0 0
      %612 = vmatprep.subr.bf16.mxu0 0
      %613 = vmatpush1.bf16.msra.mxu0 0
      %614 = vmatprep.subr.bf16.mxu0 0
      %615 = vmatpush1.bf16.msra.mxu0 0
      %616 = vmatprep.subr.bf16.mxu0 0
      %617 = vmatpush1.bf16.msra.mxu0 0
      %618 = vmatprep.subr.bf16.mxu0 0
      %619 = vmatpush1.bf16.msra.mxu0 0
      %620 = vmatprep.subr.bf16.mxu0 0
      %621 = vmatpush1.bf16.msra.mxu0 0
      %622 = vmatprep.subr.bf16.mxu0 0
      %623 = vmatpush1.bf16.msra.mxu0 0
      %624 = vmatprep.subr.bf16.mxu0 0
      %625 = vmatpush1.bf16.msra.mxu0 0
      %626 = vmatprep.subr.bf16.mxu0 0
      %627 = vmatpush1.bf16.msra.mxu0 0
      %628 = vmatprep.mubr.bf16.mxu0 0
      %629 = vmatmul.mubr.bf16.gmra.mrb[0].mxu0 %v591
      %v630 = vpop.f32.mrb[0].mxu0
      %v631 = vadd.f32 0.0, %v630
      %v632 = vpop.f32.mrb[0].mxu0
      %v633 = vpop.f32.mrb[0].mxu0
      %v634 = vadd.f32 0.0, %v633
      %v635 = vpop.f32.mrb[0].mxu0
      %636 = vdwg.mxu0
      %v639 = vunpack.c.l.b16 %v465
      %v640 = vunpack.c.l.b16 %v466
      %v641 = vpack.c.b16 %v640, %v639
      %v643 = vsel %vm484, %v641, 0
      %v646 = vsel %vm488, %v470, 0
      %648 = vmatprep.subr.bf16.mxu0 0
      %649 = vmatpush1.bf16.msra.mxu0 %v646
      %650 = vmatprep.subr.bf16.mxu0 0
      %651 = vmatpush1.bf16.msra.mxu0 0
      %652 = vmatprep.subr.bf16.mxu0 0
      %653 = vmatpush1.bf16.msra.mxu0 0
      %654 = vmatprep.subr.bf16.mxu0 0
      %655 = vmatpush1.bf16.msra.mxu0 0
      %656 = vmatprep.subr.bf16.mxu0 0
      %657 = vmatpush1.bf16.msra.mxu0 0
      %658 = vmatprep.subr.bf16.mxu0 0
      %659 = vmatpush1.bf16.msra.mxu0 0
      %660 = vmatprep.subr.bf16.mxu0 0
      %661 = vmatpush1.bf16.msra.mxu0 0
      %662 = vmatprep.subr.bf16.mxu0 0
      %663 = vmatpush1.bf16.msra.mxu0 0
      %664 = vmatprep.subr.bf16.mxu0 0
      %665 = vmatpush1.bf16.msra.mxu0 0
      %666 = vmatprep.subr.bf16.mxu0 0
      %667 = vmatpush1.bf16.msra.mxu0 0
      %668 = vmatprep.subr.bf16.mxu0 0
      %669 = vmatpush1.bf16.msra.mxu0 0
      %670 = vmatprep.subr.bf16.mxu0 0
      %671 = vmatpush1.bf16.msra.mxu0 0
      %672 = vmatprep.subr.bf16.mxu0 0
      %673 = vmatpush1.bf16.msra.mxu0 0
      %674 = vmatprep.subr.bf16.mxu0 0
      %675 = vmatpush1.bf16.msra.mxu0 0
      %676 = vmatprep.subr.bf16.mxu0 0
      %677 = vmatpush1.bf16.msra.mxu0 0
      %678 = vmatprep.subr.bf16.mxu0 0
      %679 = vmatpush1.bf16.msra.mxu0 0
      %680 = vmatprep.mubr.bf16.mxu0 0
      %681 = vmatmul.mubr.bf16.gmra.mrb[0].mxu0 %v643
      %v682 = vpop.f32.mrb[0].mxu0
      %v683 = vadd.f32 0.0, %v682
      %v684 = vpop.f32.mrb[0].mxu0
      %v685 = vpop.f32.mrb[0].mxu0
      %v686 = vadd.f32 0.0, %v685
      %v687 = vpop.f32.mrb[0].mxu0
      %688 = vdwg.mxu0
      %s689 = smul.u32 %s25, 16
      %v690 = vlaneseq
      %v691 = vand.u32 %v690, 127
      %v692 = vstv %s689
      %v693 = vadd.s32 %v692, %v691
      %vm694 = vcmp.lt.s32.totalorder %v693, 12
      %v695 = vsel %vm694, %v527, -1e+30
      %v696 = vsel %vm694, %v530, -1e+30
      %v697 = vsel %vm694, %v579, -1e+30
      %v698 = vsel %vm694, %v582, -1e+30
      %v699 = vsel %vm694, %v631, -1e+30
      %v700 = vsel %vm694, %v634, -1e+30
      %v701 = vsel %vm694, %v683, -1e+30
      %v702 = vsel %vm694, %v686, -1e+30
      %v703 = vld [vmem:[#allocation2] sm:$0xff]
      %v704 = vld [vmem:[#allocation2 + $0x8] sm:$0xff]
      %v705 = vld [vmem:[#allocation2 + $0x10] sm:$0xff]
      %v706 = vld [vmem:[#allocation2 + $0x18] sm:$0xff]
      %v707 = vld [vmem:[#allocation2 + $0x20] sm:$0xff]
      %v708 = vld [vmem:[#allocation2 + $0x28] sm:$0xff]
      %v709 = vld [vmem:[#allocation2 + $0x30] sm:$0xff]
      %v710 = vld [vmem:[#allocation2 + $0x38] sm:$0xff]
      %vm711 = vcmask 130048
      %v712 = vsel %vm711, %v695, -inf
      %713 = vmax.xlane.f32.xlu0 %v712
      %v714 = vpop.xlane.xlu0 %713
      %v715 = vsel %vm711, %v696, -inf
      %716 = vmax.xlane.f32.xlu0 %v715
      %v717 = vpop.xlane.xlu0 %716
      %v718 = vsel %vm711, %v697, -inf
      %719 = vmax.xlane.f32.xlu0 %v718
      %v720 = vpop.xlane.xlu0 %719
      %v721 = vsel %vm711, %v698, -inf
      %722 = vmax.xlane.f32.xlu0 %v721
      %v723 = vpop.xlane.xlu0 %722
      %v724 = vsel %vm711, %v699, -inf
      %725 = vmax.xlane.f32.xlu0 %v724
      %v726 = vpop.xlane.xlu0 %725
      %v727 = vsel %vm711, %v700, -inf
      %728 = vmax.xlane.f32.xlu0 %v727
      %v729 = vpop.xlane.xlu0 %728
      %v730 = vsel %vm711, %v701, -inf
      %731 = vmax.xlane.f32.xlu0 %v730
      %v732 = vpop.xlane.xlu0 %731
      %v733 = vsel %vm711, %v702, -inf
      %734 = vmax.xlane.f32.xlu0 %v733
      %v735 = vpop.xlane.xlu0 %734
      %v736 = vmax.f32 %v703, %v714
      %v737 = vmax.f32 %v704, %v717
      %v738 = vmax.f32 %v705, %v720
      %v739 = vmax.f32 %v706, %v723
      %v740 = vmax.f32 %v707, %v726
      %v741 = vmax.f32 %v708, %v729
      %v742 = vmax.f32 %v709, %v732
      %v743 = vmax.f32 %v710, %v735
      %v744 = vsub.f32 %v703, %v736
      %v745 = vsub.f32 %v704, %v737
      %v746 = vsub.f32 %v705, %v738
      %v747 = vsub.f32 %v706, %v739
      %v748 = vsub.f32 %v707, %v740
      %v749 = vsub.f32 %v708, %v741
      %v750 = vsub.f32 %v709, %v742
      %v751 = vsub.f32 %v710, %v743
      %v752 = vmul.f32 %v744, 1.442695
      %v753 = vpow.pop %v752
      %v754 = vmul.f32 %v745, 1.442695
      %v755 = vpow.pop %v754
      %v756 = vmul.f32 %v746, 1.442695
      %v757 = vpow.pop %v756
      %v758 = vmul.f32 %v747, 1.442695
      %v759 = vpow.pop %v758
      %v760 = vmul.f32 %v748, 1.442695
      %v761 = vpow.pop %v760
      %v762 = vmul.f32 %v749, 1.442695
      %v763 = vpow.pop %v762
      %v764 = vmul.f32 %v750, 1.442695
      %v765 = vpow.pop %v764
      %v766 = vmul.f32 %v751, 1.442695
      %v767 = vpow.pop %v766
      %769 = vset.pattern.permute.xlu0 0
      %770 = vperm.xlu0 %769, %v736
      %v771 = vpop.permute.xlu0 %770
      %774 = vset.pattern.permute.xlu0 0
      %775 = vperm.xlu0 %774, %v737
      %v776 = vpop.permute.xlu0 %775
      %779 = vset.pattern.permute.xlu0 0
      %780 = vperm.xlu0 %779, %v738
      %v781 = vpop.permute.xlu0 %780
      %784 = vset.pattern.permute.xlu0 0
      %785 = vperm.xlu0 %784, %v739
      %v786 = vpop.permute.xlu0 %785
      %789 = vset.pattern.permute.xlu0 0
      %790 = vperm.xlu0 %789, %v740
      %v791 = vpop.permute.xlu0 %790
      %794 = vset.pattern.permute.xlu0 0
      %795 = vperm.xlu0 %794, %v741
      %v796 = vpop.permute.xlu0 %795
      %799 = vset.pattern.permute.xlu0 0
      %800 = vperm.xlu0 %799, %v742
      %v801 = vpop.permute.xlu0 %800
      %804 = vset.pattern.permute.xlu0 0
      %805 = vperm.xlu0 %804, %v743
      %v806 = vpop.permute.xlu0 %805
      %v808 = vsub.f32 %v695, %v771
      %v809 = vsub.f32 %v696, %v776
      %v810 = vsub.f32 %v697, %v781
      %v811 = vsub.f32 %v698, %v786
      %v812 = vsub.f32 %v699, %v791
      %v813 = vsub.f32 %v700, %v796
      %v814 = vsub.f32 %v701, %v801
      %v815 = vsub.f32 %v702, %v806
      %v816 = vmul.f32 %v808, 1.442695
      %v817 = vpow.pop %v816
      %v818 = vmul.f32 %v809, 1.442695
      %v819 = vpow.pop %v818
      %v820 = vmul.f32 %v810, 1.442695
      %v821 = vpow.pop %v820
      %v822 = vmul.f32 %v811, 1.442695
      %v823 = vpow.pop %v822
      %v824 = vmul.f32 %v812, 1.442695
      %v825 = vpow.pop %v824
      %v826 = vmul.f32 %v813, 1.442695
      %v827 = vpow.pop %v826
      %v828 = vmul.f32 %v814, 1.442695
      %v829 = vpow.pop %v828
      %v830 = vmul.f32 %v815, 1.442695
      %v831 = vpow.pop %v830
      %v832 = vld [vmem:[#allocation3] sm:$0xff]
      %v833 = vld [vmem:[#allocation3 + $0x8] sm:$0xff]
      %v834 = vld [vmem:[#allocation3 + $0x10] sm:$0xff]
      %v835 = vld [vmem:[#allocation3 + $0x18] sm:$0xff]
      %v836 = vld [vmem:[#allocation3 + $0x20] sm:$0xff]
      %v837 = vld [vmem:[#allocation3 + $0x28] sm:$0xff]
      %v838 = vld [vmem:[#allocation3 + $0x30] sm:$0xff]
      %v839 = vld [vmem:[#allocation3 + $0x38] sm:$0xff]
      %v840 = vmul.f32 %v753, %v832
      %v841 = vmul.f32 %v755, %v833
      %v842 = vmul.f32 %v757, %v834
      %v843 = vmul.f32 %v759, %v835
      %v844 = vmul.f32 %v761, %v836
      %v845 = vmul.f32 %v763, %v837
      %v846 = vmul.f32 %v765, %v838
      %v847 = vmul.f32 %v767, %v839
      %v848 = vsel %vm711, %v817, 0.0
      %849 = vadd.xlane.f32.xlu0 %v848
      %v850 = vpop.xlane.xlu0 %849
      %v851 = vsel %vm711, %v819, 0.0
      %852 = vadd.xlane.f32.xlu0 %v851
      %v853 = vpop.xlane.xlu0 %852
      %v854 = vsel %vm711, %v821, 0.0
      %855 = vadd.xlane.f32.xlu0 %v854
      %v856 = vpop.xlane.xlu0 %855
      %v857 = vsel %vm711, %v823, 0.0
      %858 = vadd.xlane.f32.xlu0 %v857
      %v859 = vpop.xlane.xlu0 %858
      %v860 = vsel %vm711, %v825, 0.0
      %861 = vadd.xlane.f32.xlu0 %v860
      %v862 = vpop.xlane.xlu0 %861
      %v863 = vsel %vm711, %v827, 0.0
      %864 = vadd.xlane.f32.xlu0 %v863
      %v865 = vpop.xlane.xlu0 %864
      %v866 = vsel %vm711, %v829, 0.0
      %867 = vadd.xlane.f32.xlu0 %v866
      %v868 = vpop.xlane.xlu0 %867
      %v869 = vsel %vm711, %v831, 0.0
      %870 = vadd.xlane.f32.xlu0 %v869
      %v871 = vpop.xlane.xlu0 %870
      %v872 = vadd.f32 %v840, %v850
      %v873 = vadd.f32 %v841, %v853
      %v874 = vadd.f32 %v842, %v856
      %v875 = vadd.f32 %v843, %v859
      %v876 = vadd.f32 %v844, %v862
      %v877 = vadd.f32 %v845, %v865
      %v878 = vadd.f32 %v846, %v868
      %v879 = vadd.f32 %v847, %v871
      %vm880 = vcmask 7168
      %881 = vst.msk [vmem:[#allocation3] sm:$0xff] %vm880, %v872
      %882 = vst.msk [vmem:[#allocation3 + $0x8] sm:$0xff] %vm880, %v873
      %883 = vst.msk [vmem:[#allocation3 + $0x10] sm:$0xff] %vm880, %v874
      %884 = vst.msk [vmem:[#allocation3 + $0x18] sm:$0xff] %vm880, %v875
      %885 = vst.msk [vmem:[#allocation3 + $0x20] sm:$0xff] %vm880, %v876
      %886 = vst.msk [vmem:[#allocation3 + $0x28] sm:$0xff] %vm880, %v877
      %887 = vst.msk [vmem:[#allocation3 + $0x30] sm:$0xff] %vm880, %v878
      %888 = vst.msk [vmem:[#allocation3 + $0x38] sm:$0xff] %vm880, %v879
      %v889 = vld [vmem:[#allocation4] sm:$0xff]
      %v890 = vld [vmem:[#allocation4 + $0x8] sm:$0xff]
      %v891 = vld [vmem:[#allocation4 + $0x10] sm:$0xff]
      %v892 = vld [vmem:[#allocation4 + $0x18] sm:$0xff]
      %v893 = vld [vmem:[#allocation4 + $0x20] sm:$0xff]
      %v894 = vld [vmem:[#allocation4 + $0x28] sm:$0xff]
      %v895 = vld [vmem:[#allocation4 + $0x30] sm:$0xff]
      %v896 = vld [vmem:[#allocation4 + $0x38] sm:$0xff]
      %898 = vset.pattern.permute.xlu0 0
      %899 = vperm.xlu0 %898, %v753
      %v900 = vpop.permute.xlu0 %899
      %903 = vset.pattern.permute.xlu0 0
      %904 = vperm.xlu0 %903, %v755
      %v905 = vpop.permute.xlu0 %904
      %908 = vset.pattern.permute.xlu0 0
      %909 = vperm.xlu0 %908, %v757
      %v910 = vpop.permute.xlu0 %909
      %913 = vset.pattern.permute.xlu0 0
      %914 = vperm.xlu0 %913, %v759
      %v915 = vpop.permute.xlu0 %914
      %918 = vset.pattern.permute.xlu0 0
      %919 = vperm.xlu0 %918, %v761
      %v920 = vpop.permute.xlu0 %919
      %923 = vset.pattern.permute.xlu0 0
      %924 = vperm.xlu0 %923, %v763
      %v925 = vpop.permute.xlu0 %924
      %928 = vset.pattern.permute.xlu0 0
      %929 = vperm.xlu0 %928, %v765
      %v930 = vpop.permute.xlu0 %929
      %933 = vset.pattern.permute.xlu0 0
      %934 = vperm.xlu0 %933, %v767
      %v935 = vpop.permute.xlu0 %934
      %v937 = vmul.f32 %v900, %v889
      %v938 = vmul.f32 %v905, %v890
      %v939 = vmul.f32 %v910, %v891
      %v940 = vmul.f32 %v915, %v892
      %v941 = vmul.f32 %v920, %v893
      %v942 = vmul.f32 %v925, %v894
      %v943 = vmul.f32 %v930, %v895
      %v944 = vmul.f32 %v935, %v896
      %v945 = vpack.c.bf16 %v819, %v817
      %v946 = vpack.c.bf16 %v823, %v821
      %v947 = vpack.c.bf16 %v827, %v825
      %v948 = vpack.c.bf16 %v831, %v829
      %v951 = vunpack.c.l.b16 %v471
      %v952 = vunpack.c.l.b16 %v472
      %v953 = vpack.c.b16 %v952, %v951
      %v956 = vsel %vm711, %v945, 0
      %958 = vmatprep.subr.bf16.mxu0 0
      %959 = vmatpush1.bf16.msra.mxu0 %v953
      %960 = vmatprep.subr.bf16.mxu0 0
      %961 = vmatpush1.bf16.msra.mxu0 0
      %962 = vmatprep.subr.bf16.mxu0 0
      %963 = vmatpush1.bf16.msra.mxu0 0
      %964 = vmatprep.subr.bf16.mxu0 0
      %965 = vmatpush1.bf16.msra.mxu0 0
      %966 = vmatprep.subr.bf16.mxu0 0
      %967 = vmatpush1.bf16.msra.mxu0 0
      %968 = vmatprep.subr.bf16.mxu0 0
      %969 = vmatpush1.bf16.msra.mxu0 0
      %970 = vmatprep.subr.bf16.mxu0 0
      %971 = vmatpush1.bf16.msra.mxu0 0
      %972 = vmatprep.subr.bf16.mxu0 0
      %973 = vmatpush1.bf16.msra.mxu0 0
      %974 = vmatprep.subr.bf16.mxu0 0
      %975 = vmatpush1.bf16.msra.mxu0 0
      %976 = vmatprep.subr.bf16.mxu0 0
      %977 = vmatpush1.bf16.msra.mxu0 0
      %978 = vmatprep.subr.bf16.mxu0 0
      %979 = vmatpush1.bf16.msra.mxu0 0
      %980 = vmatprep.subr.bf16.mxu0 0
      %981 = vmatpush1.bf16.msra.mxu0 0
      %982 = vmatprep.subr.bf16.mxu0 0
      %983 = vmatpush1.bf16.msra.mxu0 0
      %984 = vmatprep.subr.bf16.mxu0 0
      %985 = vmatpush1.bf16.msra.mxu0 0
      %986 = vmatprep.subr.bf16.mxu0 0
      %987 = vmatpush1.bf16.msra.mxu0 0
      %988 = vmatprep.subr.bf16.mxu0 0
      %989 = vmatpush1.bf16.msra.mxu0 0
      %990 = vmatprep.mubr.bf16.mxu0 0
      %991 = vmatmul.mubr.bf16.gmra.mrb[0].mxu0 %v956
      %v992 = vpop.f32.mrb[0].mxu0
      %v993 = vadd.f32 0.0, %v992
      %v994 = vpop.f32.mrb[0].mxu0
      %v995 = vpop.f32.mrb[0].mxu0
      %v996 = vadd.f32 0.0, %v995
      %v997 = vpop.f32.mrb[0].mxu0
      %998 = vdwg.mxu0
      %v1001 = vunpack.c.l.b16 %v473
      %v1002 = vunpack.c.l.b16 %v474
      %v1003 = vpack.c.b16 %v1002, %v1001
      %v1006 = vsel %vm711, %v946, 0
      %1008 = vmatprep.subr.bf16.mxu0 0
      %1009 = vmatpush1.bf16.msra.mxu0 %v1003
      %1010 = vmatprep.subr.bf16.mxu0 0
      %1011 = vmatpush1.bf16.msra.mxu0 0
      %1012 = vmatprep.subr.bf16.mxu0 0
      %1013 = vmatpush1.bf16.msra.mxu0 0
      %1014 = vmatprep.subr.bf16.mxu0 0
      %1015 = vmatpush1.bf16.msra.mxu0 0
      %1016 = vmatprep.subr.bf16.mxu0 0
      %1017 = vmatpush1.bf16.msra.mxu0 0
      %1018 = vmatprep.subr.bf16.mxu0 0
      %1019 = vmatpush1.bf16.msra.mxu0 0
      %1020 = vmatprep.subr.bf16.mxu0 0
      %1021 = vmatpush1.bf16.msra.mxu0 0
      %1022 = vmatprep.subr.bf16.mxu0 0
      %1023 = vmatpush1.bf16.msra.mxu0 0
      %1024 = vmatprep.subr.bf16.mxu0 0
      %1025 = vmatpush1.bf16.msra.mxu0 0
      %1026 = vmatprep.subr.bf16.mxu0 0
      %1027 = vmatpush1.bf16.msra.mxu0 0
      %1028 = vmatprep.subr.bf16.mxu0 0
      %1029 = vmatpush1.bf16.msra.mxu0 0
      %1030 = vmatprep.subr.bf16.mxu0 0
      %1031 = vmatpush1.bf16.msra.mxu0 0
      %1032 = vmatprep.subr.bf16.mxu0 0
      %1033 = vmatpush1.bf16.msra.mxu0 0
      %1034 = vmatprep.subr.bf16.mxu0 0
      %1035 = vmatpush1.bf16.msra.mxu0 0
      %1036 = vmatprep.subr.bf16.mxu0 0
      %1037 = vmatpush1.bf16.msra.mxu0 0
      %1038 = vmatprep.subr.bf16.mxu0 0
      %1039 = vmatpush1.bf16.msra.mxu0 0
      %1040 = vmatprep.mubr.bf16.mxu0 0
      %1041 = vmatmul.mubr.bf16.gmra.mrb[0].mxu0 %v1006
      %v1042 = vpop.f32.mrb[0].mxu0
      %v1043 = vadd.f32 0.0, %v1042
      %v1044 = vpop.f32.mrb[0].mxu0
      %v1045 = vpop.f32.mrb[0].mxu0
      %v1046 = vadd.f32 0.0, %v1045
      %v1047 = vpop.f32.mrb[0].mxu0
      %1048 = vdwg.mxu0
      %v1051 = vunpack.c.l.b16 %v475
      %v1052 = vunpack.c.l.b16 %v476
      %v1053 = vpack.c.b16 %v1052, %v1051
      %v1056 = vsel %vm711, %v947, 0
      %1058 = vmatprep.subr.bf16.mxu0 0
      %1059 = vmatpush1.bf16.msra.mxu0 %v1053
      %1060 = vmatprep.subr.bf16.mxu0 0
      %1061 = vmatpush1.bf16.msra.mxu0 0
      %1062 = vmatprep.subr.bf16.mxu0 0
      %1063 = vmatpush1.bf16.msra.mxu0 0
      %1064 = vmatprep.subr.bf16.mxu0 0
      %1065 = vmatpush1.bf16.msra.mxu0 0
      %1066 = vmatprep.subr.bf16.mxu0 0
      %1067 = vmatpush1.bf16.msra.mxu0 0
      %1068 = vmatprep.subr.bf16.mxu0 0
      %1069 = vmatpush1.bf16.msra.mxu0 0
      %1070 = vmatprep.subr.bf16.mxu0 0
      %1071 = vmatpush1.bf16.msra.mxu0 0
      %1072 = vmatprep.subr.bf16.mxu0 0
      %1073 = vmatpush1.bf16.msra.mxu0 0
      %1074 = vmatprep.subr.bf16.mxu0 0
      %1075 = vmatpush1.bf16.msra.mxu0 0
      %1076 = vmatprep.subr.bf16.mxu0 0
      %1077 = vmatpush1.bf16.msra.mxu0 0
      %1078 = vmatprep.subr.bf16.mxu0 0
      %1079 = vmatpush1.bf16.msra.mxu0 0
      %1080 = vmatprep.subr.bf16.mxu0 0
      %1081 = vmatpush1.bf16.msra.mxu0 0
      %1082 = vmatprep.subr.bf16.mxu0 0
      %1083 = vmatpush1.bf16.msra.mxu0 0
      %1084 = vmatprep.subr.bf16.mxu0 0
      %1085 = vmatpush1.bf16.msra.mxu0 0
      %1086 = vmatprep.subr.bf16.mxu0 0
      %1087 = vmatpush1.bf16.msra.mxu0 0
      %1088 = vmatprep.subr.bf16.mxu0 0
      %1089 = vmatpush1.bf16.msra.mxu0 0
      %1090 = vmatprep.mubr.bf16.mxu0 0
      %1091 = vmatmul.mubr.bf16.gmra.mrb[0].mxu0 %v1056
      %v1092 = vpop.f32.mrb[0].mxu0
      %v1093 = vadd.f32 0.0, %v1092
      %v1094 = vpop.f32.mrb[0].mxu0
      %v1095 = vpop.f32.mrb[0].mxu0
      %v1096 = vadd.f32 0.0, %v1095
      %v1097 = vpop.f32.mrb[0].mxu0
      %1098 = vdwg.mxu0
      %v1101 = vunpack.c.l.b16 %v477
      %v1102 = vunpack.c.l.b16 %v478
      %v1103 = vpack.c.b16 %v1102, %v1101
      %v1106 = vsel %vm711, %v948, 0
      %1108 = vmatprep.subr.bf16.mxu0 0
      %1109 = vmatpush1.bf16.msra.mxu0 %v1103
      %1110 = vmatprep.subr.bf16.mxu0 0
      %1111 = vmatpush1.bf16.msra.mxu0 0
      %1112 = vmatprep.subr.bf16.mxu0 0
      %1113 = vmatpush1.bf16.msra.mxu0 0
      %1114 = vmatprep.subr.bf16.mxu0 0
      %1115 = vmatpush1.bf16.msra.mxu0 0
      %1116 = vmatprep.subr.bf16.mxu0 0
      %1117 = vmatpush1.bf16.msra.mxu0 0
      %1118 = vmatprep.subr.bf16.mxu0 0
      %1119 = vmatpush1.bf16.msra.mxu0 0
      %1120 = vmatprep.subr.bf16.mxu0 0
      %1121 = vmatpush1.bf16.msra.mxu0 0
      %1122 = vmatprep.subr.bf16.mxu0 0
      %1123 = vmatpush1.bf16.msra.mxu0 0
      %1124 = vmatprep.subr.bf16.mxu0 0
      %1125 = vmatpush1.bf16.msra.mxu0 0
      %1126 = vmatprep.subr.bf16.mxu0 0
      %1127 = vmatpush1.bf16.msra.mxu0 0
      %1128 = vmatprep.subr.bf16.mxu0 0
      %1129 = vmatpush1.bf16.msra.mxu0 0
      %1130 = vmatprep.subr.bf16.mxu0 0
      %1131 = vmatpush1.bf16.msra.mxu0 0
      %1132 = vmatprep.subr.bf16.mxu0 0
      %1133 = vmatpush1.bf16.msra.mxu0 0
      %1134 = vmatprep.subr.bf16.mxu0 0
      %1135 = vmatpush1.bf16.msra.mxu0 0
      %1136 = vmatprep.subr.bf16.mxu0 0
      %1137 = vmatpush1.bf16.msra.mxu0 0
      %1138 = vmatprep.subr.bf16.mxu0 0
      %1139 = vmatpush1.bf16.msra.mxu0 0
      %1140 = vmatprep.mubr.bf16.mxu0 0
      %1141 = vmatmul.mubr.bf16.gmra.mrb[0].mxu0 %v1106
      %v1142 = vpop.f32.mrb[0].mxu0
      %v1143 = vadd.f32 0.0, %v1142
      %v1144 = vpop.f32.mrb[0].mxu0
      %v1145 = vpop.f32.mrb[0].mxu0
      %v1146 = vadd.f32 0.0, %v1145
      %v1147 = vpop.f32.mrb[0].mxu0
      %1148 = vdwg.mxu0
      %v1149 = vadd.f32 %v937, %v993
      %v1150 = vadd.f32 %v938, %v996
      %v1151 = vadd.f32 %v939, %v1043
      %v1152 = vadd.f32 %v940, %v1046
      %v1153 = vadd.f32 %v941, %v1093
      %v1154 = vadd.f32 %v942, %v1096
      %v1155 = vadd.f32 %v943, %v1143
      %v1156 = vadd.f32 %v944, %v1146
      %1157 = vst.msk [vmem:[#allocation4] sm:$0xff] %vm484, %v1149
      %1158 = vst.msk [vmem:[#allocation4 + $0x8] sm:$0xff] %vm484, %v1150
      %1159 = vst.msk [vmem:[#allocation4 + $0x10] sm:$0xff] %vm484, %v1151
      %1160 = vst.msk [vmem:[#allocation4 + $0x18] sm:$0xff] %vm484, %v1152
      %1161 = vst.msk [vmem:[#allocation4 + $0x20] sm:$0xff] %vm484, %v1153
      %1162 = vst.msk [vmem:[#allocation4 + $0x28] sm:$0xff] %vm484, %v1154
      %1163 = vst.msk [vmem:[#allocation4 + $0x30] sm:$0xff] %vm484, %v1155
      %1164 = vst.msk [vmem:[#allocation4 + $0x38] sm:$0xff] %vm484, %v1156
      %1165 = vst.msk [vmem:[#allocation2] sm:$0xff] %vm880, %v736
      %1166 = vst.msk [vmem:[#allocation2 + $0x8] sm:$0xff] %vm880, %v737
      %1167 = vst.msk [vmem:[#allocation2 + $0x10] sm:$0xff] %vm880, %v738
      %1168 = vst.msk [vmem:[#allocation2 + $0x18] sm:$0xff] %vm880, %v739
      %1169 = vst.msk [vmem:[#allocation2 + $0x20] sm:$0xff] %vm880, %v740
      %1170 = vst.msk [vmem:[#allocation2 + $0x28] sm:$0xff] %vm880, %v741
      %1171 = vst.msk [vmem:[#allocation2 + $0x30] sm:$0xff] %vm880, %v742
      %1172 = vst.msk [vmem:[#allocation2 + $0x38] sm:$0xff] %vm880, %v743
      // Predicated region
      $region53: #{transformer_forward.10} parent=47 // pred_check
        %p1173 = pneg %p429
      $region54: #{transformer_forward.10} parent=47 // pred_check_branch
        %1175 = sbr.rel (%p1173) target = $region56
      $region55: #{transformer_forward.10} parent=47 // pred_region
        %v1176 = vld [vmem:[#allocation4] sm:$0xff]
        %v1177 = vld [vmem:[#allocation4 + $0x8] sm:$0xff]
        %v1178 = vld [vmem:[#allocation4 + $0x10] sm:$0xff]
        %v1179 = vld [vmem:[#allocation4 + $0x18] sm:$0xff]
        %v1180 = vld [vmem:[#allocation4 + $0x20] sm:$0xff]
        %v1181 = vld [vmem:[#allocation4 + $0x28] sm:$0xff]
        %v1182 = vld [vmem:[#allocation4 + $0x30] sm:$0xff]
        %v1183 = vld [vmem:[#allocation4 + $0x38] sm:$0xff]
        %v1184 = vld [vmem:[#allocation3] sm:$0xff]
        %v1185 = vld [vmem:[#allocation3 + $0x8] sm:$0xff]
        %v1186 = vld [vmem:[#allocation3 + $0x10] sm:$0xff]
        %v1187 = vld [vmem:[#allocation3 + $0x18] sm:$0xff]
        %v1188 = vld [vmem:[#allocation3 + $0x20] sm:$0xff]
        %v1189 = vld [vmem:[#allocation3 + $0x28] sm:$0xff]
        %v1190 = vld [vmem:[#allocation3 + $0x30] sm:$0xff]
        %v1191 = vld [vmem:[#allocation3 + $0x38] sm:$0xff]
        %1193 = vset.pattern.permute.xlu0 0
        %1194 = vperm.xlu0 %1193, %v1184
        %v1195 = vpop.permute.xlu0 %1194
        %1198 = vset.pattern.permute.xlu0 0
        %1199 = vperm.xlu0 %1198, %v1185
        %v1200 = vpop.permute.xlu0 %1199
        %1203 = vset.pattern.permute.xlu0 0
        %1204 = vperm.xlu0 %1203, %v1186
        %v1205 = vpop.permute.xlu0 %1204
        %1208 = vset.pattern.permute.xlu0 0
        %1209 = vperm.xlu0 %1208, %v1187
        %v1210 = vpop.permute.xlu0 %1209
        %1213 = vset.pattern.permute.xlu0 0
        %1214 = vperm.xlu0 %1213, %v1188
        %v1215 = vpop.permute.xlu0 %1214
        %1218 = vset.pattern.permute.xlu0 0
        %1219 = vperm.xlu0 %1218, %v1189
        %v1220 = vpop.permute.xlu0 %1219
        %1223 = vset.pattern.permute.xlu0 0
        %1224 = vperm.xlu0 %1223, %v1190
        %v1225 = vpop.permute.xlu0 %1224
        %1228 = vset.pattern.permute.xlu0 0
        %1229 = vperm.xlu0 %1228, %v1191
        %v1230 = vpop.permute.xlu0 %1229
        %v1232 = vrcp.pop %v1195
        %v1233 = vmul.f32 %v1176, %v1232
        %v1234 = vrcp.pop %v1200
        %v1235 = vmul.f32 %v1177, %v1234
        %v1236 = vrcp.pop %v1205
        %v1237 = vmul.f32 %v1178, %v1236
        %v1238 = vrcp.pop %v1210
        %v1239 = vmul.f32 %v1179, %v1238
        %v1240 = vrcp.pop %v1215
        %v1241 = vmul.f32 %v1180, %v1240
        %v1242 = vrcp.pop %v1220
        %v1243 = vmul.f32 %v1181, %v1242
        %v1244 = vrcp.pop %v1225
        %v1245 = vmul.f32 %v1182, %v1244
        %v1246 = vrcp.pop %v1230
        %v1247 = vmul.f32 %v1183, %v1246
        %v1248 = vcombine.low %v1233, %v1241
        %v1249 = vcombine.high %v1233, %v1241
        %v1251 = vunpack.c.l.s4 1983009808
        %v1252 = vunpack.c.0.s8 %v1251
        %v1253 = vlaneseq
        %v1254 = vshrl.u32 %v1253, 7
        %v1255 = vsub.s32 %v1252, %v1254
        %v1256 = vrot.slane %v1248, %v1255
        %v1258 = vunpack.c.l.s4 1983009808
        %v1259 = vunpack.c.0.s8 %v1258
        %v1260 = vlaneseq
        %v1261 = vshrl.u32 %v1260, 7
        %v1262 = vsub.s32 %v1259, %v1261
        %v1263 = vrot.slane %v1249, %v1262
        %v1264 = vcombine.low %v1237, %v1245
        %v1265 = vcombine.high %v1237, %v1245
        %v1267 = vunpack.c.l.s4 1983009808
        %v1268 = vunpack.c.0.s8 %v1267
        %v1269 = vlaneseq
        %v1270 = vshrl.u32 %v1269, 7
        %v1271 = vsub.s32 %v1268, %v1270
        %v1272 = vrot.slane %v1264, %v1271
        %v1274 = vunpack.c.l.s4 1983009808
        %v1275 = vunpack.c.0.s8 %v1274
        %v1276 = vlaneseq
        %v1277 = vshrl.u32 %v1276, 7
        %v1278 = vsub.s32 %v1275, %v1277
        %v1279 = vrot.slane %v1265, %v1278
        %v1280 = vcombine.low %v1256, %v1272
        %v1281 = vcombine.high %v1256, %v1272
        %v1283 = vunpack.c.l.s4 1934713408
        %v1284 = vunpack.c.0.s8 %v1283
        %v1285 = vlaneseq
        %v1286 = vshrl.u32 %v1285, 7
        %v1287 = vsub.s32 %v1284, %v1286
        %v1288 = vrot.slane %v1280, %v1287
        %v1290 = vunpack.c.l.s4 1934713408
        %v1291 = vunpack.c.0.s8 %v1290
        %v1292 = vlaneseq
        %v1293 = vshrl.u32 %v1292, 7
        %v1294 = vsub.s32 %v1291, %v1293
        %v1295 = vrot.slane %v1281, %v1294
        %v1296 = vcombine.low %v1263, %v1279
        %v1297 = vcombine.high %v1263, %v1279
        %v1299 = vunpack.c.l.s4 1934713408
        %v1300 = vunpack.c.0.s8 %v1299
        %v1301 = vlaneseq
        %v1302 = vshrl.u32 %v1301, 7
        %v1303 = vsub.s32 %v1300, %v1302
        %v1304 = vrot.slane %v1296, %v1303
        %v1306 = vunpack.c.l.s4 1934713408
        %v1307 = vunpack.c.0.s8 %v1306
        %v1308 = vlaneseq
        %v1309 = vshrl.u32 %v1308, 7
        %v1310 = vsub.s32 %v1307, %v1309
        %v1311 = vrot.slane %v1297, %v1310
        %v1312 = vcombine.high %v1288, 0.0
        %v1313 = vcombine.high %v1295, 0.0
        %v1314 = vcombine.high %v1304, 0.0
        %v1315 = vcombine.high %v1311, 0.0
        %v1316 = vcombine.low %v1235, %v1243
        %v1317 = vcombine.high %v1235, %v1243
        %v1319 = vunpack.c.l.s4 1983009808
        %v1320 = vunpack.c.0.s8 %v1319
        %v1321 = vlaneseq
        %v1322 = vshrl.u32 %v1321, 7
        %v1323 = vsub.s32 %v1320, %v1322
        %v1324 = vrot.slane %v1316, %v1323
        %v1326 = vunpack.c.l.s4 1983009808
        %v1327 = vunpack.c.0.s8 %v1326
        %v1328 = vlaneseq
        %v1329 = vshrl.u32 %v1328, 7
        %v1330 = vsub.s32 %v1327, %v1329
        %v1331 = vrot.slane %v1317, %v1330
        %v1332 = vcombine.low %v1239, %v1247
        %v1333 = vcombine.high %v1239, %v1247
        %v1335 = vunpack.c.l.s4 1983009808
        %v1336 = vunpack.c.0.s8 %v1335
        %v1337 = vlaneseq
        %v1338 = vshrl.u32 %v1337, 7
        %v1339 = vsub.s32 %v1336, %v1338
        %v1340 = vrot.slane %v1332, %v1339
        %v1342 = vunpack.c.l.s4 1983009808
        %v1343 = vunpack.c.0.s8 %v1342
        %v1344 = vlaneseq
        %v1345 = vshrl.u32 %v1344, 7
        %v1346 = vsub.s32 %v1343, %v1345
        %v1347 = vrot.slane %v1333, %v1346
        %v1348 = vcombine.low %v1324, %v1340
        %v1349 = vcombine.high %v1324, %v1340
        %v1351 = vunpack.c.l.s4 1934713408
        %v1352 = vunpack.c.0.s8 %v1351
        %v1353 = vlaneseq
        %v1354 = vshrl.u32 %v1353, 7
        %v1355 = vsub.s32 %v1352, %v1354
        %v1356 = vrot.slane %v1348, %v1355
        %v1358 = vunpack.c.l.s4 1934713408
        %v1359 = vunpack.c.0.s8 %v1358
        %v1360 = vlaneseq
        %v1361 = vshrl.u32 %v1360, 7
        %v1362 = vsub.s32 %v1359, %v1361
        %v1363 = vrot.slane %v1349, %v1362
        %v1364 = vcombine.low %v1331, %v1347
        %v1365 = vcombine.high %v1331, %v1347
        %v1367 = vunpack.c.l.s4 1934713408
        %v1368 = vunpack.c.0.s8 %v1367
        %v1369 = vlaneseq
        %v1370 = vshrl.u32 %v1369, 7
        %v1371 = vsub.s32 %v1368, %v1370
        %v1372 = vrot.slane %v1364, %v1371
        %v1374 = vunpack.c.l.s4 1934713408
        %v1375 = vunpack.c.0.s8 %v1374
        %v1376 = vlaneseq
        %v1377 = vshrl.u32 %v1376, 7
        %v1378 = vsub.s32 %v1375, %v1377
        %v1379 = vrot.slane %v1365, %v1378
        %v1380 = vcombine.high %v1356, 0.0
        %v1381 = vcombine.high %v1363, 0.0
        %v1382 = vcombine.high %v1372, 0.0
        %v1383 = vcombine.high %v1379, 0.0
        %v1384 = vcombine.low %v1288, %v1295
        %v1386 = vunpack.c.l.s4 1983009808
        %v1387 = vunpack.c.0.s8 %v1386
        %v1388 = vlaneseq
        %v1389 = vshrl.u32 %v1388, 7
        %v1390 = vsub.s32 %v1387, %v1389
        %v1391 = vrot.slane %v1384, %v1390
        %v1392 = vcombine.low %v1312, %v1313
        %v1394 = vunpack.c.l.s4 1983009808
        %v1395 = vunpack.c.0.s8 %v1394
        %v1396 = vlaneseq
        %v1397 = vshrl.u32 %v1396, 7
        %v1398 = vsub.s32 %v1395, %v1397
        %v1399 = vrot.slane %v1392, %v1398
        %v1400 = vcombine.low %v1304, %v1311
        %v1402 = vunpack.c.l.s4 1983009808
        %v1403 = vunpack.c.0.s8 %v1402
        %v1404 = vlaneseq
        %v1405 = vshrl.u32 %v1404, 7
        %v1406 = vsub.s32 %v1403, %v1405
        %v1407 = vrot.slane %v1400, %v1406
        %v1408 = vcombine.low %v1314, %v1315
        %v1410 = vunpack.c.l.s4 1983009808
        %v1411 = vunpack.c.0.s8 %v1410
        %v1412 = vlaneseq
        %v1413 = vshrl.u32 %v1412, 7
        %v1414 = vsub.s32 %v1411, %v1413
        %v1415 = vrot.slane %v1408, %v1414
        %v1416 = vcombine.low %v1391, %v1399
        %v1417 = vcombine.high %v1391, %v1399
        %v1419 = vunpack.c.l.s4 1934713408
        %v1420 = vunpack.c.0.s8 %v1419
        %v1421 = vlaneseq
        %v1422 = vshrl.u32 %v1421, 7
        %v1423 = vsub.s32 %v1420, %v1422
        %v1424 = vrot.slane %v1416, %v1423
        %v1426 = vunpack.c.l.s4 1934713408
        %v1427 = vunpack.c.0.s8 %v1426
        %v1428 = vlaneseq
        %v1429 = vshrl.u32 %v1428, 7
        %v1430 = vsub.s32 %v1427, %v1429
        %v1431 = vrot.slane %v1417, %v1430
        %v1432 = vcombine.low %v1407, %v1415
        %v1433 = vcombine.high %v1407, %v1415
        %v1435 = vunpack.c.l.s4 1934713408
        %v1436 = vunpack.c.0.s8 %v1435
        %v1437 = vlaneseq
        %v1438 = vshrl.u32 %v1437, 7
        %v1439 = vsub.s32 %v1436, %v1438
        %v1440 = vrot.slane %v1432, %v1439
        %v1442 = vunpack.c.l.s4 1934713408
        %v1443 = vunpack.c.0.s8 %v1442
        %v1444 = vlaneseq
        %v1445 = vshrl.u32 %v1444, 7
        %v1446 = vsub.s32 %v1443, %v1445
        %v1447 = vrot.slane %v1433, %v1446
        %v1448 = vcombine.low %v1424, %v1440
        %v1449 = vcombine.high %v1424, %v1440
        %v1450 = vcombine.low %v1431, %v1447
        %v1451 = vcombine.high %v1431, %v1447
        %v1452 = vcombine.low %v1356, %v1363
        %v1454 = vunpack.c.l.s4 1983009808
        %v1455 = vunpack.c.0.s8 %v1454
        %v1456 = vlaneseq
        %v1457 = vshrl.u32 %v1456, 7
        %v1458 = vsub.s32 %v1455, %v1457
        %v1459 = vrot.slane %v1452, %v1458
        %v1460 = vcombine.low %v1380, %v1381
        %v1462 = vunpack.c.l.s4 1983009808
        %v1463 = vunpack.c.0.s8 %v1462
        %v1464 = vlaneseq
        %v1465 = vshrl.u32 %v1464, 7
        %v1466 = vsub.s32 %v1463, %v1465
        %v1467 = vrot.slane %v1460, %v1466
        %v1468 = vcombine.low %v1372, %v1379
        %v1470 = vunpack.c.l.s4 1983009808
        %v1471 = vunpack.c.0.s8 %v1470
        %v1472 = vlaneseq
        %v1473 = vshrl.u32 %v1472, 7
        %v1474 = vsub.s32 %v1471, %v1473
        %v1475 = vrot.slane %v1468, %v1474
        %v1476 = vcombine.low %v1382, %v1383
        %v1478 = vunpack.c.l.s4 1983009808
        %v1479 = vunpack.c.0.s8 %v1478
        %v1480 = vlaneseq
        %v1481 = vshrl.u32 %v1480, 7
        %v1482 = vsub.s32 %v1479, %v1481
        %v1483 = vrot.slane %v1476, %v1482
        %v1484 = vcombine.low %v1459, %v1467
        %v1485 = vcombine.high %v1459, %v1467
        %v1487 = vunpack.c.l.s4 1934713408
        %v1488 = vunpack.c.0.s8 %v1487
        %v1489 = vlaneseq
        %v1490 = vshrl.u32 %v1489, 7
        %v1491 = vsub.s32 %v1488, %v1490
        %v1492 = vrot.slane %v1484, %v1491
        %v1494 = vunpack.c.l.s4 1934713408
        %v1495 = vunpack.c.0.s8 %v1494
        %v1496 = vlaneseq
        %v1497 = vshrl.u32 %v1496, 7
        %v1498 = vsub.s32 %v1495, %v1497
        %v1499 = vrot.slane %v1485, %v1498
        %v1500 = vcombine.low %v1475, %v1483
        %v1501 = vcombine.high %v1475, %v1483
        %v1503 = vunpack.c.l.s4 1934713408
        %v1504 = vunpack.c.0.s8 %v1503
        %v1505 = vlaneseq
        %v1506 = vshrl.u32 %v1505, 7
        %v1507 = vsub.s32 %v1504, %v1506
        %v1508 = vrot.slane %v1500, %v1507
        %v1510 = vunpack.c.l.s4 1934713408
        %v1511 = vunpack.c.0.s8 %v1510
        %v1512 = vlaneseq
        %v1513 = vshrl.u32 %v1512, 7
        %v1514 = vsub.s32 %v1511, %v1513
        %v1515 = vrot.slane %v1501, %v1514
        %v1516 = vcombine.low %v1492, %v1508
        %v1517 = vcombine.high %v1492, %v1508
        %v1518 = vcombine.low %v1499, %v1515
        %v1519 = vcombine.high %v1499, %v1515
        %1522 = vrot.lane.b32.xlu0 %v1449, 8
        %v1523 = vpop.permute.xlu0 %1522
        %1524 = vrot.lane.b32.xlu0 %v1517, 8
        %v1525 = vpop.permute.xlu0 %1524
        %1530 = vrot.lane.b32.xlu0 %v1450, 16
        %v1531 = vpop.permute.xlu0 %1530
        %1532 = vrot.lane.b32.xlu0 %v1518, 16
        %v1533 = vpop.permute.xlu0 %1532
        %1538 = vrot.lane.b32.xlu0 %v1451, 24
        %v1539 = vpop.permute.xlu0 %1538
        %1540 = vrot.lane.b32.xlu0 %v1519, 24
        %v1541 = vpop.permute.xlu0 %1540
        %v1544 = vsel %vm484, %v1448, %v1523
        %v1545 = vsel %vm484, %v1516, %v1525
        %v1546 = vsel %vm711, %v1544, %v1531
        %v1547 = vsel %vm711, %v1545, %v1533
        %vm1548 = vcmask 195584
        %v1549 = vsel %vm1548, %v1546, %v1539
        %v1550 = vsel %vm1548, %v1547, %v1541
        %v1551 = vpack.c.bf16 %v1550, %v1549
        %v1552 = vld [vmem:[%s5] sm:$0xf]
        %v1553 = vld [vmem:[%s5 + $0x4] sm:$0xf]
        %v1554 = vld [vmem:[%s5 + $0x8] sm:$0xf]
        %v1555 = vld [vmem:[%s5 + $0xc] sm:$0xf]
        %v1560 = vunpack.c.l.b16 %v1552
        %v1561 = vunpack.c.l.b16 %v1553
        %v1562 = vunpack.c.l.b16 %v1554
        %v1563 = vunpack.c.l.b16 %v1555
        %v1564 = vpack.c.b16 %v1561, %v1560
        %v1565 = vpack.c.b16 %v1563, %v1562
        %vm1568 = vcmask 261120
        %v1570 = vsel %vm1568, %v1551, 0
        %1572 = vmatprep.subr.bf16.mxu0 0
        %1573 = vmatpush1.bf16.msra.mxu0 %v1564
        %1574 = vmatprep.subr.bf16.mxu0 0
        %1575 = vmatpush1.bf16.msra.mxu0 %v1565
        %1576 = vmatprep.subr.bf16.mxu0 0
        %1577 = vmatpush1.bf16.msra.mxu0 0
        %1578 = vmatprep.subr.bf16.mxu0 0
        %1579 = vmatpush1.bf16.msra.mxu0 0
        %1580 = vmatprep.subr.bf16.mxu0 0
        %1581 = vmatpush1.bf16.msra.mxu0 0
        %1582 = vmatprep.subr.bf16.mxu0 0
        %1583 = vmatpush1.bf16.msra.mxu0 0
        %1584 = vmatprep.subr.bf16.mxu0 0
        %1585 = vmatpush1.bf16.msra.mxu0 0
        %1586 = vmatprep.subr.bf16.mxu0 0
        %1587 = vmatpush1.bf16.msra.mxu0 0
        %1588 = vmatprep.subr.bf16.mxu0 0
        %1589 = vmatpush1.bf16.msra.mxu0 0
        %1590 = vmatprep.subr.bf16.mxu0 0
        %1591 = vmatpush1.bf16.msra.mxu0 0
        %1592 = vmatprep.subr.bf16.mxu0 0
        %1593 = vmatpush1.bf16.msra.mxu0 0
        %1594 = vmatprep.subr.bf16.mxu0 0
        %1595 = vmatpush1.bf16.msra.mxu0 0
        %1596 = vmatprep.subr.bf16.mxu0 0
        %1597 = vmatpush1.bf16.msra.mxu0 0
        %1598 = vmatprep.subr.bf16.mxu0 0
        %1599 = vmatpush1.bf16.msra.mxu0 0
        %1600 = vmatprep.subr.bf16.mxu0 0
        %1601 = vmatpush1.bf16.msra.mxu0 0
        %1602 = vmatprep.subr.bf16.mxu0 0
        %1603 = vmatpush1.bf16.msra.mxu0 0
        %1604 = vmatprep.mubr.bf16.mxu0 0
        %1605 = vmatmul.mubr.bf16.gmra.mrb[0].mxu0 %v1570
        %v1606 = vpop.f32.mrb[0].mxu0
        %v1607 = vadd.f32 0.0, %v1606
        %v1608 = vpop.f32.mrb[0].mxu0
        %v1609 = vpop.f32.mrb[0].mxu0
        %v1610 = vadd.f32 0.0, %v1609
        %v1611 = vpop.f32.mrb[0].mxu0
        %1612 = vdwg.mxu0
        %v1613 = vld [vmem:[%s6] sm:$0x1]
        %v1614 = vsel %vm1568, %v1607, 0.0
        %1615 = vadd.xlane.f32.xlu0 %v1614
        %v1616 = vpop.xlane.xlu0 %1615
        %v1617 = vsel %vm1568, %v1610, 0.0
        %1618 = vadd.xlane.f32.xlu0 %v1617
        %v1619 = vpop.xlane.xlu0 %1618
        %v1620 = vrcp.pop 32.0
        %v1621 = vmul.f32 %v1616, %v1620
        %v1622 = vmul.f32 %v1619, %v1620
        %v1623 = vsub.f32 %v1607, %v1621
        %v1624 = vsub.f32 %v1610, %v1622
        %v1625 = vmul.f32 %v1623, %v1623
        %v1626 = vmul.f32 %v1624, %v1624
        %v1627 = vsel %vm1568, %v1625, 0.0
        %1628 = vadd.xlane.f32.xlu0 %v1627
        %v1629 = vpop.xlane.xlu0 %1628
        %v1630 = vsel %vm1568, %v1626, 0.0
        %1631 = vadd.xlane.f32.xlu0 %v1630
        %v1632 = vpop.xlane.xlu0 %1631
        %v1633 = vmul.f32 %v1629, %v1620
        %v1634 = vmul.f32 %v1632, %v1620
        %v1635 = vadd.f32 %v1633, 1e-05
        %v1636 = vadd.f32 %v1634, 1e-05
        %v1637 = vrsqrt.pop %v1635
        %v1638 = vrsqrt.pop %v1636
        %v1639 = vmul.f32 %v1623, %v1637
        %v1640 = vmul.f32 %v1624, %v1638
        %v1642 = vlaneseq
        %v1643 = vshrl.u32 %v1642, 7
        %v1644 = vsub.s32 0, %v1643
        %v1645 = vrot.slane %v1613, %v1644
        %v1647 = vmul.f32 %v1639, %v1645
        %v1648 = vmul.f32 %v1640, %v1645
        %v1649 = vld [vmem:[%s388] sm:$0xff]
        %v1650 = vld [vmem:[%s388 + $0x8] sm:$0xff]
        %v1651 = vadd.f32 %v1647, %v1649
        %v1652 = vadd.f32 %v1648, %v1650
        %1653 = vst.msk [vmem:[%s426] sm:$0xff] %vm1568, %v1651
        %1654 = vst.msk [vmem:[%s426 + $0x8] sm:$0xff] %vm1568, %v1652
      $region56: #{transformer_forward.10} parent=47 // pred_fallthru
        _
      %s1655 = smul.u32 2, %s24
      %p1656 = scmp.lt.s32.totalorder %s23, 1
      %s1657 = scalar_select %p1656, %s23, 1
      %p1658 = scmp.lt.s32.totalorder %s1655, 1
      %s1659 = scalar_select %p1658, %s1655, 1
      %s1660 = smul.addr %s1657, 2
      %s1661 = sadd.s32 %s1659, %s1660
      %s1662 = smul.addr %s1661, 8
      %s1663 = scalar_lea.vmem %s7, %s1662
      // Predicated region
      $region57: #{transformer_forward.10} parent=47 // pred_check
        %p1664 = pneg %p232
      $region58: #{transformer_forward.10} parent=47 // pred_check_branch
        %1666 = sbr.rel (%p1664) target = $region60
      $region59: #{transformer_forward.10} parent=47 // pred_region
        %s1667 = smul.u32 2, %s24
      $region60: #{transformer_forward.10} parent=47 // pred_fallthru
        _
    $region48: #{transformer_forward.10} parent=5 // pred_fallthru
      _
    %p1668 = scmp.le.s32.totalorder 2, %s13
    // Predicated region
    $region61: #{transformer_forward.10} parent=5 // pred_check
      %p1669 = pneg %p1668
    $region62: #{transformer_forward.10} parent=5 // pred_check_branch
      %1671 = sbr.rel (%p1669) target = $region64
    $region63: #{transformer_forward.10} parent=5 // pred_region
      %s1672 = ssub.s32 %s13, 2
      // Predicated region
      $region65: #{transformer_forward.10} parent=63 // pred_check
        %p1673 = pneg %p238
      $region66: #{transformer_forward.10} parent=63 // pred_check_branch
        %1675 = sbr.rel (%p1673) target = $region68
      $region67: #{transformer_forward.10} parent=63 // pred_region
        %s1676 = smul.u32 2, %s27
        %p1677 = scmp.lt.s32.totalorder %s26, 1
        %s1678 = scalar_select %p1677, %s26, 1
        %p1679 = scmp.lt.s32.totalorder %s1676, 1
        %s1680 = scalar_select %p1679, %s1676, 1
        %s1681 = smul.addr %s1678, 2
        %s1682 = sadd.s32 %s1680, %s1681
        %s1683 = smul.addr %s1682, 8
        %s1684 = scalar_lea.vmem %s7, %s1683
      $region68: #{transformer_forward.10} parent=63 // pred_fallthru
        _
    $region64: #{transformer_forward.10} parent=5 // pred_fallthru
      _
  $region6: #{transformer_forward.10} parent=0 // loop_footer
    %s17 = sadd.s32 1, %s13
  $region7: #{transformer_forward.10} parent=0 // loop_footer_branch
    %12 = sbr.rel target = $region3
  $region8: #{transformer_forward.10} parent=0 // loop_exit
    _

</llo_original>
